<compile_context>
chip_gen: v7x
topology: tpu7x:2x2x1
jax: 0.10.0
libtpu: 0.0.40
codegen_flags: <defaults>
</compile_context>

<pallas_src>
import jax
import jax.numpy as jnp
from jax.experimental import pallas as pl
from jax.experimental.pallas import tpu as pltpu

PAD = 3  # max dilation / padding among the three dilated convs


def _dee_fused_kernel(x_ref, wcol_ref, fcw_ref, fcb_ref, o_ref):
    """Both DEE branches for one (batch, H-tile) grid step.

    x_ref   : (1, H+2*PAD, W+2*PAD, C)  bf16 padded input (VMEM-resident across h)
    wcol_ref: (27*C, 2*C4)              bf16 packed dilated-conv weights, K order
                                        (dilation, kh, kw, cin); 1/3 mean folded in
    fcw_ref : (2*C4, 2*C)               bf16 block-diagonal 1x1-conv weights
    fcb_ref : (1, 2*C)                  f32  concatenated 1x1-conv biases
    o_ref   : (1, TH, W, 2*C)           output tile, lanes = [x1 | x2]
    """
    _, TH, W, C2 = o_ref.shape
    C = x_ref.shape[3]
    n_mid = wcol_ref.shape[1]          # 2*C4
    GK = max(1, 256 // C)              # taps per MXU dot: fill ~256-deep K

    h = pl.program_id(1)
    row0 = h * TH
    if TH % 8 == 0:
        row0 = pl.multiple_of(row0, 8)

    # Flat tap order must match the wrapper's weight packing: (dilation, kh, kw).
    taps = [(d, i, j) for d in (1, 2, 3) for i in range(3) for j in range(3)]

    # Accumulate the fused "sum of 3 dilated 3x3 convs, both branches" GEMM as a
    # short chain of K~256 dots, slicing shifted taps straight off the input Ref.
    acc = jnp.zeros((TH * W, n_mid), jnp.float32)
    t = 0
    while t < len(taps):
        group = taps[t:t + GK]
        lhs_parts = []
        for (d, i, j) in group:
            oh = row0 + PAD + d * (i - 1)   # dynamic (outer-dim) row offset
            ow = PAD + d * (j - 1)          # static 0..6 sublane offset
            lhs_parts.append(x_ref[0, pl.ds(oh, TH), pl.ds(ow, W), :])
        lhs = lhs_parts[0] if len(lhs_parts) == 1 else jnp.concatenate(
            lhs_parts, axis=-1)             # (TH, W, len(group)*C), lane-aligned
        lhs = lhs.reshape(TH * W, len(group) * C)
        wblk = wcol_ref[t * C:(t + len(group)) * C, :]
        acc = acc + jnp.dot(lhs, wblk, preferred_element_type=jnp.float32)
        t += len(group)

    # 1/3 mean already folded into wcol; ReLU in f32, then block-diagonal 1x1
    # conv (both branches in one dot) + bias.
    acc = jnp.maximum(acc, 0.0)
    out = jnp.dot(acc.astype(jnp.bfloat16), fcw_ref[...],
                  preferred_element_type=jnp.float32)
    out = out + fcb_ref[...]                              # (TH*W, 2C) + (1, 2C)
    o_ref[0] = out.reshape(TH, W, C2).astype(o_ref.dtype)


def _vmem_limit_bytes():
    """Generation-aware VMEM limit (~50 MiB on v7x, ~100 MiB on v5e/v6e)."""
    cap = 64 * 1024 * 1024  # conservative default = v7x physical VMEM
    try:
        info = pltpu.get_tpu_info()
        c = getattr(info, "vmem_capacity_bytes", None)
        if c:
            cap = int(c)
    except Exception:
        pass
    return min(int(cap * 0.78), 100 * 1024 * 1024)


def _dee_branches_fused(xp_bf16, w_col, fc_blk, fc_b, N, H, W, C, out_dtype):
    C4 = C // 4
    Hp, Wp = H + 2 * PAD, W + 2 * PAD
    out_isz = jnp.dtype(out_dtype).itemsize
    GK = max(1, 256 // C)

    vmem_limit = _vmem_limit_bytes()
    tile_budget = int(vmem_limit * 0.8)   # headroom for Mosaic internal scratch

    # TODO(synk): single-buffer the constant-index weight blocks
    # (pipeline_mode=pl.Buffered(1)) when top-level pallas_call support for it is
    # guaranteed; until then their double-buffer copy is counted in the budget.
    w_bytes = 2 * (w_col.size * 2 + fc_blk.size * 2 + fc_b.size * 4)
    in_bytes = 2 * (Hp * Wp * C * 2)      # resident padded image, bf16, 2 bufs

    def footprint(th):
        out_blk = 2 * (th * W * 2 * C * out_isz)
        work = th * W * (2 * C4 * 4 + GK * C * 2 + 2 * C * 4)  # acc + tap LHS + pre-store
        return w_bytes + in_bytes + out_blk + work

    # Largest H tile (TH = H allowed) whose footprint fits the per-generation budget.
    TH = None
    for th in range(H, 0, -1):
        if H % th == 0 and footprint(th) <= tile_budget:
            TH = th
            break
    if TH is None:
        # TODO(synk): fall back to an H-tiled input BlockSpec with a 2*PAD-row
        # halo (manual DMA) when even the smallest tile with a resident padded
        # image overflows VMEM; not reachable at realistic DEE feature-map sizes.
        TH = 1
    n_h = H // TH

    flops = (2 * N * H * W * (27 * C) * (2 * C4)      # fused dilated convs
             + 2 * N * H * W * (2 * C4) * (2 * C))    # block-diag 1x1 convs
    bytes_accessed = (xp_bf16.size * 2 + w_col.size * 2 + fc_blk.size * 2
                      + fc_b.size * 4 + N * H * W * 2 * C * out_isz)

    return pl.pallas_call(
        _dee_fused_kernel,
        out_shape=jax.ShapeDtypeStruct((N, H, W, 2 * C), out_dtype),
        grid_spec=pltpu.PrefetchScalarGridSpec(
            num_scalar_prefetch=0,
            grid=(N, n_h),
            in_specs=[
                # Full padded image per batch element; index_map ignores h so the
                # block stays VMEM-resident across the inner H-tile axis.
                pl.BlockSpec((1, Hp, Wp, C), lambda n, h: (n, 0, 0, 0)),
                pl.BlockSpec((27 * C, 2 * C4), lambda n, h: (0, 0)),
                pl.BlockSpec((2 * C4, 2 * C), lambda n, h: (0, 0)),
                pl.BlockSpec((1, 2 * C), lambda n, h: (0, 0)),
            ],
            out_specs=pl.BlockSpec((1, TH, W, 2 * C),
                                   lambda n, h: (n, h, 0, 0)),
        ),
        compiler_params=pltpu.CompilerParams(
            # Batch axis parallel, H-tile axis arbitrary: on v7x the two
            # TensorCores split on n, so each padded image is DMA'd once per core.
            dimension_semantics=("parallel", "arbitrary"),
            vmem_limit_bytes=vmem_limit,
        ),
        cost_estimate=pl.CostEstimate(flops=flops, transcendentals=0,
                                      bytes_accessed=bytes_accessed),
    )(xp_bf16, w_col, fc_blk, fc_b)


def dee_forward(x_nchw, params):
    """DEE_module.forward. Input/Output are NCHW like the PyTorch module."""
    N, C, H, W = x_nchw.shape
    C4 = C // 4

    # NHWC + global zero pad (PAD = max dilation); bf16 halves the input DMA.
    x_nhwc = jnp.transpose(x_nchw, (0, 2, 3, 1)).astype(jnp.bfloat16)
    xp = jnp.pad(x_nhwc, ((0, 0), (PAD, PAD), (PAD, PAD), (0, 0)))

    # Pack the six dilated-conv weights into one (27*C, 2*C4) matrix.
    # K order (dilation, kh, kw, cin) matches the kernel's tap order; Cout is
    # [branch1 | branch2].  The 1/3 mean is folded in here (exact under ReLU).
    wb1 = jnp.stack([params["w11"], params["w12"], params["w13"]],
                    axis=0).reshape(27 * C, C4)
    wb2 = jnp.stack([params["w21"], params["w22"], params["w23"]],
                    axis=0).reshape(27 * C, C4)
    w_col = (jnp.concatenate([wb1, wb2], axis=1) * (1.0 / 3.0)).astype(jnp.bfloat16)

    # Block-diagonal 1x1-conv weight so both branches use one MXU matmul.
    z = jnp.zeros((C4, C), params["fc1_w"].dtype)
    fc_blk = jnp.concatenate(
        [jnp.concatenate([params["fc1_w"], z], axis=1),
         jnp.concatenate([z, params["fc2_w"]], axis=1)],
        axis=0).astype(jnp.bfloat16)                          # (2*C4, 2*C)
    fc_b = jnp.concatenate([params["fc1_b"], params["fc2_b"]],
                           axis=1).astype(jnp.float32)        # (1, 2*C)

    out = _dee_branches_fused(xp, w_col, fc_blk, fc_b, N, H, W, C,
                              x_nchw.dtype)                   # (N, H, W, 2C)

    # NHWC -> NCHW and stack [x, x1, x2] along batch (single big transpose).
    # TODO(synk): keeping the surrounding model NHWC end-to-end (or donating
    # into a preallocated (3N,...) buffer) would remove these extra HBM passes;
    # kept to preserve the PyTorch NCHW interface.
    branches = jnp.transpose(out, (0, 3, 1, 2)).reshape(N, 2, C, H, W)
    branches = jnp.moveaxis(branches, 1, 0).reshape(2 * N, C, H, W)
    result = jnp.concatenate([x_nchw, branches.astype(x_nchw.dtype)], axis=0)
    # Dropout(p=0.01): identity in eval/inference mode.
    # TODO(synk): training-mode dropout (random mask + 1/(1-p) scale) not implemented.
    return result


def init_params(key, channel):
    """Kaiming-normal init matching the PyTorch __init__ shapes.

    Dilated 3x3 convs: fan_in = channel*9 (bias=False); 1x1 convs: fan_in = channel//4.
    Weights stored in (kH, kW, Cin, Cout) / (Cin, Cout) layout.
    """
    c4 = channel // 4
    keys = jax.random.split(key, 8)
    std3 = (2.0 / (channel * 3 * 3)) ** 0.5
    std1 = (2.0 / c4) ** 0.5
    p = {}
    for i, name in enumerate(["w11", "w12", "w13", "w21", "w22", "w23"]):
        p[name] = std3 * jax.random.normal(keys[i], (3, 3, channel, c4),
                                           dtype=jnp.float32)
    p["fc1_w"] = std1 * jax.random.normal(keys[6], (c4, channel), dtype=jnp.float32)
    p["fc2_w"] = std1 * jax.random.normal(keys[7], (c4, channel), dtype=jnp.float32)
    p["fc1_b"] = jnp.zeros((1, channel), dtype=jnp.float32)
    p["fc2_b"] = jnp.zeros((1, channel), dtype=jnp.float32)
    return p


def _dee_reference(x_nchw, params):
    """Pure-JAX (XLA conv) reference of the same forward, in f32."""
    x = jnp.transpose(x_nchw, (0, 2, 3, 1))

    def conv3(w, d):
        return jax.lax.conv_general_dilated(
            x, w, window_strides=(1, 1), padding=[(d, d), (d, d)],
            rhs_dilation=(d, d), dimension_numbers=("NHWC", "HWIO", "NHWC"))

    def branch(w1, w2, w3, fw, fb):
        y = (conv3(w1, 1) + conv3(w2, 2) + conv3(w3, 3)) / 3.0
        y = jnp.maximum(y, 0.0)
        y = jnp.einsum("nhwc,cd->nhwd", y, fw) + fb.reshape(1, 1, 1, -1)
        return jnp.transpose(y, (0, 3, 1, 2))

    x1 = branch(params["w11"], params["w12"], params["w13"],
                params["fc1_w"], params["fc1_b"])
    x2 = branch(params["w21"], params["w22"], params["w23"],
                params["fc2_w"], params["fc2_b"])
    return jnp.concatenate([x_nchw, x1, x2], axis=0)


if __name__ == "__main__":
    key = jax.random.PRNGKey(0)
    # Small but representative: C multiple of 128 keeps the tap channel blocks
    # lane-aligned (DEE is applied to wide ResNet feature maps in practice).
    N, C, H, W = 2, 128, 16, 16

    kx, kp = jax.random.split(key)
    x = jax.random.normal(kx, (N, C, H, W), dtype=jnp.float32)
    params = init_params(kp, C)

    out = jax.jit(dee_forward)(x, params)
    out = jax.block_until_ready(out)

    assert out.shape == (3 * N, C, H, W), out.shape
    assert bool(jnp.all(jnp.isfinite(out)))

    # Numerical check vs an f32 XLA-conv reference (tolerance covers the bf16
    # MXU operands; layout / weight-packing bugs would produce O(1) errors).
    ref = _dee_reference(x, params)
    max_err = float(jnp.max(jnp.abs(out - ref)))
    assert max_err < 0.15, f"max abs error vs reference: {max_err}"

    print("KERNEL_OK")
</pallas_src>

<mosaic_0001>
module attributes {stable_mosaic.version = 11 : i64} {
  func.func @_dee_fused_kernel(%arg0: i32, %arg1: i32, %arg2: memref<1x22x22x128xbf16, #tpu.memory_space<vmem>>, %arg3: memref<3456x64xbf16, #tpu.memory_space<vmem>>, %arg4: memref<64x256xbf16, #tpu.memory_space<vmem>>, %arg5: memref<1x256xf32, #tpu.memory_space<vmem>>, %arg6: memref<1x16x16x256xf32, #tpu.memory_space<vmem>>) attributes {dimension_semantics = [#tpu.dimension_semantics<parallel>, #tpu.dimension_semantics<arbitrary>], iteration_bounds = array<i64: 2, 1>, scalar_prefetch = 0 : i64, scratch_operands = 0 : i64, tpu.core_type = #tpu.core_type<tc>, window_params = [{transform_indices = @transform_0, window_bounds = array<i64: 1, 22, 22, 128>}, {pipeline_mode = #tpu.pipeline_mode<synchronous>, transform_indices = @transform_1, window_bounds = array<i64: 3456, 64>}, {pipeline_mode = #tpu.pipeline_mode<synchronous>, transform_indices = @transform_2, window_bounds = array<i64: 64, 256>}, {pipeline_mode = #tpu.pipeline_mode<synchronous>, transform_indices = @transform_3, window_bounds = array<i64: 1, 256>}, {transform_indices = @transform_4, window_bounds = array<i64: 1, 16, 16, 256>}]} {
    %c16_i32 = arith.constant 16 : i32
    %0 = arith.muli %arg1, %c16_i32 : i32
    %1 = tpu.assume_multiple %0, 8 : i32
    %cst = arith.constant 0.000000e+00 : f32
    %2 = vector.broadcast %cst : f32 to vector<256x64xf32>
    %c3_i32 = arith.constant 3 : i32
    %3 = arith.addi %1, %c3_i32 : i32
    %c-1_i32 = arith.constant -1 : i32
    %4 = arith.addi %3, %c-1_i32 : i32
    %c0 = arith.constant 0 : index
    %5 = arith.index_cast %4 : i32 to index
    %c2 = arith.constant 2 : index
    %c0_0 = arith.constant 0 : index
    %6 = vector.load %arg2[%c0, %5, %c2, %c0_0] : memref<1x22x22x128xbf16, #tpu.memory_space<vmem>>, vector<1x16x16x128xbf16>
    %7 = vector.shape_cast %6 : vector<1x16x16x128xbf16> to vector<16x16x128xbf16>
    %c3_i32_1 = arith.constant 3 : i32
    %8 = arith.addi %1, %c3_i32_1 : i32
    %c-1_i32_2 = arith.constant -1 : i32
    %9 = arith.addi %8, %c-1_i32_2 : i32
    %c0_3 = arith.constant 0 : index
    %10 = arith.index_cast %9 : i32 to index
    %c3 = arith.constant 3 : index
    %c0_4 = arith.constant 0 : index
    %11 = vector.load %arg2[%c0_3, %10, %c3, %c0_4] : memref<1x22x22x128xbf16, #tpu.memory_space<vmem>>, vector<1x16x16x128xbf16>
    %12 = vector.shape_cast %11 : vector<1x16x16x128xbf16> to vector<16x16x128xbf16>
    %13 = tpu.concatenate %7, %12 in 2 : vector<16x16x128xbf16>, vector<16x16x128xbf16> -> vector<16x16x256xbf16>
    %14 = vector.shape_cast %13 : vector<16x16x256xbf16> to vector<256x256xbf16>
    %c0_5 = arith.constant 0 : index
    %c0_6 = arith.constant 0 : index
    %15 = vector.load %arg3[%c0_5, %c0_6] : memref<3456x64xbf16, #tpu.memory_space<vmem>>, vector<256x64xbf16>
    %cst_7 = arith.constant dense<0.000000e+00> : vector<256x64xf32>
    %16 = tpu.matmul %14, %15, %cst_7 {dimension_numbers = #tpu.dot_dimension_numbers<[1], [0], [0], [1], [0, 0, 1, 1], [], []>} : vector<256x256xbf16>, vector<256x64xbf16>, vector<256x64xf32> -> vector<256x64xf32>
    %17 = arith.addf %2, %16 : vector<256x64xf32>
    %c3_i32_8 = arith.constant 3 : i32
    %18 = arith.addi %1, %c3_i32_8 : i32
    %c-1_i32_9 = arith.constant -1 : i32
    %19 = arith.addi %18, %c-1_i32_9 : i32
    %c0_10 = arith.constant 0 : index
    %20 = arith.index_cast %19 : i32 to index
    %c4 = arith.constant 4 : index
    %c0_11 = arith.constant 0 : index
    %21 = vector.load %arg2[%c0_10, %20, %c4, %c0_11] : memref<1x22x22x128xbf16, #tpu.memory_space<vmem>>, vector<1x16x16x128xbf16>
    %22 = vector.shape_cast %21 : vector<1x16x16x128xbf16> to vector<16x16x128xbf16>
    %c3_i32_12 = arith.constant 3 : i32
    %23 = arith.addi %1, %c3_i32_12 : i32
    %c0_i32 = arith.constant 0 : i32
    %24 = arith.addi %23, %c0_i32 : i32
    %c0_13 = arith.constant 0 : index
    %25 = arith.index_cast %24 : i32 to index
    %c2_14 = arith.constant 2 : index
    %c0_15 = arith.constant 0 : index
    %26 = vector.load %arg2[%c0_13, %25, %c2_14, %c0_15] : memref<1x22x22x128xbf16, #tpu.memory_space<vmem>>, vector<1x16x16x128xbf16>
    %27 = vector.shape_cast %26 : vector<1x16x16x128xbf16> to vector<16x16x128xbf16>
    %28 = tpu.concatenate %22, %27 in 2 : vector<16x16x128xbf16>, vector<16x16x128xbf16> -> vector<16x16x256xbf16>
    %29 = vector.shape_cast %28 : vector<16x16x256xbf16> to vector<256x256xbf16>
    %c256 = arith.constant 256 : index
    %c0_16 = arith.constant 0 : index
    %30 = vector.load %arg3[%c256, %c0_16] : memref<3456x64xbf16, #tpu.memory_space<vmem>>, vector<256x64xbf16>
    %cst_17 = arith.constant dense<0.000000e+00> : vector<256x64xf32>
    %31 = tpu.matmul %29, %30, %cst_17 {dimension_numbers = #tpu.dot_dimension_numbers<[1], [0], [0], [1], [0, 0, 1, 1], [], []>} : vector<256x256xbf16>, vector<256x64xbf16>, vector<256x64xf32> -> vector<256x64xf32>
    %32 = arith.addf %17, %31 : vector<256x64xf32>
    %c3_i32_18 = arith.constant 3 : i32
    %33 = arith.addi %1, %c3_i32_18 : i32
    %c0_i32_19 = arith.constant 0 : i32
    %34 = arith.addi %33, %c0_i32_19 : i32
    %c0_20 = arith.constant 0 : index
    %35 = arith.index_cast %34 : i32 to index
    %c3_21 = arith.constant 3 : index
    %c0_22 = arith.constant 0 : index
    %36 = vector.load %arg2[%c0_20, %35, %c3_21, %c0_22] : memref<1x22x22x128xbf16, #tpu.memory_space<vmem>>, vector<1x16x16x128xbf16>
    %37 = vector.shape_cast %36 : vector<1x16x16x128xbf16> to vector<16x16x128xbf16>
    %c3_i32_23 = arith.constant 3 : i32
    %38 = arith.addi %1, %c3_i32_23 : i32
    %c0_i32_24 = arith.constant 0 : i32
    %39 = arith.addi %38, %c0_i32_24 : i32
    %c0_25 = arith.constant 0 : index
    %40 = arith.index_cast %39 : i32 to index
    %c4_26 = arith.constant 4 : index
    %c0_27 = arith.constant 0 : index
    %41 = vector.load %arg2[%c0_25, %40, %c4_26, %c0_27] : memref<1x22x22x128xbf16, #tpu.memory_space<vmem>>, vector<1x16x16x128xbf16>
    %42 = vector.shape_cast %41 : vector<1x16x16x128xbf16> to vector<16x16x128xbf16>
    %43 = tpu.concatenate %37, %42 in 2 : vector<16x16x128xbf16>, vector<16x16x128xbf16> -> vector<16x16x256xbf16>
    %44 = vector.shape_cast %43 : vector<16x16x256xbf16> to vector<256x256xbf16>
    %c512 = arith.constant 512 : index
    %c0_28 = arith.constant 0 : index
    %45 = vector.load %arg3[%c512, %c0_28] : memref<3456x64xbf16, #tpu.memory_space<vmem>>, vector<256x64xbf16>
    %cst_29 = arith.constant dense<0.000000e+00> : vector<256x64xf32>
    %46 = tpu.matmul %44, %45, %cst_29 {dimension_numbers = #tpu.dot_dimension_numbers<[1], [0], [0], [1], [0, 0, 1, 1], [], []>} : vector<256x256xbf16>, vector<256x64xbf16>, vector<256x64xf32> -> vector<256x64xf32>
    %47 = arith.addf %32, %46 : vector<256x64xf32>
    %c3_i32_30 = arith.constant 3 : i32
    %48 = arith.addi %1, %c3_i32_30 : i32
    %c1_i32 = arith.constant 1 : i32
    %49 = arith.addi %48, %c1_i32 : i32
    %c0_31 = arith.constant 0 : index
    %50 = arith.index_cast %49 : i32 to index
    %c2_32 = arith.constant 2 : index
    %c0_33 = arith.constant 0 : index
    %51 = vector.load %arg2[%c0_31, %50, %c2_32, %c0_33] : memref<1x22x22x128xbf16, #tpu.memory_space<vmem>>, vector<1x16x16x128xbf16>
    %52 = vector.shape_cast %51 : vector<1x16x16x128xbf16> to vector<16x16x128xbf16>
    %c3_i32_34 = arith.constant 3 : i32
    %53 = arith.addi %1, %c3_i32_34 : i32
    %c1_i32_35 = arith.constant 1 : i32
    %54 = arith.addi %53, %c1_i32_35 : i32
    %c0_36 = arith.constant 0 : index
    %55 = arith.index_cast %54 : i32 to index
    %c3_37 = arith.constant 3 : index
    %c0_38 = arith.constant 0 : index
    %56 = vector.load %arg2[%c0_36, %55, %c3_37, %c0_38] : memref<1x22x22x128xbf16, #tpu.memory_space<vmem>>, vector<1x16x16x128xbf16>
    %57 = vector.shape_cast %56 : vector<1x16x16x128xbf16> to vector<16x16x128xbf16>
    %58 = tpu.concatenate %52, %57 in 2 : vector<16x16x128xbf16>, vector<16x16x128xbf16> -> vector<16x16x256xbf16>
    %59 = vector.shape_cast %58 : vector<16x16x256xbf16> to vector<256x256xbf16>
    %c768 = arith.constant 768 : index
    %c0_39 = arith.constant 0 : index
    %60 = vector.load %arg3[%c768, %c0_39] : memref<3456x64xbf16, #tpu.memory_space<vmem>>, vector<256x64xbf16>
    %cst_40 = arith.constant dense<0.000000e+00> : vector<256x64xf32>
    %61 = tpu.matmul %59, %60, %cst_40 {dimension_numbers = #tpu.dot_dimension_numbers<[1], [0], [0], [1], [0, 0, 1, 1], [], []>} : vector<256x256xbf16>, vector<256x64xbf16>, vector<256x64xf32> -> vector<256x64xf32>
    %62 = arith.addf %47, %61 : vector<256x64xf32>
    %c3_i32_41 = arith.constant 3 : i32
    %63 = arith.addi %1, %c3_i32_41 : i32
    %c1_i32_42 = arith.constant 1 : i32
    %64 = arith.addi %63, %c1_i32_42 : i32
    %c0_43 = arith.constant 0 : index
    %65 = arith.index_cast %64 : i32 to index
    %c4_44 = arith.constant 4 : index
    %c0_45 = arith.constant 0 : index
    %66 = vector.load %arg2[%c0_43, %65, %c4_44, %c0_45] : memref<1x22x22x128xbf16, #tpu.memory_space<vmem>>, vector<1x16x16x128xbf16>
    %67 = vector.shape_cast %66 : vector<1x16x16x128xbf16> to vector<16x16x128xbf16>
    %c3_i32_46 = arith.constant 3 : i32
    %68 = arith.addi %1, %c3_i32_46 : i32
    %c-2_i32 = arith.constant -2 : i32
    %69 = arith.addi %68, %c-2_i32 : i32
    %c0_47 = arith.constant 0 : index
    %70 = arith.index_cast %69 : i32 to index
    %c1 = arith.constant 1 : index
    %c0_48 = arith.constant 0 : index
    %71 = vector.load %arg2[%c0_47, %70, %c1, %c0_48] : memref<1x22x22x128xbf16, #tpu.memory_space<vmem>>, vector<1x16x16x128xbf16>
    %72 = vector.shape_cast %71 : vector<1x16x16x128xbf16> to vector<16x16x128xbf16>
    %73 = tpu.concatenate %67, %72 in 2 : vector<16x16x128xbf16>, vector<16x16x128xbf16> -> vector<16x16x256xbf16>
    %74 = vector.shape_cast %73 : vector<16x16x256xbf16> to vector<256x256xbf16>
    %c1024 = arith.constant 1024 : index
    %c0_49 = arith.constant 0 : index
    %75 = vector.load %arg3[%c1024, %c0_49] : memref<3456x64xbf16, #tpu.memory_space<vmem>>, vector<256x64xbf16>
    %cst_50 = arith.constant dense<0.000000e+00> : vector<256x64xf32>
    %76 = tpu.matmul %74, %75, %cst_50 {dimension_numbers = #tpu.dot_dimension_numbers<[1], [0], [0], [1], [0, 0, 1, 1], [], []>} : vector<256x256xbf16>, vector<256x64xbf16>, vector<256x64xf32> -> vector<256x64xf32>
    %77 = arith.addf %62, %76 : vector<256x64xf32>
    %c3_i32_51 = arith.constant 3 : i32
    %78 = arith.addi %1, %c3_i32_51 : i32
    %c-2_i32_52 = arith.constant -2 : i32
    %79 = arith.addi %78, %c-2_i32_52 : i32
    %c0_53 = arith.constant 0 : index
    %80 = arith.index_cast %79 : i32 to index
    %c3_54 = arith.constant 3 : index
    %c0_55 = arith.constant 0 : index
    %81 = vector.load %arg2[%c0_53, %80, %c3_54, %c0_55] : memref<1x22x22x128xbf16, #tpu.memory_space<vmem>>, vector<1x16x16x128xbf16>
    %82 = vector.shape_cast %81 : vector<1x16x16x128xbf16> to vector<16x16x128xbf16>
    %c3_i32_56 = arith.constant 3 : i32
    %83 = arith.addi %1, %c3_i32_56 : i32
    %c-2_i32_57 = arith.constant -2 : i32
    %84 = arith.addi %83, %c-2_i32_57 : i32
    %c0_58 = arith.constant 0 : index
    %85 = arith.index_cast %84 : i32 to index
    %c5 = arith.constant 5 : index
    %c0_59 = arith.constant 0 : index
    %86 = vector.load %arg2[%c0_58, %85, %c5, %c0_59] : memref<1x22x22x128xbf16, #tpu.memory_space<vmem>>, vector<1x16x16x128xbf16>
    %87 = vector.shape_cast %86 : vector<1x16x16x128xbf16> to vector<16x16x128xbf16>
    %88 = tpu.concatenate %82, %87 in 2 : vector<16x16x128xbf16>, vector<16x16x128xbf16> -> vector<16x16x256xbf16>
    %89 = vector.shape_cast %88 : vector<16x16x256xbf16> to vector<256x256xbf16>
    %c1280 = arith.constant 1280 : index
    %c0_60 = arith.constant 0 : index
    %90 = vector.load %arg3[%c1280, %c0_60] : memref<3456x64xbf16, #tpu.memory_space<vmem>>, vector<256x64xbf16>
    %cst_61 = arith.constant dense<0.000000e+00> : vector<256x64xf32>
    %91 = tpu.matmul %89, %90, %cst_61 {dimension_numbers = #tpu.dot_dimension_numbers<[1], [0], [0], [1], [0, 0, 1, 1], [], []>} : vector<256x256xbf16>, vector<256x64xbf16>, vector<256x64xf32> -> vector<256x64xf32>
    %92 = arith.addf %77, %91 : vector<256x64xf32>
    %c3_i32_62 = arith.constant 3 : i32
    %93 = arith.addi %1, %c3_i32_62 : i32
    %c0_i32_63 = arith.constant 0 : i32
    %94 = arith.addi %93, %c0_i32_63 : i32
    %c0_64 = arith.constant 0 : index
    %95 = arith.index_cast %94 : i32 to index
    %c1_65 = arith.constant 1 : index
    %c0_66 = arith.constant 0 : index
    %96 = vector.load %arg2[%c0_64, %95, %c1_65, %c0_66] : memref<1x22x22x128xbf16, #tpu.memory_space<vmem>>, vector<1x16x16x128xbf16>
    %97 = vector.shape_cast %96 : vector<1x16x16x128xbf16> to vector<16x16x128xbf16>
    %c3_i32_67 = arith.constant 3 : i32
    %98 = arith.addi %1, %c3_i32_67 : i32
    %c0_i32_68 = arith.constant 0 : i32
    %99 = arith.addi %98, %c0_i32_68 : i32
    %c0_69 = arith.constant 0 : index
    %100 = arith.index_cast %99 : i32 to index
    %c3_70 = arith.constant 3 : index
    %c0_71 = arith.constant 0 : index
    %101 = vector.load %arg2[%c0_69, %100, %c3_70, %c0_71] : memref<1x22x22x128xbf16, #tpu.memory_space<vmem>>, vector<1x16x16x128xbf16>
    %102 = vector.shape_cast %101 : vector<1x16x16x128xbf16> to vector<16x16x128xbf16>
    %103 = tpu.concatenate %97, %102 in 2 : vector<16x16x128xbf16>, vector<16x16x128xbf16> -> vector<16x16x256xbf16>
    %104 = vector.shape_cast %103 : vector<16x16x256xbf16> to vector<256x256xbf16>
    %c1536 = arith.constant 1536 : index
    %c0_72 = arith.constant 0 : index
    %105 = vector.load %arg3[%c1536, %c0_72] : memref<3456x64xbf16, #tpu.memory_space<vmem>>, vector<256x64xbf16>
    %cst_73 = arith.constant dense<0.000000e+00> : vector<256x64xf32>
    %106 = tpu.matmul %104, %105, %cst_73 {dimension_numbers = #tpu.dot_dimension_numbers<[1], [0], [0], [1], [0, 0, 1, 1], [], []>} : vector<256x256xbf16>, vector<256x64xbf16>, vector<256x64xf32> -> vector<256x64xf32>
    %107 = arith.addf %92, %106 : vector<256x64xf32>
    %c3_i32_74 = arith.constant 3 : i32
    %108 = arith.addi %1, %c3_i32_74 : i32
    %c0_i32_75 = arith.constant 0 : i32
    %109 = arith.addi %108, %c0_i32_75 : i32
    %c0_76 = arith.constant 0 : index
    %110 = arith.index_cast %109 : i32 to index
    %c5_77 = arith.constant 5 : index
    %c0_78 = arith.constant 0 : index
    %111 = vector.load %arg2[%c0_76, %110, %c5_77, %c0_78] : memref<1x22x22x128xbf16, #tpu.memory_space<vmem>>, vector<1x16x16x128xbf16>
    %112 = vector.shape_cast %111 : vector<1x16x16x128xbf16> to vector<16x16x128xbf16>
    %c3_i32_79 = arith.constant 3 : i32
    %113 = arith.addi %1, %c3_i32_79 : i32
    %c2_i32 = arith.constant 2 : i32
    %114 = arith.addi %113, %c2_i32 : i32
    %c0_80 = arith.constant 0 : index
    %115 = arith.index_cast %114 : i32 to index
    %c1_81 = arith.constant 1 : index
    %c0_82 = arith.constant 0 : index
    %116 = vector.load %arg2[%c0_80, %115, %c1_81, %c0_82] : memref<1x22x22x128xbf16, #tpu.memory_space<vmem>>, vector<1x16x16x128xbf16>
    %117 = vector.shape_cast %116 : vector<1x16x16x128xbf16> to vector<16x16x128xbf16>
    %118 = tpu.concatenate %112, %117 in 2 : vector<16x16x128xbf16>, vector<16x16x128xbf16> -> vector<16x16x256xbf16>
    %119 = vector.shape_cast %118 : vector<16x16x256xbf16> to vector<256x256xbf16>
    %c1792 = arith.constant 1792 : index
    %c0_83 = arith.constant 0 : index
    %120 = vector.load %arg3[%c1792, %c0_83] : memref<3456x64xbf16, #tpu.memory_space<vmem>>, vector<256x64xbf16>
    %cst_84 = arith.constant dense<0.000000e+00> : vector<256x64xf32>
    %121 = tpu.matmul %119, %120, %cst_84 {dimension_numbers = #tpu.dot_dimension_numbers<[1], [0], [0], [1], [0, 0, 1, 1], [], []>} : vector<256x256xbf16>, vector<256x64xbf16>, vector<256x64xf32> -> vector<256x64xf32>
    %122 = arith.addf %107, %121 : vector<256x64xf32>
    %c3_i32_85 = arith.constant 3 : i32
    %123 = arith.addi %1, %c3_i32_85 : i32
    %c2_i32_86 = arith.constant 2 : i32
    %124 = arith.addi %123, %c2_i32_86 : i32
    %c0_87 = arith.constant 0 : index
    %125 = arith.index_cast %124 : i32 to index
    %c3_88 = arith.constant 3 : index
    %c0_89 = arith.constant 0 : index
    %126 = vector.load %arg2[%c0_87, %125, %c3_88, %c0_89] : memref<1x22x22x128xbf16, #tpu.memory_space<vmem>>, vector<1x16x16x128xbf16>
    %127 = vector.shape_cast %126 : vector<1x16x16x128xbf16> to vector<16x16x128xbf16>
    %c3_i32_90 = arith.constant 3 : i32
    %128 = arith.addi %1, %c3_i32_90 : i32
    %c2_i32_91 = arith.constant 2 : i32
    %129 = arith.addi %128, %c2_i32_91 : i32
    %c0_92 = arith.constant 0 : index
    %130 = arith.index_cast %129 : i32 to index
    %c5_93 = arith.constant 5 : index
    %c0_94 = arith.constant 0 : index
    %131 = vector.load %arg2[%c0_92, %130, %c5_93, %c0_94] : memref<1x22x22x128xbf16, #tpu.memory_space<vmem>>, vector<1x16x16x128xbf16>
    %132 = vector.shape_cast %131 : vector<1x16x16x128xbf16> to vector<16x16x128xbf16>
    %133 = tpu.concatenate %127, %132 in 2 : vector<16x16x128xbf16>, vector<16x16x128xbf16> -> vector<16x16x256xbf16>
    %134 = vector.shape_cast %133 : vector<16x16x256xbf16> to vector<256x256xbf16>
    %c2048 = arith.constant 2048 : index
    %c0_95 = arith.constant 0 : index
    %135 = vector.load %arg3[%c2048, %c0_95] : memref<3456x64xbf16, #tpu.memory_space<vmem>>, vector<256x64xbf16>
    %cst_96 = arith.constant dense<0.000000e+00> : vector<256x64xf32>
    %136 = tpu.matmul %134, %135, %cst_96 {dimension_numbers = #tpu.dot_dimension_numbers<[1], [0], [0], [1], [0, 0, 1, 1], [], []>} : vector<256x256xbf16>, vector<256x64xbf16>, vector<256x64xf32> -> vector<256x64xf32>
    %137 = arith.addf %122, %136 : vector<256x64xf32>
    %c3_i32_97 = arith.constant 3 : i32
    %138 = arith.addi %1, %c3_i32_97 : i32
    %c-3_i32 = arith.constant -3 : i32
    %139 = arith.addi %138, %c-3_i32 : i32
    %c0_98 = arith.constant 0 : index
    %140 = arith.index_cast %139 : i32 to index
    %c0_99 = arith.constant 0 : index
    %c0_100 = arith.constant 0 : index
    %141 = vector.load %arg2[%c0_98, %140, %c0_99, %c0_100] : memref<1x22x22x128xbf16, #tpu.memory_space<vmem>>, vector<1x16x16x128xbf16>
    %142 = vector.shape_cast %141 : vector<1x16x16x128xbf16> to vector<16x16x128xbf16>
    %c3_i32_101 = arith.constant 3 : i32
    %143 = arith.addi %1, %c3_i32_101 : i32
    %c-3_i32_102 = arith.constant -3 : i32
    %144 = arith.addi %143, %c-3_i32_102 : i32
    %c0_103 = arith.constant 0 : index
    %145 = arith.index_cast %144 : i32 to index
    %c3_104 = arith.constant 3 : index
    %c0_105 = arith.constant 0 : index
    %146 = vector.load %arg2[%c0_103, %145, %c3_104, %c0_105] : memref<1x22x22x128xbf16, #tpu.memory_space<vmem>>, vector<1x16x16x128xbf16>
    %147 = vector.shape_cast %146 : vector<1x16x16x128xbf16> to vector<16x16x128xbf16>
    %148 = tpu.concatenate %142, %147 in 2 : vector<16x16x128xbf16>, vector<16x16x128xbf16> -> vector<16x16x256xbf16>
    %149 = vector.shape_cast %148 : vector<16x16x256xbf16> to vector<256x256xbf16>
    %c2304 = arith.constant 2304 : index
    %c0_106 = arith.constant 0 : index
    %150 = vector.load %arg3[%c2304, %c0_106] : memref<3456x64xbf16, #tpu.memory_space<vmem>>, vector<256x64xbf16>
    %cst_107 = arith.constant dense<0.000000e+00> : vector<256x64xf32>
    %151 = tpu.matmul %149, %150, %cst_107 {dimension_numbers = #tpu.dot_dimension_numbers<[1], [0], [0], [1], [0, 0, 1, 1], [], []>} : vector<256x256xbf16>, vector<256x64xbf16>, vector<256x64xf32> -> vector<256x64xf32>
    %152 = arith.addf %137, %151 : vector<256x64xf32>
    %c3_i32_108 = arith.constant 3 : i32
    %153 = arith.addi %1, %c3_i32_108 : i32
    %c-3_i32_109 = arith.constant -3 : i32
    %154 = arith.addi %153, %c-3_i32_109 : i32
    %c0_110 = arith.constant 0 : index
    %155 = arith.index_cast %154 : i32 to index
    %c6 = arith.constant 6 : index
    %c0_111 = arith.constant 0 : index
    %156 = vector.load %arg2[%c0_110, %155, %c6, %c0_111] : memref<1x22x22x128xbf16, #tpu.memory_space<vmem>>, vector<1x16x16x128xbf16>
    %157 = vector.shape_cast %156 : vector<1x16x16x128xbf16> to vector<16x16x128xbf16>
    %c3_i32_112 = arith.constant 3 : i32
    %158 = arith.addi %1, %c3_i32_112 : i32
    %c0_i32_113 = arith.constant 0 : i32
    %159 = arith.addi %158, %c0_i32_113 : i32
    %c0_114 = arith.constant 0 : index
    %160 = arith.index_cast %159 : i32 to index
    %c0_115 = arith.constant 0 : index
    %c0_116 = arith.constant 0 : index
    %161 = vector.load %arg2[%c0_114, %160, %c0_115, %c0_116] : memref<1x22x22x128xbf16, #tpu.memory_space<vmem>>, vector<1x16x16x128xbf16>
    %162 = vector.shape_cast %161 : vector<1x16x16x128xbf16> to vector<16x16x128xbf16>
    %163 = tpu.concatenate %157, %162 in 2 : vector<16x16x128xbf16>, vector<16x16x128xbf16> -> vector<16x16x256xbf16>
    %164 = vector.shape_cast %163 : vector<16x16x256xbf16> to vector<256x256xbf16>
    %c2560 = arith.constant 2560 : index
    %c0_117 = arith.constant 0 : index
    %165 = vector.load %arg3[%c2560, %c0_117] : memref<3456x64xbf16, #tpu.memory_space<vmem>>, vector<256x64xbf16>
    %cst_118 = arith.constant dense<0.000000e+00> : vector<256x64xf32>
    %166 = tpu.matmul %164, %165, %cst_118 {dimension_numbers = #tpu.dot_dimension_numbers<[1], [0], [0], [1], [0, 0, 1, 1], [], []>} : vector<256x256xbf16>, vector<256x64xbf16>, vector<256x64xf32> -> vector<256x64xf32>
    %167 = arith.addf %152, %166 : vector<256x64xf32>
    %c3_i32_119 = arith.constant 3 : i32
    %168 = arith.addi %1, %c3_i32_119 : i32
    %c0_i32_120 = arith.constant 0 : i32
    %169 = arith.addi %168, %c0_i32_120 : i32
    %c0_121 = arith.constant 0 : index
    %170 = arith.index_cast %169 : i32 to index
    %c3_122 = arith.constant 3 : index
    %c0_123 = arith.constant 0 : index
    %171 = vector.load %arg2[%c0_121, %170, %c3_122, %c0_123] : memref<1x22x22x128xbf16, #tpu.memory_space<vmem>>, vector<1x16x16x128xbf16>
    %172 = vector.shape_cast %171 : vector<1x16x16x128xbf16> to vector<16x16x128xbf16>
    %c3_i32_124 = arith.constant 3 : i32
    %173 = arith.addi %1, %c3_i32_124 : i32
    %c0_i32_125 = arith.constant 0 : i32
    %174 = arith.addi %173, %c0_i32_125 : i32
    %c0_126 = arith.constant 0 : index
    %175 = arith.index_cast %174 : i32 to index
    %c6_127 = arith.constant 6 : index
    %c0_128 = arith.constant 0 : index
    %176 = vector.load %arg2[%c0_126, %175, %c6_127, %c0_128] : memref<1x22x22x128xbf16, #tpu.memory_space<vmem>>, vector<1x16x16x128xbf16>
    %177 = vector.shape_cast %176 : vector<1x16x16x128xbf16> to vector<16x16x128xbf16>
    %178 = tpu.concatenate %172, %177 in 2 : vector<16x16x128xbf16>, vector<16x16x128xbf16> -> vector<16x16x256xbf16>
    %179 = vector.shape_cast %178 : vector<16x16x256xbf16> to vector<256x256xbf16>
    %c2816 = arith.constant 2816 : index
    %c0_129 = arith.constant 0 : index
    %180 = vector.load %arg3[%c2816, %c0_129] : memref<3456x64xbf16, #tpu.memory_space<vmem>>, vector<256x64xbf16>
    %cst_130 = arith.constant dense<0.000000e+00> : vector<256x64xf32>
    %181 = tpu.matmul %179, %180, %cst_130 {dimension_numbers = #tpu.dot_dimension_numbers<[1], [0], [0], [1], [0, 0, 1, 1], [], []>} : vector<256x256xbf16>, vector<256x64xbf16>, vector<256x64xf32> -> vector<256x64xf32>
    %182 = arith.addf %167, %181 : vector<256x64xf32>
    %c3_i32_131 = arith.constant 3 : i32
    %183 = arith.addi %1, %c3_i32_131 : i32
    %c3_i32_132 = arith.constant 3 : i32
    %184 = arith.addi %183, %c3_i32_132 : i32
    %c0_133 = arith.constant 0 : index
    %185 = arith.index_cast %184 : i32 to index
    %c0_134 = arith.constant 0 : index
    %c0_135 = arith.constant 0 : index
    %186 = vector.load %arg2[%c0_133, %185, %c0_134, %c0_135] : memref<1x22x22x128xbf16, #tpu.memory_space<vmem>>, vector<1x16x16x128xbf16>
    %187 = vector.shape_cast %186 : vector<1x16x16x128xbf16> to vector<16x16x128xbf16>
    %c3_i32_136 = arith.constant 3 : i32
    %188 = arith.addi %1, %c3_i32_136 : i32
    %c3_i32_137 = arith.constant 3 : i32
    %189 = arith.addi %188, %c3_i32_137 : i32
    %c0_138 = arith.constant 0 : index
    %190 = arith.index_cast %189 : i32 to index
    %c3_139 = arith.constant 3 : index
    %c0_140 = arith.constant 0 : index
    %191 = vector.load %arg2[%c0_138, %190, %c3_139, %c0_140] : memref<1x22x22x128xbf16, #tpu.memory_space<vmem>>, vector<1x16x16x128xbf16>
    %192 = vector.shape_cast %191 : vector<1x16x16x128xbf16> to vector<16x16x128xbf16>
    %193 = tpu.concatenate %187, %192 in 2 : vector<16x16x128xbf16>, vector<16x16x128xbf16> -> vector<16x16x256xbf16>
    %194 = vector.shape_cast %193 : vector<16x16x256xbf16> to vector<256x256xbf16>
    %c3072 = arith.constant 3072 : index
    %c0_141 = arith.constant 0 : index
    %195 = vector.load %arg3[%c3072, %c0_141] : memref<3456x64xbf16, #tpu.memory_space<vmem>>, vector<256x64xbf16>
    %cst_142 = arith.constant dense<0.000000e+00> : vector<256x64xf32>
    %196 = tpu.matmul %194, %195, %cst_142 {dimension_numbers = #tpu.dot_dimension_numbers<[1], [0], [0], [1], [0, 0, 1, 1], [], []>} : vector<256x256xbf16>, vector<256x64xbf16>, vector<256x64xf32> -> vector<256x64xf32>
    %197 = arith.addf %182, %196 : vector<256x64xf32>
    %c3_i32_143 = arith.constant 3 : i32
    %198 = arith.addi %1, %c3_i32_143 : i32
    %c3_i32_144 = arith.constant 3 : i32
    %199 = arith.addi %198, %c3_i32_144 : i32
    %c0_145 = arith.constant 0 : index
    %200 = arith.index_cast %199 : i32 to index
    %c6_146 = arith.constant 6 : index
    %c0_147 = arith.constant 0 : index
    %201 = vector.load %arg2[%c0_145, %200, %c6_146, %c0_147] : memref<1x22x22x128xbf16, #tpu.memory_space<vmem>>, vector<1x16x16x128xbf16>
    %202 = vector.shape_cast %201 : vector<1x16x16x128xbf16> to vector<16x16x128xbf16>
    %203 = vector.shape_cast %202 : vector<16x16x128xbf16> to vector<256x128xbf16>
    %c3328 = arith.constant 3328 : index
    %c0_148 = arith.constant 0 : index
    %204 = vector.load %arg3[%c3328, %c0_148] : memref<3456x64xbf16, #tpu.memory_space<vmem>>, vector<128x64xbf16>
    %cst_149 = arith.constant dense<0.000000e+00> : vector<256x64xf32>
    %205 = tpu.matmul %203, %204, %cst_149 {dimension_numbers = #tpu.dot_dimension_numbers<[1], [0], [0], [1], [0, 0, 1, 1], [], []>} : vector<256x128xbf16>, vector<128x64xbf16>, vector<256x64xf32> -> vector<256x64xf32>
    %206 = arith.addf %197, %205 : vector<256x64xf32>
    %cst_150 = arith.constant 0.000000e+00 : f32
    %207 = vector.broadcast %cst_150 : f32 to vector<256x64xf32>
    %208 = arith.maximumf %206, %207 : vector<256x64xf32>
    %209 = arith.truncf %208 : vector<256x64xf32> to vector<256x64xbf16>
    %c0_151 = arith.constant 0 : index
    %c0_152 = arith.constant 0 : index
    %210 = vector.load %arg4[%c0_151, %c0_152] : memref<64x256xbf16, #tpu.memory_space<vmem>>, vector<64x256xbf16>
    %cst_153 = arith.constant dense<0.000000e+00> : vector<256x256xf32>
    %211 = tpu.matmul %209, %210, %cst_153 {dimension_numbers = #tpu.dot_dimension_numbers<[1], [0], [0], [1], [0, 0, 1, 1], [], []>} : vector<256x64xbf16>, vector<64x256xbf16>, vector<256x256xf32> -> vector<256x256xf32>
    %c0_154 = arith.constant 0 : index
    %c0_155 = arith.constant 0 : index
    %212 = vector.load %arg5[%c0_154, %c0_155] : memref<1x256xf32, #tpu.memory_space<vmem>>, vector<1x256xf32>
    %213 = vector.broadcast %212 : vector<1x256xf32> to vector<256x256xf32>
    %214 = arith.addf %211, %213 : vector<256x256xf32>
    %215 = vector.shape_cast %214 : vector<256x256xf32> to vector<16x16x256xf32>
    %c0_156 = arith.constant 0 : index
    %c0_157 = arith.constant 0 : index
    %c0_158 = arith.constant 0 : index
    %c0_159 = arith.constant 0 : index
    %216 = vector.load %arg6[%c0_156, %c0_157, %c0_158, %c0_159] : memref<1x16x16x256xf32, #tpu.memory_space<vmem>>, vector<1x16x16x256xf32>
    %217 = vector.shape_cast %216 : vector<1x16x16x256xf32> to vector<16x16x256xf32>
    %218 = vector.shape_cast %215 : vector<16x16x256xf32> to vector<1x16x16x256xf32>
    tpu.vector_store %arg6[%c0_156, %c0_157, %c0_158, %c0_159], %218 {strides = array<i32>} : memref<1x16x16x256xf32, #tpu.memory_space<vmem>>, vector<1x16x16x256xf32>,
    return
  }
  func.func @transform_0(%arg0: i32, %arg1: i32) -> (i32, i32, i32, i32) {
    %c0_i32 = arith.constant 0 : i32
    %c0_i32_0 = arith.constant 0 : i32
    %c0_i32_1 = arith.constant 0 : i32
    %c0_i32_2 = arith.constant 0 : i32
    return %arg0, %c0_i32, %c0_i32_0, %c0_i32_1 : i32, i32, i32, i32
  }
  func.func @transform_1(%arg0: i32, %arg1: i32) -> (i32, i32) {
    %c0_i32 = arith.constant 0 : i32
    %c0_i32_0 = arith.constant 0 : i32
    %c0_i32_1 = arith.constant 0 : i32
    return %c0_i32, %c0_i32_0 : i32, i32
  }
  func.func @transform_2(%arg0: i32, %arg1: i32) -> (i32, i32) {
    %c0_i32 = arith.constant 0 : i32
    %c0_i32_0 = arith.constant 0 : i32
    %c0_i32_1 = arith.constant 0 : i32
    return %c0_i32, %c0_i32_0 : i32, i32
  }
  func.func @transform_3(%arg0: i32, %arg1: i32) -> (i32, i32) {
    %c0_i32 = arith.constant 0 : i32
    %c0_i32_0 = arith.constant 0 : i32
    %c0_i32_1 = arith.constant 0 : i32
    return %c0_i32, %c0_i32_0 : i32, i32
  }
  func.func @transform_4(%arg0: i32, %arg1: i32) -> (i32, i32, i32, i32) {
    %c0_i32 = arith.constant 0 : i32
    %c0_i32_0 = arith.constant 0 : i32
    %c0_i32_1 = arith.constant 0 : i32
    return %arg0, %arg1, %c0_i32, %c0_i32_0 : i32, i32, i32, i32
  }
}

</mosaic_0001>

<llo_original>
// kernel: dee_forward.1
$region0: #{dee_forward.1}
  #allocation0 [shape = 'u32[]', space=smem, size = 0x4, offset = 0x4, fixed_abs, tag = 'smem constant byte address 0x4 - core index']
  #allocation1 [shape = 'u32[144,128]{1,0:T(1,128)}', space=vmem, size = 0x12000, scoped, tag = 'internal scratch']
  %s0 = inlined_call_operand.vmem [shape: bf16[2,22,22,128], index: 0, kind: input, shape index: {}]
  %s1 = inlined_call_operand.vmem [shape: bf16[3456,64], index: 1, kind: input, shape index: {}]
  %s2 = inlined_call_operand.vmem [shape: bf16[64,256], index: 2, kind: input, shape index: {}]
  %s3 = inlined_call_operand.vmem [shape: f32[1,256], index: 3, kind: input, shape index: {}]
  %s4 = inlined_call_operand.vmem [shape: f32[2,16,16,256], index: 4, kind: output, shape index: {}]
  %s5 = sld [smem:[#allocation0]]
  $region49: #{dee_forward.1} parent=0
    _
  %s7 = ssub.s32 1, %s5
  %s8 = scalar_select 0, %s7, %s5
  loop: start=0, step=1, limit=4
  $region2: #{dee_forward.1} parent=0 // loop_pre_header
    _
  $region3: #{dee_forward.1} parent=0 // loop_header
    %s10 = sphi 0, %s14
    %p11 = scmp.ge.s32.totalorder %s10, 4
    %s17 = sphi 0, %s29
    %s18 = sphi 0, %s25
    %s19 = sphi 0, %s17
    %s20 = sphi 0, %s18
    %s21 = sphi 0, %s19
    %s22 = sphi 0, %s20
    %s32 = sphi 0, %s34
    %s35 = sphi 0, %s32
    %s36 = sphi 0, %s35
    %s52 = sphi 0, %s36
    %s56 = sphi 0, %s56
    %s58 = sphi 0, %s56
    %s59 = sphi 0, %s58
    %s73 = sphi 0, %s59
    %s77 = sphi 0, %s77
    %s79 = sphi 0, %s77
    %s80 = sphi 0, %s79
    %s94 = sphi 0, %s80
    %s98 = sphi 0, %s98
    %s100 = sphi 0, %s98
    %s101 = sphi 0, %s100
    %s115 = sphi 0, %s101
    %s123 = sphi 0, %s125
    %s126 = sphi 0, %s123
    %s127 = sphi 0, %s126
    %s143 = sphi 0, %s127
  $region4: #{dee_forward.1} parent=0 // loop_header_branch
    %13 = sbr.rel (%p11) target = $region8
  $region5: #{dee_forward.1} parent=0 // loop_body
    %s15 = ssub.s32 %s10, 1
    %s16 = ssub.s32 %s10, 2
    %s23 = sadd.s32 1, %s18
    %p24 = scmp.ge.s32.totalorder %s23, 1
    %s25 = scalar_select %p24, 0, %s23
    %s26 = sadd.s32 1, %s17
    %s27 = scalar_select %p24, %s26, %s17
    %p28 = scmp.ge.s32.totalorder %s27, 2
    %s29 = scalar_select %p28, 0, %s27
    %s30 = ssub.s32 %s17, %s29
    %p31 = scmp.eq.s32.totalorder %s30, 0
    %s33 = sadd.s32 %s32, 1
    %s34 = scalar_select %p31, %s32, %s33
    %p37 = pneg %p31
    %p38 = scmp.eq.s32.totalorder %s10, 1
    %p39 = por %p37, %p38
    %p40 = scmp.ne.s32.totalorder %s32, %s35
    %p41 = scmp.eq.s32.totalorder %s10, 0
    %p42 = por %p40, %p41
    %p43 = scmp.ne.s32.totalorder %s32, %s35
    %p44 = scmp.eq.s32.totalorder %s15, 1
    %p45 = por %p43, %p44
    %p46 = scmp.ne.s32.totalorder %s35, %s36
    %p47 = scmp.eq.s32.totalorder %s15, 0
    %p48 = por %p46, %p47
    %p49 = scmp.ne.s32.totalorder %s35, %s36
    %p50 = scmp.eq.s32.totalorder %s16, 1
    %p51 = por %p49, %p50
    %p53 = scmp.ne.s32.totalorder %s36, %s52
    %p54 = scmp.eq.s32.totalorder %s16, 0
    %p55 = por %p53, %p54
    %s57 = sadd.s32 %s56, 1
    %p60 = scmp.eq.s32.totalorder %s10, 1
    %p61 = scmp.ne.s32.totalorder %s56, %s58
    %p62 = scmp.eq.s32.totalorder %s10, 0
    %p63 = por %p61, %p62
    %p64 = scmp.ne.s32.totalorder %s56, %s58
    %p65 = scmp.eq.s32.totalorder %s15, 1
    %p66 = por %p64, %p65
    %p67 = scmp.ne.s32.totalorder %s58, %s59
    %p68 = scmp.eq.s32.totalorder %s15, 0
    %p69 = por %p67, %p68
    %p70 = scmp.ne.s32.totalorder %s58, %s59
    %p71 = scmp.eq.s32.totalorder %s16, 1
    %p72 = por %p70, %p71
    %p74 = scmp.ne.s32.totalorder %s59, %s73
    %p75 = scmp.eq.s32.totalorder %s16, 0
    %p76 = por %p74, %p75
    %s78 = sadd.s32 %s77, 1
    %p81 = scmp.eq.s32.totalorder %s10, 1
    %p82 = scmp.ne.s32.totalorder %s77, %s79
    %p83 = scmp.eq.s32.totalorder %s10, 0
    %p84 = por %p82, %p83
    %p85 = scmp.ne.s32.totalorder %s77, %s79
    %p86 = scmp.eq.s32.totalorder %s15, 1
    %p87 = por %p85, %p86
    %p88 = scmp.ne.s32.totalorder %s79, %s80
    %p89 = scmp.eq.s32.totalorder %s15, 0
    %p90 = por %p88, %p89
    %p91 = scmp.ne.s32.totalorder %s79, %s80
    %p92 = scmp.eq.s32.totalorder %s16, 1
    %p93 = por %p91, %p92
    %p95 = scmp.ne.s32.totalorder %s80, %s94
    %p96 = scmp.eq.s32.totalorder %s16, 0
    %p97 = por %p95, %p96
    %s99 = sadd.s32 %s98, 1
    %p102 = scmp.eq.s32.totalorder %s10, 1
    %p103 = scmp.ne.s32.totalorder %s98, %s100
    %p104 = scmp.eq.s32.totalorder %s10, 0
    %p105 = por %p103, %p104
    %p106 = scmp.ne.s32.totalorder %s98, %s100
    %p107 = scmp.eq.s32.totalorder %s15, 1
    %p108 = por %p106, %p107
    %p109 = scmp.ne.s32.totalorder %s100, %s101
    %p110 = scmp.eq.s32.totalorder %s15, 0
    %p111 = por %p109, %p110
    %p112 = scmp.ne.s32.totalorder %s100, %s101
    %p113 = scmp.eq.s32.totalorder %s16, 1
    %p114 = por %p112, %p113
    %p116 = scmp.ne.s32.totalorder %s101, %s115
    %p117 = scmp.eq.s32.totalorder %s16, 0
    %p118 = por %p116, %p117
    %s119 = ssub.s32 %s17, %s29
    %s120 = ssub.s32 %s18, %s25
    %s121 = sor.u32 %s119, %s120
    %p122 = scmp.eq.s32.totalorder %s121, 0
    %s124 = sadd.s32 %s123, 1
    %s125 = scalar_select %p122, %s123, %s124
    %p128 = pneg %p122
    %p129 = scmp.eq.s32.totalorder %s10, 1
    %p130 = por %p128, %p129
    %p131 = scmp.ne.s32.totalorder %s123, %s126
    %p132 = scmp.eq.s32.totalorder %s10, 0
    %p133 = por %p131, %p132
    %p134 = scmp.ne.s32.totalorder %s123, %s126
    %p135 = scmp.eq.s32.totalorder %s15, 1
    %p136 = por %p134, %p135
    %p137 = scmp.ne.s32.totalorder %s126, %s127
    %p138 = scmp.eq.s32.totalorder %s15, 0
    %p139 = por %p137, %p138
    %p140 = scmp.ne.s32.totalorder %s126, %s127
    %p141 = scmp.eq.s32.totalorder %s16, 1
    %p142 = por %p140, %p141
    %p144 = scmp.ne.s32.totalorder %s127, %s143
    %p145 = scmp.eq.s32.totalorder %s16, 0
    %p146 = por %p144, %p145
    %p147 = scmp.le.s32.totalorder 1, %s10
    %p148 = scmp.lt.s32.totalorder %s10, 3
    %p149 = pnand %p147, %p148
    %p150 = pneg %p149
    // Predicated region
    $region9: #{dee_forward.1} parent=5 // pred_check
      _
    $region10: #{dee_forward.1} parent=5 // pred_check_branch
      %152 = sbr.rel (%p149) target = $region12
    $region11: #{dee_forward.1} parent=5 // pred_region
      %s153 = ssub.s32 %s10, 1
      // Predicated region
      $region13: #{dee_forward.1} parent=11 // pred_check
        %p154 = pneg %p69
      $region14: #{dee_forward.1} parent=11 // pred_check_branch
        %156 = sbr.rel (%p154) target = $region16
      $region15: #{dee_forward.1} parent=11 // pred_region
        _
      $region16: #{dee_forward.1} parent=11 // pred_fallthru
        _
      // Predicated region
      $region17: #{dee_forward.1} parent=11 // pred_check
        %p157 = pneg %p90
      $region18: #{dee_forward.1} parent=11 // pred_check_branch
        %159 = sbr.rel (%p157) target = $region20
      $region19: #{dee_forward.1} parent=11 // pred_region
        _
      $region20: #{dee_forward.1} parent=11 // pred_fallthru
        _
      // Predicated region
      $region21: #{dee_forward.1} parent=11 // pred_check
        %p160 = pneg %p111
      $region22: #{dee_forward.1} parent=11 // pred_check_branch
        %162 = sbr.rel (%p160) target = $region24
      $region23: #{dee_forward.1} parent=11 // pred_region
        _
      $region24: #{dee_forward.1} parent=11 // pred_fallthru
        _
    $region12: #{dee_forward.1} parent=5 // pred_fallthru
      _
    %p163 = scmp.lt.s32.totalorder %s10, 2
    // Predicated region
    $region25: #{dee_forward.1} parent=5 // pred_check
      %p164 = pneg %p163
    $region26: #{dee_forward.1} parent=5 // pred_check_branch
      %166 = sbr.rel (%p164) target = $region28
    $region27: #{dee_forward.1} parent=5 // pred_region
      // Predicated region
      $region29: #{dee_forward.1} parent=27 // pred_check
        %p167 = pneg %p42
      $region30: #{dee_forward.1} parent=27 // pred_check_branch
        %169 = sbr.rel (%p167) target = $region32
      $region31: #{dee_forward.1} parent=27 // pred_region
        %p170 = scmp.lt.s32.totalorder %s17, 1
        %s171 = scalar_select %p170, %s17, 1
        %s172 = smul.addr %s171, 66
        %s173 = smul.addr %s172, 4
        %s174 = scalar_lea.vmem %s0, %s173
      $region32: #{dee_forward.1} parent=27 // pred_fallthru
        _
    $region28: #{dee_forward.1} parent=5 // pred_fallthru
      _
    %p175 = scmp.le.s32.totalorder 1, %s10
    %p176 = scmp.lt.s32.totalorder %s10, 3
    %p177 = pnand %p175, %p176
    %p178 = pneg %p177
    // Predicated region
    $region33: #{dee_forward.1} parent=5 // pred_check
      _
    $region34: #{dee_forward.1} parent=5 // pred_check_branch
      %180 = sbr.rel (%p177) target = $region36
    $region35: #{dee_forward.1} parent=5 // pred_region
      %s181 = ssub.s32 %s10, 1
      %p182 = scmp.lt.s32.totalorder %s19, 1
      %s183 = scalar_select %p182, %s19, 1
      %s184 = smul.addr %s183, 66
      %s185 = smul.addr %s184, 4
      %s186 = scalar_lea.vmem %s0, %s185
      %p187 = pneg %p48
      %p188 = pneg %p45
      %p189 = pneg %p69
      %p190 = pneg %p66
      %p191 = pneg %p90
      %p192 = pneg %p87
      %p193 = pneg %p111
      %p194 = pneg %p108
      %p195 = pneg %p139
      %p196 = pneg %p136
      %s197 = smul.u32 16, %s20
      %p198 = scmp.lt.s32.totalorder %s19, 1
      %s199 = scalar_select %p198, %s19, 1
      %p200 = scmp.lt.s32.totalorder %s197, 15
      %s201 = scalar_select %p200, %s197, 15
      %s202 = smul.addr %s201, 4
      %s203 = smul.addr %s199, 64
      %s204 = sadd.s32 %s202, %s203
      %s205 = smul.addr %s204, 8
      %s206 = scalar_lea.vmem %s4, %s205
      %p207 = scmp.lt.s32.totalorder %s19, 1
      %s208 = scalar_select %p207, %s19, 1
      %s209 = smul.addr %s208, 66
      %s210 = smul.addr %s209, 4
      %s211 = scalar_lea.vmem %s0, %s210
      %s212 = smul.u32 16, %s20
      %p213 = scmp.lt.s32.totalorder %s19, 1
      %s214 = scalar_select %p213, %s19, 1
      %p215 = scmp.lt.s32.totalorder %s212, 15
      %s216 = scalar_select %p215, %s212, 15
      %s217 = smul.addr %s216, 4
      %s218 = smul.addr %s214, 64
      %s219 = sadd.s32 %s217, %s218
      %s220 = smul.addr %s219, 8
      %s221 = scalar_lea.vmem %s4, %s220
      %s222 = smul.u32 16, %s20
      %s224 = smul.u32 %s20, 16
      %s225 = sadd.s32 %s224, 2
      %s226 = smul.u32 %s225, 3
      %s227 = smul.addr %s226, 4
      %s228 = scalar_lea.vmem %s211, %s227
      %v229 = vld [vmem:[%s228] sm:$0xe]
      %v230 = vld [vmem:[%s228 + $0x4] sm:$0xf]
      %v231 = vld [vmem:[%s228 + $0x8] sm:$0x1]
      %v232 = vld [vmem:[%s228 + $0xc] sm:$0xe]
      %v233 = vld [vmem:[%s228 + $0x10] sm:$0xf]
      %v234 = vld [vmem:[%s228 + $0x14] sm:$0x1]
      %v235 = vld [vmem:[%s228 + $0x18] sm:$0xe]
      %v236 = vld [vmem:[%s228 + $0x1c] sm:$0xf]
      %v237 = vld [vmem:[%s228 + $0x20] sm:$0x1]
      %v238 = vld [vmem:[%s228 + $0x24] sm:$0xe]
      %v239 = vld [vmem:[%s228 + $0x28] sm:$0xf]
      %v240 = vld [vmem:[%s228 + $0x2c] sm:$0x1]
      %v241 = vld [vmem:[%s228 + $0x30] sm:$0xe]
      %v242 = vld [vmem:[%s228 + $0x34] sm:$0xf]
      %v243 = vld [vmem:[%s228 + $0x38] sm:$0x1]
      %v244 = vld [vmem:[%s228 + $0x3c] sm:$0xe]
      %v245 = vld [vmem:[%s228 + $0x40] sm:$0xf]
      %v246 = vld [vmem:[%s228 + $0x44] sm:$0x1]
      %v247 = vld [vmem:[%s228 + $0x48] sm:$0xe]
      %v248 = vld [vmem:[%s228 + $0x4c] sm:$0xf]
      %v249 = vld [vmem:[%s228 + $0x50] sm:$0x1]
      %v250 = vld [vmem:[%s228 + $0x54] sm:$0xe]
      %v251 = vld [vmem:[%s228 + $0x58] sm:$0xf]
      %v252 = vld [vmem:[%s228 + $0x5c] sm:$0x1]
      %v253 = vld [vmem:[%s228 + $0x60] sm:$0xe]
      %v254 = vld [vmem:[%s228 + $0x64] sm:$0xf]
      %v255 = vld [vmem:[%s228 + $0x68] sm:$0x1]
      %v256 = vld [vmem:[%s228 + $0x6c] sm:$0xe]
      %v257 = vld [vmem:[%s228 + $0x70] sm:$0xf]
      %v258 = vld [vmem:[%s228 + $0x74] sm:$0x1]
      %v259 = vld [vmem:[%s228 + $0x78] sm:$0xe]
      %v260 = vld [vmem:[%s228 + $0x7c] sm:$0xf]
      %v261 = vld [vmem:[%s228 + $0x80] sm:$0x1]
      %v262 = vld [vmem:[%s228 + $0x84] sm:$0xe]
      %v263 = vld [vmem:[%s228 + $0x88] sm:$0xf]
      %v264 = vld [vmem:[%s228 + $0x8c] sm:$0x1]
      %v265 = vld [vmem:[%s228 + $0x90] sm:$0xe]
      %v266 = vld [vmem:[%s228 + $0x94] sm:$0xf]
      %v267 = vld [vmem:[%s228 + $0x98] sm:$0x1]
      %v268 = vld [vmem:[%s228 + $0x9c] sm:$0xe]
      %v269 = vld [vmem:[%s228 + $0xa0] sm:$0xf]
      %v270 = vld [vmem:[%s228 + $0xa4] sm:$0x1]
      %v271 = vld [vmem:[%s228 + $0xa8] sm:$0xe]
      %v272 = vld [vmem:[%s228 + $0xac] sm:$0xf]
      %v273 = vld [vmem:[%s228 + $0xb0] sm:$0x1]
      %v274 = vld [vmem:[%s228 + $0xb4] sm:$0xe]
      %v275 = vld [vmem:[%s228 + $0xb8] sm:$0xf]
      %v276 = vld [vmem:[%s228 + $0xbc] sm:$0x1]
      %v277 = vld [vmem:[%s228 + $0x8] sm:$0x3]
      %v278 = vld [vmem:[%s228 + $0x14] sm:$0x3]
      %v279 = vld [vmem:[%s228 + $0x20] sm:$0x3]
      %v280 = vld [vmem:[%s228 + $0x2c] sm:$0x3]
      %v281 = vld [vmem:[%s228 + $0x38] sm:$0x3]
      %v282 = vld [vmem:[%s228 + $0x44] sm:$0x3]
      %v283 = vld [vmem:[%s228 + $0x50] sm:$0x3]
      %v284 = vld [vmem:[%s228 + $0x5c] sm:$0x3]
      %v285 = vld [vmem:[%s228 + $0x68] sm:$0x3]
      %v286 = vld [vmem:[%s228 + $0x74] sm:$0x3]
      %v287 = vld [vmem:[%s228 + $0x80] sm:$0x3]
      %v288 = vld [vmem:[%s228 + $0x8c] sm:$0x3]
      %v289 = vld [vmem:[%s228 + $0x98] sm:$0x3]
      %v290 = vld [vmem:[%s228 + $0xa4] sm:$0x3]
      %v291 = vld [vmem:[%s228 + $0xb0] sm:$0x3]
      %v292 = vld [vmem:[%s228 + $0xbc] sm:$0x3]
      %v341 = vunpack.c.l.b16 %v229
      %v342 = vunpack.c.l.b16 %v230
      %v343 = vunpack.c.l.b16 %v231
      %v344 = vunpack.c.l.b16 %v232
      %v345 = vunpack.c.l.b16 %v233
      %v346 = vunpack.c.l.b16 %v234
      %v347 = vunpack.c.l.b16 %v235
      %v348 = vunpack.c.l.b16 %v236
      %v349 = vunpack.c.l.b16 %v237
      %v350 = vunpack.c.l.b16 %v238
      %v351 = vunpack.c.l.b16 %v239
      %v352 = vunpack.c.l.b16 %v240
      %v353 = vunpack.c.l.b16 %v241
      %v354 = vunpack.c.l.b16 %v242
      %v355 = vunpack.c.l.b16 %v243
      %v356 = vunpack.c.l.b16 %v244
      %v357 = vunpack.c.l.b16 %v245
      %v358 = vunpack.c.l.b16 %v246
      %v359 = vunpack.c.l.b16 %v247
      %v360 = vunpack.c.l.b16 %v248
      %v361 = vunpack.c.l.b16 %v249
      %v362 = vunpack.c.l.b16 %v250
      %v363 = vunpack.c.l.b16 %v251
      %v364 = vunpack.c.l.b16 %v252
      %v365 = vunpack.c.l.b16 %v253
      %v366 = vunpack.c.l.b16 %v254
      %v367 = vunpack.c.l.b16 %v255
      %v368 = vunpack.c.l.b16 %v256
      %v369 = vunpack.c.l.b16 %v257
      %v370 = vunpack.c.l.b16 %v258
      %v371 = vunpack.c.l.b16 %v259
      %v372 = vunpack.c.l.b16 %v260
      %v373 = vunpack.c.l.b16 %v261
      %v374 = vunpack.c.l.b16 %v262
      %v375 = vunpack.c.l.b16 %v263
      %v376 = vunpack.c.l.b16 %v264
      %v377 = vunpack.c.l.b16 %v265
      %v378 = vunpack.c.l.b16 %v266
      %v379 = vunpack.c.l.b16 %v267
      %v380 = vunpack.c.l.b16 %v268
      %v381 = vunpack.c.l.b16 %v269
      %v382 = vunpack.c.l.b16 %v270
      %v383 = vunpack.c.l.b16 %v271
      %v384 = vunpack.c.l.b16 %v272
      %v385 = vunpack.c.l.b16 %v273
      %v386 = vunpack.c.l.b16 %v274
      %v387 = vunpack.c.l.b16 %v275
      %v388 = vunpack.c.l.b16 %v276
      %v389 = vpack.c.b16 %v342, %v341
      %v390 = vpack.c.b16 %v343, %v343
      %v391 = vpack.c.b16 %v345, %v344
      %v392 = vpack.c.b16 %v346, %v346
      %v393 = vpack.c.b16 %v348, %v347
      %v394 = vpack.c.b16 %v349, %v349
      %v395 = vpack.c.b16 %v351, %v350
      %v396 = vpack.c.b16 %v352, %v352
      %v397 = vpack.c.b16 %v354, %v353
      %v398 = vpack.c.b16 %v355, %v355
      %v399 = vpack.c.b16 %v357, %v356
      %v400 = vpack.c.b16 %v358, %v358
      %v401 = vpack.c.b16 %v360, %v359
      %v402 = vpack.c.b16 %v361, %v361
      %v403 = vpack.c.b16 %v363, %v362
      %v404 = vpack.c.b16 %v364, %v364
      %v405 = vpack.c.b16 %v366, %v365
      %v406 = vpack.c.b16 %v367, %v367
      %v407 = vpack.c.b16 %v369, %v368
      %v408 = vpack.c.b16 %v370, %v370
      %v409 = vpack.c.b16 %v372, %v371
      %v410 = vpack.c.b16 %v373, %v373
      %v411 = vpack.c.b16 %v375, %v374
      %v412 = vpack.c.b16 %v376, %v376
      %v413 = vpack.c.b16 %v378, %v377
      %v414 = vpack.c.b16 %v379, %v379
      %v415 = vpack.c.b16 %v381, %v380
      %v416 = vpack.c.b16 %v382, %v382
      %v417 = vpack.c.b16 %v384, %v383
      %v418 = vpack.c.b16 %v385, %v385
      %v419 = vpack.c.b16 %v387, %v386
      %v420 = vpack.c.b16 %v388, %v388
      %v437 = vunpack.c.l.b16 %v277
      %v438 = vunpack.c.l.b16 %v278
      %v439 = vunpack.c.l.b16 %v279
      %v440 = vunpack.c.l.b16 %v280
      %v441 = vunpack.c.l.b16 %v281
      %v442 = vunpack.c.l.b16 %v282
      %v443 = vunpack.c.l.b16 %v283
      %v444 = vunpack.c.l.b16 %v284
      %v445 = vunpack.c.l.b16 %v285
      %v446 = vunpack.c.l.b16 %v286
      %v447 = vunpack.c.l.b16 %v287
      %v448 = vunpack.c.l.b16 %v288
      %v449 = vunpack.c.l.b16 %v289
      %v450 = vunpack.c.l.b16 %v290
      %v451 = vunpack.c.l.b16 %v291
      %v452 = vunpack.c.l.b16 %v292
      %v453 = vpack.c.b16 %v437, %v437
      %v454 = vpack.c.b16 %v438, %v438
      %v455 = vpack.c.b16 %v439, %v439
      %v456 = vpack.c.b16 %v440, %v440
      %v457 = vpack.c.b16 %v441, %v441
      %v458 = vpack.c.b16 %v442, %v442
      %v459 = vpack.c.b16 %v443, %v443
      %v460 = vpack.c.b16 %v444, %v444
      %v461 = vpack.c.b16 %v445, %v445
      %v462 = vpack.c.b16 %v446, %v446
      %v463 = vpack.c.b16 %v447, %v447
      %v464 = vpack.c.b16 %v448, %v448
      %v465 = vpack.c.b16 %v449, %v449
      %v466 = vpack.c.b16 %v450, %v450
      %v467 = vpack.c.b16 %v451, %v451
      %v468 = vpack.c.b16 %v452, %v452
      %vm469 = vsmask.f32 7424
      %v471 = vshrl.u32 %v389, 16
      %v473 = vshll.u32 %v389, 16
      %v475 = vrot.slane %v473, 1
      %v476 = vor.u32 %v471, %v475
      %v478 = vshll.u32 %v453, 16
      %v480 = vrot.slane %v478, 1
      %v481 = vsel %vm469, %v476, %v480
      %v482 = vshrl.u32 %v453, 16
      %v484 = vor.u32 %v482, %v480
      %v486 = vshrl.u32 %v391, 16
      %v488 = vshll.u32 %v391, 16
      %v490 = vrot.slane %v488, 1
      %v491 = vor.u32 %v486, %v490
      %v493 = vshll.u32 %v454, 16
      %v495 = vrot.slane %v493, 1
      %v496 = vsel %vm469, %v491, %v495
      %v497 = vshrl.u32 %v454, 16
      %v499 = vor.u32 %v497, %v495
      %v501 = vshrl.u32 %v393, 16
      %v503 = vshll.u32 %v393, 16
      %v505 = vrot.slane %v503, 1
      %v506 = vor.u32 %v501, %v505
      %v508 = vshll.u32 %v455, 16
      %v510 = vrot.slane %v508, 1
      %v511 = vsel %vm469, %v506, %v510
      %v512 = vshrl.u32 %v455, 16
      %v514 = vor.u32 %v512, %v510
      %v516 = vshrl.u32 %v395, 16
      %v518 = vshll.u32 %v395, 16
      %v520 = vrot.slane %v518, 1
      %v521 = vor.u32 %v516, %v520
      %v523 = vshll.u32 %v456, 16
      %v525 = vrot.slane %v523, 1
      %v526 = vsel %vm469, %v521, %v525
      %v527 = vshrl.u32 %v456, 16
      %v529 = vor.u32 %v527, %v525
      %v531 = vshrl.u32 %v397, 16
      %v533 = vshll.u32 %v397, 16
      %v535 = vrot.slane %v533, 1
      %v536 = vor.u32 %v531, %v535
      %v538 = vshll.u32 %v457, 16
      %v540 = vrot.slane %v538, 1
      %v541 = vsel %vm469, %v536, %v540
      %v542 = vshrl.u32 %v457, 16
      %v544 = vor.u32 %v542, %v540
      %v546 = vshrl.u32 %v399, 16
      %v548 = vshll.u32 %v399, 16
      %v550 = vrot.slane %v548, 1
      %v551 = vor.u32 %v546, %v550
      %v553 = vshll.u32 %v458, 16
      %v555 = vrot.slane %v553, 1
      %v556 = vsel %vm469, %v551, %v555
      %v557 = vshrl.u32 %v458, 16
      %v559 = vor.u32 %v557, %v555
      %v561 = vshrl.u32 %v401, 16
      %v563 = vshll.u32 %v401, 16
      %v565 = vrot.slane %v563, 1
      %v566 = vor.u32 %v561, %v565
      %v568 = vshll.u32 %v459, 16
      %v570 = vrot.slane %v568, 1
      %v571 = vsel %vm469, %v566, %v570
      %v572 = vshrl.u32 %v459, 16
      %v574 = vor.u32 %v572, %v570
      %v576 = vshrl.u32 %v403, 16
      %v578 = vshll.u32 %v403, 16
      %v580 = vrot.slane %v578, 1
      %v581 = vor.u32 %v576, %v580
      %v583 = vshll.u32 %v460, 16
      %v585 = vrot.slane %v583, 1
      %v586 = vsel %vm469, %v581, %v585
      %v587 = vshrl.u32 %v460, 16
      %v589 = vor.u32 %v587, %v585
      %v591 = vshrl.u32 %v405, 16
      %v593 = vshll.u32 %v405, 16
      %v595 = vrot.slane %v593, 1
      %v596 = vor.u32 %v591, %v595
      %v598 = vshll.u32 %v461, 16
      %v600 = vrot.slane %v598, 1
      %v601 = vsel %vm469, %v596, %v600
      %v602 = vshrl.u32 %v461, 16
      %v604 = vor.u32 %v602, %v600
      %v606 = vshrl.u32 %v407, 16
      %v608 = vshll.u32 %v407, 16
      %v610 = vrot.slane %v608, 1
      %v611 = vor.u32 %v606, %v610
      %v613 = vshll.u32 %v462, 16
      %v615 = vrot.slane %v613, 1
      %v616 = vsel %vm469, %v611, %v615
      %v617 = vshrl.u32 %v462, 16
      %v619 = vor.u32 %v617, %v615
      %v621 = vshrl.u32 %v409, 16
      %v623 = vshll.u32 %v409, 16
      %v625 = vrot.slane %v623, 1
      %v626 = vor.u32 %v621, %v625
      %v628 = vshll.u32 %v463, 16
      %v630 = vrot.slane %v628, 1
      %v631 = vsel %vm469, %v626, %v630
      %v632 = vshrl.u32 %v463, 16
      %v634 = vor.u32 %v632, %v630
      %v636 = vshrl.u32 %v411, 16
      %v638 = vshll.u32 %v411, 16
      %v640 = vrot.slane %v638, 1
      %v641 = vor.u32 %v636, %v640
      %v643 = vshll.u32 %v464, 16
      %v645 = vrot.slane %v643, 1
      %v646 = vsel %vm469, %v641, %v645
      %v647 = vshrl.u32 %v464, 16
      %v649 = vor.u32 %v647, %v645
      %v651 = vshrl.u32 %v413, 16
      %v653 = vshll.u32 %v413, 16
      %v655 = vrot.slane %v653, 1
      %v656 = vor.u32 %v651, %v655
      %v658 = vshll.u32 %v465, 16
      %v660 = vrot.slane %v658, 1
      %v661 = vsel %vm469, %v656, %v660
      %v662 = vshrl.u32 %v465, 16
      %v664 = vor.u32 %v662, %v660
      %v666 = vshrl.u32 %v415, 16
      %v668 = vshll.u32 %v415, 16
      %v670 = vrot.slane %v668, 1
      %v671 = vor.u32 %v666, %v670
      %v673 = vshll.u32 %v466, 16
      %v675 = vrot.slane %v673, 1
      %v676 = vsel %vm469, %v671, %v675
      %v677 = vshrl.u32 %v466, 16
      %v679 = vor.u32 %v677, %v675
      %v681 = vshrl.u32 %v417, 16
      %v683 = vshll.u32 %v417, 16
      %v685 = vrot.slane %v683, 1
      %v686 = vor.u32 %v681, %v685
      %v688 = vshll.u32 %v467, 16
      %v690 = vrot.slane %v688, 1
      %v691 = vsel %vm469, %v686, %v690
      %v692 = vshrl.u32 %v467, 16
      %v694 = vor.u32 %v692, %v690
      %v696 = vshrl.u32 %v419, 16
      %v698 = vshll.u32 %v419, 16
      %v700 = vrot.slane %v698, 1
      %v701 = vor.u32 %v696, %v700
      %v703 = vshll.u32 %v468, 16
      %v705 = vrot.slane %v703, 1
      %v706 = vsel %vm469, %v701, %v705
      %v707 = vshrl.u32 %v468, 16
      %v709 = vor.u32 %v707, %v705
      %vm710 = vcmask 1046528
      %v711 = vrot.slane %v389, 1
      %v712 = vrot.slane %v390, 1
      %v713 = vsel %vm710, %v711, %v712
      %v714 = vrot.slane %v481, 1
      %v715 = vrot.slane %v484, 1
      %v716 = vsel %vm710, %v714, %v715
      %v717 = vrot.slane %v391, 1
      %v718 = vrot.slane %v392, 1
      %v719 = vsel %vm710, %v717, %v718
      %v720 = vrot.slane %v496, 1
      %v721 = vrot.slane %v499, 1
      %v722 = vsel %vm710, %v720, %v721
      %v723 = vrot.slane %v393, 1
      %v724 = vrot.slane %v394, 1
      %v725 = vsel %vm710, %v723, %v724
      %v726 = vrot.slane %v511, 1
      %v727 = vrot.slane %v514, 1
      %v728 = vsel %vm710, %v726, %v727
      %v729 = vrot.slane %v395, 1
      %v730 = vrot.slane %v396, 1
      %v731 = vsel %vm710, %v729, %v730
      %v732 = vrot.slane %v526, 1
      %v733 = vrot.slane %v529, 1
      %v734 = vsel %vm710, %v732, %v733
      %v735 = vrot.slane %v397, 1
      %v736 = vrot.slane %v398, 1
      %v737 = vsel %vm710, %v735, %v736
      %v738 = vrot.slane %v541, 1
      %v739 = vrot.slane %v544, 1
      %v740 = vsel %vm710, %v738, %v739
      %v741 = vrot.slane %v399, 1
      %v742 = vrot.slane %v400, 1
      %v743 = vsel %vm710, %v741, %v742
      %v744 = vrot.slane %v556, 1
      %v745 = vrot.slane %v559, 1
      %v746 = vsel %vm710, %v744, %v745
      %v747 = vrot.slane %v401, 1
      %v748 = vrot.slane %v402, 1
      %v749 = vsel %vm710, %v747, %v748
      %v750 = vrot.slane %v571, 1
      %v751 = vrot.slane %v574, 1
      %v752 = vsel %vm710, %v750, %v751
      %v753 = vrot.slane %v403, 1
      %v754 = vrot.slane %v404, 1
      %v755 = vsel %vm710, %v753, %v754
      %v756 = vrot.slane %v586, 1
      %v757 = vrot.slane %v589, 1
      %v758 = vsel %vm710, %v756, %v757
      %v759 = vrot.slane %v405, 1
      %v760 = vrot.slane %v406, 1
      %v761 = vsel %vm710, %v759, %v760
      %v762 = vrot.slane %v601, 1
      %v763 = vrot.slane %v604, 1
      %v764 = vsel %vm710, %v762, %v763
      %v765 = vrot.slane %v407, 1
      %v766 = vrot.slane %v408, 1
      %v767 = vsel %vm710, %v765, %v766
      %v768 = vrot.slane %v616, 1
      %v769 = vrot.slane %v619, 1
      %v770 = vsel %vm710, %v768, %v769
      %v771 = vrot.slane %v409, 1
      %v772 = vrot.slane %v410, 1
      %v773 = vsel %vm710, %v771, %v772
      %v774 = vrot.slane %v631, 1
      %v775 = vrot.slane %v634, 1
      %v776 = vsel %vm710, %v774, %v775
      %v777 = vrot.slane %v411, 1
      %v778 = vrot.slane %v412, 1
      %v779 = vsel %vm710, %v777, %v778
      %v780 = vrot.slane %v646, 1
      %v781 = vrot.slane %v649, 1
      %v782 = vsel %vm710, %v780, %v781
      %v783 = vrot.slane %v413, 1
      %v784 = vrot.slane %v414, 1
      %v785 = vsel %vm710, %v783, %v784
      %v786 = vrot.slane %v661, 1
      %v787 = vrot.slane %v664, 1
      %v788 = vsel %vm710, %v786, %v787
      %v789 = vrot.slane %v415, 1
      %v790 = vrot.slane %v416, 1
      %v791 = vsel %vm710, %v789, %v790
      %v792 = vrot.slane %v676, 1
      %v793 = vrot.slane %v679, 1
      %v794 = vsel %vm710, %v792, %v793
      %v795 = vrot.slane %v417, 1
      %v796 = vrot.slane %v418, 1
      %v797 = vsel %vm710, %v795, %v796
      %v798 = vrot.slane %v691, 1
      %v799 = vrot.slane %v694, 1
      %v800 = vsel %vm710, %v798, %v799
      %v801 = vrot.slane %v419, 1
      %v802 = vrot.slane %v420, 1
      %v803 = vsel %vm710, %v801, %v802
      %v804 = vrot.slane %v706, 1
      %v805 = vrot.slane %v709, 1
      %v806 = vsel %vm710, %v804, %v805
      %v839 = vld [vmem:[%s1] sm:$0xf]
      %v840 = vld [vmem:[%s1 + $0x4] sm:$0xf]
      %v841 = vld [vmem:[%s1 + $0x8] sm:$0xf]
      %v842 = vld [vmem:[%s1 + $0xc] sm:$0xf]
      %v843 = vld [vmem:[%s1 + $0x10] sm:$0xf]
      %v844 = vld [vmem:[%s1 + $0x14] sm:$0xf]
      %v845 = vld [vmem:[%s1 + $0x18] sm:$0xf]
      %v846 = vld [vmem:[%s1 + $0x1c] sm:$0xf]
      %v847 = vld [vmem:[%s1 + $0x20] sm:$0xf]
      %v848 = vld [vmem:[%s1 + $0x24] sm:$0xf]
      %v849 = vld [vmem:[%s1 + $0x28] sm:$0xf]
      %v850 = vld [vmem:[%s1 + $0x2c] sm:$0xf]
      %v851 = vld [vmem:[%s1 + $0x30] sm:$0xf]
      %v852 = vld [vmem:[%s1 + $0x34] sm:$0xf]
      %v853 = vld [vmem:[%s1 + $0x38] sm:$0xf]
      %v854 = vld [vmem:[%s1 + $0x3c] sm:$0xf]
      %v855 = vld [vmem:[%s1 + $0x40] sm:$0xf]
      %v856 = vld [vmem:[%s1 + $0x44] sm:$0xf]
      %v857 = vld [vmem:[%s1 + $0x48] sm:$0xf]
      %v858 = vld [vmem:[%s1 + $0x4c] sm:$0xf]
      %v859 = vld [vmem:[%s1 + $0x50] sm:$0xf]
      %v860 = vld [vmem:[%s1 + $0x54] sm:$0xf]
      %v861 = vld [vmem:[%s1 + $0x58] sm:$0xf]
      %v862 = vld [vmem:[%s1 + $0x5c] sm:$0xf]
      %v863 = vld [vmem:[%s1 + $0x60] sm:$0xf]
      %v864 = vld [vmem:[%s1 + $0x64] sm:$0xf]
      %v865 = vld [vmem:[%s1 + $0x68] sm:$0xf]
      %v866 = vld [vmem:[%s1 + $0x6c] sm:$0xf]
      %v867 = vld [vmem:[%s1 + $0x70] sm:$0xf]
      %v868 = vld [vmem:[%s1 + $0x74] sm:$0xf]
      %v869 = vld [vmem:[%s1 + $0x78] sm:$0xf]
      %v870 = vld [vmem:[%s1 + $0x7c] sm:$0xf]
      %v871 = vld [vmem:[%s228] sm:$0xc]
      %v872 = vld [vmem:[%s228 + $0xc] sm:$0xc]
      %v873 = vld [vmem:[%s228 + $0x18] sm:$0xc]
      %v874 = vld [vmem:[%s228 + $0x24] sm:$0xc]
      %v875 = vld [vmem:[%s228 + $0x30] sm:$0xc]
      %v876 = vld [vmem:[%s228 + $0x3c] sm:$0xc]
      %v877 = vld [vmem:[%s228 + $0x48] sm:$0xc]
      %v878 = vld [vmem:[%s228 + $0x54] sm:$0xc]
      %v879 = vld [vmem:[%s228 + $0x60] sm:$0xc]
      %v880 = vld [vmem:[%s228 + $0x6c] sm:$0xc]
      %v881 = vld [vmem:[%s228 + $0x78] sm:$0xc]
      %v882 = vld [vmem:[%s228 + $0x84] sm:$0xc]
      %v883 = vld [vmem:[%s228 + $0x90] sm:$0xc]
      %v884 = vld [vmem:[%s228 + $0x9c] sm:$0xc]
      %v885 = vld [vmem:[%s228 + $0xa8] sm:$0xc]
      %v886 = vld [vmem:[%s228 + $0xb4] sm:$0xc]
      %s887 = sadd.s32 %s224, 3
      %s888 = smul.u32 %s887, 3
      %s889 = smul.addr %s888, 4
      %s890 = scalar_lea.vmem %s211, %s889
      %v891 = vld [vmem:[%s890] sm:$0xe]
      %v892 = vld [vmem:[%s890 + $0x4] sm:$0xf]
      %v893 = vld [vmem:[%s890 + $0x8] sm:$0x1]
      %v894 = vld [vmem:[%s890 + $0xc] sm:$0xe]
      %v895 = vld [vmem:[%s890 + $0x10] sm:$0xf]
      %v896 = vld [vmem:[%s890 + $0x14] sm:$0x1]
      %v897 = vld [vmem:[%s890 + $0x18] sm:$0xe]
      %v898 = vld [vmem:[%s890 + $0x1c] sm:$0xf]
      %v899 = vld [vmem:[%s890 + $0x20] sm:$0x1]
      %v900 = vld [vmem:[%s890 + $0x24] sm:$0xe]
      %v901 = vld [vmem:[%s890 + $0x28] sm:$0xf]
      %v902 = vld [vmem:[%s890 + $0x2c] sm:$0x1]
      %v903 = vld [vmem:[%s890 + $0x30] sm:$0xe]
      %v904 = vld [vmem:[%s890 + $0x34] sm:$0xf]
      %v905 = vld [vmem:[%s890 + $0x38] sm:$0x1]
      %v906 = vld [vmem:[%s890 + $0x3c] sm:$0xe]
      %v907 = vld [vmem:[%s890 + $0x40] sm:$0xf]
      %v908 = vld [vmem:[%s890 + $0x44] sm:$0x1]
      %v909 = vld [vmem:[%s890 + $0x48] sm:$0xe]
      %v910 = vld [vmem:[%s890 + $0x4c] sm:$0xf]
      %v911 = vld [vmem:[%s890 + $0x50] sm:$0x1]
      %v912 = vld [vmem:[%s890 + $0x54] sm:$0xe]
      %v913 = vld [vmem:[%s890 + $0x58] sm:$0xf]
      %v914 = vld [vmem:[%s890 + $0x5c] sm:$0x1]
      %v915 = vld [vmem:[%s890 + $0x60] sm:$0xe]
      %v916 = vld [vmem:[%s890 + $0x64] sm:$0xf]
      %v917 = vld [vmem:[%s890 + $0x68] sm:$0x1]
      %v918 = vld [vmem:[%s890 + $0x6c] sm:$0xe]
      %v919 = vld [vmem:[%s890 + $0x70] sm:$0xf]
      %v920 = vld [vmem:[%s890 + $0x74] sm:$0x1]
      %v921 = vld [vmem:[%s890 + $0x78] sm:$0xe]
      %v922 = vld [vmem:[%s890 + $0x7c] sm:$0xf]
      %v923 = vld [vmem:[%s890 + $0x80] sm:$0x1]
      %v924 = vld [vmem:[%s890 + $0x84] sm:$0xe]
      %v925 = vld [vmem:[%s890 + $0x88] sm:$0xf]
      %v926 = vld [vmem:[%s890 + $0x8c] sm:$0x1]
      %v927 = vld [vmem:[%s890 + $0x90] sm:$0xe]
      %v928 = vld [vmem:[%s890 + $0x94] sm:$0xf]
      %v929 = vld [vmem:[%s890 + $0x98] sm:$0x1]
      %v930 = vld [vmem:[%s890 + $0x9c] sm:$0xe]
      %v931 = vld [vmem:[%s890 + $0xa0] sm:$0xf]
      %v932 = vld [vmem:[%s890 + $0xa4] sm:$0x1]
      %v933 = vld [vmem:[%s890 + $0xa8] sm:$0xe]
      %v934 = vld [vmem:[%s890 + $0xac] sm:$0xf]
      %v935 = vld [vmem:[%s890 + $0xb0] sm:$0x1]
      %v936 = vld [vmem:[%s890 + $0xb4] sm:$0xe]
      %v937 = vld [vmem:[%s890 + $0xb8] sm:$0xf]
      %v938 = vld [vmem:[%s890 + $0xbc] sm:$0x1]
      %v955 = vunpack.c.l.b16 %v871
      %v956 = vunpack.c.l.b16 %v872
      %v957 = vunpack.c.l.b16 %v873
      %v958 = vunpack.c.l.b16 %v874
      %v959 = vunpack.c.l.b16 %v875
      %v960 = vunpack.c.l.b16 %v876
      %v961 = vunpack.c.l.b16 %v877
      %v962 = vunpack.c.l.b16 %v878
      %v963 = vunpack.c.l.b16 %v879
      %v964 = vunpack.c.l.b16 %v880
      %v965 = vunpack.c.l.b16 %v881
      %v966 = vunpack.c.l.b16 %v882
      %v967 = vunpack.c.l.b16 %v883
      %v968 = vunpack.c.l.b16 %v884
      %v969 = vunpack.c.l.b16 %v885
      %v970 = vunpack.c.l.b16 %v886
      %v971 = vpack.c.b16 %v342, %v955
      %v972 = vpack.c.b16 %v345, %v956
      %v973 = vpack.c.b16 %v348, %v957
      %v974 = vpack.c.b16 %v351, %v958
      %v975 = vpack.c.b16 %v354, %v959
      %v976 = vpack.c.b16 %v357, %v960
      %v977 = vpack.c.b16 %v360, %v961
      %v978 = vpack.c.b16 %v363, %v962
      %v979 = vpack.c.b16 %v366, %v963
      %v980 = vpack.c.b16 %v369, %v964
      %v981 = vpack.c.b16 %v372, %v965
      %v982 = vpack.c.b16 %v375, %v966
      %v983 = vpack.c.b16 %v378, %v967
      %v984 = vpack.c.b16 %v381, %v968
      %v985 = vpack.c.b16 %v384, %v969
      %v986 = vpack.c.b16 %v387, %v970
      %v1035 = vunpack.c.l.b16 %v891
      %v1036 = vunpack.c.l.b16 %v892
      %v1037 = vunpack.c.l.b16 %v893
      %v1038 = vunpack.c.l.b16 %v894
      %v1039 = vunpack.c.l.b16 %v895
      %v1040 = vunpack.c.l.b16 %v896
      %v1041 = vunpack.c.l.b16 %v897
      %v1042 = vunpack.c.l.b16 %v898
      %v1043 = vunpack.c.l.b16 %v899
      %v1044 = vunpack.c.l.b16 %v900
      %v1045 = vunpack.c.l.b16 %v901
      %v1046 = vunpack.c.l.b16 %v902
      %v1047 = vunpack.c.l.b16 %v903
      %v1048 = vunpack.c.l.b16 %v904
      %v1049 = vunpack.c.l.b16 %v905
      %v1050 = vunpack.c.l.b16 %v906
      %v1051 = vunpack.c.l.b16 %v907
      %v1052 = vunpack.c.l.b16 %v908
      %v1053 = vunpack.c.l.b16 %v909
      %v1054 = vunpack.c.l.b16 %v910
      %v1055 = vunpack.c.l.b16 %v911
      %v1056 = vunpack.c.l.b16 %v912
      %v1057 = vunpack.c.l.b16 %v913
      %v1058 = vunpack.c.l.b16 %v914
      %v1059 = vunpack.c.l.b16 %v915
      %v1060 = vunpack.c.l.b16 %v916
      %v1061 = vunpack.c.l.b16 %v917
      %v1062 = vunpack.c.l.b16 %v918
      %v1063 = vunpack.c.l.b16 %v919
      %v1064 = vunpack.c.l.b16 %v920
      %v1065 = vunpack.c.l.b16 %v921
      %v1066 = vunpack.c.l.b16 %v922
      %v1067 = vunpack.c.l.b16 %v923
      %v1068 = vunpack.c.l.b16 %v924
      %v1069 = vunpack.c.l.b16 %v925
      %v1070 = vunpack.c.l.b16 %v926
      %v1071 = vunpack.c.l.b16 %v927
      %v1072 = vunpack.c.l.b16 %v928
      %v1073 = vunpack.c.l.b16 %v929
      %v1074 = vunpack.c.l.b16 %v930
      %v1075 = vunpack.c.l.b16 %v931
      %v1076 = vunpack.c.l.b16 %v932
      %v1077 = vunpack.c.l.b16 %v933
      %v1078 = vunpack.c.l.b16 %v934
      %v1079 = vunpack.c.l.b16 %v935
      %v1080 = vunpack.c.l.b16 %v936
      %v1081 = vunpack.c.l.b16 %v937
      %v1082 = vunpack.c.l.b16 %v938
      %v1083 = vpack.c.b16 %v1036, %v1035
      %v1084 = vpack.c.b16 %v1037, %v1037
      %v1085 = vpack.c.b16 %v1039, %v1038
      %v1086 = vpack.c.b16 %v1040, %v1040
      %v1087 = vpack.c.b16 %v1042, %v1041
      %v1088 = vpack.c.b16 %v1043, %v1043
      %v1089 = vpack.c.b16 %v1045, %v1044
      %v1090 = vpack.c.b16 %v1046, %v1046
      %v1091 = vpack.c.b16 %v1048, %v1047
      %v1092 = vpack.c.b16 %v1049, %v1049
      %v1093 = vpack.c.b16 %v1051, %v1050
      %v1094 = vpack.c.b16 %v1052, %v1052
      %v1095 = vpack.c.b16 %v1054, %v1053
      %v1096 = vpack.c.b16 %v1055, %v1055
      %v1097 = vpack.c.b16 %v1057, %v1056
      %v1098 = vpack.c.b16 %v1058, %v1058
      %v1099 = vpack.c.b16 %v1060, %v1059
      %v1100 = vpack.c.b16 %v1061, %v1061
      %v1101 = vpack.c.b16 %v1063, %v1062
      %v1102 = vpack.c.b16 %v1064, %v1064
      %v1103 = vpack.c.b16 %v1066, %v1065
      %v1104 = vpack.c.b16 %v1067, %v1067
      %v1105 = vpack.c.b16 %v1069, %v1068
      %v1106 = vpack.c.b16 %v1070, %v1070
      %v1107 = vpack.c.b16 %v1072, %v1071
      %v1108 = vpack.c.b16 %v1073, %v1073
      %v1109 = vpack.c.b16 %v1075, %v1074
      %v1110 = vpack.c.b16 %v1076, %v1076
      %v1111 = vpack.c.b16 %v1078, %v1077
      %v1112 = vpack.c.b16 %v1079, %v1079
      %v1113 = vpack.c.b16 %v1081, %v1080
      %v1114 = vpack.c.b16 %v1082, %v1082
      %vm1115 = vcmask 1040384
      %v1116 = vrot.slane %v1083, 7
      %v1117 = vrot.slane %v1084, 7
      %v1118 = vsel %vm1115, %v1116, %v1117
      %v1119 = vrot.slane %v1085, 7
      %v1120 = vrot.slane %v1086, 7
      %v1121 = vsel %vm1115, %v1119, %v1120
      %v1122 = vrot.slane %v1087, 7
      %v1123 = vrot.slane %v1088, 7
      %v1124 = vsel %vm1115, %v1122, %v1123
      %v1125 = vrot.slane %v1089, 7
      %v1126 = vrot.slane %v1090, 7
      %v1127 = vsel %vm1115, %v1125, %v1126
      %v1128 = vrot.slane %v1091, 7
      %v1129 = vrot.slane %v1092, 7
      %v1130 = vsel %vm1115, %v1128, %v1129
      %v1131 = vrot.slane %v1093, 7
      %v1132 = vrot.slane %v1094, 7
      %v1133 = vsel %vm1115, %v1131, %v1132
      %v1134 = vrot.slane %v1095, 7
      %v1135 = vrot.slane %v1096, 7
      %v1136 = vsel %vm1115, %v1134, %v1135
      %v1137 = vrot.slane %v1097, 7
      %v1138 = vrot.slane %v1098, 7
      %v1139 = vsel %vm1115, %v1137, %v1138
      %v1140 = vrot.slane %v1099, 7
      %v1141 = vrot.slane %v1100, 7
      %v1142 = vsel %vm1115, %v1140, %v1141
      %v1143 = vrot.slane %v1101, 7
      %v1144 = vrot.slane %v1102, 7
      %v1145 = vsel %vm1115, %v1143, %v1144
      %v1146 = vrot.slane %v1103, 7
      %v1147 = vrot.slane %v1104, 7
      %v1148 = vsel %vm1115, %v1146, %v1147
      %v1149 = vrot.slane %v1105, 7
      %v1150 = vrot.slane %v1106, 7
      %v1151 = vsel %vm1115, %v1149, %v1150
      %v1152 = vrot.slane %v1107, 7
      %v1153 = vrot.slane %v1108, 7
      %v1154 = vsel %vm1115, %v1152, %v1153
      %v1155 = vrot.slane %v1109, 7
      %v1156 = vrot.slane %v1110, 7
      %v1157 = vsel %vm1115, %v1155, %v1156
      %v1158 = vrot.slane %v1111, 7
      %v1159 = vrot.slane %v1112, 7
      %v1160 = vsel %vm1115, %v1158, %v1159
      %v1161 = vrot.slane %v1113, 7
      %v1162 = vrot.slane %v1114, 7
      %v1163 = vsel %vm1115, %v1161, %v1162
      %vm1164 = vcmask 1045504
      %v1165 = vrot.slane %v971, 2
      %v1166 = vrot.slane %v453, 2
      %v1167 = vsel %vm1164, %v1165, %v1166
      %v1168 = vrot.slane %v1116, 2
      %v1169 = vrot.slane %v1118, 2
      %v1170 = vsel %vm1164, %v1168, %v1169
      %v1171 = vrot.slane %v972, 2
      %v1172 = vrot.slane %v454, 2
      %v1173 = vsel %vm1164, %v1171, %v1172
      %v1174 = vrot.slane %v1119, 2
      %v1175 = vrot.slane %v1121, 2
      %v1176 = vsel %vm1164, %v1174, %v1175
      %v1177 = vrot.slane %v973, 2
      %v1178 = vrot.slane %v455, 2
      %v1179 = vsel %vm1164, %v1177, %v1178
      %v1180 = vrot.slane %v1122, 2
      %v1181 = vrot.slane %v1124, 2
      %v1182 = vsel %vm1164, %v1180, %v1181
      %v1183 = vrot.slane %v974, 2
      %v1184 = vrot.slane %v456, 2
      %v1185 = vsel %vm1164, %v1183, %v1184
      %v1186 = vrot.slane %v1125, 2
      %v1187 = vrot.slane %v1127, 2
      %v1188 = vsel %vm1164, %v1186, %v1187
      %v1189 = vrot.slane %v975, 2
      %v1190 = vrot.slane %v457, 2
      %v1191 = vsel %vm1164, %v1189, %v1190
      %v1192 = vrot.slane %v1128, 2
      %v1193 = vrot.slane %v1130, 2
      %v1194 = vsel %vm1164, %v1192, %v1193
      %v1195 = vrot.slane %v976, 2
      %v1196 = vrot.slane %v458, 2
      %v1197 = vsel %vm1164, %v1195, %v1196
      %v1198 = vrot.slane %v1131, 2
      %v1199 = vrot.slane %v1133, 2
      %v1200 = vsel %vm1164, %v1198, %v1199
      %v1201 = vrot.slane %v977, 2
      %v1202 = vrot.slane %v459, 2
      %v1203 = vsel %vm1164, %v1201, %v1202
      %v1204 = vrot.slane %v1134, 2
      %v1205 = vrot.slane %v1136, 2
      %v1206 = vsel %vm1164, %v1204, %v1205
      %v1207 = vrot.slane %v978, 2
      %v1208 = vrot.slane %v460, 2
      %v1209 = vsel %vm1164, %v1207, %v1208
      %v1210 = vrot.slane %v1137, 2
      %v1211 = vrot.slane %v1139, 2
      %v1212 = vsel %vm1164, %v1210, %v1211
      %v1213 = vrot.slane %v979, 2
      %v1214 = vrot.slane %v461, 2
      %v1215 = vsel %vm1164, %v1213, %v1214
      %v1216 = vrot.slane %v1140, 2
      %v1217 = vrot.slane %v1142, 2
      %v1218 = vsel %vm1164, %v1216, %v1217
      %v1219 = vrot.slane %v980, 2
      %v1220 = vrot.slane %v462, 2
      %v1221 = vsel %vm1164, %v1219, %v1220
      %v1222 = vrot.slane %v1143, 2
      %v1223 = vrot.slane %v1145, 2
      %v1224 = vsel %vm1164, %v1222, %v1223
      %v1225 = vrot.slane %v981, 2
      %v1226 = vrot.slane %v463, 2
      %v1227 = vsel %vm1164, %v1225, %v1226
      %v1228 = vrot.slane %v1146, 2
      %v1229 = vrot.slane %v1148, 2
      %v1230 = vsel %vm1164, %v1228, %v1229
      %v1231 = vrot.slane %v982, 2
      %v1232 = vrot.slane %v464, 2
      %v1233 = vsel %vm1164, %v1231, %v1232
      %v1234 = vrot.slane %v1149, 2
      %v1235 = vrot.slane %v1151, 2
      %v1236 = vsel %vm1164, %v1234, %v1235
      %v1237 = vrot.slane %v983, 2
      %v1238 = vrot.slane %v465, 2
      %v1239 = vsel %vm1164, %v1237, %v1238
      %v1240 = vrot.slane %v1152, 2
      %v1241 = vrot.slane %v1154, 2
      %v1242 = vsel %vm1164, %v1240, %v1241
      %v1243 = vrot.slane %v984, 2
      %v1244 = vrot.slane %v466, 2
      %v1245 = vsel %vm1164, %v1243, %v1244
      %v1246 = vrot.slane %v1155, 2
      %v1247 = vrot.slane %v1157, 2
      %v1248 = vsel %vm1164, %v1246, %v1247
      %v1249 = vrot.slane %v985, 2
      %v1250 = vrot.slane %v467, 2
      %v1251 = vsel %vm1164, %v1249, %v1250
      %v1252 = vrot.slane %v1158, 2
      %v1253 = vrot.slane %v1160, 2
      %v1254 = vsel %vm1164, %v1252, %v1253
      %v1255 = vrot.slane %v986, 2
      %v1256 = vrot.slane %v468, 2
      %v1257 = vsel %vm1164, %v1255, %v1256
      %v1258 = vrot.slane %v1161, 2
      %v1259 = vrot.slane %v1163, 2
      %v1260 = vsel %vm1164, %v1258, %v1259
      %v1293 = vld [vmem:[%s1 + $0x80] sm:$0xf]
      %v1294 = vld [vmem:[%s1 + $0x84] sm:$0xf]
      %v1295 = vld [vmem:[%s1 + $0x88] sm:$0xf]
      %v1296 = vld [vmem:[%s1 + $0x8c] sm:$0xf]
      %v1297 = vld [vmem:[%s1 + $0x90] sm:$0xf]
      %v1298 = vld [vmem:[%s1 + $0x94] sm:$0xf]
      %v1299 = vld [vmem:[%s1 + $0x98] sm:$0xf]
      %v1300 = vld [vmem:[%s1 + $0x9c] sm:$0xf]
      %v1301 = vld [vmem:[%s1 + $0xa0] sm:$0xf]
      %v1302 = vld [vmem:[%s1 + $0xa4] sm:$0xf]
      %v1303 = vld [vmem:[%s1 + $0xa8] sm:$0xf]
      %v1304 = vld [vmem:[%s1 + $0xac] sm:$0xf]
      %v1305 = vld [vmem:[%s1 + $0xb0] sm:$0xf]
      %v1306 = vld [vmem:[%s1 + $0xb4] sm:$0xf]
      %v1307 = vld [vmem:[%s1 + $0xb8] sm:$0xf]
      %v1308 = vld [vmem:[%s1 + $0xbc] sm:$0xf]
      %v1309 = vld [vmem:[%s1 + $0xc0] sm:$0xf]
      %v1310 = vld [vmem:[%s1 + $0xc4] sm:$0xf]
      %v1311 = vld [vmem:[%s1 + $0xc8] sm:$0xf]
      %v1312 = vld [vmem:[%s1 + $0xcc] sm:$0xf]
      %v1313 = vld [vmem:[%s1 + $0xd0] sm:$0xf]
      %v1314 = vld [vmem:[%s1 + $0xd4] sm:$0xf]
      %v1315 = vld [vmem:[%s1 + $0xd8] sm:$0xf]
      %v1316 = vld [vmem:[%s1 + $0xdc] sm:$0xf]
      %v1317 = vld [vmem:[%s1 + $0xe0] sm:$0xf]
      %v1318 = vld [vmem:[%s1 + $0xe4] sm:$0xf]
      %v1319 = vld [vmem:[%s1 + $0xe8] sm:$0xf]
      %v1320 = vld [vmem:[%s1 + $0xec] sm:$0xf]
      %v1321 = vld [vmem:[%s1 + $0xf0] sm:$0xf]
      %v1322 = vld [vmem:[%s1 + $0xf4] sm:$0xf]
      %v1323 = vld [vmem:[%s1 + $0xf8] sm:$0xf]
      %v1324 = vld [vmem:[%s1 + $0xfc] sm:$0xf]
      %v1357 = vunpack.c.l.b16 %v1293
      %v1358 = vunpack.c.l.b16 %v1294
      %v1359 = vunpack.c.l.b16 %v1295
      %v1360 = vunpack.c.l.b16 %v1296
      %v1361 = vunpack.c.l.b16 %v1297
      %v1362 = vunpack.c.l.b16 %v1298
      %v1363 = vunpack.c.l.b16 %v1299
      %v1364 = vunpack.c.l.b16 %v1300
      %v1365 = vunpack.c.l.b16 %v1301
      %v1366 = vunpack.c.l.b16 %v1302
      %v1367 = vunpack.c.l.b16 %v1303
      %v1368 = vunpack.c.l.b16 %v1304
      %v1369 = vunpack.c.l.b16 %v1305
      %v1370 = vunpack.c.l.b16 %v1306
      %v1371 = vunpack.c.l.b16 %v1307
      %v1372 = vunpack.c.l.b16 %v1308
      %v1373 = vunpack.c.l.b16 %v1309
      %v1374 = vunpack.c.l.b16 %v1310
      %v1375 = vunpack.c.l.b16 %v1311
      %v1376 = vunpack.c.l.b16 %v1312
      %v1377 = vunpack.c.l.b16 %v1313
      %v1378 = vunpack.c.l.b16 %v1314
      %v1379 = vunpack.c.l.b16 %v1315
      %v1380 = vunpack.c.l.b16 %v1316
      %v1381 = vunpack.c.l.b16 %v1317
      %v1382 = vunpack.c.l.b16 %v1318
      %v1383 = vunpack.c.l.b16 %v1319
      %v1384 = vunpack.c.l.b16 %v1320
      %v1385 = vunpack.c.l.b16 %v1321
      %v1386 = vunpack.c.l.b16 %v1322
      %v1387 = vunpack.c.l.b16 %v1323
      %v1388 = vunpack.c.l.b16 %v1324
      %v1389 = vpack.c.b16 %v1358, %v1357
      %v1390 = vpack.c.b16 %v1360, %v1359
      %v1391 = vpack.c.b16 %v1362, %v1361
      %v1392 = vpack.c.b16 %v1364, %v1363
      %v1393 = vpack.c.b16 %v1366, %v1365
      %v1394 = vpack.c.b16 %v1368, %v1367
      %v1395 = vpack.c.b16 %v1370, %v1369
      %v1396 = vpack.c.b16 %v1372, %v1371
      %v1397 = vpack.c.b16 %v1374, %v1373
      %v1398 = vpack.c.b16 %v1376, %v1375
      %v1399 = vpack.c.b16 %v1378, %v1377
      %v1400 = vpack.c.b16 %v1380, %v1379
      %v1401 = vpack.c.b16 %v1382, %v1381
      %v1402 = vpack.c.b16 %v1384, %v1383
      %v1403 = vpack.c.b16 %v1386, %v1385
      %v1404 = vpack.c.b16 %v1388, %v1387
      %1421 = vmatprep.subr.bf16.mxu0 0
      %1422 = vmatpush1.bf16.msra.mxu0 %v1389
      %1423 = vmatprep.subr.bf16.mxu0 0
      %1424 = vmatpush1.bf16.msra.mxu0 %v1390
      %1425 = vmatprep.subr.bf16.mxu0 0
      %1426 = vmatpush1.bf16.msra.mxu0 %v1391
      %1427 = vmatprep.subr.bf16.mxu0 0
      %1428 = vmatpush1.bf16.msra.mxu0 %v1392
      %1429 = vmatprep.subr.bf16.mxu0 0
      %1430 = vmatpush1.bf16.msra.mxu0 %v1393
      %1431 = vmatprep.subr.bf16.mxu0 0
      %1432 = vmatpush1.bf16.msra.mxu0 %v1394
      %1433 = vmatprep.subr.bf16.mxu0 0
      %1434 = vmatpush1.bf16.msra.mxu0 %v1395
      %1435 = vmatprep.subr.bf16.mxu0 0
      %1436 = vmatpush1.bf16.msra.mxu0 %v1396
      %1437 = vmatprep.subr.bf16.mxu0 0
      %1438 = vmatpush1.bf16.msra.mxu0 %v1397
      %1439 = vmatprep.subr.bf16.mxu0 0
      %1440 = vmatpush1.bf16.msra.mxu0 %v1398
      %1441 = vmatprep.subr.bf16.mxu0 0
      %1442 = vmatpush1.bf16.msra.mxu0 %v1399
      %1443 = vmatprep.subr.bf16.mxu0 0
      %1444 = vmatpush1.bf16.msra.mxu0 %v1400
      %1445 = vmatprep.subr.bf16.mxu0 0
      %1446 = vmatpush1.bf16.msra.mxu0 %v1401
      %1447 = vmatprep.subr.bf16.mxu0 0
      %1448 = vmatpush1.bf16.msra.mxu0 %v1402
      %1449 = vmatprep.subr.bf16.mxu0 0
      %1450 = vmatpush1.bf16.msra.mxu0 %v1403
      %1451 = vmatprep.subr.bf16.mxu0 0
      %1452 = vmatpush1.bf16.msra.mxu0 %v1404
      %1453 = vmatprep.mubr.bf16.mxu0 %v1170
      %1454 = vmatmul.mubr.bf16.gmra.mrb[0].mxu0 %v1167
      %v1455 = vpop.f32.mrb[0].mxu0
      %v1456 = vadd.f32 0.0, %v1455
      %v1457 = vpop.f32.mrb[0].mxu0
      %v1458 = vpop.f32.mrb[0].mxu0
      %v1459 = vadd.f32 0.0, %v1458
      %v1460 = vpop.f32.mrb[0].mxu0
      %1461 = vmatprep.mubr.bf16.mxu0 %v1176
      %1462 = vmatmul.mubr.bf16.gmra.mrb[0].mxu0 %v1173
      %v1463 = vpop.f32.mrb[0].mxu0
      %v1464 = vadd.f32 0.0, %v1463
      %v1465 = vpop.f32.mrb[0].mxu0
      %v1466 = vpop.f32.mrb[0].mxu0
      %v1467 = vadd.f32 0.0, %v1466
      %v1468 = vpop.f32.mrb[0].mxu0
      %1469 = vmatprep.mubr.bf16.mxu0 %v1182
      %1470 = vmatmul.mubr.bf16.gmra.mrb[0].mxu0 %v1179
      %v1471 = vpop.f32.mrb[0].mxu0
      %v1472 = vadd.f32 0.0, %v1471
      %v1473 = vpop.f32.mrb[0].mxu0
      %v1474 = vpop.f32.mrb[0].mxu0
      %v1475 = vadd.f32 0.0, %v1474
      %v1476 = vpop.f32.mrb[0].mxu0
      %1477 = vmatprep.mubr.bf16.mxu0 %v1188
      %1478 = vmatmul.mubr.bf16.gmra.mrb[0].mxu0 %v1185
      %v1479 = vpop.f32.mrb[0].mxu0
      %v1480 = vadd.f32 0.0, %v1479
      %v1481 = vpop.f32.mrb[0].mxu0
      %v1482 = vpop.f32.mrb[0].mxu0
      %v1483 = vadd.f32 0.0, %v1482
      %v1484 = vpop.f32.mrb[0].mxu0
      %1485 = vmatprep.mubr.bf16.mxu0 %v1194
      %1486 = vmatmul.mubr.bf16.gmra.mrb[0].mxu0 %v1191
      %v1487 = vpop.f32.mrb[0].mxu0
      %v1488 = vadd.f32 0.0, %v1487
      %v1489 = vpop.f32.mrb[0].mxu0
      %v1490 = vpop.f32.mrb[0].mxu0
      %v1491 = vadd.f32 0.0, %v1490
      %v1492 = vpop.f32.mrb[0].mxu0
      %1493 = vmatprep.mubr.bf16.mxu0 %v1200
      %1494 = vmatmul.mubr.bf16.gmra.mrb[0].mxu0 %v1197
      %v1495 = vpop.f32.mrb[0].mxu0
      %v1496 = vadd.f32 0.0, %v1495
      %v1497 = vpop.f32.mrb[0].mxu0
      %v1498 = vpop.f32.mrb[0].mxu0
      %v1499 = vadd.f32 0.0, %v1498
      %v1500 = vpop.f32.mrb[0].mxu0
      %1501 = vmatprep.mubr.bf16.mxu0 %v1206
      %1502 = vmatmul.mubr.bf16.gmra.mrb[0].mxu0 %v1203
      %v1503 = vpop.f32.mrb[0].mxu0
      %v1504 = vadd.f32 0.0, %v1503
      %v1505 = vpop.f32.mrb[0].mxu0
      %v1506 = vpop.f32.mrb[0].mxu0
      %v1507 = vadd.f32 0.0, %v1506
      %v1508 = vpop.f32.mrb[0].mxu0
      %1509 = vmatprep.mubr.bf16.mxu0 %v1212
      %1510 = vmatmul.mubr.bf16.gmra.mrb[0].mxu0 %v1209
      %v1511 = vpop.f32.mrb[0].mxu0
      %v1512 = vadd.f32 0.0, %v1511
      %v1513 = vpop.f32.mrb[0].mxu0
      %v1514 = vpop.f32.mrb[0].mxu0
      %v1515 = vadd.f32 0.0, %v1514
      %v1516 = vpop.f32.mrb[0].mxu0
      %1517 = vmatprep.mubr.bf16.mxu0 %v1218
      %1518 = vmatmul.mubr.bf16.gmra.mrb[0].mxu0 %v1215
      %v1519 = vpop.f32.mrb[0].mxu0
      %v1520 = vadd.f32 0.0, %v1519
      %v1521 = vpop.f32.mrb[0].mxu0
      %v1522 = vpop.f32.mrb[0].mxu0
      %v1523 = vadd.f32 0.0, %v1522
      %v1524 = vpop.f32.mrb[0].mxu0
      %1525 = vmatprep.mubr.bf16.mxu0 %v1224
      %1526 = vmatmul.mubr.bf16.gmra.mrb[0].mxu0 %v1221
      %v1527 = vpop.f32.mrb[0].mxu0
      %v1528 = vadd.f32 0.0, %v1527
      %v1529 = vpop.f32.mrb[0].mxu0
      %v1530 = vpop.f32.mrb[0].mxu0
      %v1531 = vadd.f32 0.0, %v1530
      %v1532 = vpop.f32.mrb[0].mxu0
      %1533 = vmatprep.mubr.bf16.mxu0 %v1230
      %1534 = vmatmul.mubr.bf16.gmra.mrb[0].mxu0 %v1227
      %v1535 = vpop.f32.mrb[0].mxu0
      %v1536 = vadd.f32 0.0, %v1535
      %v1537 = vpop.f32.mrb[0].mxu0
      %v1538 = vpop.f32.mrb[0].mxu0
      %v1539 = vadd.f32 0.0, %v1538
      %v1540 = vpop.f32.mrb[0].mxu0
      %1541 = vmatprep.mubr.bf16.mxu0 %v1236
      %1542 = vmatmul.mubr.bf16.gmra.mrb[0].mxu0 %v1233
      %v1543 = vpop.f32.mrb[0].mxu0
      %v1544 = vadd.f32 0.0, %v1543
      %v1545 = vpop.f32.mrb[0].mxu0
      %v1546 = vpop.f32.mrb[0].mxu0
      %v1547 = vadd.f32 0.0, %v1546
      %v1548 = vpop.f32.mrb[0].mxu0
      %1549 = vmatprep.mubr.bf16.mxu0 %v1242
      %1550 = vmatmul.mubr.bf16.gmra.mrb[0].mxu0 %v1239
      %v1551 = vpop.f32.mrb[0].mxu0
      %v1552 = vadd.f32 0.0, %v1551
      %v1553 = vpop.f32.mrb[0].mxu0
      %v1554 = vpop.f32.mrb[0].mxu0
      %v1555 = vadd.f32 0.0, %v1554
      %v1556 = vpop.f32.mrb[0].mxu0
      %1557 = vmatprep.mubr.bf16.mxu0 %v1248
      %1558 = vmatmul.mubr.bf16.gmra.mrb[0].mxu0 %v1245
      %v1559 = vpop.f32.mrb[0].mxu0
      %v1560 = vadd.f32 0.0, %v1559
      %v1561 = vpop.f32.mrb[0].mxu0
      %v1562 = vpop.f32.mrb[0].mxu0
      %v1563 = vadd.f32 0.0, %v1562
      %v1564 = vpop.f32.mrb[0].mxu0
      %1565 = vmatprep.mubr.bf16.mxu0 %v1254
      %1566 = vmatmul.mubr.bf16.gmra.mrb[0].mxu0 %v1251
      %v1567 = vpop.f32.mrb[0].mxu0
      %v1568 = vadd.f32 0.0, %v1567
      %v1569 = vpop.f32.mrb[0].mxu0
      %v1570 = vpop.f32.mrb[0].mxu0
      %v1571 = vadd.f32 0.0, %v1570
      %v1572 = vpop.f32.mrb[0].mxu0
      %1573 = vmatprep.mubr.bf16.mxu0 %v1260
      %1574 = vmatmul.mubr.bf16.gmra.mrb[0].mxu0 %v1257
      %v1575 = vpop.f32.mrb[0].mxu0
      %v1576 = vadd.f32 0.0, %v1575
      %v1577 = vpop.f32.mrb[0].mxu0
      %v1578 = vpop.f32.mrb[0].mxu0
      %v1579 = vadd.f32 0.0, %v1578
      %v1580 = vpop.f32.mrb[0].mxu0
      %1581 = vdwg.mxu0
      %v1614 = vunpack.c.l.b16 %v839
      %v1615 = vunpack.c.l.b16 %v840
      %v1616 = vunpack.c.l.b16 %v841
      %v1617 = vunpack.c.l.b16 %v842
      %v1618 = vunpack.c.l.b16 %v843
      %v1619 = vunpack.c.l.b16 %v844
      %v1620 = vunpack.c.l.b16 %v845
      %v1621 = vunpack.c.l.b16 %v846
      %v1622 = vunpack.c.l.b16 %v847
      %v1623 = vunpack.c.l.b16 %v848
      %v1624 = vunpack.c.l.b16 %v849
      %v1625 = vunpack.c.l.b16 %v850
      %v1626 = vunpack.c.l.b16 %v851
      %v1627 = vunpack.c.l.b16 %v852
      %v1628 = vunpack.c.l.b16 %v853
      %v1629 = vunpack.c.l.b16 %v854
      %v1630 = vunpack.c.l.b16 %v855
      %v1631 = vunpack.c.l.b16 %v856
      %v1632 = vunpack.c.l.b16 %v857
      %v1633 = vunpack.c.l.b16 %v858
      %v1634 = vunpack.c.l.b16 %v859
      %v1635 = vunpack.c.l.b16 %v860
      %v1636 = vunpack.c.l.b16 %v861
      %v1637 = vunpack.c.l.b16 %v862
      %v1638 = vunpack.c.l.b16 %v863
      %v1639 = vunpack.c.l.b16 %v864
      %v1640 = vunpack.c.l.b16 %v865
      %v1641 = vunpack.c.l.b16 %v866
      %v1642 = vunpack.c.l.b16 %v867
      %v1643 = vunpack.c.l.b16 %v868
      %v1644 = vunpack.c.l.b16 %v869
      %v1645 = vunpack.c.l.b16 %v870
      %v1646 = vpack.c.b16 %v1615, %v1614
      %v1647 = vpack.c.b16 %v1617, %v1616
      %v1648 = vpack.c.b16 %v1619, %v1618
      %v1649 = vpack.c.b16 %v1621, %v1620
      %v1650 = vpack.c.b16 %v1623, %v1622
      %v1651 = vpack.c.b16 %v1625, %v1624
      %v1652 = vpack.c.b16 %v1627, %v1626
      %v1653 = vpack.c.b16 %v1629, %v1628
      %v1654 = vpack.c.b16 %v1631, %v1630
      %v1655 = vpack.c.b16 %v1633, %v1632
      %v1656 = vpack.c.b16 %v1635, %v1634
      %v1657 = vpack.c.b16 %v1637, %v1636
      %v1658 = vpack.c.b16 %v1639, %v1638
      %v1659 = vpack.c.b16 %v1641, %v1640
      %v1660 = vpack.c.b16 %v1643, %v1642
      %v1661 = vpack.c.b16 %v1645, %v1644
      %1678 = vmatprep.subr.bf16.mxu0 0
      %1679 = vmatpush1.bf16.msra.mxu0 %v1646
      %1680 = vmatprep.subr.bf16.mxu0 0
      %1681 = vmatpush1.bf16.msra.mxu0 %v1647
      %1682 = vmatprep.subr.bf16.mxu0 0
      %1683 = vmatpush1.bf16.msra.mxu0 %v1648
      %1684 = vmatprep.subr.bf16.mxu0 0
      %1685 = vmatpush1.bf16.msra.mxu0 %v1649
      %1686 = vmatprep.subr.bf16.mxu0 0
      %1687 = vmatpush1.bf16.msra.mxu0 %v1650
      %1688 = vmatprep.subr.bf16.mxu0 0
      %1689 = vmatpush1.bf16.msra.mxu0 %v1651
      %1690 = vmatprep.subr.bf16.mxu0 0
      %1691 = vmatpush1.bf16.msra.mxu0 %v1652
      %1692 = vmatprep.subr.bf16.mxu0 0
      %1693 = vmatpush1.bf16.msra.mxu0 %v1653
      %1694 = vmatprep.subr.bf16.mxu0 0
      %1695 = vmatpush1.bf16.msra.mxu0 %v1654
      %1696 = vmatprep.subr.bf16.mxu0 0
      %1697 = vmatpush1.bf16.msra.mxu0 %v1655
      %1698 = vmatprep.subr.bf16.mxu0 0
      %1699 = vmatpush1.bf16.msra.mxu0 %v1656
      %1700 = vmatprep.subr.bf16.mxu0 0
      %1701 = vmatpush1.bf16.msra.mxu0 %v1657
      %1702 = vmatprep.subr.bf16.mxu0 0
      %1703 = vmatpush1.bf16.msra.mxu0 %v1658
      %1704 = vmatprep.subr.bf16.mxu0 0
      %1705 = vmatpush1.bf16.msra.mxu0 %v1659
      %1706 = vmatprep.subr.bf16.mxu0 0
      %1707 = vmatpush1.bf16.msra.mxu0 %v1660
      %1708 = vmatprep.subr.bf16.mxu0 0
      %1709 = vmatpush1.bf16.msra.mxu0 %v1661
      %1710 = vmatprep.mubr.bf16.mxu0 %v716
      %1711 = vmatmul.mubr.bf16.gmra.mrb[0].mxu0 %v713
      %v1712 = vpop.f32.mrb[0].mxu0
      %v1713 = vadd.f32 %v1456, %v1712
      %v1714 = vpop.f32.mrb[0].mxu0
      %v1715 = vpop.f32.mrb[0].mxu0
      %v1716 = vadd.f32 %v1459, %v1715
      %v1717 = vpop.f32.mrb[0].mxu0
      %1718 = vmatprep.mubr.bf16.mxu0 %v722
      %1719 = vmatmul.mubr.bf16.gmra.mrb[0].mxu0 %v719
      %v1720 = vpop.f32.mrb[0].mxu0
      %v1721 = vadd.f32 %v1464, %v1720
      %v1722 = vpop.f32.mrb[0].mxu0
      %v1723 = vpop.f32.mrb[0].mxu0
      %v1724 = vadd.f32 %v1467, %v1723
      %v1725 = vpop.f32.mrb[0].mxu0
      %1726 = vmatprep.mubr.bf16.mxu0 %v728
      %1727 = vmatmul.mubr.bf16.gmra.mrb[0].mxu0 %v725
      %v1728 = vpop.f32.mrb[0].mxu0
      %v1729 = vadd.f32 %v1472, %v1728
      %v1730 = vpop.f32.mrb[0].mxu0
      %v1731 = vpop.f32.mrb[0].mxu0
      %v1732 = vadd.f32 %v1475, %v1731
      %v1733 = vpop.f32.mrb[0].mxu0
      %1734 = vmatprep.mubr.bf16.mxu0 %v734
      %1735 = vmatmul.mubr.bf16.gmra.mrb[0].mxu0 %v731
      %v1736 = vpop.f32.mrb[0].mxu0
      %v1737 = vadd.f32 %v1480, %v1736
      %v1738 = vpop.f32.mrb[0].mxu0
      %v1739 = vpop.f32.mrb[0].mxu0
      %v1740 = vadd.f32 %v1483, %v1739
      %v1741 = vpop.f32.mrb[0].mxu0
      %1742 = vmatprep.mubr.bf16.mxu0 %v740
      %1743 = vmatmul.mubr.bf16.gmra.mrb[0].mxu0 %v737
      %v1744 = vpop.f32.mrb[0].mxu0
      %v1745 = vadd.f32 %v1488, %v1744
      %v1746 = vpop.f32.mrb[0].mxu0
      %v1747 = vpop.f32.mrb[0].mxu0
      %v1748 = vadd.f32 %v1491, %v1747
      %v1749 = vpop.f32.mrb[0].mxu0
      %1750 = vmatprep.mubr.bf16.mxu0 %v746
      %1751 = vmatmul.mubr.bf16.gmra.mrb[0].mxu0 %v743
      %v1752 = vpop.f32.mrb[0].mxu0
      %v1753 = vadd.f32 %v1496, %v1752
      %v1754 = vpop.f32.mrb[0].mxu0
      %v1755 = vpop.f32.mrb[0].mxu0
      %v1756 = vadd.f32 %v1499, %v1755
      %v1757 = vpop.f32.mrb[0].mxu0
      %1758 = vmatprep.mubr.bf16.mxu0 %v752
      %1759 = vmatmul.mubr.bf16.gmra.mrb[0].mxu0 %v749
      %v1760 = vpop.f32.mrb[0].mxu0
      %v1761 = vadd.f32 %v1504, %v1760
      %v1762 = vpop.f32.mrb[0].mxu0
      %v1763 = vpop.f32.mrb[0].mxu0
      %v1764 = vadd.f32 %v1507, %v1763
      %v1765 = vpop.f32.mrb[0].mxu0
      %1766 = vmatprep.mubr.bf16.mxu0 %v758
      %1767 = vmatmul.mubr.bf16.gmra.mrb[0].mxu0 %v755
      %v1768 = vpop.f32.mrb[0].mxu0
      %v1769 = vadd.f32 %v1512, %v1768
      %v1770 = vpop.f32.mrb[0].mxu0
      %v1771 = vpop.f32.mrb[0].mxu0
      %v1772 = vadd.f32 %v1515, %v1771
      %v1773 = vpop.f32.mrb[0].mxu0
      %1774 = vmatprep.mubr.bf16.mxu0 %v764
      %1775 = vmatmul.mubr.bf16.gmra.mrb[0].mxu0 %v761
      %v1776 = vpop.f32.mrb[0].mxu0
      %v1777 = vadd.f32 %v1520, %v1776
      %v1778 = vpop.f32.mrb[0].mxu0
      %v1779 = vpop.f32.mrb[0].mxu0
      %v1780 = vadd.f32 %v1523, %v1779
      %v1781 = vpop.f32.mrb[0].mxu0
      %1782 = vmatprep.mubr.bf16.mxu0 %v770
      %1783 = vmatmul.mubr.bf16.gmra.mrb[0].mxu0 %v767
      %v1784 = vpop.f32.mrb[0].mxu0
      %v1785 = vadd.f32 %v1528, %v1784
      %v1786 = vpop.f32.mrb[0].mxu0
      %v1787 = vpop.f32.mrb[0].mxu0
      %v1788 = vadd.f32 %v1531, %v1787
      %v1789 = vpop.f32.mrb[0].mxu0
      %1790 = vmatprep.mubr.bf16.mxu0 %v776
      %1791 = vmatmul.mubr.bf16.gmra.mrb[0].mxu0 %v773
      %v1792 = vpop.f32.mrb[0].mxu0
      %v1793 = vadd.f32 %v1536, %v1792
      %v1794 = vpop.f32.mrb[0].mxu0
      %v1795 = vpop.f32.mrb[0].mxu0
      %v1796 = vadd.f32 %v1539, %v1795
      %v1797 = vpop.f32.mrb[0].mxu0
      %1798 = vmatprep.mubr.bf16.mxu0 %v782
      %1799 = vmatmul.mubr.bf16.gmra.mrb[0].mxu0 %v779
      %v1800 = vpop.f32.mrb[0].mxu0
      %v1801 = vadd.f32 %v1544, %v1800
      %v1802 = vpop.f32.mrb[0].mxu0
      %v1803 = vpop.f32.mrb[0].mxu0
      %v1804 = vadd.f32 %v1547, %v1803
      %v1805 = vpop.f32.mrb[0].mxu0
      %1806 = vmatprep.mubr.bf16.mxu0 %v788
      %1807 = vmatmul.mubr.bf16.gmra.mrb[0].mxu0 %v785
      %v1808 = vpop.f32.mrb[0].mxu0
      %v1809 = vadd.f32 %v1552, %v1808
      %v1810 = vpop.f32.mrb[0].mxu0
      %v1811 = vpop.f32.mrb[0].mxu0
      %v1812 = vadd.f32 %v1555, %v1811
      %v1813 = vpop.f32.mrb[0].mxu0
      %1814 = vmatprep.mubr.bf16.mxu0 %v794
      %1815 = vmatmul.mubr.bf16.gmra.mrb[0].mxu0 %v791
      %v1816 = vpop.f32.mrb[0].mxu0
      %v1817 = vadd.f32 %v1560, %v1816
      %v1818 = vpop.f32.mrb[0].mxu0
      %v1819 = vpop.f32.mrb[0].mxu0
      %v1820 = vadd.f32 %v1563, %v1819
      %v1821 = vpop.f32.mrb[0].mxu0
      %1822 = vmatprep.mubr.bf16.mxu0 %v800
      %1823 = vmatmul.mubr.bf16.gmra.mrb[0].mxu0 %v797
      %v1824 = vpop.f32.mrb[0].mxu0
      %v1825 = vadd.f32 %v1568, %v1824
      %v1826 = vpop.f32.mrb[0].mxu0
      %v1827 = vpop.f32.mrb[0].mxu0
      %v1828 = vadd.f32 %v1571, %v1827
      %v1829 = vpop.f32.mrb[0].mxu0
      %1830 = vmatprep.mubr.bf16.mxu0 %v806
      %1831 = vmatmul.mubr.bf16.gmra.mrb[0].mxu0 %v803
      %v1832 = vpop.f32.mrb[0].mxu0
      %v1833 = vadd.f32 %v1576, %v1832
      %v1834 = vpop.f32.mrb[0].mxu0
      %v1835 = vpop.f32.mrb[0].mxu0
      %v1836 = vadd.f32 %v1579, %v1835
      %v1837 = vpop.f32.mrb[0].mxu0
      %1838 = vdwg.mxu0
      %v1839 = vld [vmem:[%s890 + $0x8] sm:$0x3]
      %v1840 = vld [vmem:[%s890 + $0x14] sm:$0x3]
      %v1841 = vld [vmem:[%s890 + $0x20] sm:$0x3]
      %v1842 = vld [vmem:[%s890 + $0x2c] sm:$0x3]
      %v1843 = vld [vmem:[%s890 + $0x38] sm:$0x3]
      %v1844 = vld [vmem:[%s890 + $0x44] sm:$0x3]
      %v1845 = vld [vmem:[%s890 + $0x50] sm:$0x3]
      %v1846 = vld [vmem:[%s890 + $0x5c] sm:$0x3]
      %v1847 = vld [vmem:[%s890 + $0x68] sm:$0x3]
      %v1848 = vld [vmem:[%s890 + $0x74] sm:$0x3]
      %v1849 = vld [vmem:[%s890 + $0x80] sm:$0x3]
      %v1850 = vld [vmem:[%s890 + $0x8c] sm:$0x3]
      %v1851 = vld [vmem:[%s890 + $0x98] sm:$0x3]
      %v1852 = vld [vmem:[%s890 + $0xa4] sm:$0x3]
      %v1853 = vld [vmem:[%s890 + $0xb0] sm:$0x3]
      %v1854 = vld [vmem:[%s890 + $0xbc] sm:$0x3]
      %v1855 = vld [vmem:[%s890] sm:$0xc]
      %v1856 = vld [vmem:[%s890 + $0xc] sm:$0xc]
      %v1857 = vld [vmem:[%s890 + $0x18] sm:$0xc]
      %v1858 = vld [vmem:[%s890 + $0x24] sm:$0xc]
      %v1859 = vld [vmem:[%s890 + $0x30] sm:$0xc]
      %v1860 = vld [vmem:[%s890 + $0x3c] sm:$0xc]
      %v1861 = vld [vmem:[%s890 + $0x48] sm:$0xc]
      %v1862 = vld [vmem:[%s890 + $0x54] sm:$0xc]
      %v1863 = vld [vmem:[%s890 + $0x60] sm:$0xc]
      %v1864 = vld [vmem:[%s890 + $0x6c] sm:$0xc]
      %v1865 = vld [vmem:[%s890 + $0x78] sm:$0xc]
      %v1866 = vld [vmem:[%s890 + $0x84] sm:$0xc]
      %v1867 = vld [vmem:[%s890 + $0x90] sm:$0xc]
      %v1868 = vld [vmem:[%s890 + $0x9c] sm:$0xc]
      %v1869 = vld [vmem:[%s890 + $0xa8] sm:$0xc]
      %v1870 = vld [vmem:[%s890 + $0xb4] sm:$0xc]
      %v1887 = vunpack.c.l.b16 %v1839
      %v1888 = vunpack.c.l.b16 %v1840
      %v1889 = vunpack.c.l.b16 %v1841
      %v1890 = vunpack.c.l.b16 %v1842
      %v1891 = vunpack.c.l.b16 %v1843
      %v1892 = vunpack.c.l.b16 %v1844
      %v1893 = vunpack.c.l.b16 %v1845
      %v1894 = vunpack.c.l.b16 %v1846
      %v1895 = vunpack.c.l.b16 %v1847
      %v1896 = vunpack.c.l.b16 %v1848
      %v1897 = vunpack.c.l.b16 %v1849
      %v1898 = vunpack.c.l.b16 %v1850
      %v1899 = vunpack.c.l.b16 %v1851
      %v1900 = vunpack.c.l.b16 %v1852
      %v1901 = vunpack.c.l.b16 %v1853
      %v1902 = vunpack.c.l.b16 %v1854
      %v1903 = vpack.c.b16 %v1887, %v1887
      %v1904 = vpack.c.b16 %v1888, %v1888
      %v1905 = vpack.c.b16 %v1889, %v1889
      %v1906 = vpack.c.b16 %v1890, %v1890
      %v1907 = vpack.c.b16 %v1891, %v1891
      %v1908 = vpack.c.b16 %v1892, %v1892
      %v1909 = vpack.c.b16 %v1893, %v1893
      %v1910 = vpack.c.b16 %v1894, %v1894
      %v1911 = vpack.c.b16 %v1895, %v1895
      %v1912 = vpack.c.b16 %v1896, %v1896
      %v1913 = vpack.c.b16 %v1897, %v1897
      %v1914 = vpack.c.b16 %v1898, %v1898
      %v1915 = vpack.c.b16 %v1899, %v1899
      %v1916 = vpack.c.b16 %v1900, %v1900
      %v1917 = vpack.c.b16 %v1901, %v1901
      %v1918 = vpack.c.b16 %v1902, %v1902
      %v1935 = vunpack.c.l.b16 %v1855
      %v1936 = vunpack.c.l.b16 %v1856
      %v1937 = vunpack.c.l.b16 %v1857
      %v1938 = vunpack.c.l.b16 %v1858
      %v1939 = vunpack.c.l.b16 %v1859
      %v1940 = vunpack.c.l.b16 %v1860
      %v1941 = vunpack.c.l.b16 %v1861
      %v1942 = vunpack.c.l.b16 %v1862
      %v1943 = vunpack.c.l.b16 %v1863
      %v1944 = vunpack.c.l.b16 %v1864
      %v1945 = vunpack.c.l.b16 %v1865
      %v1946 = vunpack.c.l.b16 %v1866
      %v1947 = vunpack.c.l.b16 %v1867
      %v1948 = vunpack.c.l.b16 %v1868
      %v1949 = vunpack.c.l.b16 %v1869
      %v1950 = vunpack.c.l.b16 %v1870
      %v1951 = vpack.c.b16 %v1036, %v1935
      %v1952 = vpack.c.b16 %v1039, %v1936
      %v1953 = vpack.c.b16 %v1042, %v1937
      %v1954 = vpack.c.b16 %v1045, %v1938
      %v1955 = vpack.c.b16 %v1048, %v1939
      %v1956 = vpack.c.b16 %v1051, %v1940
      %v1957 = vpack.c.b16 %v1054, %v1941
      %v1958 = vpack.c.b16 %v1057, %v1942
      %v1959 = vpack.c.b16 %v1060, %v1943
      %v1960 = vpack.c.b16 %v1063, %v1944
      %v1961 = vpack.c.b16 %v1066, %v1945
      %v1962 = vpack.c.b16 %v1069, %v1946
      %v1963 = vpack.c.b16 %v1072, %v1947
      %v1964 = vpack.c.b16 %v1075, %v1948
      %v1965 = vpack.c.b16 %v1078, %v1949
      %v1966 = vpack.c.b16 %v1081, %v1950
      %v1968 = vshrl.u32 %v1951, 16
      %v1970 = vshll.u32 %v1951, 16
      %v1972 = vrot.slane %v1970, 1
      %v1973 = vor.u32 %v1968, %v1972
      %v1975 = vshll.u32 %v1903, 16
      %v1977 = vrot.slane %v1975, 1
      %v1978 = vsel %vm469, %v1973, %v1977
      %v1979 = vshrl.u32 %v1903, 16
      %v1981 = vor.u32 %v1979, %v1977
      %v1983 = vshrl.u32 %v1952, 16
      %v1985 = vshll.u32 %v1952, 16
      %v1987 = vrot.slane %v1985, 1
      %v1988 = vor.u32 %v1983, %v1987
      %v1990 = vshll.u32 %v1904, 16
      %v1992 = vrot.slane %v1990, 1
      %v1993 = vsel %vm469, %v1988, %v1992
      %v1994 = vshrl.u32 %v1904, 16
      %v1996 = vor.u32 %v1994, %v1992
      %v1998 = vshrl.u32 %v1953, 16
      %v2000 = vshll.u32 %v1953, 16
      %v2002 = vrot.slane %v2000, 1
      %v2003 = vor.u32 %v1998, %v2002
      %v2005 = vshll.u32 %v1905, 16
      %v2007 = vrot.slane %v2005, 1
      %v2008 = vsel %vm469, %v2003, %v2007
      %v2009 = vshrl.u32 %v1905, 16
      %v2011 = vor.u32 %v2009, %v2007
      %v2013 = vshrl.u32 %v1954, 16
      %v2015 = vshll.u32 %v1954, 16
      %v2017 = vrot.slane %v2015, 1
      %v2018 = vor.u32 %v2013, %v2017
      %v2020 = vshll.u32 %v1906, 16
      %v2022 = vrot.slane %v2020, 1
      %v2023 = vsel %vm469, %v2018, %v2022
      %v2024 = vshrl.u32 %v1906, 16
      %v2026 = vor.u32 %v2024, %v2022
      %v2028 = vshrl.u32 %v1955, 16
      %v2030 = vshll.u32 %v1955, 16
      %v2032 = vrot.slane %v2030, 1
      %v2033 = vor.u32 %v2028, %v2032
      %v2035 = vshll.u32 %v1907, 16
      %v2037 = vrot.slane %v2035, 1
      %v2038 = vsel %vm469, %v2033, %v2037
      %v2039 = vshrl.u32 %v1907, 16
      %v2041 = vor.u32 %v2039, %v2037
      %v2043 = vshrl.u32 %v1956, 16
      %v2045 = vshll.u32 %v1956, 16
      %v2047 = vrot.slane %v2045, 1
      %v2048 = vor.u32 %v2043, %v2047
      %v2050 = vshll.u32 %v1908, 16
      %v2052 = vrot.slane %v2050, 1
      %v2053 = vsel %vm469, %v2048, %v2052
      %v2054 = vshrl.u32 %v1908, 16
      %v2056 = vor.u32 %v2054, %v2052
      %v2058 = vshrl.u32 %v1957, 16
      %v2060 = vshll.u32 %v1957, 16
      %v2062 = vrot.slane %v2060, 1
      %v2063 = vor.u32 %v2058, %v2062
      %v2065 = vshll.u32 %v1909, 16
      %v2067 = vrot.slane %v2065, 1
      %v2068 = vsel %vm469, %v2063, %v2067
      %v2069 = vshrl.u32 %v1909, 16
      %v2071 = vor.u32 %v2069, %v2067
      %v2073 = vshrl.u32 %v1958, 16
      %v2075 = vshll.u32 %v1958, 16
      %v2077 = vrot.slane %v2075, 1
      %v2078 = vor.u32 %v2073, %v2077
      %v2080 = vshll.u32 %v1910, 16
      %v2082 = vrot.slane %v2080, 1
      %v2083 = vsel %vm469, %v2078, %v2082
      %v2084 = vshrl.u32 %v1910, 16
      %v2086 = vor.u32 %v2084, %v2082
      %v2088 = vshrl.u32 %v1959, 16
      %v2090 = vshll.u32 %v1959, 16
      %v2092 = vrot.slane %v2090, 1
      %v2093 = vor.u32 %v2088, %v2092
      %v2095 = vshll.u32 %v1911, 16
      %v2097 = vrot.slane %v2095, 1
      %v2098 = vsel %vm469, %v2093, %v2097
      %v2099 = vshrl.u32 %v1911, 16
      %v2101 = vor.u32 %v2099, %v2097
      %v2103 = vshrl.u32 %v1960, 16
      %v2105 = vshll.u32 %v1960, 16
      %v2107 = vrot.slane %v2105, 1
      %v2108 = vor.u32 %v2103, %v2107
      %v2110 = vshll.u32 %v1912, 16
      %v2112 = vrot.slane %v2110, 1
      %v2113 = vsel %vm469, %v2108, %v2112
      %v2114 = vshrl.u32 %v1912, 16
      %v2116 = vor.u32 %v2114, %v2112
      %v2118 = vshrl.u32 %v1961, 16
      %v2120 = vshll.u32 %v1961, 16
      %v2122 = vrot.slane %v2120, 1
      %v2123 = vor.u32 %v2118, %v2122
      %v2125 = vshll.u32 %v1913, 16
      %v2127 = vrot.slane %v2125, 1
      %v2128 = vsel %vm469, %v2123, %v2127
      %v2129 = vshrl.u32 %v1913, 16
      %v2131 = vor.u32 %v2129, %v2127
      %v2133 = vshrl.u32 %v1962, 16
      %v2135 = vshll.u32 %v1962, 16
      %v2137 = vrot.slane %v2135, 1
      %v2138 = vor.u32 %v2133, %v2137
      %v2140 = vshll.u32 %v1914, 16
      %v2142 = vrot.slane %v2140, 1
      %v2143 = vsel %vm469, %v2138, %v2142
      %v2144 = vshrl.u32 %v1914, 16
      %v2146 = vor.u32 %v2144, %v2142
      %v2148 = vshrl.u32 %v1963, 16
      %v2150 = vshll.u32 %v1963, 16
      %v2152 = vrot.slane %v2150, 1
      %v2153 = vor.u32 %v2148, %v2152
      %v2155 = vshll.u32 %v1915, 16
      %v2157 = vrot.slane %v2155, 1
      %v2158 = vsel %vm469, %v2153, %v2157
      %v2159 = vshrl.u32 %v1915, 16
      %v2161 = vor.u32 %v2159, %v2157
      %v2163 = vshrl.u32 %v1964, 16
      %v2165 = vshll.u32 %v1964, 16
      %v2167 = vrot.slane %v2165, 1
      %v2168 = vor.u32 %v2163, %v2167
      %v2170 = vshll.u32 %v1916, 16
      %v2172 = vrot.slane %v2170, 1
      %v2173 = vsel %vm469, %v2168, %v2172
      %v2174 = vshrl.u32 %v1916, 16
      %v2176 = vor.u32 %v2174, %v2172
      %v2178 = vshrl.u32 %v1965, 16
      %v2180 = vshll.u32 %v1965, 16
      %v2182 = vrot.slane %v2180, 1
      %v2183 = vor.u32 %v2178, %v2182
      %v2185 = vshll.u32 %v1917, 16
      %v2187 = vrot.slane %v2185, 1
      %v2188 = vsel %vm469, %v2183, %v2187
      %v2189 = vshrl.u32 %v1917, 16
      %v2191 = vor.u32 %v2189, %v2187
      %v2193 = vshrl.u32 %v1966, 16
      %v2195 = vshll.u32 %v1966, 16
      %v2197 = vrot.slane %v2195, 1
      %v2198 = vor.u32 %v2193, %v2197
      %v2200 = vshll.u32 %v1918, 16
      %v2202 = vrot.slane %v2200, 1
      %v2203 = vsel %vm469, %v2198, %v2202
      %v2204 = vshrl.u32 %v1918, 16
      %v2206 = vor.u32 %v2204, %v2202
      %vm2207 = vsmask.f32 6400
      %v2209 = vshrl.u32 %v1083, 16
      %v2211 = vrot.slane %v2209, 1
      %v2212 = vshll.u32 %v1083, 16
      %v2214 = vrot.slane %v2212, 2
      %v2215 = vor.u32 %v2211, %v2214
      %v2216 = vrot.slane %v1979, 1
      %v2217 = vrot.slane %v1975, 2
      %v2218 = vor.u32 %v2216, %v2217
      %v2219 = vsel %vm2207, %v2215, %v2218
      %v2221 = vshrl.u32 %v1978, 16
      %v2223 = vrot.slane %v2221, 1
      %v2224 = vshll.u32 %v1978, 16
      %v2226 = vrot.slane %v2224, 2
      %v2227 = vor.u32 %v2223, %v2226
      %v2229 = vshrl.u32 %v1981, 16
      %v2231 = vrot.slane %v2229, 1
      %v2232 = vshll.u32 %v1981, 16
      %v2234 = vrot.slane %v2232, 2
      %v2235 = vor.u32 %v2231, %v2234
      %v2236 = vsel %vm2207, %v2227, %v2235
      %v2238 = vshrl.u32 %v1085, 16
      %v2240 = vrot.slane %v2238, 1
      %v2241 = vshll.u32 %v1085, 16
      %v2243 = vrot.slane %v2241, 2
      %v2244 = vor.u32 %v2240, %v2243
      %v2245 = vrot.slane %v1994, 1
      %v2246 = vrot.slane %v1990, 2
      %v2247 = vor.u32 %v2245, %v2246
      %v2248 = vsel %vm2207, %v2244, %v2247
      %v2250 = vshrl.u32 %v1993, 16
      %v2252 = vrot.slane %v2250, 1
      %v2253 = vshll.u32 %v1993, 16
      %v2255 = vrot.slane %v2253, 2
      %v2256 = vor.u32 %v2252, %v2255
      %v2258 = vshrl.u32 %v1996, 16
      %v2260 = vrot.slane %v2258, 1
      %v2261 = vshll.u32 %v1996, 16
      %v2263 = vrot.slane %v2261, 2
      %v2264 = vor.u32 %v2260, %v2263
      %v2265 = vsel %vm2207, %v2256, %v2264
      %v2267 = vshrl.u32 %v1087, 16
      %v2269 = vrot.slane %v2267, 1
      %v2270 = vshll.u32 %v1087, 16
      %v2272 = vrot.slane %v2270, 2
      %v2273 = vor.u32 %v2269, %v2272
      %v2274 = vrot.slane %v2009, 1
      %v2275 = vrot.slane %v2005, 2
      %v2276 = vor.u32 %v2274, %v2275
      %v2277 = vsel %vm2207, %v2273, %v2276
      %v2279 = vshrl.u32 %v2008, 16
      %v2281 = vrot.slane %v2279, 1
      %v2282 = vshll.u32 %v2008, 16
      %v2284 = vrot.slane %v2282, 2
      %v2285 = vor.u32 %v2281, %v2284
      %v2287 = vshrl.u32 %v2011, 16
      %v2289 = vrot.slane %v2287, 1
      %v2290 = vshll.u32 %v2011, 16
      %v2292 = vrot.slane %v2290, 2
      %v2293 = vor.u32 %v2289, %v2292
      %v2294 = vsel %vm2207, %v2285, %v2293
      %v2296 = vshrl.u32 %v1089, 16
      %v2298 = vrot.slane %v2296, 1
      %v2299 = vshll.u32 %v1089, 16
      %v2301 = vrot.slane %v2299, 2
      %v2302 = vor.u32 %v2298, %v2301
      %v2303 = vrot.slane %v2024, 1
      %v2304 = vrot.slane %v2020, 2
      %v2305 = vor.u32 %v2303, %v2304
      %v2306 = vsel %vm2207, %v2302, %v2305
      %v2308 = vshrl.u32 %v2023, 16
      %v2310 = vrot.slane %v2308, 1
      %v2311 = vshll.u32 %v2023, 16
      %v2313 = vrot.slane %v2311, 2
      %v2314 = vor.u32 %v2310, %v2313
      %v2316 = vshrl.u32 %v2026, 16
      %v2318 = vrot.slane %v2316, 1
      %v2319 = vshll.u32 %v2026, 16
      %v2321 = vrot.slane %v2319, 2
      %v2322 = vor.u32 %v2318, %v2321
      %v2323 = vsel %vm2207, %v2314, %v2322
      %v2325 = vshrl.u32 %v1091, 16
      %v2327 = vrot.slane %v2325, 1
      %v2328 = vshll.u32 %v1091, 16
      %v2330 = vrot.slane %v2328, 2
      %v2331 = vor.u32 %v2327, %v2330
      %v2332 = vrot.slane %v2039, 1
      %v2333 = vrot.slane %v2035, 2
      %v2334 = vor.u32 %v2332, %v2333
      %v2335 = vsel %vm2207, %v2331, %v2334
      %v2337 = vshrl.u32 %v2038, 16
      %v2339 = vrot.slane %v2337, 1
      %v2340 = vshll.u32 %v2038, 16
      %v2342 = vrot.slane %v2340, 2
      %v2343 = vor.u32 %v2339, %v2342
      %v2345 = vshrl.u32 %v2041, 16
      %v2347 = vrot.slane %v2345, 1
      %v2348 = vshll.u32 %v2041, 16
      %v2350 = vrot.slane %v2348, 2
      %v2351 = vor.u32 %v2347, %v2350
      %v2352 = vsel %vm2207, %v2343, %v2351
      %v2354 = vshrl.u32 %v1093, 16
      %v2356 = vrot.slane %v2354, 1
      %v2357 = vshll.u32 %v1093, 16
      %v2359 = vrot.slane %v2357, 2
      %v2360 = vor.u32 %v2356, %v2359
      %v2361 = vrot.slane %v2054, 1
      %v2362 = vrot.slane %v2050, 2
      %v2363 = vor.u32 %v2361, %v2362
      %v2364 = vsel %vm2207, %v2360, %v2363
      %v2366 = vshrl.u32 %v2053, 16
      %v2368 = vrot.slane %v2366, 1
      %v2369 = vshll.u32 %v2053, 16
      %v2371 = vrot.slane %v2369, 2
      %v2372 = vor.u32 %v2368, %v2371
      %v2374 = vshrl.u32 %v2056, 16
      %v2376 = vrot.slane %v2374, 1
      %v2377 = vshll.u32 %v2056, 16
      %v2379 = vrot.slane %v2377, 2
      %v2380 = vor.u32 %v2376, %v2379
      %v2381 = vsel %vm2207, %v2372, %v2380
      %v2383 = vshrl.u32 %v1095, 16
      %v2385 = vrot.slane %v2383, 1
      %v2386 = vshll.u32 %v1095, 16
      %v2388 = vrot.slane %v2386, 2
      %v2389 = vor.u32 %v2385, %v2388
      %v2390 = vrot.slane %v2069, 1
      %v2391 = vrot.slane %v2065, 2
      %v2392 = vor.u32 %v2390, %v2391
      %v2393 = vsel %vm2207, %v2389, %v2392
      %v2395 = vshrl.u32 %v2068, 16
      %v2397 = vrot.slane %v2395, 1
      %v2398 = vshll.u32 %v2068, 16
      %v2400 = vrot.slane %v2398, 2
      %v2401 = vor.u32 %v2397, %v2400
      %v2403 = vshrl.u32 %v2071, 16
      %v2405 = vrot.slane %v2403, 1
      %v2406 = vshll.u32 %v2071, 16
      %v2408 = vrot.slane %v2406, 2
      %v2409 = vor.u32 %v2405, %v2408
      %v2410 = vsel %vm2207, %v2401, %v2409
      %v2412 = vshrl.u32 %v1097, 16
      %v2414 = vrot.slane %v2412, 1
      %v2415 = vshll.u32 %v1097, 16
      %v2417 = vrot.slane %v2415, 2
      %v2418 = vor.u32 %v2414, %v2417
      %v2419 = vrot.slane %v2084, 1
      %v2420 = vrot.slane %v2080, 2
      %v2421 = vor.u32 %v2419, %v2420
      %v2422 = vsel %vm2207, %v2418, %v2421
      %v2424 = vshrl.u32 %v2083, 16
      %v2426 = vrot.slane %v2424, 1
      %v2427 = vshll.u32 %v2083, 16
      %v2429 = vrot.slane %v2427, 2
      %v2430 = vor.u32 %v2426, %v2429
      %v2432 = vshrl.u32 %v2086, 16
      %v2434 = vrot.slane %v2432, 1
      %v2435 = vshll.u32 %v2086, 16
      %v2437 = vrot.slane %v2435, 2
      %v2438 = vor.u32 %v2434, %v2437
      %v2439 = vsel %vm2207, %v2430, %v2438
      %v2441 = vshrl.u32 %v1099, 16
      %v2443 = vrot.slane %v2441, 1
      %v2444 = vshll.u32 %v1099, 16
      %v2446 = vrot.slane %v2444, 2
      %v2447 = vor.u32 %v2443, %v2446
      %v2448 = vrot.slane %v2099, 1
      %v2449 = vrot.slane %v2095, 2
      %v2450 = vor.u32 %v2448, %v2449
      %v2451 = vsel %vm2207, %v2447, %v2450
      %v2453 = vshrl.u32 %v2098, 16
      %v2455 = vrot.slane %v2453, 1
      %v2456 = vshll.u32 %v2098, 16
      %v2458 = vrot.slane %v2456, 2
      %v2459 = vor.u32 %v2455, %v2458
      %v2461 = vshrl.u32 %v2101, 16
      %v2463 = vrot.slane %v2461, 1
      %v2464 = vshll.u32 %v2101, 16
      %v2466 = vrot.slane %v2464, 2
      %v2467 = vor.u32 %v2463, %v2466
      %v2468 = vsel %vm2207, %v2459, %v2467
      %v2470 = vshrl.u32 %v1101, 16
      %v2472 = vrot.slane %v2470, 1
      %v2473 = vshll.u32 %v1101, 16
      %v2475 = vrot.slane %v2473, 2
      %v2476 = vor.u32 %v2472, %v2475
      %v2477 = vrot.slane %v2114, 1
      %v2478 = vrot.slane %v2110, 2
      %v2479 = vor.u32 %v2477, %v2478
      %v2480 = vsel %vm2207, %v2476, %v2479
      %v2482 = vshrl.u32 %v2113, 16
      %v2484 = vrot.slane %v2482, 1
      %v2485 = vshll.u32 %v2113, 16
      %v2487 = vrot.slane %v2485, 2
      %v2488 = vor.u32 %v2484, %v2487
      %v2490 = vshrl.u32 %v2116, 16
      %v2492 = vrot.slane %v2490, 1
      %v2493 = vshll.u32 %v2116, 16
      %v2495 = vrot.slane %v2493, 2
      %v2496 = vor.u32 %v2492, %v2495
      %v2497 = vsel %vm2207, %v2488, %v2496
      %v2499 = vshrl.u32 %v1103, 16
      %v2501 = vrot.slane %v2499, 1
      %v2502 = vshll.u32 %v1103, 16
      %v2504 = vrot.slane %v2502, 2
      %v2505 = vor.u32 %v2501, %v2504
      %v2506 = vrot.slane %v2129, 1
      %v2507 = vrot.slane %v2125, 2
      %v2508 = vor.u32 %v2506, %v2507
      %v2509 = vsel %vm2207, %v2505, %v2508
      %v2511 = vshrl.u32 %v2128, 16
      %v2513 = vrot.slane %v2511, 1
      %v2514 = vshll.u32 %v2128, 16
      %v2516 = vrot.slane %v2514, 2
      %v2517 = vor.u32 %v2513, %v2516
      %v2519 = vshrl.u32 %v2131, 16
      %v2521 = vrot.slane %v2519, 1
      %v2522 = vshll.u32 %v2131, 16
      %v2524 = vrot.slane %v2522, 2
      %v2525 = vor.u32 %v2521, %v2524
      %v2526 = vsel %vm2207, %v2517, %v2525
      %v2528 = vshrl.u32 %v1105, 16
      %v2530 = vrot.slane %v2528, 1
      %v2531 = vshll.u32 %v1105, 16
      %v2533 = vrot.slane %v2531, 2
      %v2534 = vor.u32 %v2530, %v2533
      %v2535 = vrot.slane %v2144, 1
      %v2536 = vrot.slane %v2140, 2
      %v2537 = vor.u32 %v2535, %v2536
      %v2538 = vsel %vm2207, %v2534, %v2537
      %v2540 = vshrl.u32 %v2143, 16
      %v2542 = vrot.slane %v2540, 1
      %v2543 = vshll.u32 %v2143, 16
      %v2545 = vrot.slane %v2543, 2
      %v2546 = vor.u32 %v2542, %v2545
      %v2548 = vshrl.u32 %v2146, 16
      %v2550 = vrot.slane %v2548, 1
      %v2551 = vshll.u32 %v2146, 16
      %v2553 = vrot.slane %v2551, 2
      %v2554 = vor.u32 %v2550, %v2553
      %v2555 = vsel %vm2207, %v2546, %v2554
      %v2557 = vshrl.u32 %v1107, 16
      %v2559 = vrot.slane %v2557, 1
      %v2560 = vshll.u32 %v1107, 16
      %v2562 = vrot.slane %v2560, 2
      %v2563 = vor.u32 %v2559, %v2562
      %v2564 = vrot.slane %v2159, 1
      %v2565 = vrot.slane %v2155, 2
      %v2566 = vor.u32 %v2564, %v2565
      %v2567 = vsel %vm2207, %v2563, %v2566
      %v2569 = vshrl.u32 %v2158, 16
      %v2571 = vrot.slane %v2569, 1
      %v2572 = vshll.u32 %v2158, 16
      %v2574 = vrot.slane %v2572, 2
      %v2575 = vor.u32 %v2571, %v2574
      %v2577 = vshrl.u32 %v2161, 16
      %v2579 = vrot.slane %v2577, 1
      %v2580 = vshll.u32 %v2161, 16
      %v2582 = vrot.slane %v2580, 2
      %v2583 = vor.u32 %v2579, %v2582
      %v2584 = vsel %vm2207, %v2575, %v2583
      %v2586 = vshrl.u32 %v1109, 16
      %v2588 = vrot.slane %v2586, 1
      %v2589 = vshll.u32 %v1109, 16
      %v2591 = vrot.slane %v2589, 2
      %v2592 = vor.u32 %v2588, %v2591
      %v2593 = vrot.slane %v2174, 1
      %v2594 = vrot.slane %v2170, 2
      %v2595 = vor.u32 %v2593, %v2594
      %v2596 = vsel %vm2207, %v2592, %v2595
      %v2598 = vshrl.u32 %v2173, 16
      %v2600 = vrot.slane %v2598, 1
      %v2601 = vshll.u32 %v2173, 16
      %v2603 = vrot.slane %v2601, 2
      %v2604 = vor.u32 %v2600, %v2603
      %v2606 = vshrl.u32 %v2176, 16
      %v2608 = vrot.slane %v2606, 1
      %v2609 = vshll.u32 %v2176, 16
      %v2611 = vrot.slane %v2609, 2
      %v2612 = vor.u32 %v2608, %v2611
      %v2613 = vsel %vm2207, %v2604, %v2612
      %v2615 = vshrl.u32 %v1111, 16
      %v2617 = vrot.slane %v2615, 1
      %v2618 = vshll.u32 %v1111, 16
      %v2620 = vrot.slane %v2618, 2
      %v2621 = vor.u32 %v2617, %v2620
      %v2622 = vrot.slane %v2189, 1
      %v2623 = vrot.slane %v2185, 2
      %v2624 = vor.u32 %v2622, %v2623
      %v2625 = vsel %vm2207, %v2621, %v2624
      %v2627 = vshrl.u32 %v2188, 16
      %v2629 = vrot.slane %v2627, 1
      %v2630 = vshll.u32 %v2188, 16
      %v2632 = vrot.slane %v2630, 2
      %v2633 = vor.u32 %v2629, %v2632
      %v2635 = vshrl.u32 %v2191, 16
      %v2637 = vrot.slane %v2635, 1
      %v2638 = vshll.u32 %v2191, 16
      %v2640 = vrot.slane %v2638, 2
      %v2641 = vor.u32 %v2637, %v2640
      %v2642 = vsel %vm2207, %v2633, %v2641
      %v2644 = vshrl.u32 %v1113, 16
      %v2646 = vrot.slane %v2644, 1
      %v2647 = vshll.u32 %v1113, 16
      %v2649 = vrot.slane %v2647, 2
      %v2650 = vor.u32 %v2646, %v2649
      %v2651 = vrot.slane %v2204, 1
      %v2652 = vrot.slane %v2200, 2
      %v2653 = vor.u32 %v2651, %v2652
      %v2654 = vsel %vm2207, %v2650, %v2653
      %v2656 = vshrl.u32 %v2203, 16
      %v2658 = vrot.slane %v2656, 1
      %v2659 = vshll.u32 %v2203, 16
      %v2661 = vrot.slane %v2659, 2
      %v2662 = vor.u32 %v2658, %v2661
      %v2664 = vshrl.u32 %v2206, 16
      %v2666 = vrot.slane %v2664, 1
      %v2667 = vshll.u32 %v2206, 16
      %v2669 = vrot.slane %v2667, 2
      %v2670 = vor.u32 %v2666, %v2669
      %v2671 = vsel %vm2207, %v2662, %v2670
      %v2704 = vld [vmem:[%s1 + $0x100] sm:$0xf]
      %v2705 = vld [vmem:[%s1 + $0x104] sm:$0xf]
      %v2706 = vld [vmem:[%s1 + $0x108] sm:$0xf]
      %v2707 = vld [vmem:[%s1 + $0x10c] sm:$0xf]
      %v2708 = vld [vmem:[%s1 + $0x110] sm:$0xf]
      %v2709 = vld [vmem:[%s1 + $0x114] sm:$0xf]
      %v2710 = vld [vmem:[%s1 + $0x118] sm:$0xf]
      %v2711 = vld [vmem:[%s1 + $0x11c] sm:$0xf]
      %v2712 = vld [vmem:[%s1 + $0x120] sm:$0xf]
      %v2713 = vld [vmem:[%s1 + $0x124] sm:$0xf]
      %v2714 = vld [vmem:[%s1 + $0x128] sm:$0xf]
      %v2715 = vld [vmem:[%s1 + $0x12c] sm:$0xf]
      %v2716 = vld [vmem:[%s1 + $0x130] sm:$0xf]
      %v2717 = vld [vmem:[%s1 + $0x134] sm:$0xf]
      %v2718 = vld [vmem:[%s1 + $0x138] sm:$0xf]
      %v2719 = vld [vmem:[%s1 + $0x13c] sm:$0xf]
      %v2720 = vld [vmem:[%s1 + $0x140] sm:$0xf]
      %v2721 = vld [vmem:[%s1 + $0x144] sm:$0xf]
      %v2722 = vld [vmem:[%s1 + $0x148] sm:$0xf]
      %v2723 = vld [vmem:[%s1 + $0x14c] sm:$0xf]
      %v2724 = vld [vmem:[%s1 + $0x150] sm:$0xf]
      %v2725 = vld [vmem:[%s1 + $0x154] sm:$0xf]
      %v2726 = vld [vmem:[%s1 + $0x158] sm:$0xf]
      %v2727 = vld [vmem:[%s1 + $0x15c] sm:$0xf]
      %v2728 = vld [vmem:[%s1 + $0x160] sm:$0xf]
      %v2729 = vld [vmem:[%s1 + $0x164] sm:$0xf]
      %v2730 = vld [vmem:[%s1 + $0x168] sm:$0xf]
      %v2731 = vld [vmem:[%s1 + $0x16c] sm:$0xf]
      %v2732 = vld [vmem:[%s1 + $0x170] sm:$0xf]
      %v2733 = vld [vmem:[%s1 + $0x174] sm:$0xf]
      %v2734 = vld [vmem:[%s1 + $0x178] sm:$0xf]
      %v2735 = vld [vmem:[%s1 + $0x17c] sm:$0xf]
      %v2768 = vunpack.c.l.b16 %v2704
      %v2769 = vunpack.c.l.b16 %v2705
      %v2770 = vunpack.c.l.b16 %v2706
      %v2771 = vunpack.c.l.b16 %v2707
      %v2772 = vunpack.c.l.b16 %v2708
      %v2773 = vunpack.c.l.b16 %v2709
      %v2774 = vunpack.c.l.b16 %v2710
      %v2775 = vunpack.c.l.b16 %v2711
      %v2776 = vunpack.c.l.b16 %v2712
      %v2777 = vunpack.c.l.b16 %v2713
      %v2778 = vunpack.c.l.b16 %v2714
      %v2779 = vunpack.c.l.b16 %v2715
      %v2780 = vunpack.c.l.b16 %v2716
      %v2781 = vunpack.c.l.b16 %v2717
      %v2782 = vunpack.c.l.b16 %v2718
      %v2783 = vunpack.c.l.b16 %v2719
      %v2784 = vunpack.c.l.b16 %v2720
      %v2785 = vunpack.c.l.b16 %v2721
      %v2786 = vunpack.c.l.b16 %v2722
      %v2787 = vunpack.c.l.b16 %v2723
      %v2788 = vunpack.c.l.b16 %v2724
      %v2789 = vunpack.c.l.b16 %v2725
      %v2790 = vunpack.c.l.b16 %v2726
      %v2791 = vunpack.c.l.b16 %v2727
      %v2792 = vunpack.c.l.b16 %v2728
      %v2793 = vunpack.c.l.b16 %v2729
      %v2794 = vunpack.c.l.b16 %v2730
      %v2795 = vunpack.c.l.b16 %v2731
      %v2796 = vunpack.c.l.b16 %v2732
      %v2797 = vunpack.c.l.b16 %v2733
      %v2798 = vunpack.c.l.b16 %v2734
      %v2799 = vunpack.c.l.b16 %v2735
      %v2800 = vpack.c.b16 %v2769, %v2768
      %v2801 = vpack.c.b16 %v2771, %v2770
      %v2802 = vpack.c.b16 %v2773, %v2772
      %v2803 = vpack.c.b16 %v2775, %v2774
      %v2804 = vpack.c.b16 %v2777, %v2776
      %v2805 = vpack.c.b16 %v2779, %v2778
      %v2806 = vpack.c.b16 %v2781, %v2780
      %v2807 = vpack.c.b16 %v2783, %v2782
      %v2808 = vpack.c.b16 %v2785, %v2784
      %v2809 = vpack.c.b16 %v2787, %v2786
      %v2810 = vpack.c.b16 %v2789, %v2788
      %v2811 = vpack.c.b16 %v2791, %v2790
      %v2812 = vpack.c.b16 %v2793, %v2792
      %v2813 = vpack.c.b16 %v2795, %v2794
      %v2814 = vpack.c.b16 %v2797, %v2796
      %v2815 = vpack.c.b16 %v2799, %v2798
      %2832 = vmatprep.subr.bf16.mxu0 0
      %2833 = vmatpush1.bf16.msra.mxu0 %v2800
      %2834 = vmatprep.subr.bf16.mxu0 0
      %2835 = vmatpush1.bf16.msra.mxu0 %v2801
      %2836 = vmatprep.subr.bf16.mxu0 0
      %2837 = vmatpush1.bf16.msra.mxu0 %v2802
      %2838 = vmatprep.subr.bf16.mxu0 0
      %2839 = vmatpush1.bf16.msra.mxu0 %v2803
      %2840 = vmatprep.subr.bf16.mxu0 0
      %2841 = vmatpush1.bf16.msra.mxu0 %v2804
      %2842 = vmatprep.subr.bf16.mxu0 0
      %2843 = vmatpush1.bf16.msra.mxu0 %v2805
      %2844 = vmatprep.subr.bf16.mxu0 0
      %2845 = vmatpush1.bf16.msra.mxu0 %v2806
      %2846 = vmatprep.subr.bf16.mxu0 0
      %2847 = vmatpush1.bf16.msra.mxu0 %v2807
      %2848 = vmatprep.subr.bf16.mxu0 0
      %2849 = vmatpush1.bf16.msra.mxu0 %v2808
      %2850 = vmatprep.subr.bf16.mxu0 0
      %2851 = vmatpush1.bf16.msra.mxu0 %v2809
      %2852 = vmatprep.subr.bf16.mxu0 0
      %2853 = vmatpush1.bf16.msra.mxu0 %v2810
      %2854 = vmatprep.subr.bf16.mxu0 0
      %2855 = vmatpush1.bf16.msra.mxu0 %v2811
      %2856 = vmatprep.subr.bf16.mxu0 0
      %2857 = vmatpush1.bf16.msra.mxu0 %v2812
      %2858 = vmatprep.subr.bf16.mxu0 0
      %2859 = vmatpush1.bf16.msra.mxu0 %v2813
      %2860 = vmatprep.subr.bf16.mxu0 0
      %2861 = vmatpush1.bf16.msra.mxu0 %v2814
      %2862 = vmatprep.subr.bf16.mxu0 0
      %2863 = vmatpush1.bf16.msra.mxu0 %v2815
      %2864 = vmatprep.mubr.bf16.mxu0 %v2236
      %2865 = vmatmul.mubr.bf16.gmra.mrb[0].mxu0 %v2219
      %v2866 = vpop.f32.mrb[0].mxu0
      %v2867 = vadd.f32 0.0, %v2866
      %v2868 = vpop.f32.mrb[0].mxu0
      %v2869 = vpop.f32.mrb[0].mxu0
      %v2870 = vadd.f32 0.0, %v2869
      %v2871 = vpop.f32.mrb[0].mxu0
      %2872 = vmatprep.mubr.bf16.mxu0 %v2265
      %2873 = vmatmul.mubr.bf16.gmra.mrb[0].mxu0 %v2248
      %v2874 = vpop.f32.mrb[0].mxu0
      %v2875 = vadd.f32 0.0, %v2874
      %v2876 = vpop.f32.mrb[0].mxu0
      %v2877 = vpop.f32.mrb[0].mxu0
      %v2878 = vadd.f32 0.0, %v2877
      %v2879 = vpop.f32.mrb[0].mxu0
      %2880 = vmatprep.mubr.bf16.mxu0 %v2294
      %2881 = vmatmul.mubr.bf16.gmra.mrb[0].mxu0 %v2277
      %v2882 = vpop.f32.mrb[0].mxu0
      %v2883 = vadd.f32 0.0, %v2882
      %v2884 = vpop.f32.mrb[0].mxu0
      %v2885 = vpop.f32.mrb[0].mxu0
      %v2886 = vadd.f32 0.0, %v2885
      %v2887 = vpop.f32.mrb[0].mxu0
      %2888 = vmatprep.mubr.bf16.mxu0 %v2323
      %2889 = vmatmul.mubr.bf16.gmra.mrb[0].mxu0 %v2306
      %v2890 = vpop.f32.mrb[0].mxu0
      %v2891 = vadd.f32 0.0, %v2890
      %v2892 = vpop.f32.mrb[0].mxu0
      %v2893 = vpop.f32.mrb[0].mxu0
      %v2894 = vadd.f32 0.0, %v2893
      %v2895 = vpop.f32.mrb[0].mxu0
      %2896 = vmatprep.mubr.bf16.mxu0 %v2352
      %2897 = vmatmul.mubr.bf16.gmra.mrb[0].mxu0 %v2335
      %v2898 = vpop.f32.mrb[0].mxu0
      %v2899 = vadd.f32 0.0, %v2898
      %v2900 = vpop.f32.mrb[0].mxu0
      %v2901 = vpop.f32.mrb[0].mxu0
      %v2902 = vadd.f32 0.0, %v2901
      %v2903 = vpop.f32.mrb[0].mxu0
      %2904 = vmatprep.mubr.bf16.mxu0 %v2381
      %2905 = vmatmul.mubr.bf16.gmra.mrb[0].mxu0 %v2364
      %v2906 = vpop.f32.mrb[0].mxu0
      %v2907 = vadd.f32 0.0, %v2906
      %v2908 = vpop.f32.mrb[0].mxu0
      %v2909 = vpop.f32.mrb[0].mxu0
      %v2910 = vadd.f32 0.0, %v2909
      %v2911 = vpop.f32.mrb[0].mxu0
      %2912 = vmatprep.mubr.bf16.mxu0 %v2410
      %2913 = vmatmul.mubr.bf16.gmra.mrb[0].mxu0 %v2393
      %v2914 = vpop.f32.mrb[0].mxu0
      %v2915 = vadd.f32 0.0, %v2914
      %v2916 = vpop.f32.mrb[0].mxu0
      %v2917 = vpop.f32.mrb[0].mxu0
      %v2918 = vadd.f32 0.0, %v2917
      %v2919 = vpop.f32.mrb[0].mxu0
      %2920 = vmatprep.mubr.bf16.mxu0 %v2439
      %2921 = vmatmul.mubr.bf16.gmra.mrb[0].mxu0 %v2422
      %v2922 = vpop.f32.mrb[0].mxu0
      %v2923 = vadd.f32 0.0, %v2922
      %v2924 = vpop.f32.mrb[0].mxu0
      %v2925 = vpop.f32.mrb[0].mxu0
      %v2926 = vadd.f32 0.0, %v2925
      %v2927 = vpop.f32.mrb[0].mxu0
      %2928 = vmatprep.mubr.bf16.mxu0 %v2468
      %2929 = vmatmul.mubr.bf16.gmra.mrb[0].mxu0 %v2451
      %v2930 = vpop.f32.mrb[0].mxu0
      %v2931 = vadd.f32 0.0, %v2930
      %v2932 = vpop.f32.mrb[0].mxu0
      %v2933 = vpop.f32.mrb[0].mxu0
      %v2934 = vadd.f32 0.0, %v2933
      %v2935 = vpop.f32.mrb[0].mxu0
      %2936 = vmatprep.mubr.bf16.mxu0 %v2497
      %2937 = vmatmul.mubr.bf16.gmra.mrb[0].mxu0 %v2480
      %v2938 = vpop.f32.mrb[0].mxu0
      %v2939 = vadd.f32 0.0, %v2938
      %v2940 = vpop.f32.mrb[0].mxu0
      %v2941 = vpop.f32.mrb[0].mxu0
      %v2942 = vadd.f32 0.0, %v2941
      %v2943 = vpop.f32.mrb[0].mxu0
      %2944 = vmatprep.mubr.bf16.mxu0 %v2526
      %2945 = vmatmul.mubr.bf16.gmra.mrb[0].mxu0 %v2509
      %v2946 = vpop.f32.mrb[0].mxu0
      %v2947 = vadd.f32 0.0, %v2946
      %v2948 = vpop.f32.mrb[0].mxu0
      %v2949 = vpop.f32.mrb[0].mxu0
      %v2950 = vadd.f32 0.0, %v2949
      %v2951 = vpop.f32.mrb[0].mxu0
      %2952 = vmatprep.mubr.bf16.mxu0 %v2555
      %2953 = vmatmul.mubr.bf16.gmra.mrb[0].mxu0 %v2538
      %v2954 = vpop.f32.mrb[0].mxu0
      %v2955 = vadd.f32 0.0, %v2954
      %v2956 = vpop.f32.mrb[0].mxu0
      %v2957 = vpop.f32.mrb[0].mxu0
      %v2958 = vadd.f32 0.0, %v2957
      %v2959 = vpop.f32.mrb[0].mxu0
      %2960 = vmatprep.mubr.bf16.mxu0 %v2584
      %2961 = vmatmul.mubr.bf16.gmra.mrb[0].mxu0 %v2567
      %v2962 = vpop.f32.mrb[0].mxu0
      %v2963 = vadd.f32 0.0, %v2962
      %v2964 = vpop.f32.mrb[0].mxu0
      %v2965 = vpop.f32.mrb[0].mxu0
      %v2966 = vadd.f32 0.0, %v2965
      %v2967 = vpop.f32.mrb[0].mxu0
      %2968 = vmatprep.mubr.bf16.mxu0 %v2613
      %2969 = vmatmul.mubr.bf16.gmra.mrb[0].mxu0 %v2596
      %v2970 = vpop.f32.mrb[0].mxu0
      %v2971 = vadd.f32 0.0, %v2970
      %v2972 = vpop.f32.mrb[0].mxu0
      %v2973 = vpop.f32.mrb[0].mxu0
      %v2974 = vadd.f32 0.0, %v2973
      %v2975 = vpop.f32.mrb[0].mxu0
      %2976 = vmatprep.mubr.bf16.mxu0 %v2642
      %2977 = vmatmul.mubr.bf16.gmra.mrb[0].mxu0 %v2625
      %v2978 = vpop.f32.mrb[0].mxu0
      %v2979 = vadd.f32 0.0, %v2978
      %v2980 = vpop.f32.mrb[0].mxu0
      %v2981 = vpop.f32.mrb[0].mxu0
      %v2982 = vadd.f32 0.0, %v2981
      %v2983 = vpop.f32.mrb[0].mxu0
      %2984 = vmatprep.mubr.bf16.mxu0 %v2671
      %2985 = vmatmul.mubr.bf16.gmra.mrb[0].mxu0 %v2654
      %v2986 = vpop.f32.mrb[0].mxu0
      %v2987 = vadd.f32 0.0, %v2986
      %v2988 = vpop.f32.mrb[0].mxu0
      %v2989 = vpop.f32.mrb[0].mxu0
      %v2990 = vadd.f32 0.0, %v2989
      %v2991 = vpop.f32.mrb[0].mxu0
      %2992 = vdwg.mxu0
      %v2993 = vadd.f32 %v1713, %v2867
      %v2994 = vadd.f32 %v1716, %v2870
      %v2995 = vadd.f32 %v1721, %v2875
      %v2996 = vadd.f32 %v1724, %v2878
      %v2997 = vadd.f32 %v1729, %v2883
      %v2998 = vadd.f32 %v1732, %v2886
      %v2999 = vadd.f32 %v1737, %v2891
      %v3000 = vadd.f32 %v1740, %v2894
      %v3001 = vadd.f32 %v1745, %v2899
      %v3002 = vadd.f32 %v1748, %v2902
      %v3003 = vadd.f32 %v1753, %v2907
      %v3004 = vadd.f32 %v1756, %v2910
      %v3005 = vadd.f32 %v1761, %v2915
      %v3006 = vadd.f32 %v1764, %v2918
      %v3007 = vadd.f32 %v1769, %v2923
      %v3008 = vadd.f32 %v1772, %v2926
      %v3009 = vadd.f32 %v1777, %v2931
      %v3010 = vadd.f32 %v1780, %v2934
      %v3011 = vadd.f32 %v1785, %v2939
      %v3012 = vadd.f32 %v1788, %v2942
      %v3013 = vadd.f32 %v1793, %v2947
      %v3014 = vadd.f32 %v1796, %v2950
      %v3015 = vadd.f32 %v1801, %v2955
      %v3016 = vadd.f32 %v1804, %v2958
      %v3017 = vadd.f32 %v1809, %v2963
      %v3018 = vadd.f32 %v1812, %v2966
      %v3019 = vadd.f32 %v1817, %v2971
      %v3020 = vadd.f32 %v1820, %v2974
      %v3021 = vadd.f32 %v1825, %v2979
      %v3022 = vadd.f32 %v1828, %v2982
      %v3023 = vadd.f32 %v1833, %v2987
      %v3024 = vadd.f32 %v1836, %v2990
      %s3025 = sadd.s32 %s224, 4
      %s3026 = smul.u32 %s3025, 3
      %s3027 = smul.addr %s3026, 4
      %s3028 = scalar_lea.vmem %s211, %s3027
      %v3029 = vld [vmem:[%s3028] sm:$0xe]
      %v3030 = vld [vmem:[%s3028 + $0x4] sm:$0xf]
      %v3031 = vld [vmem:[%s3028 + $0x8] sm:$0x1]
      %v3032 = vld [vmem:[%s3028 + $0xc] sm:$0xe]
      %v3033 = vld [vmem:[%s3028 + $0x10] sm:$0xf]
      %v3034 = vld [vmem:[%s3028 + $0x14] sm:$0x1]
      %v3035 = vld [vmem:[%s3028 + $0x18] sm:$0xe]
      %v3036 = vld [vmem:[%s3028 + $0x1c] sm:$0xf]
      %v3037 = vld [vmem:[%s3028 + $0x20] sm:$0x1]
      %v3038 = vld [vmem:[%s3028 + $0x24] sm:$0xe]
      %v3039 = vld [vmem:[%s3028 + $0x28] sm:$0xf]
      %v3040 = vld [vmem:[%s3028 + $0x2c] sm:$0x1]
      %v3041 = vld [vmem:[%s3028 + $0x30] sm:$0xe]
      %v3042 = vld [vmem:[%s3028 + $0x34] sm:$0xf]
      %v3043 = vld [vmem:[%s3028 + $0x38] sm:$0x1]
      %v3044 = vld [vmem:[%s3028 + $0x3c] sm:$0xe]
      %v3045 = vld [vmem:[%s3028 + $0x40] sm:$0xf]
      %v3046 = vld [vmem:[%s3028 + $0x44] sm:$0x1]
      %v3047 = vld [vmem:[%s3028 + $0x48] sm:$0xe]
      %v3048 = vld [vmem:[%s3028 + $0x4c] sm:$0xf]
      %v3049 = vld [vmem:[%s3028 + $0x50] sm:$0x1]
      %v3050 = vld [vmem:[%s3028 + $0x54] sm:$0xe]
      %v3051 = vld [vmem:[%s3028 + $0x58] sm:$0xf]
      %v3052 = vld [vmem:[%s3028 + $0x5c] sm:$0x1]
      %v3053 = vld [vmem:[%s3028 + $0x60] sm:$0xe]
      %v3054 = vld [vmem:[%s3028 + $0x64] sm:$0xf]
      %v3055 = vld [vmem:[%s3028 + $0x68] sm:$0x1]
      %v3056 = vld [vmem:[%s3028 + $0x6c] sm:$0xe]
      %v3057 = vld [vmem:[%s3028 + $0x70] sm:$0xf]
      %v3058 = vld [vmem:[%s3028 + $0x74] sm:$0x1]
      %v3059 = vld [vmem:[%s3028 + $0x78] sm:$0xe]
      %v3060 = vld [vmem:[%s3028 + $0x7c] sm:$0xf]
      %v3061 = vld [vmem:[%s3028 + $0x80] sm:$0x1]
      %v3062 = vld [vmem:[%s3028 + $0x84] sm:$0xe]
      %v3063 = vld [vmem:[%s3028 + $0x88] sm:$0xf]
      %v3064 = vld [vmem:[%s3028 + $0x8c] sm:$0x1]
      %v3065 = vld [vmem:[%s3028 + $0x90] sm:$0xe]
      %v3066 = vld [vmem:[%s3028 + $0x94] sm:$0xf]
      %v3067 = vld [vmem:[%s3028 + $0x98] sm:$0x1]
      %v3068 = vld [vmem:[%s3028 + $0x9c] sm:$0xe]
      %v3069 = vld [vmem:[%s3028 + $0xa0] sm:$0xf]
      %v3070 = vld [vmem:[%s3028 + $0xa4] sm:$0x1]
      %v3071 = vld [vmem:[%s3028 + $0xa8] sm:$0xe]
      %v3072 = vld [vmem:[%s3028 + $0xac] sm:$0xf]
      %v3073 = vld [vmem:[%s3028 + $0xb0] sm:$0x1]
      %v3074 = vld [vmem:[%s3028 + $0xb4] sm:$0xe]
      %v3075 = vld [vmem:[%s3028 + $0xb8] sm:$0xf]
      %v3076 = vld [vmem:[%s3028 + $0xbc] sm:$0x1]
      %v3077 = vld [vmem:[%s3028 + $0x8] sm:$0x3]
      %v3078 = vld [vmem:[%s3028 + $0x14] sm:$0x3]
      %v3079 = vld [vmem:[%s3028 + $0x20] sm:$0x3]
      %v3080 = vld [vmem:[%s3028 + $0x2c] sm:$0x3]
      %v3081 = vld [vmem:[%s3028 + $0x38] sm:$0x3]
      %v3082 = vld [vmem:[%s3028 + $0x44] sm:$0x3]
      %v3083 = vld [vmem:[%s3028 + $0x50] sm:$0x3]
      %v3084 = vld [vmem:[%s3028 + $0x5c] sm:$0x3]
      %v3085 = vld [vmem:[%s3028 + $0x68] sm:$0x3]
      %v3086 = vld [vmem:[%s3028 + $0x74] sm:$0x3]
      %v3087 = vld [vmem:[%s3028 + $0x80] sm:$0x3]
      %v3088 = vld [vmem:[%s3028 + $0x8c] sm:$0x3]
      %v3089 = vld [vmem:[%s3028 + $0x98] sm:$0x3]
      %v3090 = vld [vmem:[%s3028 + $0xa4] sm:$0x3]
      %v3091 = vld [vmem:[%s3028 + $0xb0] sm:$0x3]
      %v3092 = vld [vmem:[%s3028 + $0xbc] sm:$0x3]
      %v3141 = vunpack.c.l.b16 %v3029
      %v3142 = vunpack.c.l.b16 %v3030
      %v3143 = vunpack.c.l.b16 %v3031
      %v3144 = vunpack.c.l.b16 %v3032
      %v3145 = vunpack.c.l.b16 %v3033
      %v3146 = vunpack.c.l.b16 %v3034
      %v3147 = vunpack.c.l.b16 %v3035
      %v3148 = vunpack.c.l.b16 %v3036
      %v3149 = vunpack.c.l.b16 %v3037
      %v3150 = vunpack.c.l.b16 %v3038
      %v3151 = vunpack.c.l.b16 %v3039
      %v3152 = vunpack.c.l.b16 %v3040
      %v3153 = vunpack.c.l.b16 %v3041
      %v3154 = vunpack.c.l.b16 %v3042
      %v3155 = vunpack.c.l.b16 %v3043
      %v3156 = vunpack.c.l.b16 %v3044
      %v3157 = vunpack.c.l.b16 %v3045
      %v3158 = vunpack.c.l.b16 %v3046
      %v3159 = vunpack.c.l.b16 %v3047
      %v3160 = vunpack.c.l.b16 %v3048
      %v3161 = vunpack.c.l.b16 %v3049
      %v3162 = vunpack.c.l.b16 %v3050
      %v3163 = vunpack.c.l.b16 %v3051
      %v3164 = vunpack.c.l.b16 %v3052
      %v3165 = vunpack.c.l.b16 %v3053
      %v3166 = vunpack.c.l.b16 %v3054
      %v3167 = vunpack.c.l.b16 %v3055
      %v3168 = vunpack.c.l.b16 %v3056
      %v3169 = vunpack.c.l.b16 %v3057
      %v3170 = vunpack.c.l.b16 %v3058
      %v3171 = vunpack.c.l.b16 %v3059
      %v3172 = vunpack.c.l.b16 %v3060
      %v3173 = vunpack.c.l.b16 %v3061
      %v3174 = vunpack.c.l.b16 %v3062
      %v3175 = vunpack.c.l.b16 %v3063
      %v3176 = vunpack.c.l.b16 %v3064
      %v3177 = vunpack.c.l.b16 %v3065
      %v3178 = vunpack.c.l.b16 %v3066
      %v3179 = vunpack.c.l.b16 %v3067
      %v3180 = vunpack.c.l.b16 %v3068
      %v3181 = vunpack.c.l.b16 %v3069
      %v3182 = vunpack.c.l.b16 %v3070
      %v3183 = vunpack.c.l.b16 %v3071
      %v3184 = vunpack.c.l.b16 %v3072
      %v3185 = vunpack.c.l.b16 %v3073
      %v3186 = vunpack.c.l.b16 %v3074
      %v3187 = vunpack.c.l.b16 %v3075
      %v3188 = vunpack.c.l.b16 %v3076
      %v3189 = vpack.c.b16 %v3142, %v3141
      %v3190 = vpack.c.b16 %v3143, %v3143
      %v3191 = vpack.c.b16 %v3145, %v3144
      %v3192 = vpack.c.b16 %v3146, %v3146
      %v3193 = vpack.c.b16 %v3148, %v3147
      %v3194 = vpack.c.b16 %v3149, %v3149
      %v3195 = vpack.c.b16 %v3151, %v3150
      %v3196 = vpack.c.b16 %v3152, %v3152
      %v3197 = vpack.c.b16 %v3154, %v3153
      %v3198 = vpack.c.b16 %v3155, %v3155
      %v3199 = vpack.c.b16 %v3157, %v3156
      %v3200 = vpack.c.b16 %v3158, %v3158
      %v3201 = vpack.c.b16 %v3160, %v3159
      %v3202 = vpack.c.b16 %v3161, %v3161
      %v3203 = vpack.c.b16 %v3163, %v3162
      %v3204 = vpack.c.b16 %v3164, %v3164
      %v3205 = vpack.c.b16 %v3166, %v3165
      %v3206 = vpack.c.b16 %v3167, %v3167
      %v3207 = vpack.c.b16 %v3169, %v3168
      %v3208 = vpack.c.b16 %v3170, %v3170
      %v3209 = vpack.c.b16 %v3172, %v3171
      %v3210 = vpack.c.b16 %v3173, %v3173
      %v3211 = vpack.c.b16 %v3175, %v3174
      %v3212 = vpack.c.b16 %v3176, %v3176
      %v3213 = vpack.c.b16 %v3178, %v3177
      %v3214 = vpack.c.b16 %v3179, %v3179
      %v3215 = vpack.c.b16 %v3181, %v3180
      %v3216 = vpack.c.b16 %v3182, %v3182
      %v3217 = vpack.c.b16 %v3184, %v3183
      %v3218 = vpack.c.b16 %v3185, %v3185
      %v3219 = vpack.c.b16 %v3187, %v3186
      %v3220 = vpack.c.b16 %v3188, %v3188
      %v3237 = vunpack.c.l.b16 %v3077
      %v3238 = vunpack.c.l.b16 %v3078
      %v3239 = vunpack.c.l.b16 %v3079
      %v3240 = vunpack.c.l.b16 %v3080
      %v3241 = vunpack.c.l.b16 %v3081
      %v3242 = vunpack.c.l.b16 %v3082
      %v3243 = vunpack.c.l.b16 %v3083
      %v3244 = vunpack.c.l.b16 %v3084
      %v3245 = vunpack.c.l.b16 %v3085
      %v3246 = vunpack.c.l.b16 %v3086
      %v3247 = vunpack.c.l.b16 %v3087
      %v3248 = vunpack.c.l.b16 %v3088
      %v3249 = vunpack.c.l.b16 %v3089
      %v3250 = vunpack.c.l.b16 %v3090
      %v3251 = vunpack.c.l.b16 %v3091
      %v3252 = vunpack.c.l.b16 %v3092
      %v3253 = vpack.c.b16 %v3237, %v3237
      %v3254 = vpack.c.b16 %v3238, %v3238
      %v3255 = vpack.c.b16 %v3239, %v3239
      %v3256 = vpack.c.b16 %v3240, %v3240
      %v3257 = vpack.c.b16 %v3241, %v3241
      %v3258 = vpack.c.b16 %v3242, %v3242
      %v3259 = vpack.c.b16 %v3243, %v3243
      %v3260 = vpack.c.b16 %v3244, %v3244
      %v3261 = vpack.c.b16 %v3245, %v3245
      %v3262 = vpack.c.b16 %v3246, %v3246
      %v3263 = vpack.c.b16 %v3247, %v3247
      %v3264 = vpack.c.b16 %v3248, %v3248
      %v3265 = vpack.c.b16 %v3249, %v3249
      %v3266 = vpack.c.b16 %v3250, %v3250
      %v3267 = vpack.c.b16 %v3251, %v3251
      %v3268 = vpack.c.b16 %v3252, %v3252
      %v3270 = vshrl.u32 %v3189, 16
      %v3272 = vshll.u32 %v3189, 16
      %v3274 = vrot.slane %v3272, 1
      %v3275 = vor.u32 %v3270, %v3274
      %v3277 = vshll.u32 %v3253, 16
      %v3279 = vrot.slane %v3277, 1
      %v3280 = vsel %vm469, %v3275, %v3279
      %v3281 = vshrl.u32 %v3253, 16
      %v3283 = vor.u32 %v3281, %v3279
      %v3285 = vshrl.u32 %v3191, 16
      %v3287 = vshll.u32 %v3191, 16
      %v3289 = vrot.slane %v3287, 1
      %v3290 = vor.u32 %v3285, %v3289
      %v3292 = vshll.u32 %v3254, 16
      %v3294 = vrot.slane %v3292, 1
      %v3295 = vsel %vm469, %v3290, %v3294
      %v3296 = vshrl.u32 %v3254, 16
      %v3298 = vor.u32 %v3296, %v3294
      %v3300 = vshrl.u32 %v3193, 16
      %v3302 = vshll.u32 %v3193, 16
      %v3304 = vrot.slane %v3302, 1
      %v3305 = vor.u32 %v3300, %v3304
      %v3307 = vshll.u32 %v3255, 16
      %v3309 = vrot.slane %v3307, 1
      %v3310 = vsel %vm469, %v3305, %v3309
      %v3311 = vshrl.u32 %v3255, 16
      %v3313 = vor.u32 %v3311, %v3309
      %v3315 = vshrl.u32 %v3195, 16
      %v3317 = vshll.u32 %v3195, 16
      %v3319 = vrot.slane %v3317, 1
      %v3320 = vor.u32 %v3315, %v3319
      %v3322 = vshll.u32 %v3256, 16
      %v3324 = vrot.slane %v3322, 1
      %v3325 = vsel %vm469, %v3320, %v3324
      %v3326 = vshrl.u32 %v3256, 16
      %v3328 = vor.u32 %v3326, %v3324
      %v3330 = vshrl.u32 %v3197, 16
      %v3332 = vshll.u32 %v3197, 16
      %v3334 = vrot.slane %v3332, 1
      %v3335 = vor.u32 %v3330, %v3334
      %v3337 = vshll.u32 %v3257, 16
      %v3339 = vrot.slane %v3337, 1
      %v3340 = vsel %vm469, %v3335, %v3339
      %v3341 = vshrl.u32 %v3257, 16
      %v3343 = vor.u32 %v3341, %v3339
      %v3345 = vshrl.u32 %v3199, 16
      %v3347 = vshll.u32 %v3199, 16
      %v3349 = vrot.slane %v3347, 1
      %v3350 = vor.u32 %v3345, %v3349
      %v3352 = vshll.u32 %v3258, 16
      %v3354 = vrot.slane %v3352, 1
      %v3355 = vsel %vm469, %v3350, %v3354
      %v3356 = vshrl.u32 %v3258, 16
      %v3358 = vor.u32 %v3356, %v3354
      %v3360 = vshrl.u32 %v3201, 16
      %v3362 = vshll.u32 %v3201, 16
      %v3364 = vrot.slane %v3362, 1
      %v3365 = vor.u32 %v3360, %v3364
      %v3367 = vshll.u32 %v3259, 16
      %v3369 = vrot.slane %v3367, 1
      %v3370 = vsel %vm469, %v3365, %v3369
      %v3371 = vshrl.u32 %v3259, 16
      %v3373 = vor.u32 %v3371, %v3369
      %v3375 = vshrl.u32 %v3203, 16
      %v3377 = vshll.u32 %v3203, 16
      %v3379 = vrot.slane %v3377, 1
      %v3380 = vor.u32 %v3375, %v3379
      %v3382 = vshll.u32 %v3260, 16
      %v3384 = vrot.slane %v3382, 1
      %v3385 = vsel %vm469, %v3380, %v3384
      %v3386 = vshrl.u32 %v3260, 16
      %v3388 = vor.u32 %v3386, %v3384
      %v3390 = vshrl.u32 %v3205, 16
      %v3392 = vshll.u32 %v3205, 16
      %v3394 = vrot.slane %v3392, 1
      %v3395 = vor.u32 %v3390, %v3394
      %v3397 = vshll.u32 %v3261, 16
      %v3399 = vrot.slane %v3397, 1
      %v3400 = vsel %vm469, %v3395, %v3399
      %v3401 = vshrl.u32 %v3261, 16
      %v3403 = vor.u32 %v3401, %v3399
      %v3405 = vshrl.u32 %v3207, 16
      %v3407 = vshll.u32 %v3207, 16
      %v3409 = vrot.slane %v3407, 1
      %v3410 = vor.u32 %v3405, %v3409
      %v3412 = vshll.u32 %v3262, 16
      %v3414 = vrot.slane %v3412, 1
      %v3415 = vsel %vm469, %v3410, %v3414
      %v3416 = vshrl.u32 %v3262, 16
      %v3418 = vor.u32 %v3416, %v3414
      %v3420 = vshrl.u32 %v3209, 16
      %v3422 = vshll.u32 %v3209, 16
      %v3424 = vrot.slane %v3422, 1
      %v3425 = vor.u32 %v3420, %v3424
      %v3427 = vshll.u32 %v3263, 16
      %v3429 = vrot.slane %v3427, 1
      %v3430 = vsel %vm469, %v3425, %v3429
      %v3431 = vshrl.u32 %v3263, 16
      %v3433 = vor.u32 %v3431, %v3429
      %v3435 = vshrl.u32 %v3211, 16
      %v3437 = vshll.u32 %v3211, 16
      %v3439 = vrot.slane %v3437, 1
      %v3440 = vor.u32 %v3435, %v3439
      %v3442 = vshll.u32 %v3264, 16
      %v3444 = vrot.slane %v3442, 1
      %v3445 = vsel %vm469, %v3440, %v3444
      %v3446 = vshrl.u32 %v3264, 16
      %v3448 = vor.u32 %v3446, %v3444
      %v3450 = vshrl.u32 %v3213, 16
      %v3452 = vshll.u32 %v3213, 16
      %v3454 = vrot.slane %v3452, 1
      %v3455 = vor.u32 %v3450, %v3454
      %v3457 = vshll.u32 %v3265, 16
      %v3459 = vrot.slane %v3457, 1
      %v3460 = vsel %vm469, %v3455, %v3459
      %v3461 = vshrl.u32 %v3265, 16
      %v3463 = vor.u32 %v3461, %v3459
      %v3465 = vshrl.u32 %v3215, 16
      %v3467 = vshll.u32 %v3215, 16
      %v3469 = vrot.slane %v3467, 1
      %v3470 = vor.u32 %v3465, %v3469
      %v3472 = vshll.u32 %v3266, 16
      %v3474 = vrot.slane %v3472, 1
      %v3475 = vsel %vm469, %v3470, %v3474
      %v3476 = vshrl.u32 %v3266, 16
      %v3478 = vor.u32 %v3476, %v3474
      %v3480 = vshrl.u32 %v3217, 16
      %v3482 = vshll.u32 %v3217, 16
      %v3484 = vrot.slane %v3482, 1
      %v3485 = vor.u32 %v3480, %v3484
      %v3487 = vshll.u32 %v3267, 16
      %v3489 = vrot.slane %v3487, 1
      %v3490 = vsel %vm469, %v3485, %v3489
      %v3491 = vshrl.u32 %v3267, 16
      %v3493 = vor.u32 %v3491, %v3489
      %v3495 = vshrl.u32 %v3219, 16
      %v3497 = vshll.u32 %v3219, 16
      %v3499 = vrot.slane %v3497, 1
      %v3500 = vor.u32 %v3495, %v3499
      %v3502 = vshll.u32 %v3268, 16
      %v3504 = vrot.slane %v3502, 1
      %v3505 = vsel %vm469, %v3500, %v3504
      %v3506 = vshrl.u32 %v3268, 16
      %v3508 = vor.u32 %v3506, %v3504
      %v3509 = vrot.slane %v3189, 1
      %v3510 = vrot.slane %v3190, 1
      %v3511 = vsel %vm710, %v3509, %v3510
      %v3512 = vrot.slane %v3280, 1
      %v3513 = vrot.slane %v3283, 1
      %v3514 = vsel %vm710, %v3512, %v3513
      %v3515 = vrot.slane %v3191, 1
      %v3516 = vrot.slane %v3192, 1
      %v3517 = vsel %vm710, %v3515, %v3516
      %v3518 = vrot.slane %v3295, 1
      %v3519 = vrot.slane %v3298, 1
      %v3520 = vsel %vm710, %v3518, %v3519
      %v3521 = vrot.slane %v3193, 1
      %v3522 = vrot.slane %v3194, 1
      %v3523 = vsel %vm710, %v3521, %v3522
      %v3524 = vrot.slane %v3310, 1
      %v3525 = vrot.slane %v3313, 1
      %v3526 = vsel %vm710, %v3524, %v3525
      %v3527 = vrot.slane %v3195, 1
      %v3528 = vrot.slane %v3196, 1
      %v3529 = vsel %vm710, %v3527, %v3528
      %v3530 = vrot.slane %v3325, 1
      %v3531 = vrot.slane %v3328, 1
      %v3532 = vsel %vm710, %v3530, %v3531
      %v3533 = vrot.slane %v3197, 1
      %v3534 = vrot.slane %v3198, 1
      %v3535 = vsel %vm710, %v3533, %v3534
      %v3536 = vrot.slane %v3340, 1
      %v3537 = vrot.slane %v3343, 1
      %v3538 = vsel %vm710, %v3536, %v3537
      %v3539 = vrot.slane %v3199, 1
      %v3540 = vrot.slane %v3200, 1
      %v3541 = vsel %vm710, %v3539, %v3540
      %v3542 = vrot.slane %v3355, 1
      %v3543 = vrot.slane %v3358, 1
      %v3544 = vsel %vm710, %v3542, %v3543
      %v3545 = vrot.slane %v3201, 1
      %v3546 = vrot.slane %v3202, 1
      %v3547 = vsel %vm710, %v3545, %v3546
      %v3548 = vrot.slane %v3370, 1
      %v3549 = vrot.slane %v3373, 1
      %v3550 = vsel %vm710, %v3548, %v3549
      %v3551 = vrot.slane %v3203, 1
      %v3552 = vrot.slane %v3204, 1
      %v3553 = vsel %vm710, %v3551, %v3552
      %v3554 = vrot.slane %v3385, 1
      %v3555 = vrot.slane %v3388, 1
      %v3556 = vsel %vm710, %v3554, %v3555
      %v3557 = vrot.slane %v3205, 1
      %v3558 = vrot.slane %v3206, 1
      %v3559 = vsel %vm710, %v3557, %v3558
      %v3560 = vrot.slane %v3400, 1
      %v3561 = vrot.slane %v3403, 1
      %v3562 = vsel %vm710, %v3560, %v3561
      %v3563 = vrot.slane %v3207, 1
      %v3564 = vrot.slane %v3208, 1
      %v3565 = vsel %vm710, %v3563, %v3564
      %v3566 = vrot.slane %v3415, 1
      %v3567 = vrot.slane %v3418, 1
      %v3568 = vsel %vm710, %v3566, %v3567
      %v3569 = vrot.slane %v3209, 1
      %v3570 = vrot.slane %v3210, 1
      %v3571 = vsel %vm710, %v3569, %v3570
      %v3572 = vrot.slane %v3430, 1
      %v3573 = vrot.slane %v3433, 1
      %v3574 = vsel %vm710, %v3572, %v3573
      %v3575 = vrot.slane %v3211, 1
      %v3576 = vrot.slane %v3212, 1
      %v3577 = vsel %vm710, %v3575, %v3576
      %v3578 = vrot.slane %v3445, 1
      %v3579 = vrot.slane %v3448, 1
      %v3580 = vsel %vm710, %v3578, %v3579
      %v3581 = vrot.slane %v3213, 1
      %v3582 = vrot.slane %v3214, 1
      %v3583 = vsel %vm710, %v3581, %v3582
      %v3584 = vrot.slane %v3460, 1
      %v3585 = vrot.slane %v3463, 1
      %v3586 = vsel %vm710, %v3584, %v3585
      %v3587 = vrot.slane %v3215, 1
      %v3588 = vrot.slane %v3216, 1
      %v3589 = vsel %vm710, %v3587, %v3588
      %v3590 = vrot.slane %v3475, 1
      %v3591 = vrot.slane %v3478, 1
      %v3592 = vsel %vm710, %v3590, %v3591
      %v3593 = vrot.slane %v3217, 1
      %v3594 = vrot.slane %v3218, 1
      %v3595 = vsel %vm710, %v3593, %v3594
      %v3596 = vrot.slane %v3490, 1
      %v3597 = vrot.slane %v3493, 1
      %v3598 = vsel %vm710, %v3596, %v3597
      %v3599 = vrot.slane %v3219, 1
      %v3600 = vrot.slane %v3220, 1
      %v3601 = vsel %vm710, %v3599, %v3600
      %v3602 = vrot.slane %v3505, 1
      %v3603 = vrot.slane %v3508, 1
      %v3604 = vsel %vm710, %v3602, %v3603
      %v3637 = vld [vmem:[%s1 + $0x180] sm:$0xf]
      %v3638 = vld [vmem:[%s1 + $0x184] sm:$0xf]
      %v3639 = vld [vmem:[%s1 + $0x188] sm:$0xf]
      %v3640 = vld [vmem:[%s1 + $0x18c] sm:$0xf]
      %v3641 = vld [vmem:[%s1 + $0x190] sm:$0xf]
      %v3642 = vld [vmem:[%s1 + $0x194] sm:$0xf]
      %v3643 = vld [vmem:[%s1 + $0x198] sm:$0xf]
      %v3644 = vld [vmem:[%s1 + $0x19c] sm:$0xf]
      %v3645 = vld [vmem:[%s1 + $0x1a0] sm:$0xf]
      %v3646 = vld [vmem:[%s1 + $0x1a4] sm:$0xf]
      %v3647 = vld [vmem:[%s1 + $0x1a8] sm:$0xf]
      %v3648 = vld [vmem:[%s1 + $0x1ac] sm:$0xf]
      %v3649 = vld [vmem:[%s1 + $0x1b0] sm:$0xf]
      %v3650 = vld [vmem:[%s1 + $0x1b4] sm:$0xf]
      %v3651 = vld [vmem:[%s1 + $0x1b8] sm:$0xf]
      %v3652 = vld [vmem:[%s1 + $0x1bc] sm:$0xf]
      %v3653 = vld [vmem:[%s1 + $0x1c0] sm:$0xf]
      %v3654 = vld [vmem:[%s1 + $0x1c4] sm:$0xf]
      %v3655 = vld [vmem:[%s1 + $0x1c8] sm:$0xf]
      %v3656 = vld [vmem:[%s1 + $0x1cc] sm:$0xf]
      %v3657 = vld [vmem:[%s1 + $0x1d0] sm:$0xf]
      %v3658 = vld [vmem:[%s1 + $0x1d4] sm:$0xf]
      %v3659 = vld [vmem:[%s1 + $0x1d8] sm:$0xf]
      %v3660 = vld [vmem:[%s1 + $0x1dc] sm:$0xf]
      %v3661 = vld [vmem:[%s1 + $0x1e0] sm:$0xf]
      %v3662 = vld [vmem:[%s1 + $0x1e4] sm:$0xf]
      %v3663 = vld [vmem:[%s1 + $0x1e8] sm:$0xf]
      %v3664 = vld [vmem:[%s1 + $0x1ec] sm:$0xf]
      %v3665 = vld [vmem:[%s1 + $0x1f0] sm:$0xf]
      %v3666 = vld [vmem:[%s1 + $0x1f4] sm:$0xf]
      %v3667 = vld [vmem:[%s1 + $0x1f8] sm:$0xf]
      %v3668 = vld [vmem:[%s1 + $0x1fc] sm:$0xf]
      %v3701 = vunpack.c.l.b16 %v3637
      %v3702 = vunpack.c.l.b16 %v3638
      %v3703 = vunpack.c.l.b16 %v3639
      %v3704 = vunpack.c.l.b16 %v3640
      %v3705 = vunpack.c.l.b16 %v3641
      %v3706 = vunpack.c.l.b16 %v3642
      %v3707 = vunpack.c.l.b16 %v3643
      %v3708 = vunpack.c.l.b16 %v3644
      %v3709 = vunpack.c.l.b16 %v3645
      %v3710 = vunpack.c.l.b16 %v3646
      %v3711 = vunpack.c.l.b16 %v3647
      %v3712 = vunpack.c.l.b16 %v3648
      %v3713 = vunpack.c.l.b16 %v3649
      %v3714 = vunpack.c.l.b16 %v3650
      %v3715 = vunpack.c.l.b16 %v3651
      %v3716 = vunpack.c.l.b16 %v3652
      %v3717 = vunpack.c.l.b16 %v3653
      %v3718 = vunpack.c.l.b16 %v3654
      %v3719 = vunpack.c.l.b16 %v3655
      %v3720 = vunpack.c.l.b16 %v3656
      %v3721 = vunpack.c.l.b16 %v3657
      %v3722 = vunpack.c.l.b16 %v3658
      %v3723 = vunpack.c.l.b16 %v3659
      %v3724 = vunpack.c.l.b16 %v3660
      %v3725 = vunpack.c.l.b16 %v3661
      %v3726 = vunpack.c.l.b16 %v3662
      %v3727 = vunpack.c.l.b16 %v3663
      %v3728 = vunpack.c.l.b16 %v3664
      %v3729 = vunpack.c.l.b16 %v3665
      %v3730 = vunpack.c.l.b16 %v3666
      %v3731 = vunpack.c.l.b16 %v3667
      %v3732 = vunpack.c.l.b16 %v3668
      %v3733 = vpack.c.b16 %v3702, %v3701
      %v3734 = vpack.c.b16 %v3704, %v3703
      %v3735 = vpack.c.b16 %v3706, %v3705
      %v3736 = vpack.c.b16 %v3708, %v3707
      %v3737 = vpack.c.b16 %v3710, %v3709
      %v3738 = vpack.c.b16 %v3712, %v3711
      %v3739 = vpack.c.b16 %v3714, %v3713
      %v3740 = vpack.c.b16 %v3716, %v3715
      %v3741 = vpack.c.b16 %v3718, %v3717
      %v3742 = vpack.c.b16 %v3720, %v3719
      %v3743 = vpack.c.b16 %v3722, %v3721
      %v3744 = vpack.c.b16 %v3724, %v3723
      %v3745 = vpack.c.b16 %v3726, %v3725
      %v3746 = vpack.c.b16 %v3728, %v3727
      %v3747 = vpack.c.b16 %v3730, %v3729
      %v3748 = vpack.c.b16 %v3732, %v3731
      %3765 = vmatprep.subr.bf16.mxu0 0
      %3766 = vmatpush1.bf16.msra.mxu0 %v3733
      %3767 = vmatprep.subr.bf16.mxu0 0
      %3768 = vmatpush1.bf16.msra.mxu0 %v3734
      %3769 = vmatprep.subr.bf16.mxu0 0
      %3770 = vmatpush1.bf16.msra.mxu0 %v3735
      %3771 = vmatprep.subr.bf16.mxu0 0
      %3772 = vmatpush1.bf16.msra.mxu0 %v3736
      %3773 = vmatprep.subr.bf16.mxu0 0
      %3774 = vmatpush1.bf16.msra.mxu0 %v3737
      %3775 = vmatprep.subr.bf16.mxu0 0
      %3776 = vmatpush1.bf16.msra.mxu0 %v3738
      %3777 = vmatprep.subr.bf16.mxu0 0
      %3778 = vmatpush1.bf16.msra.mxu0 %v3739
      %3779 = vmatprep.subr.bf16.mxu0 0
      %3780 = vmatpush1.bf16.msra.mxu0 %v3740
      %3781 = vmatprep.subr.bf16.mxu0 0
      %3782 = vmatpush1.bf16.msra.mxu0 %v3741
      %3783 = vmatprep.subr.bf16.mxu0 0
      %3784 = vmatpush1.bf16.msra.mxu0 %v3742
      %3785 = vmatprep.subr.bf16.mxu0 0
      %3786 = vmatpush1.bf16.msra.mxu0 %v3743
      %3787 = vmatprep.subr.bf16.mxu0 0
      %3788 = vmatpush1.bf16.msra.mxu0 %v3744
      %3789 = vmatprep.subr.bf16.mxu0 0
      %3790 = vmatpush1.bf16.msra.mxu0 %v3745
      %3791 = vmatprep.subr.bf16.mxu0 0
      %3792 = vmatpush1.bf16.msra.mxu0 %v3746
      %3793 = vmatprep.subr.bf16.mxu0 0
      %3794 = vmatpush1.bf16.msra.mxu0 %v3747
      %3795 = vmatprep.subr.bf16.mxu0 0
      %3796 = vmatpush1.bf16.msra.mxu0 %v3748
      %3797 = vmatprep.mubr.bf16.mxu0 %v3514
      %3798 = vmatmul.mubr.bf16.gmra.mrb[0].mxu0 %v3511
      %v3799 = vpop.f32.mrb[0].mxu0
      %v3800 = vadd.f32 0.0, %v3799
      %v3801 = vpop.f32.mrb[0].mxu0
      %v3802 = vpop.f32.mrb[0].mxu0
      %v3803 = vadd.f32 0.0, %v3802
      %v3804 = vpop.f32.mrb[0].mxu0
      %3805 = vmatprep.mubr.bf16.mxu0 %v3520
      %3806 = vmatmul.mubr.bf16.gmra.mrb[0].mxu0 %v3517
      %v3807 = vpop.f32.mrb[0].mxu0
      %v3808 = vadd.f32 0.0, %v3807
      %v3809 = vpop.f32.mrb[0].mxu0
      %v3810 = vpop.f32.mrb[0].mxu0
      %v3811 = vadd.f32 0.0, %v3810
      %v3812 = vpop.f32.mrb[0].mxu0
      %3813 = vmatprep.mubr.bf16.mxu0 %v3526
      %3814 = vmatmul.mubr.bf16.gmra.mrb[0].mxu0 %v3523
      %v3815 = vpop.f32.mrb[0].mxu0
      %v3816 = vadd.f32 0.0, %v3815
      %v3817 = vpop.f32.mrb[0].mxu0
      %v3818 = vpop.f32.mrb[0].mxu0
      %v3819 = vadd.f32 0.0, %v3818
      %v3820 = vpop.f32.mrb[0].mxu0
      %3821 = vmatprep.mubr.bf16.mxu0 %v3532
      %3822 = vmatmul.mubr.bf16.gmra.mrb[0].mxu0 %v3529
      %v3823 = vpop.f32.mrb[0].mxu0
      %v3824 = vadd.f32 0.0, %v3823
      %v3825 = vpop.f32.mrb[0].mxu0
      %v3826 = vpop.f32.mrb[0].mxu0
      %v3827 = vadd.f32 0.0, %v3826
      %v3828 = vpop.f32.mrb[0].mxu0
      %3829 = vmatprep.mubr.bf16.mxu0 %v3538
      %3830 = vmatmul.mubr.bf16.gmra.mrb[0].mxu0 %v3535
      %v3831 = vpop.f32.mrb[0].mxu0
      %v3832 = vadd.f32 0.0, %v3831
      %v3833 = vpop.f32.mrb[0].mxu0
      %v3834 = vpop.f32.mrb[0].mxu0
      %v3835 = vadd.f32 0.0, %v3834
      %v3836 = vpop.f32.mrb[0].mxu0
      %3837 = vmatprep.mubr.bf16.mxu0 %v3544
      %3838 = vmatmul.mubr.bf16.gmra.mrb[0].mxu0 %v3541
      %v3839 = vpop.f32.mrb[0].mxu0
      %v3840 = vadd.f32 0.0, %v3839
      %v3841 = vpop.f32.mrb[0].mxu0
      %v3842 = vpop.f32.mrb[0].mxu0
      %v3843 = vadd.f32 0.0, %v3842
      %v3844 = vpop.f32.mrb[0].mxu0
      %3845 = vmatprep.mubr.bf16.mxu0 %v3550
      %3846 = vmatmul.mubr.bf16.gmra.mrb[0].mxu0 %v3547
      %v3847 = vpop.f32.mrb[0].mxu0
      %v3848 = vadd.f32 0.0, %v3847
      %v3849 = vpop.f32.mrb[0].mxu0
      %v3850 = vpop.f32.mrb[0].mxu0
      %v3851 = vadd.f32 0.0, %v3850
      %v3852 = vpop.f32.mrb[0].mxu0
      %3853 = vmatprep.mubr.bf16.mxu0 %v3556
      %3854 = vmatmul.mubr.bf16.gmra.mrb[0].mxu0 %v3553
      %v3855 = vpop.f32.mrb[0].mxu0
      %v3856 = vadd.f32 0.0, %v3855
      %v3857 = vpop.f32.mrb[0].mxu0
      %v3858 = vpop.f32.mrb[0].mxu0
      %v3859 = vadd.f32 0.0, %v3858
      %v3860 = vpop.f32.mrb[0].mxu0
      %3861 = vmatprep.mubr.bf16.mxu0 %v3562
      %3862 = vmatmul.mubr.bf16.gmra.mrb[0].mxu0 %v3559
      %v3863 = vpop.f32.mrb[0].mxu0
      %v3864 = vadd.f32 0.0, %v3863
      %v3865 = vpop.f32.mrb[0].mxu0
      %v3866 = vpop.f32.mrb[0].mxu0
      %v3867 = vadd.f32 0.0, %v3866
      %v3868 = vpop.f32.mrb[0].mxu0
      %3869 = vmatprep.mubr.bf16.mxu0 %v3568
      %3870 = vmatmul.mubr.bf16.gmra.mrb[0].mxu0 %v3565
      %v3871 = vpop.f32.mrb[0].mxu0
      %v3872 = vadd.f32 0.0, %v3871
      %v3873 = vpop.f32.mrb[0].mxu0
      %v3874 = vpop.f32.mrb[0].mxu0
      %v3875 = vadd.f32 0.0, %v3874
      %v3876 = vpop.f32.mrb[0].mxu0
      %3877 = vmatprep.mubr.bf16.mxu0 %v3574
      %3878 = vmatmul.mubr.bf16.gmra.mrb[0].mxu0 %v3571
      %v3879 = vpop.f32.mrb[0].mxu0
      %v3880 = vadd.f32 0.0, %v3879
      %v3881 = vpop.f32.mrb[0].mxu0
      %v3882 = vpop.f32.mrb[0].mxu0
      %v3883 = vadd.f32 0.0, %v3882
      %v3884 = vpop.f32.mrb[0].mxu0
      %3885 = vmatprep.mubr.bf16.mxu0 %v3580
      %3886 = vmatmul.mubr.bf16.gmra.mrb[0].mxu0 %v3577
      %v3887 = vpop.f32.mrb[0].mxu0
      %v3888 = vadd.f32 0.0, %v3887
      %v3889 = vpop.f32.mrb[0].mxu0
      %v3890 = vpop.f32.mrb[0].mxu0
      %v3891 = vadd.f32 0.0, %v3890
      %v3892 = vpop.f32.mrb[0].mxu0
      %3893 = vmatprep.mubr.bf16.mxu0 %v3586
      %3894 = vmatmul.mubr.bf16.gmra.mrb[0].mxu0 %v3583
      %v3895 = vpop.f32.mrb[0].mxu0
      %v3896 = vadd.f32 0.0, %v3895
      %v3897 = vpop.f32.mrb[0].mxu0
      %v3898 = vpop.f32.mrb[0].mxu0
      %v3899 = vadd.f32 0.0, %v3898
      %v3900 = vpop.f32.mrb[0].mxu0
      %3901 = vmatprep.mubr.bf16.mxu0 %v3592
      %3902 = vmatmul.mubr.bf16.gmra.mrb[0].mxu0 %v3589
      %v3903 = vpop.f32.mrb[0].mxu0
      %v3904 = vadd.f32 0.0, %v3903
      %v3905 = vpop.f32.mrb[0].mxu0
      %v3906 = vpop.f32.mrb[0].mxu0
      %v3907 = vadd.f32 0.0, %v3906
      %v3908 = vpop.f32.mrb[0].mxu0
      %3909 = vmatprep.mubr.bf16.mxu0 %v3598
      %3910 = vmatmul.mubr.bf16.gmra.mrb[0].mxu0 %v3595
      %v3911 = vpop.f32.mrb[0].mxu0
      %v3912 = vadd.f32 0.0, %v3911
      %v3913 = vpop.f32.mrb[0].mxu0
      %v3914 = vpop.f32.mrb[0].mxu0
      %v3915 = vadd.f32 0.0, %v3914
      %v3916 = vpop.f32.mrb[0].mxu0
      %3917 = vmatprep.mubr.bf16.mxu0 %v3604
      %3918 = vmatmul.mubr.bf16.gmra.mrb[0].mxu0 %v3601
      %v3919 = vpop.f32.mrb[0].mxu0
      %v3920 = vadd.f32 0.0, %v3919
      %v3921 = vpop.f32.mrb[0].mxu0
      %v3922 = vpop.f32.mrb[0].mxu0
      %v3923 = vadd.f32 0.0, %v3922
      %v3924 = vpop.f32.mrb[0].mxu0
      %3925 = vdwg.mxu0
      %v3926 = vadd.f32 %v2993, %v3800
      %v3927 = vadd.f32 %v2994, %v3803
      %v3928 = vadd.f32 %v2995, %v3808
      %v3929 = vadd.f32 %v2996, %v3811
      %v3930 = vadd.f32 %v2997, %v3816
      %v3931 = vadd.f32 %v2998, %v3819
      %v3932 = vadd.f32 %v2999, %v3824
      %v3933 = vadd.f32 %v3000, %v3827
      %v3934 = vadd.f32 %v3001, %v3832
      %v3935 = vadd.f32 %v3002, %v3835
      %v3936 = vadd.f32 %v3003, %v3840
      %v3937 = vadd.f32 %v3004, %v3843
      %v3938 = vadd.f32 %v3005, %v3848
      %v3939 = vadd.f32 %v3006, %v3851
      %v3940 = vadd.f32 %v3007, %v3856
      %v3941 = vadd.f32 %v3008, %v3859
      %v3942 = vadd.f32 %v3009, %v3864
      %v3943 = vadd.f32 %v3010, %v3867
      %v3944 = vadd.f32 %v3011, %v3872
      %v3945 = vadd.f32 %v3012, %v3875
      %v3946 = vadd.f32 %v3013, %v3880
      %v3947 = vadd.f32 %v3014, %v3883
      %v3948 = vadd.f32 %v3015, %v3888
      %v3949 = vadd.f32 %v3016, %v3891
      %v3950 = vadd.f32 %v3017, %v3896
      %v3951 = vadd.f32 %v3018, %v3899
      %v3952 = vadd.f32 %v3019, %v3904
      %v3953 = vadd.f32 %v3020, %v3907
      %v3954 = vadd.f32 %v3021, %v3912
      %v3955 = vadd.f32 %v3022, %v3915
      %v3956 = vadd.f32 %v3023, %v3920
      %v3957 = vadd.f32 %v3024, %v3923
      %v3958 = vld [vmem:[%s3028] sm:$0xc]
      %v3959 = vld [vmem:[%s3028 + $0xc] sm:$0xc]
      %v3960 = vld [vmem:[%s3028 + $0x18] sm:$0xc]
      %v3961 = vld [vmem:[%s3028 + $0x24] sm:$0xc]
      %v3962 = vld [vmem:[%s3028 + $0x30] sm:$0xc]
      %v3963 = vld [vmem:[%s3028 + $0x3c] sm:$0xc]
      %v3964 = vld [vmem:[%s3028 + $0x48] sm:$0xc]
      %v3965 = vld [vmem:[%s3028 + $0x54] sm:$0xc]
      %v3966 = vld [vmem:[%s3028 + $0x60] sm:$0xc]
      %v3967 = vld [vmem:[%s3028 + $0x6c] sm:$0xc]
      %v3968 = vld [vmem:[%s3028 + $0x78] sm:$0xc]
      %v3969 = vld [vmem:[%s3028 + $0x84] sm:$0xc]
      %v3970 = vld [vmem:[%s3028 + $0x90] sm:$0xc]
      %v3971 = vld [vmem:[%s3028 + $0x9c] sm:$0xc]
      %v3972 = vld [vmem:[%s3028 + $0xa8] sm:$0xc]
      %v3973 = vld [vmem:[%s3028 + $0xb4] sm:$0xc]
      %s3974 = sadd.s32 %s224, 1
      %s3975 = smul.u32 %s3974, 3
      %s3976 = smul.addr %s3975, 4
      %s3977 = scalar_lea.vmem %s211, %s3976
      %v3978 = vld [vmem:[%s3977] sm:$0xf]
      %v3979 = vld [vmem:[%s3977 + $0x4] sm:$0xf]
      %v3980 = vld [vmem:[%s3977 + $0x8] sm:$0x1]
      %v3981 = vld [vmem:[%s3977 + $0xc] sm:$0xf]
      %v3982 = vld [vmem:[%s3977 + $0x10] sm:$0xf]
      %v3983 = vld [vmem:[%s3977 + $0x14] sm:$0x1]
      %v3984 = vld [vmem:[%s3977 + $0x18] sm:$0xf]
      %v3985 = vld [vmem:[%s3977 + $0x1c] sm:$0xf]
      %v3986 = vld [vmem:[%s3977 + $0x20] sm:$0x1]
      %v3987 = vld [vmem:[%s3977 + $0x24] sm:$0xf]
      %v3988 = vld [vmem:[%s3977 + $0x28] sm:$0xf]
      %v3989 = vld [vmem:[%s3977 + $0x2c] sm:$0x1]
      %v3990 = vld [vmem:[%s3977 + $0x30] sm:$0xf]
      %v3991 = vld [vmem:[%s3977 + $0x34] sm:$0xf]
      %v3992 = vld [vmem:[%s3977 + $0x38] sm:$0x1]
      %v3993 = vld [vmem:[%s3977 + $0x3c] sm:$0xf]
      %v3994 = vld [vmem:[%s3977 + $0x40] sm:$0xf]
      %v3995 = vld [vmem:[%s3977 + $0x44] sm:$0x1]
      %v3996 = vld [vmem:[%s3977 + $0x48] sm:$0xf]
      %v3997 = vld [vmem:[%s3977 + $0x4c] sm:$0xf]
      %v3998 = vld [vmem:[%s3977 + $0x50] sm:$0x1]
      %v3999 = vld [vmem:[%s3977 + $0x54] sm:$0xf]
      %v4000 = vld [vmem:[%s3977 + $0x58] sm:$0xf]
      %v4001 = vld [vmem:[%s3977 + $0x5c] sm:$0x1]
      %v4002 = vld [vmem:[%s3977 + $0x60] sm:$0xf]
      %v4003 = vld [vmem:[%s3977 + $0x64] sm:$0xf]
      %v4004 = vld [vmem:[%s3977 + $0x68] sm:$0x1]
      %v4005 = vld [vmem:[%s3977 + $0x6c] sm:$0xf]
      %v4006 = vld [vmem:[%s3977 + $0x70] sm:$0xf]
      %v4007 = vld [vmem:[%s3977 + $0x74] sm:$0x1]
      %v4008 = vld [vmem:[%s3977 + $0x78] sm:$0xf]
      %v4009 = vld [vmem:[%s3977 + $0x7c] sm:$0xf]
      %v4010 = vld [vmem:[%s3977 + $0x80] sm:$0x1]
      %v4011 = vld [vmem:[%s3977 + $0x84] sm:$0xf]
      %v4012 = vld [vmem:[%s3977 + $0x88] sm:$0xf]
      %v4013 = vld [vmem:[%s3977 + $0x8c] sm:$0x1]
      %v4014 = vld [vmem:[%s3977 + $0x90] sm:$0xf]
      %v4015 = vld [vmem:[%s3977 + $0x94] sm:$0xf]
      %v4016 = vld [vmem:[%s3977 + $0x98] sm:$0x1]
      %v4017 = vld [vmem:[%s3977 + $0x9c] sm:$0xf]
      %v4018 = vld [vmem:[%s3977 + $0xa0] sm:$0xf]
      %v4019 = vld [vmem:[%s3977 + $0xa4] sm:$0x1]
      %v4020 = vld [vmem:[%s3977 + $0xa8] sm:$0xf]
      %v4021 = vld [vmem:[%s3977 + $0xac] sm:$0xf]
      %v4022 = vld [vmem:[%s3977 + $0xb0] sm:$0x1]
      %v4023 = vld [vmem:[%s3977 + $0xb4] sm:$0xf]
      %v4024 = vld [vmem:[%s3977 + $0xb8] sm:$0xf]
      %v4025 = vld [vmem:[%s3977 + $0xbc] sm:$0x1]
      %v4042 = vunpack.c.l.b16 %v3958
      %v4043 = vunpack.c.l.b16 %v3959
      %v4044 = vunpack.c.l.b16 %v3960
      %v4045 = vunpack.c.l.b16 %v3961
      %v4046 = vunpack.c.l.b16 %v3962
      %v4047 = vunpack.c.l.b16 %v3963
      %v4048 = vunpack.c.l.b16 %v3964
      %v4049 = vunpack.c.l.b16 %v3965
      %v4050 = vunpack.c.l.b16 %v3966
      %v4051 = vunpack.c.l.b16 %v3967
      %v4052 = vunpack.c.l.b16 %v3968
      %v4053 = vunpack.c.l.b16 %v3969
      %v4054 = vunpack.c.l.b16 %v3970
      %v4055 = vunpack.c.l.b16 %v3971
      %v4056 = vunpack.c.l.b16 %v3972
      %v4057 = vunpack.c.l.b16 %v3973
      %v4058 = vpack.c.b16 %v3142, %v4042
      %v4059 = vpack.c.b16 %v3145, %v4043
      %v4060 = vpack.c.b16 %v3148, %v4044
      %v4061 = vpack.c.b16 %v3151, %v4045
      %v4062 = vpack.c.b16 %v3154, %v4046
      %v4063 = vpack.c.b16 %v3157, %v4047
      %v4064 = vpack.c.b16 %v3160, %v4048
      %v4065 = vpack.c.b16 %v3163, %v4049
      %v4066 = vpack.c.b16 %v3166, %v4050
      %v4067 = vpack.c.b16 %v3169, %v4051
      %v4068 = vpack.c.b16 %v3172, %v4052
      %v4069 = vpack.c.b16 %v3175, %v4053
      %v4070 = vpack.c.b16 %v3178, %v4054
      %v4071 = vpack.c.b16 %v3181, %v4055
      %v4072 = vpack.c.b16 %v3184, %v4056
      %v4073 = vpack.c.b16 %v3187, %v4057
      %v4122 = vunpack.c.l.b16 %v3978
      %v4123 = vunpack.c.l.b16 %v3979
      %v4124 = vunpack.c.l.b16 %v3980
      %v4125 = vunpack.c.l.b16 %v3981
      %v4126 = vunpack.c.l.b16 %v3982
      %v4127 = vunpack.c.l.b16 %v3983
      %v4128 = vunpack.c.l.b16 %v3984
      %v4129 = vunpack.c.l.b16 %v3985
      %v4130 = vunpack.c.l.b16 %v3986
      %v4131 = vunpack.c.l.b16 %v3987
      %v4132 = vunpack.c.l.b16 %v3988
      %v4133 = vunpack.c.l.b16 %v3989
      %v4134 = vunpack.c.l.b16 %v3990
      %v4135 = vunpack.c.l.b16 %v3991
      %v4136 = vunpack.c.l.b16 %v3992
      %v4137 = vunpack.c.l.b16 %v3993
      %v4138 = vunpack.c.l.b16 %v3994
      %v4139 = vunpack.c.l.b16 %v3995
      %v4140 = vunpack.c.l.b16 %v3996
      %v4141 = vunpack.c.l.b16 %v3997
      %v4142 = vunpack.c.l.b16 %v3998
      %v4143 = vunpack.c.l.b16 %v3999
      %v4144 = vunpack.c.l.b16 %v4000
      %v4145 = vunpack.c.l.b16 %v4001
      %v4146 = vunpack.c.l.b16 %v4002
      %v4147 = vunpack.c.l.b16 %v4003
      %v4148 = vunpack.c.l.b16 %v4004
      %v4149 = vunpack.c.l.b16 %v4005
      %v4150 = vunpack.c.l.b16 %v4006
      %v4151 = vunpack.c.l.b16 %v4007
      %v4152 = vunpack.c.l.b16 %v4008
      %v4153 = vunpack.c.l.b16 %v4009
      %v4154 = vunpack.c.l.b16 %v4010
      %v4155 = vunpack.c.l.b16 %v4011
      %v4156 = vunpack.c.l.b16 %v4012
      %v4157 = vunpack.c.l.b16 %v4013
      %v4158 = vunpack.c.l.b16 %v4014
      %v4159 = vunpack.c.l.b16 %v4015
      %v4160 = vunpack.c.l.b16 %v4016
      %v4161 = vunpack.c.l.b16 %v4017
      %v4162 = vunpack.c.l.b16 %v4018
      %v4163 = vunpack.c.l.b16 %v4019
      %v4164 = vunpack.c.l.b16 %v4020
      %v4165 = vunpack.c.l.b16 %v4021
      %v4166 = vunpack.c.l.b16 %v4022
      %v4167 = vunpack.c.l.b16 %v4023
      %v4168 = vunpack.c.l.b16 %v4024
      %v4169 = vunpack.c.l.b16 %v4025
      %v4170 = vpack.c.b16 %v4123, %v4122
      %v4171 = vpack.c.b16 %v4124, %v4124
      %v4172 = vpack.c.b16 %v4126, %v4125
      %v4173 = vpack.c.b16 %v4127, %v4127
      %v4174 = vpack.c.b16 %v4129, %v4128
      %v4175 = vpack.c.b16 %v4130, %v4130
      %v4176 = vpack.c.b16 %v4132, %v4131
      %v4177 = vpack.c.b16 %v4133, %v4133
      %v4178 = vpack.c.b16 %v4135, %v4134
      %v4179 = vpack.c.b16 %v4136, %v4136
      %v4180 = vpack.c.b16 %v4138, %v4137
      %v4181 = vpack.c.b16 %v4139, %v4139
      %v4182 = vpack.c.b16 %v4141, %v4140
      %v4183 = vpack.c.b16 %v4142, %v4142
      %v4184 = vpack.c.b16 %v4144, %v4143
      %v4185 = vpack.c.b16 %v4145, %v4145
      %v4186 = vpack.c.b16 %v4147, %v4146
      %v4187 = vpack.c.b16 %v4148, %v4148
      %v4188 = vpack.c.b16 %v4150, %v4149
      %v4189 = vpack.c.b16 %v4151, %v4151
      %v4190 = vpack.c.b16 %v4153, %v4152
      %v4191 = vpack.c.b16 %v4154, %v4154
      %v4192 = vpack.c.b16 %v4156, %v4155
      %v4193 = vpack.c.b16 %v4157, %v4157
      %v4194 = vpack.c.b16 %v4159, %v4158
      %v4195 = vpack.c.b16 %v4160, %v4160
      %v4196 = vpack.c.b16 %v4162, %v4161
      %v4197 = vpack.c.b16 %v4163, %v4163
      %v4198 = vpack.c.b16 %v4165, %v4164
      %v4199 = vpack.c.b16 %v4166, %v4166
      %v4200 = vpack.c.b16 %v4168, %v4167
      %v4201 = vpack.c.b16 %v4169, %v4169
      %vm4202 = vsmask.f32 1280
      %v4204 = vshrl.u32 %v4170, 16
      %v4206 = vrot.slane %v4204, 6
      %v4207 = vshll.u32 %v4170, 16
      %v4209 = vrot.slane %v4207, 7
      %v4210 = vor.u32 %v4206, %v4209
      %v4212 = vshll.u32 %v4171, 16
      %v4214 = vrot.slane %v4212, 7
      %v4215 = vsel %vm4202, %v4210, %v4214
      %v4217 = vshrl.u32 %v4172, 16
      %v4219 = vrot.slane %v4217, 6
      %v4220 = vshll.u32 %v4172, 16
      %v4222 = vrot.slane %v4220, 7
      %v4223 = vor.u32 %v4219, %v4222
      %v4225 = vshll.u32 %v4173, 16
      %v4227 = vrot.slane %v4225, 7
      %v4228 = vsel %vm4202, %v4223, %v4227
      %v4230 = vshrl.u32 %v4174, 16
      %v4232 = vrot.slane %v4230, 6
      %v4233 = vshll.u32 %v4174, 16
      %v4235 = vrot.slane %v4233, 7
      %v4236 = vor.u32 %v4232, %v4235
      %v4238 = vshll.u32 %v4175, 16
      %v4240 = vrot.slane %v4238, 7
      %v4241 = vsel %vm4202, %v4236, %v4240
      %v4243 = vshrl.u32 %v4176, 16
      %v4245 = vrot.slane %v4243, 6
      %v4246 = vshll.u32 %v4176, 16
      %v4248 = vrot.slane %v4246, 7
      %v4249 = vor.u32 %v4245, %v4248
      %v4251 = vshll.u32 %v4177, 16
      %v4253 = vrot.slane %v4251, 7
      %v4254 = vsel %vm4202, %v4249, %v4253
      %v4256 = vshrl.u32 %v4178, 16
      %v4258 = vrot.slane %v4256, 6
      %v4259 = vshll.u32 %v4178, 16
      %v4261 = vrot.slane %v4259, 7
      %v4262 = vor.u32 %v4258, %v4261
      %v4264 = vshll.u32 %v4179, 16
      %v4266 = vrot.slane %v4264, 7
      %v4267 = vsel %vm4202, %v4262, %v4266
      %v4269 = vshrl.u32 %v4180, 16
      %v4271 = vrot.slane %v4269, 6
      %v4272 = vshll.u32 %v4180, 16
      %v4274 = vrot.slane %v4272, 7
      %v4275 = vor.u32 %v4271, %v4274
      %v4277 = vshll.u32 %v4181, 16
      %v4279 = vrot.slane %v4277, 7
      %v4280 = vsel %vm4202, %v4275, %v4279
      %v4282 = vshrl.u32 %v4182, 16
      %v4284 = vrot.slane %v4282, 6
      %v4285 = vshll.u32 %v4182, 16
      %v4287 = vrot.slane %v4285, 7
      %v4288 = vor.u32 %v4284, %v4287
      %v4290 = vshll.u32 %v4183, 16
      %v4292 = vrot.slane %v4290, 7
      %v4293 = vsel %vm4202, %v4288, %v4292
      %v4295 = vshrl.u32 %v4184, 16
      %v4297 = vrot.slane %v4295, 6
      %v4298 = vshll.u32 %v4184, 16
      %v4300 = vrot.slane %v4298, 7
      %v4301 = vor.u32 %v4297, %v4300
      %v4303 = vshll.u32 %v4185, 16
      %v4305 = vrot.slane %v4303, 7
      %v4306 = vsel %vm4202, %v4301, %v4305
      %v4308 = vshrl.u32 %v4186, 16
      %v4310 = vrot.slane %v4308, 6
      %v4311 = vshll.u32 %v4186, 16
      %v4313 = vrot.slane %v4311, 7
      %v4314 = vor.u32 %v4310, %v4313
      %v4316 = vshll.u32 %v4187, 16
      %v4318 = vrot.slane %v4316, 7
      %v4319 = vsel %vm4202, %v4314, %v4318
      %v4321 = vshrl.u32 %v4188, 16
      %v4323 = vrot.slane %v4321, 6
      %v4324 = vshll.u32 %v4188, 16
      %v4326 = vrot.slane %v4324, 7
      %v4327 = vor.u32 %v4323, %v4326
      %v4329 = vshll.u32 %v4189, 16
      %v4331 = vrot.slane %v4329, 7
      %v4332 = vsel %vm4202, %v4327, %v4331
      %v4334 = vshrl.u32 %v4190, 16
      %v4336 = vrot.slane %v4334, 6
      %v4337 = vshll.u32 %v4190, 16
      %v4339 = vrot.slane %v4337, 7
      %v4340 = vor.u32 %v4336, %v4339
      %v4342 = vshll.u32 %v4191, 16
      %v4344 = vrot.slane %v4342, 7
      %v4345 = vsel %vm4202, %v4340, %v4344
      %v4347 = vshrl.u32 %v4192, 16
      %v4349 = vrot.slane %v4347, 6
      %v4350 = vshll.u32 %v4192, 16
      %v4352 = vrot.slane %v4350, 7
      %v4353 = vor.u32 %v4349, %v4352
      %v4355 = vshll.u32 %v4193, 16
      %v4357 = vrot.slane %v4355, 7
      %v4358 = vsel %vm4202, %v4353, %v4357
      %v4360 = vshrl.u32 %v4194, 16
      %v4362 = vrot.slane %v4360, 6
      %v4363 = vshll.u32 %v4194, 16
      %v4365 = vrot.slane %v4363, 7
      %v4366 = vor.u32 %v4362, %v4365
      %v4368 = vshll.u32 %v4195, 16
      %v4370 = vrot.slane %v4368, 7
      %v4371 = vsel %vm4202, %v4366, %v4370
      %v4373 = vshrl.u32 %v4196, 16
      %v4375 = vrot.slane %v4373, 6
      %v4376 = vshll.u32 %v4196, 16
      %v4378 = vrot.slane %v4376, 7
      %v4379 = vor.u32 %v4375, %v4378
      %v4381 = vshll.u32 %v4197, 16
      %v4383 = vrot.slane %v4381, 7
      %v4384 = vsel %vm4202, %v4379, %v4383
      %v4386 = vshrl.u32 %v4198, 16
      %v4388 = vrot.slane %v4386, 6
      %v4389 = vshll.u32 %v4198, 16
      %v4391 = vrot.slane %v4389, 7
      %v4392 = vor.u32 %v4388, %v4391
      %v4394 = vshll.u32 %v4199, 16
      %v4396 = vrot.slane %v4394, 7
      %v4397 = vsel %vm4202, %v4392, %v4396
      %v4399 = vshrl.u32 %v4200, 16
      %v4401 = vrot.slane %v4399, 6
      %v4402 = vshll.u32 %v4200, 16
      %v4404 = vrot.slane %v4402, 7
      %v4405 = vor.u32 %v4401, %v4404
      %v4407 = vshll.u32 %v4201, 16
      %v4409 = vrot.slane %v4407, 7
      %v4410 = vsel %vm4202, %v4405, %v4409
      %v4411 = vrot.slane %v4058, 2
      %v4412 = vrot.slane %v3253, 2
      %v4413 = vsel %vm1164, %v4411, %v4412
      %v4414 = vrot.slane %v4210, 2
      %v4415 = vrot.slane %v4215, 2
      %v4416 = vsel %vm1164, %v4414, %v4415
      %v4417 = vrot.slane %v4059, 2
      %v4418 = vrot.slane %v3254, 2
      %v4419 = vsel %vm1164, %v4417, %v4418
      %v4420 = vrot.slane %v4223, 2
      %v4421 = vrot.slane %v4228, 2
      %v4422 = vsel %vm1164, %v4420, %v4421
      %v4423 = vrot.slane %v4060, 2
      %v4424 = vrot.slane %v3255, 2
      %v4425 = vsel %vm1164, %v4423, %v4424
      %v4426 = vrot.slane %v4236, 2
      %v4427 = vrot.slane %v4241, 2
      %v4428 = vsel %vm1164, %v4426, %v4427
      %v4429 = vrot.slane %v4061, 2
      %v4430 = vrot.slane %v3256, 2
      %v4431 = vsel %vm1164, %v4429, %v4430
      %v4432 = vrot.slane %v4249, 2
      %v4433 = vrot.slane %v4254, 2
      %v4434 = vsel %vm1164, %v4432, %v4433
      %v4435 = vrot.slane %v4062, 2
      %v4436 = vrot.slane %v3257, 2
      %v4437 = vsel %vm1164, %v4435, %v4436
      %v4438 = vrot.slane %v4262, 2
      %v4439 = vrot.slane %v4267, 2
      %v4440 = vsel %vm1164, %v4438, %v4439
      %v4441 = vrot.slane %v4063, 2
      %v4442 = vrot.slane %v3258, 2
      %v4443 = vsel %vm1164, %v4441, %v4442
      %v4444 = vrot.slane %v4275, 2
      %v4445 = vrot.slane %v4280, 2
      %v4446 = vsel %vm1164, %v4444, %v4445
      %v4447 = vrot.slane %v4064, 2
      %v4448 = vrot.slane %v3259, 2
      %v4449 = vsel %vm1164, %v4447, %v4448
      %v4450 = vrot.slane %v4288, 2
      %v4451 = vrot.slane %v4293, 2
      %v4452 = vsel %vm1164, %v4450, %v4451
      %v4453 = vrot.slane %v4065, 2
      %v4454 = vrot.slane %v3260, 2
      %v4455 = vsel %vm1164, %v4453, %v4454
      %v4456 = vrot.slane %v4301, 2
      %v4457 = vrot.slane %v4306, 2
      %v4458 = vsel %vm1164, %v4456, %v4457
      %v4459 = vrot.slane %v4066, 2
      %v4460 = vrot.slane %v3261, 2
      %v4461 = vsel %vm1164, %v4459, %v4460
      %v4462 = vrot.slane %v4314, 2
      %v4463 = vrot.slane %v4319, 2
      %v4464 = vsel %vm1164, %v4462, %v4463
      %v4465 = vrot.slane %v4067, 2
      %v4466 = vrot.slane %v3262, 2
      %v4467 = vsel %vm1164, %v4465, %v4466
      %v4468 = vrot.slane %v4327, 2
      %v4469 = vrot.slane %v4332, 2
      %v4470 = vsel %vm1164, %v4468, %v4469
      %v4471 = vrot.slane %v4068, 2
      %v4472 = vrot.slane %v3263, 2
      %v4473 = vsel %vm1164, %v4471, %v4472
      %v4474 = vrot.slane %v4340, 2
      %v4475 = vrot.slane %v4345, 2
      %v4476 = vsel %vm1164, %v4474, %v4475
      %v4477 = vrot.slane %v4069, 2
      %v4478 = vrot.slane %v3264, 2
      %v4479 = vsel %vm1164, %v4477, %v4478
      %v4480 = vrot.slane %v4353, 2
      %v4481 = vrot.slane %v4358, 2
      %v4482 = vsel %vm1164, %v4480, %v4481
      %v4483 = vrot.slane %v4070, 2
      %v4484 = vrot.slane %v3265, 2
      %v4485 = vsel %vm1164, %v4483, %v4484
      %v4486 = vrot.slane %v4366, 2
      %v4487 = vrot.slane %v4371, 2
      %v4488 = vsel %vm1164, %v4486, %v4487
      %v4489 = vrot.slane %v4071, 2
      %v4490 = vrot.slane %v3266, 2
      %v4491 = vsel %vm1164, %v4489, %v4490
      %v4492 = vrot.slane %v4379, 2
      %v4493 = vrot.slane %v4384, 2
      %v4494 = vsel %vm1164, %v4492, %v4493
      %v4495 = vrot.slane %v4072, 2
      %v4496 = vrot.slane %v3267, 2
      %v4497 = vsel %vm1164, %v4495, %v4496
      %v4498 = vrot.slane %v4392, 2
      %v4499 = vrot.slane %v4397, 2
      %v4500 = vsel %vm1164, %v4498, %v4499
      %v4501 = vrot.slane %v4073, 2
      %v4502 = vrot.slane %v3268, 2
      %v4503 = vsel %vm1164, %v4501, %v4502
      %v4504 = vrot.slane %v4405, 2
      %v4505 = vrot.slane %v4410, 2
      %v4506 = vsel %vm1164, %v4504, %v4505
      %v4539 = vld [vmem:[%s1 + $0x200] sm:$0xf]
      %v4540 = vld [vmem:[%s1 + $0x204] sm:$0xf]
      %v4541 = vld [vmem:[%s1 + $0x208] sm:$0xf]
      %v4542 = vld [vmem:[%s1 + $0x20c] sm:$0xf]
      %v4543 = vld [vmem:[%s1 + $0x210] sm:$0xf]
      %v4544 = vld [vmem:[%s1 + $0x214] sm:$0xf]
      %v4545 = vld [vmem:[%s1 + $0x218] sm:$0xf]
      %v4546 = vld [vmem:[%s1 + $0x21c] sm:$0xf]
      %v4547 = vld [vmem:[%s1 + $0x220] sm:$0xf]
      %v4548 = vld [vmem:[%s1 + $0x224] sm:$0xf]
      %v4549 = vld [vmem:[%s1 + $0x228] sm:$0xf]
      %v4550 = vld [vmem:[%s1 + $0x22c] sm:$0xf]
      %v4551 = vld [vmem:[%s1 + $0x230] sm:$0xf]
      %v4552 = vld [vmem:[%s1 + $0x234] sm:$0xf]
      %v4553 = vld [vmem:[%s1 + $0x238] sm:$0xf]
      %v4554 = vld [vmem:[%s1 + $0x23c] sm:$0xf]
      %v4555 = vld [vmem:[%s1 + $0x240] sm:$0xf]
      %v4556 = vld [vmem:[%s1 + $0x244] sm:$0xf]
      %v4557 = vld [vmem:[%s1 + $0x248] sm:$0xf]
      %v4558 = vld [vmem:[%s1 + $0x24c] sm:$0xf]
      %v4559 = vld [vmem:[%s1 + $0x250] sm:$0xf]
      %v4560 = vld [vmem:[%s1 + $0x254] sm:$0xf]
      %v4561 = vld [vmem:[%s1 + $0x258] sm:$0xf]
      %v4562 = vld [vmem:[%s1 + $0x25c] sm:$0xf]
      %v4563 = vld [vmem:[%s1 + $0x260] sm:$0xf]
      %v4564 = vld [vmem:[%s1 + $0x264] sm:$0xf]
      %v4565 = vld [vmem:[%s1 + $0x268] sm:$0xf]
      %v4566 = vld [vmem:[%s1 + $0x26c] sm:$0xf]
      %v4567 = vld [vmem:[%s1 + $0x270] sm:$0xf]
      %v4568 = vld [vmem:[%s1 + $0x274] sm:$0xf]
      %v4569 = vld [vmem:[%s1 + $0x278] sm:$0xf]
      %v4570 = vld [vmem:[%s1 + $0x27c] sm:$0xf]
      %v4603 = vunpack.c.l.b16 %v4539
      %v4604 = vunpack.c.l.b16 %v4540
      %v4605 = vunpack.c.l.b16 %v4541
      %v4606 = vunpack.c.l.b16 %v4542
      %v4607 = vunpack.c.l.b16 %v4543
      %v4608 = vunpack.c.l.b16 %v4544
      %v4609 = vunpack.c.l.b16 %v4545
      %v4610 = vunpack.c.l.b16 %v4546
      %v4611 = vunpack.c.l.b16 %v4547
      %v4612 = vunpack.c.l.b16 %v4548
      %v4613 = vunpack.c.l.b16 %v4549
      %v4614 = vunpack.c.l.b16 %v4550
      %v4615 = vunpack.c.l.b16 %v4551
      %v4616 = vunpack.c.l.b16 %v4552
      %v4617 = vunpack.c.l.b16 %v4553
      %v4618 = vunpack.c.l.b16 %v4554
      %v4619 = vunpack.c.l.b16 %v4555
      %v4620 = vunpack.c.l.b16 %v4556
      %v4621 = vunpack.c.l.b16 %v4557
      %v4622 = vunpack.c.l.b16 %v4558
      %v4623 = vunpack.c.l.b16 %v4559
      %v4624 = vunpack.c.l.b16 %v4560
      %v4625 = vunpack.c.l.b16 %v4561
      %v4626 = vunpack.c.l.b16 %v4562
      %v4627 = vunpack.c.l.b16 %v4563
      %v4628 = vunpack.c.l.b16 %v4564
      %v4629 = vunpack.c.l.b16 %v4565
      %v4630 = vunpack.c.l.b16 %v4566
      %v4631 = vunpack.c.l.b16 %v4567
      %v4632 = vunpack.c.l.b16 %v4568
      %v4633 = vunpack.c.l.b16 %v4569
      %v4634 = vunpack.c.l.b16 %v4570
      %v4635 = vpack.c.b16 %v4604, %v4603
      %v4636 = vpack.c.b16 %v4606, %v4605
      %v4637 = vpack.c.b16 %v4608, %v4607
      %v4638 = vpack.c.b16 %v4610, %v4609
      %v4639 = vpack.c.b16 %v4612, %v4611
      %v4640 = vpack.c.b16 %v4614, %v4613
      %v4641 = vpack.c.b16 %v4616, %v4615
      %v4642 = vpack.c.b16 %v4618, %v4617
      %v4643 = vpack.c.b16 %v4620, %v4619
      %v4644 = vpack.c.b16 %v4622, %v4621
      %v4645 = vpack.c.b16 %v4624, %v4623
      %v4646 = vpack.c.b16 %v4626, %v4625
      %v4647 = vpack.c.b16 %v4628, %v4627
      %v4648 = vpack.c.b16 %v4630, %v4629
      %v4649 = vpack.c.b16 %v4632, %v4631
      %v4650 = vpack.c.b16 %v4634, %v4633
      %4667 = vmatprep.subr.bf16.mxu0 0
      %4668 = vmatpush1.bf16.msra.mxu0 %v4635
      %4669 = vmatprep.subr.bf16.mxu0 0
      %4670 = vmatpush1.bf16.msra.mxu0 %v4636
      %4671 = vmatprep.subr.bf16.mxu0 0
      %4672 = vmatpush1.bf16.msra.mxu0 %v4637
      %4673 = vmatprep.subr.bf16.mxu0 0
      %4674 = vmatpush1.bf16.msra.mxu0 %v4638
      %4675 = vmatprep.subr.bf16.mxu0 0
      %4676 = vmatpush1.bf16.msra.mxu0 %v4639
      %4677 = vmatprep.subr.bf16.mxu0 0
      %4678 = vmatpush1.bf16.msra.mxu0 %v4640
      %4679 = vmatprep.subr.bf16.mxu0 0
      %4680 = vmatpush1.bf16.msra.mxu0 %v4641
      %4681 = vmatprep.subr.bf16.mxu0 0
      %4682 = vmatpush1.bf16.msra.mxu0 %v4642
      %4683 = vmatprep.subr.bf16.mxu0 0
      %4684 = vmatpush1.bf16.msra.mxu0 %v4643
      %4685 = vmatprep.subr.bf16.mxu0 0
      %4686 = vmatpush1.bf16.msra.mxu0 %v4644
      %4687 = vmatprep.subr.bf16.mxu0 0
      %4688 = vmatpush1.bf16.msra.mxu0 %v4645
      %4689 = vmatprep.subr.bf16.mxu0 0
      %4690 = vmatpush1.bf16.msra.mxu0 %v4646
      %4691 = vmatprep.subr.bf16.mxu0 0
      %4692 = vmatpush1.bf16.msra.mxu0 %v4647
      %4693 = vmatprep.subr.bf16.mxu0 0
      %4694 = vmatpush1.bf16.msra.mxu0 %v4648
      %4695 = vmatprep.subr.bf16.mxu0 0
      %4696 = vmatpush1.bf16.msra.mxu0 %v4649
      %4697 = vmatprep.subr.bf16.mxu0 0
      %4698 = vmatpush1.bf16.msra.mxu0 %v4650
      %4699 = vmatprep.mubr.bf16.mxu0 %v4416
      %4700 = vmatmul.mubr.bf16.gmra.mrb[0].mxu0 %v4413
      %v4701 = vpop.f32.mrb[0].mxu0
      %v4702 = vadd.f32 0.0, %v4701
      %v4703 = vpop.f32.mrb[0].mxu0
      %v4704 = vpop.f32.mrb[0].mxu0
      %v4705 = vadd.f32 0.0, %v4704
      %v4706 = vpop.f32.mrb[0].mxu0
      %4707 = vmatprep.mubr.bf16.mxu0 %v4422
      %4708 = vmatmul.mubr.bf16.gmra.mrb[0].mxu0 %v4419
      %v4709 = vpop.f32.mrb[0].mxu0
      %v4710 = vadd.f32 0.0, %v4709
      %v4711 = vpop.f32.mrb[0].mxu0
      %v4712 = vpop.f32.mrb[0].mxu0
      %v4713 = vadd.f32 0.0, %v4712
      %v4714 = vpop.f32.mrb[0].mxu0
      %4715 = vmatprep.mubr.bf16.mxu0 %v4428
      %4716 = vmatmul.mubr.bf16.gmra.mrb[0].mxu0 %v4425
      %v4717 = vpop.f32.mrb[0].mxu0
      %v4718 = vadd.f32 0.0, %v4717
      %v4719 = vpop.f32.mrb[0].mxu0
      %v4720 = vpop.f32.mrb[0].mxu0
      %v4721 = vadd.f32 0.0, %v4720
      %v4722 = vpop.f32.mrb[0].mxu0
      %4723 = vmatprep.mubr.bf16.mxu0 %v4434
      %4724 = vmatmul.mubr.bf16.gmra.mrb[0].mxu0 %v4431
      %v4725 = vpop.f32.mrb[0].mxu0
      %v4726 = vadd.f32 0.0, %v4725
      %v4727 = vpop.f32.mrb[0].mxu0
      %v4728 = vpop.f32.mrb[0].mxu0
      %v4729 = vadd.f32 0.0, %v4728
      %v4730 = vpop.f32.mrb[0].mxu0
      %4731 = vmatprep.mubr.bf16.mxu0 %v4440
      %4732 = vmatmul.mubr.bf16.gmra.mrb[0].mxu0 %v4437
      %v4733 = vpop.f32.mrb[0].mxu0
      %v4734 = vadd.f32 0.0, %v4733
      %v4735 = vpop.f32.mrb[0].mxu0
      %v4736 = vpop.f32.mrb[0].mxu0
      %v4737 = vadd.f32 0.0, %v4736
      %v4738 = vpop.f32.mrb[0].mxu0
      %4739 = vmatprep.mubr.bf16.mxu0 %v4446
      %4740 = vmatmul.mubr.bf16.gmra.mrb[0].mxu0 %v4443
      %v4741 = vpop.f32.mrb[0].mxu0
      %v4742 = vadd.f32 0.0, %v4741
      %v4743 = vpop.f32.mrb[0].mxu0
      %v4744 = vpop.f32.mrb[0].mxu0
      %v4745 = vadd.f32 0.0, %v4744
      %v4746 = vpop.f32.mrb[0].mxu0
      %4747 = vmatprep.mubr.bf16.mxu0 %v4452
      %4748 = vmatmul.mubr.bf16.gmra.mrb[0].mxu0 %v4449
      %v4749 = vpop.f32.mrb[0].mxu0
      %v4750 = vadd.f32 0.0, %v4749
      %v4751 = vpop.f32.mrb[0].mxu0
      %v4752 = vpop.f32.mrb[0].mxu0
      %v4753 = vadd.f32 0.0, %v4752
      %v4754 = vpop.f32.mrb[0].mxu0
      %4755 = vmatprep.mubr.bf16.mxu0 %v4458
      %4756 = vmatmul.mubr.bf16.gmra.mrb[0].mxu0 %v4455
      %v4757 = vpop.f32.mrb[0].mxu0
      %v4758 = vadd.f32 0.0, %v4757
      %v4759 = vpop.f32.mrb[0].mxu0
      %v4760 = vpop.f32.mrb[0].mxu0
      %v4761 = vadd.f32 0.0, %v4760
      %v4762 = vpop.f32.mrb[0].mxu0
      %4763 = vmatprep.mubr.bf16.mxu0 %v4464
      %4764 = vmatmul.mubr.bf16.gmra.mrb[0].mxu0 %v4461
      %v4765 = vpop.f32.mrb[0].mxu0
      %v4766 = vadd.f32 0.0, %v4765
      %v4767 = vpop.f32.mrb[0].mxu0
      %v4768 = vpop.f32.mrb[0].mxu0
      %v4769 = vadd.f32 0.0, %v4768
      %v4770 = vpop.f32.mrb[0].mxu0
      %4771 = vmatprep.mubr.bf16.mxu0 %v4470
      %4772 = vmatmul.mubr.bf16.gmra.mrb[0].mxu0 %v4467
      %v4773 = vpop.f32.mrb[0].mxu0
      %v4774 = vadd.f32 0.0, %v4773
      %v4775 = vpop.f32.mrb[0].mxu0
      %v4776 = vpop.f32.mrb[0].mxu0
      %v4777 = vadd.f32 0.0, %v4776
      %v4778 = vpop.f32.mrb[0].mxu0
      %4779 = vmatprep.mubr.bf16.mxu0 %v4476
      %4780 = vmatmul.mubr.bf16.gmra.mrb[0].mxu0 %v4473
      %v4781 = vpop.f32.mrb[0].mxu0
      %v4782 = vadd.f32 0.0, %v4781
      %v4783 = vpop.f32.mrb[0].mxu0
      %v4784 = vpop.f32.mrb[0].mxu0
      %v4785 = vadd.f32 0.0, %v4784
      %v4786 = vpop.f32.mrb[0].mxu0
      %4787 = vmatprep.mubr.bf16.mxu0 %v4482
      %4788 = vmatmul.mubr.bf16.gmra.mrb[0].mxu0 %v4479
      %v4789 = vpop.f32.mrb[0].mxu0
      %v4790 = vadd.f32 0.0, %v4789
      %v4791 = vpop.f32.mrb[0].mxu0
      %v4792 = vpop.f32.mrb[0].mxu0
      %v4793 = vadd.f32 0.0, %v4792
      %v4794 = vpop.f32.mrb[0].mxu0
      %4795 = vmatprep.mubr.bf16.mxu0 %v4488
      %4796 = vmatmul.mubr.bf16.gmra.mrb[0].mxu0 %v4485
      %v4797 = vpop.f32.mrb[0].mxu0
      %v4798 = vadd.f32 0.0, %v4797
      %v4799 = vpop.f32.mrb[0].mxu0
      %v4800 = vpop.f32.mrb[0].mxu0
      %v4801 = vadd.f32 0.0, %v4800
      %v4802 = vpop.f32.mrb[0].mxu0
      %4803 = vmatprep.mubr.bf16.mxu0 %v4494
      %4804 = vmatmul.mubr.bf16.gmra.mrb[0].mxu0 %v4491
      %v4805 = vpop.f32.mrb[0].mxu0
      %v4806 = vadd.f32 0.0, %v4805
      %v4807 = vpop.f32.mrb[0].mxu0
      %v4808 = vpop.f32.mrb[0].mxu0
      %v4809 = vadd.f32 0.0, %v4808
      %v4810 = vpop.f32.mrb[0].mxu0
      %4811 = vmatprep.mubr.bf16.mxu0 %v4500
      %4812 = vmatmul.mubr.bf16.gmra.mrb[0].mxu0 %v4497
      %v4813 = vpop.f32.mrb[0].mxu0
      %v4814 = vadd.f32 0.0, %v4813
      %v4815 = vpop.f32.mrb[0].mxu0
      %v4816 = vpop.f32.mrb[0].mxu0
      %v4817 = vadd.f32 0.0, %v4816
      %v4818 = vpop.f32.mrb[0].mxu0
      %4819 = vmatprep.mubr.bf16.mxu0 %v4506
      %4820 = vmatmul.mubr.bf16.gmra.mrb[0].mxu0 %v4503
      %v4821 = vpop.f32.mrb[0].mxu0
      %v4822 = vadd.f32 0.0, %v4821
      %v4823 = vpop.f32.mrb[0].mxu0
      %v4824 = vpop.f32.mrb[0].mxu0
      %v4825 = vadd.f32 0.0, %v4824
      %v4826 = vpop.f32.mrb[0].mxu0
      %4827 = vdwg.mxu0
      %v4828 = vadd.f32 %v3926, %v4702
      %v4829 = vadd.f32 %v3927, %v4705
      %v4830 = vadd.f32 %v3928, %v4710
      %v4831 = vadd.f32 %v3929, %v4713
      %v4832 = vadd.f32 %v3930, %v4718
      %v4833 = vadd.f32 %v3931, %v4721
      %v4834 = vadd.f32 %v3932, %v4726
      %v4835 = vadd.f32 %v3933, %v4729
      %v4836 = vadd.f32 %v3934, %v4734
      %v4837 = vadd.f32 %v3935, %v4737
      %v4838 = vadd.f32 %v3936, %v4742
      %v4839 = vadd.f32 %v3937, %v4745
      %v4840 = vadd.f32 %v3938, %v4750
      %v4841 = vadd.f32 %v3939, %v4753
      %v4842 = vadd.f32 %v3940, %v4758
      %v4843 = vadd.f32 %v3941, %v4761
      %v4844 = vadd.f32 %v3942, %v4766
      %v4845 = vadd.f32 %v3943, %v4769
      %v4846 = vadd.f32 %v3944, %v4774
      %v4847 = vadd.f32 %v3945, %v4777
      %v4848 = vadd.f32 %v3946, %v4782
      %v4849 = vadd.f32 %v3947, %v4785
      %v4850 = vadd.f32 %v3948, %v4790
      %v4851 = vadd.f32 %v3949, %v4793
      %v4852 = vadd.f32 %v3950, %v4798
      %v4853 = vadd.f32 %v3951, %v4801
      %v4854 = vadd.f32 %v3952, %v4806
      %v4855 = vadd.f32 %v3953, %v4809
      %v4856 = vadd.f32 %v3954, %v4814
      %v4857 = vadd.f32 %v3955, %v4817
      %v4858 = vadd.f32 %v3956, %v4822
      %v4859 = vadd.f32 %v3957, %v4825
      %v4860 = vld [vmem:[%s3977] sm:$0xe]
      %v4861 = vld [vmem:[%s3977 + $0x8] sm:$0x3]
      %v4862 = vld [vmem:[%s3977 + $0xc] sm:$0xe]
      %v4863 = vld [vmem:[%s3977 + $0x14] sm:$0x3]
      %v4864 = vld [vmem:[%s3977 + $0x18] sm:$0xe]
      %v4865 = vld [vmem:[%s3977 + $0x20] sm:$0x3]
      %v4866 = vld [vmem:[%s3977 + $0x24] sm:$0xe]
      %v4867 = vld [vmem:[%s3977 + $0x2c] sm:$0x3]
      %v4868 = vld [vmem:[%s3977 + $0x30] sm:$0xe]
      %v4869 = vld [vmem:[%s3977 + $0x38] sm:$0x3]
      %v4870 = vld [vmem:[%s3977 + $0x3c] sm:$0xe]
      %v4871 = vld [vmem:[%s3977 + $0x44] sm:$0x3]
      %v4872 = vld [vmem:[%s3977 + $0x48] sm:$0xe]
      %v4873 = vld [vmem:[%s3977 + $0x50] sm:$0x3]
      %v4874 = vld [vmem:[%s3977 + $0x54] sm:$0xe]
      %v4875 = vld [vmem:[%s3977 + $0x5c] sm:$0x3]
      %v4876 = vld [vmem:[%s3977 + $0x60] sm:$0xe]
      %v4877 = vld [vmem:[%s3977 + $0x68] sm:$0x3]
      %v4878 = vld [vmem:[%s3977 + $0x6c] sm:$0xe]
      %v4879 = vld [vmem:[%s3977 + $0x74] sm:$0x3]
      %v4880 = vld [vmem:[%s3977 + $0x78] sm:$0xe]
      %v4881 = vld [vmem:[%s3977 + $0x80] sm:$0x3]
      %v4882 = vld [vmem:[%s3977 + $0x84] sm:$0xe]
      %v4883 = vld [vmem:[%s3977 + $0x8c] sm:$0x3]
      %v4884 = vld [vmem:[%s3977 + $0x90] sm:$0xe]
      %v4885 = vld [vmem:[%s3977 + $0x98] sm:$0x3]
      %v4886 = vld [vmem:[%s3977 + $0x9c] sm:$0xe]
      %v4887 = vld [vmem:[%s3977 + $0xa4] sm:$0x3]
      %v4888 = vld [vmem:[%s3977 + $0xa8] sm:$0xe]
      %v4889 = vld [vmem:[%s3977 + $0xb0] sm:$0x3]
      %v4890 = vld [vmem:[%s3977 + $0xb4] sm:$0xe]
      %v4891 = vld [vmem:[%s3977 + $0xbc] sm:$0x3]
      %v4892 = vld [vmem:[%s3977] sm:$0xc]
      %v4893 = vld [vmem:[%s3977 + $0x8] sm:$0x7]
      %v4894 = vld [vmem:[%s3977 + $0xc] sm:$0xc]
      %v4895 = vld [vmem:[%s3977 + $0x14] sm:$0x7]
      %v4896 = vld [vmem:[%s3977 + $0x18] sm:$0xc]
      %v4897 = vld [vmem:[%s3977 + $0x20] sm:$0x7]
      %v4898 = vld [vmem:[%s3977 + $0x24] sm:$0xc]
      %v4899 = vld [vmem:[%s3977 + $0x2c] sm:$0x7]
      %v4900 = vld [vmem:[%s3977 + $0x30] sm:$0xc]
      %v4901 = vld [vmem:[%s3977 + $0x38] sm:$0x7]
      %v4902 = vld [vmem:[%s3977 + $0x3c] sm:$0xc]
      %v4903 = vld [vmem:[%s3977 + $0x44] sm:$0x7]
      %v4904 = vld [vmem:[%s3977 + $0x48] sm:$0xc]
      %v4905 = vld [vmem:[%s3977 + $0x50] sm:$0x7]
      %v4906 = vld [vmem:[%s3977 + $0x54] sm:$0xc]
      %v4907 = vld [vmem:[%s3977 + $0x5c] sm:$0x7]
      %v4908 = vld [vmem:[%s3977 + $0x60] sm:$0xc]
      %v4909 = vld [vmem:[%s3977 + $0x68] sm:$0x7]
      %v4910 = vld [vmem:[%s3977 + $0x6c] sm:$0xc]
      %v4911 = vld [vmem:[%s3977 + $0x74] sm:$0x7]
      %v4912 = vld [vmem:[%s3977 + $0x78] sm:$0xc]
      %v4913 = vld [vmem:[%s3977 + $0x80] sm:$0x7]
      %v4914 = vld [vmem:[%s3977 + $0x84] sm:$0xc]
      %v4915 = vld [vmem:[%s3977 + $0x8c] sm:$0x7]
      %v4916 = vld [vmem:[%s3977 + $0x90] sm:$0xc]
      %v4917 = vld [vmem:[%s3977 + $0x98] sm:$0x7]
      %v4918 = vld [vmem:[%s3977 + $0x9c] sm:$0xc]
      %v4919 = vld [vmem:[%s3977 + $0xa4] sm:$0x7]
      %v4920 = vld [vmem:[%s3977 + $0xa8] sm:$0xc]
      %v4921 = vld [vmem:[%s3977 + $0xb0] sm:$0x7]
      %v4922 = vld [vmem:[%s3977 + $0xb4] sm:$0xc]
      %v4923 = vld [vmem:[%s3977 + $0xbc] sm:$0x7]
      %v4956 = vunpack.c.l.b16 %v4860
      %v4957 = vunpack.c.l.b16 %v4861
      %v4958 = vunpack.c.l.b16 %v4862
      %v4959 = vunpack.c.l.b16 %v4863
      %v4960 = vunpack.c.l.b16 %v4864
      %v4961 = vunpack.c.l.b16 %v4865
      %v4962 = vunpack.c.l.b16 %v4866
      %v4963 = vunpack.c.l.b16 %v4867
      %v4964 = vunpack.c.l.b16 %v4868
      %v4965 = vunpack.c.l.b16 %v4869
      %v4966 = vunpack.c.l.b16 %v4870
      %v4967 = vunpack.c.l.b16 %v4871
      %v4968 = vunpack.c.l.b16 %v4872
      %v4969 = vunpack.c.l.b16 %v4873
      %v4970 = vunpack.c.l.b16 %v4874
      %v4971 = vunpack.c.l.b16 %v4875
      %v4972 = vunpack.c.l.b16 %v4876
      %v4973 = vunpack.c.l.b16 %v4877
      %v4974 = vunpack.c.l.b16 %v4878
      %v4975 = vunpack.c.l.b16 %v4879
      %v4976 = vunpack.c.l.b16 %v4880
      %v4977 = vunpack.c.l.b16 %v4881
      %v4978 = vunpack.c.l.b16 %v4882
      %v4979 = vunpack.c.l.b16 %v4883
      %v4980 = vunpack.c.l.b16 %v4884
      %v4981 = vunpack.c.l.b16 %v4885
      %v4982 = vunpack.c.l.b16 %v4886
      %v4983 = vunpack.c.l.b16 %v4887
      %v4984 = vunpack.c.l.b16 %v4888
      %v4985 = vunpack.c.l.b16 %v4889
      %v4986 = vunpack.c.l.b16 %v4890
      %v4987 = vunpack.c.l.b16 %v4891
      %v4988 = vpack.c.b16 %v4123, %v4956
      %v4989 = vpack.c.b16 %v4957, %v4957
      %v4990 = vpack.c.b16 %v4126, %v4958
      %v4991 = vpack.c.b16 %v4959, %v4959
      %v4992 = vpack.c.b16 %v4129, %v4960
      %v4993 = vpack.c.b16 %v4961, %v4961
      %v4994 = vpack.c.b16 %v4132, %v4962
      %v4995 = vpack.c.b16 %v4963, %v4963
      %v4996 = vpack.c.b16 %v4135, %v4964
      %v4997 = vpack.c.b16 %v4965, %v4965
      %v4998 = vpack.c.b16 %v4138, %v4966
      %v4999 = vpack.c.b16 %v4967, %v4967
      %v5000 = vpack.c.b16 %v4141, %v4968
      %v5001 = vpack.c.b16 %v4969, %v4969
      %v5002 = vpack.c.b16 %v4144, %v4970
      %v5003 = vpack.c.b16 %v4971, %v4971
      %v5004 = vpack.c.b16 %v4147, %v4972
      %v5005 = vpack.c.b16 %v4973, %v4973
      %v5006 = vpack.c.b16 %v4150, %v4974
      %v5007 = vpack.c.b16 %v4975, %v4975
      %v5008 = vpack.c.b16 %v4153, %v4976
      %v5009 = vpack.c.b16 %v4977, %v4977
      %v5010 = vpack.c.b16 %v4156, %v4978
      %v5011 = vpack.c.b16 %v4979, %v4979
      %v5012 = vpack.c.b16 %v4159, %v4980
      %v5013 = vpack.c.b16 %v4981, %v4981
      %v5014 = vpack.c.b16 %v4162, %v4982
      %v5015 = vpack.c.b16 %v4983, %v4983
      %v5016 = vpack.c.b16 %v4165, %v4984
      %v5017 = vpack.c.b16 %v4985, %v4985
      %v5018 = vpack.c.b16 %v4168, %v4986
      %v5019 = vpack.c.b16 %v4987, %v4987
      %v5052 = vunpack.c.l.b16 %v4892
      %v5053 = vunpack.c.l.b16 %v4893
      %v5054 = vunpack.c.l.b16 %v4894
      %v5055 = vunpack.c.l.b16 %v4895
      %v5056 = vunpack.c.l.b16 %v4896
      %v5057 = vunpack.c.l.b16 %v4897
      %v5058 = vunpack.c.l.b16 %v4898
      %v5059 = vunpack.c.l.b16 %v4899
      %v5060 = vunpack.c.l.b16 %v4900
      %v5061 = vunpack.c.l.b16 %v4901
      %v5062 = vunpack.c.l.b16 %v4902
      %v5063 = vunpack.c.l.b16 %v4903
      %v5064 = vunpack.c.l.b16 %v4904
      %v5065 = vunpack.c.l.b16 %v4905
      %v5066 = vunpack.c.l.b16 %v4906
      %v5067 = vunpack.c.l.b16 %v4907
      %v5068 = vunpack.c.l.b16 %v4908
      %v5069 = vunpack.c.l.b16 %v4909
      %v5070 = vunpack.c.l.b16 %v4910
      %v5071 = vunpack.c.l.b16 %v4911
      %v5072 = vunpack.c.l.b16 %v4912
      %v5073 = vunpack.c.l.b16 %v4913
      %v5074 = vunpack.c.l.b16 %v4914
      %v5075 = vunpack.c.l.b16 %v4915
      %v5076 = vunpack.c.l.b16 %v4916
      %v5077 = vunpack.c.l.b16 %v4917
      %v5078 = vunpack.c.l.b16 %v4918
      %v5079 = vunpack.c.l.b16 %v4919
      %v5080 = vunpack.c.l.b16 %v4920
      %v5081 = vunpack.c.l.b16 %v4921
      %v5082 = vunpack.c.l.b16 %v4922
      %v5083 = vunpack.c.l.b16 %v4923
      %v5084 = vpack.c.b16 %v4123, %v5052
      %v5085 = vpack.c.b16 %v5053, %v5053
      %v5086 = vpack.c.b16 %v4126, %v5054
      %v5087 = vpack.c.b16 %v5055, %v5055
      %v5088 = vpack.c.b16 %v4129, %v5056
      %v5089 = vpack.c.b16 %v5057, %v5057
      %v5090 = vpack.c.b16 %v4132, %v5058
      %v5091 = vpack.c.b16 %v5059, %v5059
      %v5092 = vpack.c.b16 %v4135, %v5060
      %v5093 = vpack.c.b16 %v5061, %v5061
      %v5094 = vpack.c.b16 %v4138, %v5062
      %v5095 = vpack.c.b16 %v5063, %v5063
      %v5096 = vpack.c.b16 %v4141, %v5064
      %v5097 = vpack.c.b16 %v5065, %v5065
      %v5098 = vpack.c.b16 %v4144, %v5066
      %v5099 = vpack.c.b16 %v5067, %v5067
      %v5100 = vpack.c.b16 %v4147, %v5068
      %v5101 = vpack.c.b16 %v5069, %v5069
      %v5102 = vpack.c.b16 %v4150, %v5070
      %v5103 = vpack.c.b16 %v5071, %v5071
      %v5104 = vpack.c.b16 %v4153, %v5072
      %v5105 = vpack.c.b16 %v5073, %v5073
      %v5106 = vpack.c.b16 %v4156, %v5074
      %v5107 = vpack.c.b16 %v5075, %v5075
      %v5108 = vpack.c.b16 %v4159, %v5076
      %v5109 = vpack.c.b16 %v5077, %v5077
      %v5110 = vpack.c.b16 %v4162, %v5078
      %v5111 = vpack.c.b16 %v5079, %v5079
      %v5112 = vpack.c.b16 %v4165, %v5080
      %v5113 = vpack.c.b16 %v5081, %v5081
      %v5114 = vpack.c.b16 %v4168, %v5082
      %v5115 = vpack.c.b16 %v5083, %v5083
      %v5116 = vrot.slane %v5084, 1
      %v5117 = vrot.slane %v5085, 1
      %v5118 = vsel %vm710, %v5116, %v5117
      %v5119 = vrot.slane %v5086, 1
      %v5120 = vrot.slane %v5087, 1
      %v5121 = vsel %vm710, %v5119, %v5120
      %v5122 = vrot.slane %v5088, 1
      %v5123 = vrot.slane %v5089, 1
      %v5124 = vsel %vm710, %v5122, %v5123
      %v5125 = vrot.slane %v5090, 1
      %v5126 = vrot.slane %v5091, 1
      %v5127 = vsel %vm710, %v5125, %v5126
      %v5128 = vrot.slane %v5092, 1
      %v5129 = vrot.slane %v5093, 1
      %v5130 = vsel %vm710, %v5128, %v5129
      %v5131 = vrot.slane %v5094, 1
      %v5132 = vrot.slane %v5095, 1
      %v5133 = vsel %vm710, %v5131, %v5132
      %v5134 = vrot.slane %v5096, 1
      %v5135 = vrot.slane %v5097, 1
      %v5136 = vsel %vm710, %v5134, %v5135
      %v5137 = vrot.slane %v5098, 1
      %v5138 = vrot.slane %v5099, 1
      %v5139 = vsel %vm710, %v5137, %v5138
      %v5140 = vrot.slane %v5100, 1
      %v5141 = vrot.slane %v5101, 1
      %v5142 = vsel %vm710, %v5140, %v5141
      %v5143 = vrot.slane %v5102, 1
      %v5144 = vrot.slane %v5103, 1
      %v5145 = vsel %vm710, %v5143, %v5144
      %v5146 = vrot.slane %v5104, 1
      %v5147 = vrot.slane %v5105, 1
      %v5148 = vsel %vm710, %v5146, %v5147
      %v5149 = vrot.slane %v5106, 1
      %v5150 = vrot.slane %v5107, 1
      %v5151 = vsel %vm710, %v5149, %v5150
      %v5152 = vrot.slane %v5108, 1
      %v5153 = vrot.slane %v5109, 1
      %v5154 = vsel %vm710, %v5152, %v5153
      %v5155 = vrot.slane %v5110, 1
      %v5156 = vrot.slane %v5111, 1
      %v5157 = vsel %vm710, %v5155, %v5156
      %v5158 = vrot.slane %v5112, 1
      %v5159 = vrot.slane %v5113, 1
      %v5160 = vsel %vm710, %v5158, %v5159
      %v5161 = vrot.slane %v5114, 1
      %v5162 = vrot.slane %v5115, 1
      %v5163 = vsel %vm710, %v5161, %v5162
      %v5165 = vshrl.u32 %v4988, 16
      %v5167 = vrot.slane %v5165, 1
      %v5168 = vshll.u32 %v4988, 16
      %v5170 = vrot.slane %v5168, 2
      %v5171 = vor.u32 %v5167, %v5170
      %v5173 = vshrl.u32 %v4989, 16
      %v5175 = vrot.slane %v5173, 1
      %v5176 = vshll.u32 %v4989, 16
      %v5178 = vrot.slane %v5176, 2
      %v5179 = vor.u32 %v5175, %v5178
      %v5180 = vsel %vm2207, %v5171, %v5179
      %v5182 = vshrl.u32 %v5118, 16
      %v5184 = vrot.slane %v5182, 1
      %v5185 = vshll.u32 %v5118, 16
      %v5187 = vrot.slane %v5185, 2
      %v5188 = vor.u32 %v5184, %v5187
      %v5190 = vshrl.u32 %v5117, 16
      %v5192 = vrot.slane %v5190, 1
      %v5193 = vshll.u32 %v5117, 16
      %v5195 = vrot.slane %v5193, 2
      %v5196 = vor.u32 %v5192, %v5195
      %v5197 = vsel %vm2207, %v5188, %v5196
      %v5199 = vshrl.u32 %v4990, 16
      %v5201 = vrot.slane %v5199, 1
      %v5202 = vshll.u32 %v4990, 16
      %v5204 = vrot.slane %v5202, 2
      %v5205 = vor.u32 %v5201, %v5204
      %v5207 = vshrl.u32 %v4991, 16
      %v5209 = vrot.slane %v5207, 1
      %v5210 = vshll.u32 %v4991, 16
      %v5212 = vrot.slane %v5210, 2
      %v5213 = vor.u32 %v5209, %v5212
      %v5214 = vsel %vm2207, %v5205, %v5213
      %v5216 = vshrl.u32 %v5121, 16
      %v5218 = vrot.slane %v5216, 1
      %v5219 = vshll.u32 %v5121, 16
      %v5221 = vrot.slane %v5219, 2
      %v5222 = vor.u32 %v5218, %v5221
      %v5224 = vshrl.u32 %v5120, 16
      %v5226 = vrot.slane %v5224, 1
      %v5227 = vshll.u32 %v5120, 16
      %v5229 = vrot.slane %v5227, 2
      %v5230 = vor.u32 %v5226, %v5229
      %v5231 = vsel %vm2207, %v5222, %v5230
      %v5233 = vshrl.u32 %v4992, 16
      %v5235 = vrot.slane %v5233, 1
      %v5236 = vshll.u32 %v4992, 16
      %v5238 = vrot.slane %v5236, 2
      %v5239 = vor.u32 %v5235, %v5238
      %v5241 = vshrl.u32 %v4993, 16
      %v5243 = vrot.slane %v5241, 1
      %v5244 = vshll.u32 %v4993, 16
      %v5246 = vrot.slane %v5244, 2
      %v5247 = vor.u32 %v5243, %v5246
      %v5248 = vsel %vm2207, %v5239, %v5247
      %v5250 = vshrl.u32 %v5124, 16
      %v5252 = vrot.slane %v5250, 1
      %v5253 = vshll.u32 %v5124, 16
      %v5255 = vrot.slane %v5253, 2
      %v5256 = vor.u32 %v5252, %v5255
      %v5258 = vshrl.u32 %v5123, 16
      %v5260 = vrot.slane %v5258, 1
      %v5261 = vshll.u32 %v5123, 16
      %v5263 = vrot.slane %v5261, 2
      %v5264 = vor.u32 %v5260, %v5263
      %v5265 = vsel %vm2207, %v5256, %v5264
      %v5267 = vshrl.u32 %v4994, 16
      %v5269 = vrot.slane %v5267, 1
      %v5270 = vshll.u32 %v4994, 16
      %v5272 = vrot.slane %v5270, 2
      %v5273 = vor.u32 %v5269, %v5272
      %v5275 = vshrl.u32 %v4995, 16
      %v5277 = vrot.slane %v5275, 1
      %v5278 = vshll.u32 %v4995, 16
      %v5280 = vrot.slane %v5278, 2
      %v5281 = vor.u32 %v5277, %v5280
      %v5282 = vsel %vm2207, %v5273, %v5281
      %v5284 = vshrl.u32 %v5127, 16
      %v5286 = vrot.slane %v5284, 1
      %v5287 = vshll.u32 %v5127, 16
      %v5289 = vrot.slane %v5287, 2
      %v5290 = vor.u32 %v5286, %v5289
      %v5292 = vshrl.u32 %v5126, 16
      %v5294 = vrot.slane %v5292, 1
      %v5295 = vshll.u32 %v5126, 16
      %v5297 = vrot.slane %v5295, 2
      %v5298 = vor.u32 %v5294, %v5297
      %v5299 = vsel %vm2207, %v5290, %v5298
      %v5301 = vshrl.u32 %v4996, 16
      %v5303 = vrot.slane %v5301, 1
      %v5304 = vshll.u32 %v4996, 16
      %v5306 = vrot.slane %v5304, 2
      %v5307 = vor.u32 %v5303, %v5306
      %v5309 = vshrl.u32 %v4997, 16
      %v5311 = vrot.slane %v5309, 1
      %v5312 = vshll.u32 %v4997, 16
      %v5314 = vrot.slane %v5312, 2
      %v5315 = vor.u32 %v5311, %v5314
      %v5316 = vsel %vm2207, %v5307, %v5315
      %v5318 = vshrl.u32 %v5130, 16
      %v5320 = vrot.slane %v5318, 1
      %v5321 = vshll.u32 %v5130, 16
      %v5323 = vrot.slane %v5321, 2
      %v5324 = vor.u32 %v5320, %v5323
      %v5326 = vshrl.u32 %v5129, 16
      %v5328 = vrot.slane %v5326, 1
      %v5329 = vshll.u32 %v5129, 16
      %v5331 = vrot.slane %v5329, 2
      %v5332 = vor.u32 %v5328, %v5331
      %v5333 = vsel %vm2207, %v5324, %v5332
      %v5335 = vshrl.u32 %v4998, 16
      %v5337 = vrot.slane %v5335, 1
      %v5338 = vshll.u32 %v4998, 16
      %v5340 = vrot.slane %v5338, 2
      %v5341 = vor.u32 %v5337, %v5340
      %v5343 = vshrl.u32 %v4999, 16
      %v5345 = vrot.slane %v5343, 1
      %v5346 = vshll.u32 %v4999, 16
      %v5348 = vrot.slane %v5346, 2
      %v5349 = vor.u32 %v5345, %v5348
      %v5350 = vsel %vm2207, %v5341, %v5349
      %v5352 = vshrl.u32 %v5133, 16
      %v5354 = vrot.slane %v5352, 1
      %v5355 = vshll.u32 %v5133, 16
      %v5357 = vrot.slane %v5355, 2
      %v5358 = vor.u32 %v5354, %v5357
      %v5360 = vshrl.u32 %v5132, 16
      %v5362 = vrot.slane %v5360, 1
      %v5363 = vshll.u32 %v5132, 16
      %v5365 = vrot.slane %v5363, 2
      %v5366 = vor.u32 %v5362, %v5365
      %v5367 = vsel %vm2207, %v5358, %v5366
      %v5369 = vshrl.u32 %v5000, 16
      %v5371 = vrot.slane %v5369, 1
      %v5372 = vshll.u32 %v5000, 16
      %v5374 = vrot.slane %v5372, 2
      %v5375 = vor.u32 %v5371, %v5374
      %v5377 = vshrl.u32 %v5001, 16
      %v5379 = vrot.slane %v5377, 1
      %v5380 = vshll.u32 %v5001, 16
      %v5382 = vrot.slane %v5380, 2
      %v5383 = vor.u32 %v5379, %v5382
      %v5384 = vsel %vm2207, %v5375, %v5383
      %v5386 = vshrl.u32 %v5136, 16
      %v5388 = vrot.slane %v5386, 1
      %v5389 = vshll.u32 %v5136, 16
      %v5391 = vrot.slane %v5389, 2
      %v5392 = vor.u32 %v5388, %v5391
      %v5394 = vshrl.u32 %v5135, 16
      %v5396 = vrot.slane %v5394, 1
      %v5397 = vshll.u32 %v5135, 16
      %v5399 = vrot.slane %v5397, 2
      %v5400 = vor.u32 %v5396, %v5399
      %v5401 = vsel %vm2207, %v5392, %v5400
      %v5403 = vshrl.u32 %v5002, 16
      %v5405 = vrot.slane %v5403, 1
      %v5406 = vshll.u32 %v5002, 16
      %v5408 = vrot.slane %v5406, 2
      %v5409 = vor.u32 %v5405, %v5408
      %v5411 = vshrl.u32 %v5003, 16
      %v5413 = vrot.slane %v5411, 1
      %v5414 = vshll.u32 %v5003, 16
      %v5416 = vrot.slane %v5414, 2
      %v5417 = vor.u32 %v5413, %v5416
      %v5418 = vsel %vm2207, %v5409, %v5417
      %v5420 = vshrl.u32 %v5139, 16
      %v5422 = vrot.slane %v5420, 1
      %v5423 = vshll.u32 %v5139, 16
      %v5425 = vrot.slane %v5423, 2
      %v5426 = vor.u32 %v5422, %v5425
      %v5428 = vshrl.u32 %v5138, 16
      %v5430 = vrot.slane %v5428, 1
      %v5431 = vshll.u32 %v5138, 16
      %v5433 = vrot.slane %v5431, 2
      %v5434 = vor.u32 %v5430, %v5433
      %v5435 = vsel %vm2207, %v5426, %v5434
      %v5437 = vshrl.u32 %v5004, 16
      %v5439 = vrot.slane %v5437, 1
      %v5440 = vshll.u32 %v5004, 16
      %v5442 = vrot.slane %v5440, 2
      %v5443 = vor.u32 %v5439, %v5442
      %v5445 = vshrl.u32 %v5005, 16
      %v5447 = vrot.slane %v5445, 1
      %v5448 = vshll.u32 %v5005, 16
      %v5450 = vrot.slane %v5448, 2
      %v5451 = vor.u32 %v5447, %v5450
      %v5452 = vsel %vm2207, %v5443, %v5451
      %v5454 = vshrl.u32 %v5142, 16
      %v5456 = vrot.slane %v5454, 1
      %v5457 = vshll.u32 %v5142, 16
      %v5459 = vrot.slane %v5457, 2
      %v5460 = vor.u32 %v5456, %v5459
      %v5462 = vshrl.u32 %v5141, 16
      %v5464 = vrot.slane %v5462, 1
      %v5465 = vshll.u32 %v5141, 16
      %v5467 = vrot.slane %v5465, 2
      %v5468 = vor.u32 %v5464, %v5467
      %v5469 = vsel %vm2207, %v5460, %v5468
      %v5471 = vshrl.u32 %v5006, 16
      %v5473 = vrot.slane %v5471, 1
      %v5474 = vshll.u32 %v5006, 16
      %v5476 = vrot.slane %v5474, 2
      %v5477 = vor.u32 %v5473, %v5476
      %v5479 = vshrl.u32 %v5007, 16
      %v5481 = vrot.slane %v5479, 1
      %v5482 = vshll.u32 %v5007, 16
      %v5484 = vrot.slane %v5482, 2
      %v5485 = vor.u32 %v5481, %v5484
      %v5486 = vsel %vm2207, %v5477, %v5485
      %v5488 = vshrl.u32 %v5145, 16
      %v5490 = vrot.slane %v5488, 1
      %v5491 = vshll.u32 %v5145, 16
      %v5493 = vrot.slane %v5491, 2
      %v5494 = vor.u32 %v5490, %v5493
      %v5496 = vshrl.u32 %v5144, 16
      %v5498 = vrot.slane %v5496, 1
      %v5499 = vshll.u32 %v5144, 16
      %v5501 = vrot.slane %v5499, 2
      %v5502 = vor.u32 %v5498, %v5501
      %v5503 = vsel %vm2207, %v5494, %v5502
      %v5505 = vshrl.u32 %v5008, 16
      %v5507 = vrot.slane %v5505, 1
      %v5508 = vshll.u32 %v5008, 16
      %v5510 = vrot.slane %v5508, 2
      %v5511 = vor.u32 %v5507, %v5510
      %v5513 = vshrl.u32 %v5009, 16
      %v5515 = vrot.slane %v5513, 1
      %v5516 = vshll.u32 %v5009, 16
      %v5518 = vrot.slane %v5516, 2
      %v5519 = vor.u32 %v5515, %v5518
      %v5520 = vsel %vm2207, %v5511, %v5519
      %v5522 = vshrl.u32 %v5148, 16
      %v5524 = vrot.slane %v5522, 1
      %v5525 = vshll.u32 %v5148, 16
      %v5527 = vrot.slane %v5525, 2
      %v5528 = vor.u32 %v5524, %v5527
      %v5530 = vshrl.u32 %v5147, 16
      %v5532 = vrot.slane %v5530, 1
      %v5533 = vshll.u32 %v5147, 16
      %v5535 = vrot.slane %v5533, 2
      %v5536 = vor.u32 %v5532, %v5535
      %v5537 = vsel %vm2207, %v5528, %v5536
      %v5539 = vshrl.u32 %v5010, 16
      %v5541 = vrot.slane %v5539, 1
      %v5542 = vshll.u32 %v5010, 16
      %v5544 = vrot.slane %v5542, 2
      %v5545 = vor.u32 %v5541, %v5544
      %v5547 = vshrl.u32 %v5011, 16
      %v5549 = vrot.slane %v5547, 1
      %v5550 = vshll.u32 %v5011, 16
      %v5552 = vrot.slane %v5550, 2
      %v5553 = vor.u32 %v5549, %v5552
      %v5554 = vsel %vm2207, %v5545, %v5553
      %v5556 = vshrl.u32 %v5151, 16
      %v5558 = vrot.slane %v5556, 1
      %v5559 = vshll.u32 %v5151, 16
      %v5561 = vrot.slane %v5559, 2
      %v5562 = vor.u32 %v5558, %v5561
      %v5564 = vshrl.u32 %v5150, 16
      %v5566 = vrot.slane %v5564, 1
      %v5567 = vshll.u32 %v5150, 16
      %v5569 = vrot.slane %v5567, 2
      %v5570 = vor.u32 %v5566, %v5569
      %v5571 = vsel %vm2207, %v5562, %v5570
      %v5573 = vshrl.u32 %v5012, 16
      %v5575 = vrot.slane %v5573, 1
      %v5576 = vshll.u32 %v5012, 16
      %v5578 = vrot.slane %v5576, 2
      %v5579 = vor.u32 %v5575, %v5578
      %v5581 = vshrl.u32 %v5013, 16
      %v5583 = vrot.slane %v5581, 1
      %v5584 = vshll.u32 %v5013, 16
      %v5586 = vrot.slane %v5584, 2
      %v5587 = vor.u32 %v5583, %v5586
      %v5588 = vsel %vm2207, %v5579, %v5587
      %v5590 = vshrl.u32 %v5154, 16
      %v5592 = vrot.slane %v5590, 1
      %v5593 = vshll.u32 %v5154, 16
      %v5595 = vrot.slane %v5593, 2
      %v5596 = vor.u32 %v5592, %v5595
      %v5598 = vshrl.u32 %v5153, 16
      %v5600 = vrot.slane %v5598, 1
      %v5601 = vshll.u32 %v5153, 16
      %v5603 = vrot.slane %v5601, 2
      %v5604 = vor.u32 %v5600, %v5603
      %v5605 = vsel %vm2207, %v5596, %v5604
      %v5607 = vshrl.u32 %v5014, 16
      %v5609 = vrot.slane %v5607, 1
      %v5610 = vshll.u32 %v5014, 16
      %v5612 = vrot.slane %v5610, 2
      %v5613 = vor.u32 %v5609, %v5612
      %v5615 = vshrl.u32 %v5015, 16
      %v5617 = vrot.slane %v5615, 1
      %v5618 = vshll.u32 %v5015, 16
      %v5620 = vrot.slane %v5618, 2
      %v5621 = vor.u32 %v5617, %v5620
      %v5622 = vsel %vm2207, %v5613, %v5621
      %v5624 = vshrl.u32 %v5157, 16
      %v5626 = vrot.slane %v5624, 1
      %v5627 = vshll.u32 %v5157, 16
      %v5629 = vrot.slane %v5627, 2
      %v5630 = vor.u32 %v5626, %v5629
      %v5632 = vshrl.u32 %v5156, 16
      %v5634 = vrot.slane %v5632, 1
      %v5635 = vshll.u32 %v5156, 16
      %v5637 = vrot.slane %v5635, 2
      %v5638 = vor.u32 %v5634, %v5637
      %v5639 = vsel %vm2207, %v5630, %v5638
      %v5641 = vshrl.u32 %v5016, 16
      %v5643 = vrot.slane %v5641, 1
      %v5644 = vshll.u32 %v5016, 16
      %v5646 = vrot.slane %v5644, 2
      %v5647 = vor.u32 %v5643, %v5646
      %v5649 = vshrl.u32 %v5017, 16
      %v5651 = vrot.slane %v5649, 1
      %v5652 = vshll.u32 %v5017, 16
      %v5654 = vrot.slane %v5652, 2
      %v5655 = vor.u32 %v5651, %v5654
      %v5656 = vsel %vm2207, %v5647, %v5655
      %v5658 = vshrl.u32 %v5160, 16
      %v5660 = vrot.slane %v5658, 1
      %v5661 = vshll.u32 %v5160, 16
      %v5663 = vrot.slane %v5661, 2
      %v5664 = vor.u32 %v5660, %v5663
      %v5666 = vshrl.u32 %v5159, 16
      %v5668 = vrot.slane %v5666, 1
      %v5669 = vshll.u32 %v5159, 16
      %v5671 = vrot.slane %v5669, 2
      %v5672 = vor.u32 %v5668, %v5671
      %v5673 = vsel %vm2207, %v5664, %v5672
      %v5675 = vshrl.u32 %v5018, 16
      %v5677 = vrot.slane %v5675, 1
      %v5678 = vshll.u32 %v5018, 16
      %v5680 = vrot.slane %v5678, 2
      %v5681 = vor.u32 %v5677, %v5680
      %v5683 = vshrl.u32 %v5019, 16
      %v5685 = vrot.slane %v5683, 1
      %v5686 = vshll.u32 %v5019, 16
      %v5688 = vrot.slane %v5686, 2
      %v5689 = vor.u32 %v5685, %v5688
      %v5690 = vsel %vm2207, %v5681, %v5689
      %v5692 = vshrl.u32 %v5163, 16
      %v5694 = vrot.slane %v5692, 1
      %v5695 = vshll.u32 %v5163, 16
      %v5697 = vrot.slane %v5695, 2
      %v5698 = vor.u32 %v5694, %v5697
      %v5700 = vshrl.u32 %v5162, 16
      %v5702 = vrot.slane %v5700, 1
      %v5703 = vshll.u32 %v5162, 16
      %v5705 = vrot.slane %v5703, 2
      %v5706 = vor.u32 %v5702, %v5705
      %v5707 = vsel %vm2207, %v5698, %v5706
      %v5740 = vld [vmem:[%s1 + $0x280] sm:$0xf]
      %v5741 = vld [vmem:[%s1 + $0x284] sm:$0xf]
      %v5742 = vld [vmem:[%s1 + $0x288] sm:$0xf]
      %v5743 = vld [vmem:[%s1 + $0x28c] sm:$0xf]
      %v5744 = vld [vmem:[%s1 + $0x290] sm:$0xf]
      %v5745 = vld [vmem:[%s1 + $0x294] sm:$0xf]
      %v5746 = vld [vmem:[%s1 + $0x298] sm:$0xf]
      %v5747 = vld [vmem:[%s1 + $0x29c] sm:$0xf]
      %v5748 = vld [vmem:[%s1 + $0x2a0] sm:$0xf]
      %v5749 = vld [vmem:[%s1 + $0x2a4] sm:$0xf]
      %v5750 = vld [vmem:[%s1 + $0x2a8] sm:$0xf]
      %v5751 = vld [vmem:[%s1 + $0x2ac] sm:$0xf]
      %v5752 = vld [vmem:[%s1 + $0x2b0] sm:$0xf]
      %v5753 = vld [vmem:[%s1 + $0x2b4] sm:$0xf]
      %v5754 = vld [vmem:[%s1 + $0x2b8] sm:$0xf]
      %v5755 = vld [vmem:[%s1 + $0x2bc] sm:$0xf]
      %v5756 = vld [vmem:[%s1 + $0x2c0] sm:$0xf]
      %v5757 = vld [vmem:[%s1 + $0x2c4] sm:$0xf]
      %v5758 = vld [vmem:[%s1 + $0x2c8] sm:$0xf]
      %v5759 = vld [vmem:[%s1 + $0x2cc] sm:$0xf]
      %v5760 = vld [vmem:[%s1 + $0x2d0] sm:$0xf]
      %v5761 = vld [vmem:[%s1 + $0x2d4] sm:$0xf]
      %v5762 = vld [vmem:[%s1 + $0x2d8] sm:$0xf]
      %v5763 = vld [vmem:[%s1 + $0x2dc] sm:$0xf]
      %v5764 = vld [vmem:[%s1 + $0x2e0] sm:$0xf]
      %v5765 = vld [vmem:[%s1 + $0x2e4] sm:$0xf]
      %v5766 = vld [vmem:[%s1 + $0x2e8] sm:$0xf]
      %v5767 = vld [vmem:[%s1 + $0x2ec] sm:$0xf]
      %v5768 = vld [vmem:[%s1 + $0x2f0] sm:$0xf]
      %v5769 = vld [vmem:[%s1 + $0x2f4] sm:$0xf]
      %v5770 = vld [vmem:[%s1 + $0x2f8] sm:$0xf]
      %v5771 = vld [vmem:[%s1 + $0x2fc] sm:$0xf]
      %v5804 = vunpack.c.l.b16 %v5740
      %v5805 = vunpack.c.l.b16 %v5741
      %v5806 = vunpack.c.l.b16 %v5742
      %v5807 = vunpack.c.l.b16 %v5743
      %v5808 = vunpack.c.l.b16 %v5744
      %v5809 = vunpack.c.l.b16 %v5745
      %v5810 = vunpack.c.l.b16 %v5746
      %v5811 = vunpack.c.l.b16 %v5747
      %v5812 = vunpack.c.l.b16 %v5748
      %v5813 = vunpack.c.l.b16 %v5749
      %v5814 = vunpack.c.l.b16 %v5750
      %v5815 = vunpack.c.l.b16 %v5751
      %v5816 = vunpack.c.l.b16 %v5752
      %v5817 = vunpack.c.l.b16 %v5753
      %v5818 = vunpack.c.l.b16 %v5754
      %v5819 = vunpack.c.l.b16 %v5755
      %v5820 = vunpack.c.l.b16 %v5756
      %v5821 = vunpack.c.l.b16 %v5757
      %v5822 = vunpack.c.l.b16 %v5758
      %v5823 = vunpack.c.l.b16 %v5759
      %v5824 = vunpack.c.l.b16 %v5760
      %v5825 = vunpack.c.l.b16 %v5761
      %v5826 = vunpack.c.l.b16 %v5762
      %v5827 = vunpack.c.l.b16 %v5763
      %v5828 = vunpack.c.l.b16 %v5764
      %v5829 = vunpack.c.l.b16 %v5765
      %v5830 = vunpack.c.l.b16 %v5766
      %v5831 = vunpack.c.l.b16 %v5767
      %v5832 = vunpack.c.l.b16 %v5768
      %v5833 = vunpack.c.l.b16 %v5769
      %v5834 = vunpack.c.l.b16 %v5770
      %v5835 = vunpack.c.l.b16 %v5771
      %v5836 = vpack.c.b16 %v5805, %v5804
      %v5837 = vpack.c.b16 %v5807, %v5806
      %v5838 = vpack.c.b16 %v5809, %v5808
      %v5839 = vpack.c.b16 %v5811, %v5810
      %v5840 = vpack.c.b16 %v5813, %v5812
      %v5841 = vpack.c.b16 %v5815, %v5814
      %v5842 = vpack.c.b16 %v5817, %v5816
      %v5843 = vpack.c.b16 %v5819, %v5818
      %v5844 = vpack.c.b16 %v5821, %v5820
      %v5845 = vpack.c.b16 %v5823, %v5822
      %v5846 = vpack.c.b16 %v5825, %v5824
      %v5847 = vpack.c.b16 %v5827, %v5826
      %v5848 = vpack.c.b16 %v5829, %v5828
      %v5849 = vpack.c.b16 %v5831, %v5830
      %v5850 = vpack.c.b16 %v5833, %v5832
      %v5851 = vpack.c.b16 %v5835, %v5834
      %5868 = vmatprep.subr.bf16.mxu0 0
      %5869 = vmatpush1.bf16.msra.mxu0 %v5836
      %5870 = vmatprep.subr.bf16.mxu0 0
      %5871 = vmatpush1.bf16.msra.mxu0 %v5837
      %5872 = vmatprep.subr.bf16.mxu0 0
      %5873 = vmatpush1.bf16.msra.mxu0 %v5838
      %5874 = vmatprep.subr.bf16.mxu0 0
      %5875 = vmatpush1.bf16.msra.mxu0 %v5839
      %5876 = vmatprep.subr.bf16.mxu0 0
      %5877 = vmatpush1.bf16.msra.mxu0 %v5840
      %5878 = vmatprep.subr.bf16.mxu0 0
      %5879 = vmatpush1.bf16.msra.mxu0 %v5841
      %5880 = vmatprep.subr.bf16.mxu0 0
      %5881 = vmatpush1.bf16.msra.mxu0 %v5842
      %5882 = vmatprep.subr.bf16.mxu0 0
      %5883 = vmatpush1.bf16.msra.mxu0 %v5843
      %5884 = vmatprep.subr.bf16.mxu0 0
      %5885 = vmatpush1.bf16.msra.mxu0 %v5844
      %5886 = vmatprep.subr.bf16.mxu0 0
      %5887 = vmatpush1.bf16.msra.mxu0 %v5845
      %5888 = vmatprep.subr.bf16.mxu0 0
      %5889 = vmatpush1.bf16.msra.mxu0 %v5846
      %5890 = vmatprep.subr.bf16.mxu0 0
      %5891 = vmatpush1.bf16.msra.mxu0 %v5847
      %5892 = vmatprep.subr.bf16.mxu0 0
      %5893 = vmatpush1.bf16.msra.mxu0 %v5848
      %5894 = vmatprep.subr.bf16.mxu0 0
      %5895 = vmatpush1.bf16.msra.mxu0 %v5849
      %5896 = vmatprep.subr.bf16.mxu0 0
      %5897 = vmatpush1.bf16.msra.mxu0 %v5850
      %5898 = vmatprep.subr.bf16.mxu0 0
      %5899 = vmatpush1.bf16.msra.mxu0 %v5851
      %5900 = vmatprep.mubr.bf16.mxu0 %v5197
      %5901 = vmatmul.mubr.bf16.gmra.mrb[0].mxu0 %v5180
      %v5902 = vpop.f32.mrb[0].mxu0
      %v5903 = vadd.f32 0.0, %v5902
      %v5904 = vpop.f32.mrb[0].mxu0
      %v5905 = vpop.f32.mrb[0].mxu0
      %v5906 = vadd.f32 0.0, %v5905
      %v5907 = vpop.f32.mrb[0].mxu0
      %5908 = vmatprep.mubr.bf16.mxu0 %v5231
      %5909 = vmatmul.mubr.bf16.gmra.mrb[0].mxu0 %v5214
      %v5910 = vpop.f32.mrb[0].mxu0
      %v5911 = vadd.f32 0.0, %v5910
      %v5912 = vpop.f32.mrb[0].mxu0
      %v5913 = vpop.f32.mrb[0].mxu0
      %v5914 = vadd.f32 0.0, %v5913
      %v5915 = vpop.f32.mrb[0].mxu0
      %5916 = vmatprep.mubr.bf16.mxu0 %v5265
      %5917 = vmatmul.mubr.bf16.gmra.mrb[0].mxu0 %v5248
      %v5918 = vpop.f32.mrb[0].mxu0
      %v5919 = vadd.f32 0.0, %v5918
      %v5920 = vpop.f32.mrb[0].mxu0
      %v5921 = vpop.f32.mrb[0].mxu0
      %v5922 = vadd.f32 0.0, %v5921
      %v5923 = vpop.f32.mrb[0].mxu0
      %5924 = vmatprep.mubr.bf16.mxu0 %v5299
      %5925 = vmatmul.mubr.bf16.gmra.mrb[0].mxu0 %v5282
      %v5926 = vpop.f32.mrb[0].mxu0
      %v5927 = vadd.f32 0.0, %v5926
      %v5928 = vpop.f32.mrb[0].mxu0
      %v5929 = vpop.f32.mrb[0].mxu0
      %v5930 = vadd.f32 0.0, %v5929
      %v5931 = vpop.f32.mrb[0].mxu0
      %5932 = vmatprep.mubr.bf16.mxu0 %v5333
      %5933 = vmatmul.mubr.bf16.gmra.mrb[0].mxu0 %v5316
      %v5934 = vpop.f32.mrb[0].mxu0
      %v5935 = vadd.f32 0.0, %v5934
      %v5936 = vpop.f32.mrb[0].mxu0
      %v5937 = vpop.f32.mrb[0].mxu0
      %v5938 = vadd.f32 0.0, %v5937
      %v5939 = vpop.f32.mrb[0].mxu0
      %5940 = vmatprep.mubr.bf16.mxu0 %v5367
      %5941 = vmatmul.mubr.bf16.gmra.mrb[0].mxu0 %v5350
      %v5942 = vpop.f32.mrb[0].mxu0
      %v5943 = vadd.f32 0.0, %v5942
      %v5944 = vpop.f32.mrb[0].mxu0
      %v5945 = vpop.f32.mrb[0].mxu0
      %v5946 = vadd.f32 0.0, %v5945
      %v5947 = vpop.f32.mrb[0].mxu0
      %5948 = vmatprep.mubr.bf16.mxu0 %v5401
      %5949 = vmatmul.mubr.bf16.gmra.mrb[0].mxu0 %v5384
      %v5950 = vpop.f32.mrb[0].mxu0
      %v5951 = vadd.f32 0.0, %v5950
      %v5952 = vpop.f32.mrb[0].mxu0
      %v5953 = vpop.f32.mrb[0].mxu0
      %v5954 = vadd.f32 0.0, %v5953
      %v5955 = vpop.f32.mrb[0].mxu0
      %5956 = vmatprep.mubr.bf16.mxu0 %v5435
      %5957 = vmatmul.mubr.bf16.gmra.mrb[0].mxu0 %v5418
      %v5958 = vpop.f32.mrb[0].mxu0
      %v5959 = vadd.f32 0.0, %v5958
      %v5960 = vpop.f32.mrb[0].mxu0
      %v5961 = vpop.f32.mrb[0].mxu0
      %v5962 = vadd.f32 0.0, %v5961
      %v5963 = vpop.f32.mrb[0].mxu0
      %5964 = vmatprep.mubr.bf16.mxu0 %v5469
      %5965 = vmatmul.mubr.bf16.gmra.mrb[0].mxu0 %v5452
      %v5966 = vpop.f32.mrb[0].mxu0
      %v5967 = vadd.f32 0.0, %v5966
      %v5968 = vpop.f32.mrb[0].mxu0
      %v5969 = vpop.f32.mrb[0].mxu0
      %v5970 = vadd.f32 0.0, %v5969
      %v5971 = vpop.f32.mrb[0].mxu0
      %5972 = vmatprep.mubr.bf16.mxu0 %v5503
      %5973 = vmatmul.mubr.bf16.gmra.mrb[0].mxu0 %v5486
      %v5974 = vpop.f32.mrb[0].mxu0
      %v5975 = vadd.f32 0.0, %v5974
      %v5976 = vpop.f32.mrb[0].mxu0
      %v5977 = vpop.f32.mrb[0].mxu0
      %v5978 = vadd.f32 0.0, %v5977
      %v5979 = vpop.f32.mrb[0].mxu0
      %5980 = vmatprep.mubr.bf16.mxu0 %v5537
      %5981 = vmatmul.mubr.bf16.gmra.mrb[0].mxu0 %v5520
      %v5982 = vpop.f32.mrb[0].mxu0
      %v5983 = vadd.f32 0.0, %v5982
      %v5984 = vpop.f32.mrb[0].mxu0
      %v5985 = vpop.f32.mrb[0].mxu0
      %v5986 = vadd.f32 0.0, %v5985
      %v5987 = vpop.f32.mrb[0].mxu0
      %5988 = vmatprep.mubr.bf16.mxu0 %v5571
      %5989 = vmatmul.mubr.bf16.gmra.mrb[0].mxu0 %v5554
      %v5990 = vpop.f32.mrb[0].mxu0
      %v5991 = vadd.f32 0.0, %v5990
      %v5992 = vpop.f32.mrb[0].mxu0
      %v5993 = vpop.f32.mrb[0].mxu0
      %v5994 = vadd.f32 0.0, %v5993
      %v5995 = vpop.f32.mrb[0].mxu0
      %5996 = vmatprep.mubr.bf16.mxu0 %v5605
      %5997 = vmatmul.mubr.bf16.gmra.mrb[0].mxu0 %v5588
      %v5998 = vpop.f32.mrb[0].mxu0
      %v5999 = vadd.f32 0.0, %v5998
      %v6000 = vpop.f32.mrb[0].mxu0
      %v6001 = vpop.f32.mrb[0].mxu0
      %v6002 = vadd.f32 0.0, %v6001
      %v6003 = vpop.f32.mrb[0].mxu0
      %6004 = vmatprep.mubr.bf16.mxu0 %v5639
      %6005 = vmatmul.mubr.bf16.gmra.mrb[0].mxu0 %v5622
      %v6006 = vpop.f32.mrb[0].mxu0
      %v6007 = vadd.f32 0.0, %v6006
      %v6008 = vpop.f32.mrb[0].mxu0
      %v6009 = vpop.f32.mrb[0].mxu0
      %v6010 = vadd.f32 0.0, %v6009
      %v6011 = vpop.f32.mrb[0].mxu0
      %6012 = vmatprep.mubr.bf16.mxu0 %v5673
      %6013 = vmatmul.mubr.bf16.gmra.mrb[0].mxu0 %v5656
      %v6014 = vpop.f32.mrb[0].mxu0
      %v6015 = vadd.f32 0.0, %v6014
      %v6016 = vpop.f32.mrb[0].mxu0
      %v6017 = vpop.f32.mrb[0].mxu0
      %v6018 = vadd.f32 0.0, %v6017
      %v6019 = vpop.f32.mrb[0].mxu0
      %6020 = vmatprep.mubr.bf16.mxu0 %v5707
      %6021 = vmatmul.mubr.bf16.gmra.mrb[0].mxu0 %v5690
      %v6022 = vpop.f32.mrb[0].mxu0
      %v6023 = vadd.f32 0.0, %v6022
      %v6024 = vpop.f32.mrb[0].mxu0
      %v6025 = vpop.f32.mrb[0].mxu0
      %v6026 = vadd.f32 0.0, %v6025
      %v6027 = vpop.f32.mrb[0].mxu0
      %6028 = vdwg.mxu0
      %v6029 = vadd.f32 %v4828, %v5903
      %v6030 = vadd.f32 %v4829, %v5906
      %v6031 = vadd.f32 %v4830, %v5911
      %v6032 = vadd.f32 %v4831, %v5914
      %v6033 = vadd.f32 %v4832, %v5919
      %v6034 = vadd.f32 %v4833, %v5922
      %v6035 = vadd.f32 %v4834, %v5927
      %v6036 = vadd.f32 %v4835, %v5930
      %v6037 = vadd.f32 %v4836, %v5935
      %v6038 = vadd.f32 %v4837, %v5938
      %v6039 = vadd.f32 %v4838, %v5943
      %v6040 = vadd.f32 %v4839, %v5946
      %v6041 = vadd.f32 %v4840, %v5951
      %v6042 = vadd.f32 %v4841, %v5954
      %v6043 = vadd.f32 %v4842, %v5959
      %v6044 = vadd.f32 %v4843, %v5962
      %v6045 = vadd.f32 %v4844, %v5967
      %v6046 = vadd.f32 %v4845, %v5970
      %v6047 = vadd.f32 %v4846, %v5975
      %v6048 = vadd.f32 %v4847, %v5978
      %v6049 = vadd.f32 %v4848, %v5983
      %v6050 = vadd.f32 %v4849, %v5986
      %v6051 = vadd.f32 %v4850, %v5991
      %v6052 = vadd.f32 %v4851, %v5994
      %v6053 = vadd.f32 %v4852, %v5999
      %v6054 = vadd.f32 %v4853, %v6002
      %v6055 = vadd.f32 %v4854, %v6007
      %v6056 = vadd.f32 %v4855, %v6010
      %v6057 = vadd.f32 %v4856, %v6015
      %v6058 = vadd.f32 %v4857, %v6018
      %v6059 = vadd.f32 %v4858, %v6023
      %v6060 = vadd.f32 %v4859, %v6026
      %v6061 = vld [vmem:[%s890] sm:$0xf]
      %v6062 = vld [vmem:[%s890 + $0xc] sm:$0xf]
      %v6063 = vld [vmem:[%s890 + $0x18] sm:$0xf]
      %v6064 = vld [vmem:[%s890 + $0x24] sm:$0xf]
      %v6065 = vld [vmem:[%s890 + $0x30] sm:$0xf]
      %v6066 = vld [vmem:[%s890 + $0x3c] sm:$0xf]
      %v6067 = vld [vmem:[%s890 + $0x48] sm:$0xf]
      %v6068 = vld [vmem:[%s890 + $0x54] sm:$0xf]
      %v6069 = vld [vmem:[%s890 + $0x60] sm:$0xf]
      %v6070 = vld [vmem:[%s890 + $0x6c] sm:$0xf]
      %v6071 = vld [vmem:[%s890 + $0x78] sm:$0xf]
      %v6072 = vld [vmem:[%s890 + $0x84] sm:$0xf]
      %v6073 = vld [vmem:[%s890 + $0x90] sm:$0xf]
      %v6074 = vld [vmem:[%s890 + $0x9c] sm:$0xf]
      %v6075 = vld [vmem:[%s890 + $0xa8] sm:$0xf]
      %v6076 = vld [vmem:[%s890 + $0xb4] sm:$0xf]
      %v6093 = vunpack.c.l.b16 %v6061
      %v6094 = vunpack.c.l.b16 %v6062
      %v6095 = vunpack.c.l.b16 %v6063
      %v6096 = vunpack.c.l.b16 %v6064
      %v6097 = vunpack.c.l.b16 %v6065
      %v6098 = vunpack.c.l.b16 %v6066
      %v6099 = vunpack.c.l.b16 %v6067
      %v6100 = vunpack.c.l.b16 %v6068
      %v6101 = vunpack.c.l.b16 %v6069
      %v6102 = vunpack.c.l.b16 %v6070
      %v6103 = vunpack.c.l.b16 %v6071
      %v6104 = vunpack.c.l.b16 %v6072
      %v6105 = vunpack.c.l.b16 %v6073
      %v6106 = vunpack.c.l.b16 %v6074
      %v6107 = vunpack.c.l.b16 %v6075
      %v6108 = vunpack.c.l.b16 %v6076
      %v6109 = vpack.c.b16 %v1036, %v6093
      %v6110 = vpack.c.b16 %v1039, %v6094
      %v6111 = vpack.c.b16 %v1042, %v6095
      %v6112 = vpack.c.b16 %v1045, %v6096
      %v6113 = vpack.c.b16 %v1048, %v6097
      %v6114 = vpack.c.b16 %v1051, %v6098
      %v6115 = vpack.c.b16 %v1054, %v6099
      %v6116 = vpack.c.b16 %v1057, %v6100
      %v6117 = vpack.c.b16 %v1060, %v6101
      %v6118 = vpack.c.b16 %v1063, %v6102
      %v6119 = vpack.c.b16 %v1066, %v6103
      %v6120 = vpack.c.b16 %v1069, %v6104
      %v6121 = vpack.c.b16 %v1072, %v6105
      %v6122 = vpack.c.b16 %v1075, %v6106
      %v6123 = vpack.c.b16 %v1078, %v6107
      %v6124 = vpack.c.b16 %v1081, %v6108
      %v6125 = vrot.slane %v1083, 1
      %v6126 = vrot.slane %v1903, 1
      %v6127 = vsel %vm710, %v6125, %v6126
      %v6128 = vrot.slane %v1085, 1
      %v6129 = vrot.slane %v1904, 1
      %v6130 = vsel %vm710, %v6128, %v6129
      %v6131 = vrot.slane %v1087, 1
      %v6132 = vrot.slane %v1905, 1
      %v6133 = vsel %vm710, %v6131, %v6132
      %v6134 = vrot.slane %v1089, 1
      %v6135 = vrot.slane %v1906, 1
      %v6136 = vsel %vm710, %v6134, %v6135
      %v6137 = vrot.slane %v1091, 1
      %v6138 = vrot.slane %v1907, 1
      %v6139 = vsel %vm710, %v6137, %v6138
      %v6140 = vrot.slane %v1093, 1
      %v6141 = vrot.slane %v1908, 1
      %v6142 = vsel %vm710, %v6140, %v6141
      %v6143 = vrot.slane %v1095, 1
      %v6144 = vrot.slane %v1909, 1
      %v6145 = vsel %vm710, %v6143, %v6144
      %v6146 = vrot.slane %v1097, 1
      %v6147 = vrot.slane %v1910, 1
      %v6148 = vsel %vm710, %v6146, %v6147
      %v6149 = vrot.slane %v1099, 1
      %v6150 = vrot.slane %v1911, 1
      %v6151 = vsel %vm710, %v6149, %v6150
      %v6152 = vrot.slane %v1101, 1
      %v6153 = vrot.slane %v1912, 1
      %v6154 = vsel %vm710, %v6152, %v6153
      %v6155 = vrot.slane %v1103, 1
      %v6156 = vrot.slane %v1913, 1
      %v6157 = vsel %vm710, %v6155, %v6156
      %v6158 = vrot.slane %v1105, 1
      %v6159 = vrot.slane %v1914, 1
      %v6160 = vsel %vm710, %v6158, %v6159
      %v6161 = vrot.slane %v1107, 1
      %v6162 = vrot.slane %v1915, 1
      %v6163 = vsel %vm710, %v6161, %v6162
      %v6164 = vrot.slane %v1109, 1
      %v6165 = vrot.slane %v1916, 1
      %v6166 = vsel %vm710, %v6164, %v6165
      %v6167 = vrot.slane %v1111, 1
      %v6168 = vrot.slane %v1917, 1
      %v6169 = vsel %vm710, %v6167, %v6168
      %v6170 = vrot.slane %v1113, 1
      %v6171 = vrot.slane %v1918, 1
      %v6172 = vsel %vm710, %v6170, %v6171
      %v6174 = vshrl.u32 %v6109, 16
      %v6176 = vshll.u32 %v6109, 16
      %v6178 = vrot.slane %v6176, 1
      %v6179 = vor.u32 %v6174, %v6178
      %v6181 = vshll.u32 %v1084, 16
      %v6183 = vrot.slane %v6181, 1
      %v6184 = vsel %vm469, %v6179, %v6183
      %v6186 = vshrl.u32 %v6127, 16
      %v6188 = vshll.u32 %v6127, 16
      %v6190 = vrot.slane %v6188, 1
      %v6191 = vor.u32 %v6186, %v6190
      %v6193 = vshll.u32 %v6126, 16
      %v6195 = vrot.slane %v6193, 1
      %v6196 = vsel %vm469, %v6191, %v6195
      %v6198 = vshrl.u32 %v6110, 16
      %v6200 = vshll.u32 %v6110, 16
      %v6202 = vrot.slane %v6200, 1
      %v6203 = vor.u32 %v6198, %v6202
      %v6205 = vshll.u32 %v1086, 16
      %v6207 = vrot.slane %v6205, 1
      %v6208 = vsel %vm469, %v6203, %v6207
      %v6210 = vshrl.u32 %v6130, 16
      %v6212 = vshll.u32 %v6130, 16
      %v6214 = vrot.slane %v6212, 1
      %v6215 = vor.u32 %v6210, %v6214
      %v6217 = vshll.u32 %v6129, 16
      %v6219 = vrot.slane %v6217, 1
      %v6220 = vsel %vm469, %v6215, %v6219
      %v6222 = vshrl.u32 %v6111, 16
      %v6224 = vshll.u32 %v6111, 16
      %v6226 = vrot.slane %v6224, 1
      %v6227 = vor.u32 %v6222, %v6226
      %v6229 = vshll.u32 %v1088, 16
      %v6231 = vrot.slane %v6229, 1
      %v6232 = vsel %vm469, %v6227, %v6231
      %v6234 = vshrl.u32 %v6133, 16
      %v6236 = vshll.u32 %v6133, 16
      %v6238 = vrot.slane %v6236, 1
      %v6239 = vor.u32 %v6234, %v6238
      %v6241 = vshll.u32 %v6132, 16
      %v6243 = vrot.slane %v6241, 1
      %v6244 = vsel %vm469, %v6239, %v6243
      %v6246 = vshrl.u32 %v6112, 16
      %v6248 = vshll.u32 %v6112, 16
      %v6250 = vrot.slane %v6248, 1
      %v6251 = vor.u32 %v6246, %v6250
      %v6253 = vshll.u32 %v1090, 16
      %v6255 = vrot.slane %v6253, 1
      %v6256 = vsel %vm469, %v6251, %v6255
      %v6258 = vshrl.u32 %v6136, 16
      %v6260 = vshll.u32 %v6136, 16
      %v6262 = vrot.slane %v6260, 1
      %v6263 = vor.u32 %v6258, %v6262
      %v6265 = vshll.u32 %v6135, 16
      %v6267 = vrot.slane %v6265, 1
      %v6268 = vsel %vm469, %v6263, %v6267
      %v6270 = vshrl.u32 %v6113, 16
      %v6272 = vshll.u32 %v6113, 16
      %v6274 = vrot.slane %v6272, 1
      %v6275 = vor.u32 %v6270, %v6274
      %v6277 = vshll.u32 %v1092, 16
      %v6279 = vrot.slane %v6277, 1
      %v6280 = vsel %vm469, %v6275, %v6279
      %v6282 = vshrl.u32 %v6139, 16
      %v6284 = vshll.u32 %v6139, 16
      %v6286 = vrot.slane %v6284, 1
      %v6287 = vor.u32 %v6282, %v6286
      %v6289 = vshll.u32 %v6138, 16
      %v6291 = vrot.slane %v6289, 1
      %v6292 = vsel %vm469, %v6287, %v6291
      %v6294 = vshrl.u32 %v6114, 16
      %v6296 = vshll.u32 %v6114, 16
      %v6298 = vrot.slane %v6296, 1
      %v6299 = vor.u32 %v6294, %v6298
      %v6301 = vshll.u32 %v1094, 16
      %v6303 = vrot.slane %v6301, 1
      %v6304 = vsel %vm469, %v6299, %v6303
      %v6306 = vshrl.u32 %v6142, 16
      %v6308 = vshll.u32 %v6142, 16
      %v6310 = vrot.slane %v6308, 1
      %v6311 = vor.u32 %v6306, %v6310
      %v6313 = vshll.u32 %v6141, 16
      %v6315 = vrot.slane %v6313, 1
      %v6316 = vsel %vm469, %v6311, %v6315
      %v6318 = vshrl.u32 %v6115, 16
      %v6320 = vshll.u32 %v6115, 16
      %v6322 = vrot.slane %v6320, 1
      %v6323 = vor.u32 %v6318, %v6322
      %v6325 = vshll.u32 %v1096, 16
      %v6327 = vrot.slane %v6325, 1
      %v6328 = vsel %vm469, %v6323, %v6327
      %v6330 = vshrl.u32 %v6145, 16
      %v6332 = vshll.u32 %v6145, 16
      %v6334 = vrot.slane %v6332, 1
      %v6335 = vor.u32 %v6330, %v6334
      %v6337 = vshll.u32 %v6144, 16
      %v6339 = vrot.slane %v6337, 1
      %v6340 = vsel %vm469, %v6335, %v6339
      %v6342 = vshrl.u32 %v6116, 16
      %v6344 = vshll.u32 %v6116, 16
      %v6346 = vrot.slane %v6344, 1
      %v6347 = vor.u32 %v6342, %v6346
      %v6349 = vshll.u32 %v1098, 16
      %v6351 = vrot.slane %v6349, 1
      %v6352 = vsel %vm469, %v6347, %v6351
      %v6354 = vshrl.u32 %v6148, 16
      %v6356 = vshll.u32 %v6148, 16
      %v6358 = vrot.slane %v6356, 1
      %v6359 = vor.u32 %v6354, %v6358
      %v6361 = vshll.u32 %v6147, 16
      %v6363 = vrot.slane %v6361, 1
      %v6364 = vsel %vm469, %v6359, %v6363
      %v6366 = vshrl.u32 %v6117, 16
      %v6368 = vshll.u32 %v6117, 16
      %v6370 = vrot.slane %v6368, 1
      %v6371 = vor.u32 %v6366, %v6370
      %v6373 = vshll.u32 %v1100, 16
      %v6375 = vrot.slane %v6373, 1
      %v6376 = vsel %vm469, %v6371, %v6375
      %v6378 = vshrl.u32 %v6151, 16
      %v6380 = vshll.u32 %v6151, 16
      %v6382 = vrot.slane %v6380, 1
      %v6383 = vor.u32 %v6378, %v6382
      %v6385 = vshll.u32 %v6150, 16
      %v6387 = vrot.slane %v6385, 1
      %v6388 = vsel %vm469, %v6383, %v6387
      %v6390 = vshrl.u32 %v6118, 16
      %v6392 = vshll.u32 %v6118, 16
      %v6394 = vrot.slane %v6392, 1
      %v6395 = vor.u32 %v6390, %v6394
      %v6397 = vshll.u32 %v1102, 16
      %v6399 = vrot.slane %v6397, 1
      %v6400 = vsel %vm469, %v6395, %v6399
      %v6402 = vshrl.u32 %v6154, 16
      %v6404 = vshll.u32 %v6154, 16
      %v6406 = vrot.slane %v6404, 1
      %v6407 = vor.u32 %v6402, %v6406
      %v6409 = vshll.u32 %v6153, 16
      %v6411 = vrot.slane %v6409, 1
      %v6412 = vsel %vm469, %v6407, %v6411
      %v6414 = vshrl.u32 %v6119, 16
      %v6416 = vshll.u32 %v6119, 16
      %v6418 = vrot.slane %v6416, 1
      %v6419 = vor.u32 %v6414, %v6418
      %v6421 = vshll.u32 %v1104, 16
      %v6423 = vrot.slane %v6421, 1
      %v6424 = vsel %vm469, %v6419, %v6423
      %v6426 = vshrl.u32 %v6157, 16
      %v6428 = vshll.u32 %v6157, 16
      %v6430 = vrot.slane %v6428, 1
      %v6431 = vor.u32 %v6426, %v6430
      %v6433 = vshll.u32 %v6156, 16
      %v6435 = vrot.slane %v6433, 1
      %v6436 = vsel %vm469, %v6431, %v6435
      %v6438 = vshrl.u32 %v6120, 16
      %v6440 = vshll.u32 %v6120, 16
      %v6442 = vrot.slane %v6440, 1
      %v6443 = vor.u32 %v6438, %v6442
      %v6445 = vshll.u32 %v1106, 16
      %v6447 = vrot.slane %v6445, 1
      %v6448 = vsel %vm469, %v6443, %v6447
      %v6450 = vshrl.u32 %v6160, 16
      %v6452 = vshll.u32 %v6160, 16
      %v6454 = vrot.slane %v6452, 1
      %v6455 = vor.u32 %v6450, %v6454
      %v6457 = vshll.u32 %v6159, 16
      %v6459 = vrot.slane %v6457, 1
      %v6460 = vsel %vm469, %v6455, %v6459
      %v6462 = vshrl.u32 %v6121, 16
      %v6464 = vshll.u32 %v6121, 16
      %v6466 = vrot.slane %v6464, 1
      %v6467 = vor.u32 %v6462, %v6466
      %v6469 = vshll.u32 %v1108, 16
      %v6471 = vrot.slane %v6469, 1
      %v6472 = vsel %vm469, %v6467, %v6471
      %v6474 = vshrl.u32 %v6163, 16
      %v6476 = vshll.u32 %v6163, 16
      %v6478 = vrot.slane %v6476, 1
      %v6479 = vor.u32 %v6474, %v6478
      %v6481 = vshll.u32 %v6162, 16
      %v6483 = vrot.slane %v6481, 1
      %v6484 = vsel %vm469, %v6479, %v6483
      %v6486 = vshrl.u32 %v6122, 16
      %v6488 = vshll.u32 %v6122, 16
      %v6490 = vrot.slane %v6488, 1
      %v6491 = vor.u32 %v6486, %v6490
      %v6493 = vshll.u32 %v1110, 16
      %v6495 = vrot.slane %v6493, 1
      %v6496 = vsel %vm469, %v6491, %v6495
      %v6498 = vshrl.u32 %v6166, 16
      %v6500 = vshll.u32 %v6166, 16
      %v6502 = vrot.slane %v6500, 1
      %v6503 = vor.u32 %v6498, %v6502
      %v6505 = vshll.u32 %v6165, 16
      %v6507 = vrot.slane %v6505, 1
      %v6508 = vsel %vm469, %v6503, %v6507
      %v6510 = vshrl.u32 %v6123, 16
      %v6512 = vshll.u32 %v6123, 16
      %v6514 = vrot.slane %v6512, 1
      %v6515 = vor.u32 %v6510, %v6514
      %v6517 = vshll.u32 %v1112, 16
      %v6519 = vrot.slane %v6517, 1
      %v6520 = vsel %vm469, %v6515, %v6519
      %v6522 = vshrl.u32 %v6169, 16
      %v6524 = vshll.u32 %v6169, 16
      %v6526 = vrot.slane %v6524, 1
      %v6527 = vor.u32 %v6522, %v6526
      %v6529 = vshll.u32 %v6168, 16
      %v6531 = vrot.slane %v6529, 1
      %v6532 = vsel %vm469, %v6527, %v6531
      %v6534 = vshrl.u32 %v6124, 16
      %v6536 = vshll.u32 %v6124, 16
      %v6538 = vrot.slane %v6536, 1
      %v6539 = vor.u32 %v6534, %v6538
      %v6541 = vshll.u32 %v1114, 16
      %v6543 = vrot.slane %v6541, 1
      %v6544 = vsel %vm469, %v6539, %v6543
      %v6546 = vshrl.u32 %v6172, 16
      %v6548 = vshll.u32 %v6172, 16
      %v6550 = vrot.slane %v6548, 1
      %v6551 = vor.u32 %v6546, %v6550
      %v6553 = vshll.u32 %v6171, 16
      %v6555 = vrot.slane %v6553, 1
      %v6556 = vsel %vm469, %v6551, %v6555
      %v6589 = vld [vmem:[%s1 + $0x300] sm:$0xf]
      %v6590 = vld [vmem:[%s1 + $0x304] sm:$0xf]
      %v6591 = vld [vmem:[%s1 + $0x308] sm:$0xf]
      %v6592 = vld [vmem:[%s1 + $0x30c] sm:$0xf]
      %v6593 = vld [vmem:[%s1 + $0x310] sm:$0xf]
      %v6594 = vld [vmem:[%s1 + $0x314] sm:$0xf]
      %v6595 = vld [vmem:[%s1 + $0x318] sm:$0xf]
      %v6596 = vld [vmem:[%s1 + $0x31c] sm:$0xf]
      %v6597 = vld [vmem:[%s1 + $0x320] sm:$0xf]
      %v6598 = vld [vmem:[%s1 + $0x324] sm:$0xf]
      %v6599 = vld [vmem:[%s1 + $0x328] sm:$0xf]
      %v6600 = vld [vmem:[%s1 + $0x32c] sm:$0xf]
      %v6601 = vld [vmem:[%s1 + $0x330] sm:$0xf]
      %v6602 = vld [vmem:[%s1 + $0x334] sm:$0xf]
      %v6603 = vld [vmem:[%s1 + $0x338] sm:$0xf]
      %v6604 = vld [vmem:[%s1 + $0x33c] sm:$0xf]
      %v6605 = vld [vmem:[%s1 + $0x340] sm:$0xf]
      %v6606 = vld [vmem:[%s1 + $0x344] sm:$0xf]
      %v6607 = vld [vmem:[%s1 + $0x348] sm:$0xf]
      %v6608 = vld [vmem:[%s1 + $0x34c] sm:$0xf]
      %v6609 = vld [vmem:[%s1 + $0x350] sm:$0xf]
      %v6610 = vld [vmem:[%s1 + $0x354] sm:$0xf]
      %v6611 = vld [vmem:[%s1 + $0x358] sm:$0xf]
      %v6612 = vld [vmem:[%s1 + $0x35c] sm:$0xf]
      %v6613 = vld [vmem:[%s1 + $0x360] sm:$0xf]
      %v6614 = vld [vmem:[%s1 + $0x364] sm:$0xf]
      %v6615 = vld [vmem:[%s1 + $0x368] sm:$0xf]
      %v6616 = vld [vmem:[%s1 + $0x36c] sm:$0xf]
      %v6617 = vld [vmem:[%s1 + $0x370] sm:$0xf]
      %v6618 = vld [vmem:[%s1 + $0x374] sm:$0xf]
      %v6619 = vld [vmem:[%s1 + $0x378] sm:$0xf]
      %v6620 = vld [vmem:[%s1 + $0x37c] sm:$0xf]
      %v6653 = vunpack.c.l.b16 %v6589
      %v6654 = vunpack.c.l.b16 %v6590
      %v6655 = vunpack.c.l.b16 %v6591
      %v6656 = vunpack.c.l.b16 %v6592
      %v6657 = vunpack.c.l.b16 %v6593
      %v6658 = vunpack.c.l.b16 %v6594
      %v6659 = vunpack.c.l.b16 %v6595
      %v6660 = vunpack.c.l.b16 %v6596
      %v6661 = vunpack.c.l.b16 %v6597
      %v6662 = vunpack.c.l.b16 %v6598
      %v6663 = vunpack.c.l.b16 %v6599
      %v6664 = vunpack.c.l.b16 %v6600
      %v6665 = vunpack.c.l.b16 %v6601
      %v6666 = vunpack.c.l.b16 %v6602
      %v6667 = vunpack.c.l.b16 %v6603
      %v6668 = vunpack.c.l.b16 %v6604
      %v6669 = vunpack.c.l.b16 %v6605
      %v6670 = vunpack.c.l.b16 %v6606
      %v6671 = vunpack.c.l.b16 %v6607
      %v6672 = vunpack.c.l.b16 %v6608
      %v6673 = vunpack.c.l.b16 %v6609
      %v6674 = vunpack.c.l.b16 %v6610
      %v6675 = vunpack.c.l.b16 %v6611
      %v6676 = vunpack.c.l.b16 %v6612
      %v6677 = vunpack.c.l.b16 %v6613
      %v6678 = vunpack.c.l.b16 %v6614
      %v6679 = vunpack.c.l.b16 %v6615
      %v6680 = vunpack.c.l.b16 %v6616
      %v6681 = vunpack.c.l.b16 %v6617
      %v6682 = vunpack.c.l.b16 %v6618
      %v6683 = vunpack.c.l.b16 %v6619
      %v6684 = vunpack.c.l.b16 %v6620
      %v6685 = vpack.c.b16 %v6654, %v6653
      %v6686 = vpack.c.b16 %v6656, %v6655
      %v6687 = vpack.c.b16 %v6658, %v6657
      %v6688 = vpack.c.b16 %v6660, %v6659
      %v6689 = vpack.c.b16 %v6662, %v6661
      %v6690 = vpack.c.b16 %v6664, %v6663
      %v6691 = vpack.c.b16 %v6666, %v6665
      %v6692 = vpack.c.b16 %v6668, %v6667
      %v6693 = vpack.c.b16 %v6670, %v6669
      %v6694 = vpack.c.b16 %v6672, %v6671
      %v6695 = vpack.c.b16 %v6674, %v6673
      %v6696 = vpack.c.b16 %v6676, %v6675
      %v6697 = vpack.c.b16 %v6678, %v6677
      %v6698 = vpack.c.b16 %v6680, %v6679
      %v6699 = vpack.c.b16 %v6682, %v6681
      %v6700 = vpack.c.b16 %v6684, %v6683
      %6717 = vmatprep.subr.bf16.mxu0 0
      %6718 = vmatpush1.bf16.msra.mxu0 %v6685
      %6719 = vmatprep.subr.bf16.mxu0 0
      %6720 = vmatpush1.bf16.msra.mxu0 %v6686
      %6721 = vmatprep.subr.bf16.mxu0 0
      %6722 = vmatpush1.bf16.msra.mxu0 %v6687
      %6723 = vmatprep.subr.bf16.mxu0 0
      %6724 = vmatpush1.bf16.msra.mxu0 %v6688
      %6725 = vmatprep.subr.bf16.mxu0 0
      %6726 = vmatpush1.bf16.msra.mxu0 %v6689
      %6727 = vmatprep.subr.bf16.mxu0 0
      %6728 = vmatpush1.bf16.msra.mxu0 %v6690
      %6729 = vmatprep.subr.bf16.mxu0 0
      %6730 = vmatpush1.bf16.msra.mxu0 %v6691
      %6731 = vmatprep.subr.bf16.mxu0 0
      %6732 = vmatpush1.bf16.msra.mxu0 %v6692
      %6733 = vmatprep.subr.bf16.mxu0 0
      %6734 = vmatpush1.bf16.msra.mxu0 %v6693
      %6735 = vmatprep.subr.bf16.mxu0 0
      %6736 = vmatpush1.bf16.msra.mxu0 %v6694
      %6737 = vmatprep.subr.bf16.mxu0 0
      %6738 = vmatpush1.bf16.msra.mxu0 %v6695
      %6739 = vmatprep.subr.bf16.mxu0 0
      %6740 = vmatpush1.bf16.msra.mxu0 %v6696
      %6741 = vmatprep.subr.bf16.mxu0 0
      %6742 = vmatpush1.bf16.msra.mxu0 %v6697
      %6743 = vmatprep.subr.bf16.mxu0 0
      %6744 = vmatpush1.bf16.msra.mxu0 %v6698
      %6745 = vmatprep.subr.bf16.mxu0 0
      %6746 = vmatpush1.bf16.msra.mxu0 %v6699
      %6747 = vmatprep.subr.bf16.mxu0 0
      %6748 = vmatpush1.bf16.msra.mxu0 %v6700
      %6749 = vmatprep.mubr.bf16.mxu0 %v6196
      %6750 = vmatmul.mubr.bf16.gmra.mrb[0].mxu0 %v6184
      %v6751 = vpop.f32.mrb[0].mxu0
      %v6752 = vadd.f32 0.0, %v6751
      %v6753 = vpop.f32.mrb[0].mxu0
      %v6754 = vpop.f32.mrb[0].mxu0
      %v6755 = vadd.f32 0.0, %v6754
      %v6756 = vpop.f32.mrb[0].mxu0
      %6757 = vmatprep.mubr.bf16.mxu0 %v6220
      %6758 = vmatmul.mubr.bf16.gmra.mrb[0].mxu0 %v6208
      %v6759 = vpop.f32.mrb[0].mxu0
      %v6760 = vadd.f32 0.0, %v6759
      %v6761 = vpop.f32.mrb[0].mxu0
      %v6762 = vpop.f32.mrb[0].mxu0
      %v6763 = vadd.f32 0.0, %v6762
      %v6764 = vpop.f32.mrb[0].mxu0
      %6765 = vmatprep.mubr.bf16.mxu0 %v6244
      %6766 = vmatmul.mubr.bf16.gmra.mrb[0].mxu0 %v6232
      %v6767 = vpop.f32.mrb[0].mxu0
      %v6768 = vadd.f32 0.0, %v6767
      %v6769 = vpop.f32.mrb[0].mxu0
      %v6770 = vpop.f32.mrb[0].mxu0
      %v6771 = vadd.f32 0.0, %v6770
      %v6772 = vpop.f32.mrb[0].mxu0
      %6773 = vmatprep.mubr.bf16.mxu0 %v6268
      %6774 = vmatmul.mubr.bf16.gmra.mrb[0].mxu0 %v6256
      %v6775 = vpop.f32.mrb[0].mxu0
      %v6776 = vadd.f32 0.0, %v6775
      %v6777 = vpop.f32.mrb[0].mxu0
      %v6778 = vpop.f32.mrb[0].mxu0
      %v6779 = vadd.f32 0.0, %v6778
      %v6780 = vpop.f32.mrb[0].mxu0
      %6781 = vmatprep.mubr.bf16.mxu0 %v6292
      %6782 = vmatmul.mubr.bf16.gmra.mrb[0].mxu0 %v6280
      %v6783 = vpop.f32.mrb[0].mxu0
      %v6784 = vadd.f32 0.0, %v6783
      %v6785 = vpop.f32.mrb[0].mxu0
      %v6786 = vpop.f32.mrb[0].mxu0
      %v6787 = vadd.f32 0.0, %v6786
      %v6788 = vpop.f32.mrb[0].mxu0
      %6789 = vmatprep.mubr.bf16.mxu0 %v6316
      %6790 = vmatmul.mubr.bf16.gmra.mrb[0].mxu0 %v6304
      %v6791 = vpop.f32.mrb[0].mxu0
      %v6792 = vadd.f32 0.0, %v6791
      %v6793 = vpop.f32.mrb[0].mxu0
      %v6794 = vpop.f32.mrb[0].mxu0
      %v6795 = vadd.f32 0.0, %v6794
      %v6796 = vpop.f32.mrb[0].mxu0
      %6797 = vmatprep.mubr.bf16.mxu0 %v6340
      %6798 = vmatmul.mubr.bf16.gmra.mrb[0].mxu0 %v6328
      %v6799 = vpop.f32.mrb[0].mxu0
      %v6800 = vadd.f32 0.0, %v6799
      %v6801 = vpop.f32.mrb[0].mxu0
      %v6802 = vpop.f32.mrb[0].mxu0
      %v6803 = vadd.f32 0.0, %v6802
      %v6804 = vpop.f32.mrb[0].mxu0
      %6805 = vmatprep.mubr.bf16.mxu0 %v6364
      %6806 = vmatmul.mubr.bf16.gmra.mrb[0].mxu0 %v6352
      %v6807 = vpop.f32.mrb[0].mxu0
      %v6808 = vadd.f32 0.0, %v6807
      %v6809 = vpop.f32.mrb[0].mxu0
      %v6810 = vpop.f32.mrb[0].mxu0
      %v6811 = vadd.f32 0.0, %v6810
      %v6812 = vpop.f32.mrb[0].mxu0
      %6813 = vmatprep.mubr.bf16.mxu0 %v6388
      %6814 = vmatmul.mubr.bf16.gmra.mrb[0].mxu0 %v6376
      %v6815 = vpop.f32.mrb[0].mxu0
      %v6816 = vadd.f32 0.0, %v6815
      %v6817 = vpop.f32.mrb[0].mxu0
      %v6818 = vpop.f32.mrb[0].mxu0
      %v6819 = vadd.f32 0.0, %v6818
      %v6820 = vpop.f32.mrb[0].mxu0
      %6821 = vmatprep.mubr.bf16.mxu0 %v6412
      %6822 = vmatmul.mubr.bf16.gmra.mrb[0].mxu0 %v6400
      %v6823 = vpop.f32.mrb[0].mxu0
      %v6824 = vadd.f32 0.0, %v6823
      %v6825 = vpop.f32.mrb[0].mxu0
      %v6826 = vpop.f32.mrb[0].mxu0
      %v6827 = vadd.f32 0.0, %v6826
      %v6828 = vpop.f32.mrb[0].mxu0
      %6829 = vmatprep.mubr.bf16.mxu0 %v6436
      %6830 = vmatmul.mubr.bf16.gmra.mrb[0].mxu0 %v6424
      %v6831 = vpop.f32.mrb[0].mxu0
      %v6832 = vadd.f32 0.0, %v6831
      %v6833 = vpop.f32.mrb[0].mxu0
      %v6834 = vpop.f32.mrb[0].mxu0
      %v6835 = vadd.f32 0.0, %v6834
      %v6836 = vpop.f32.mrb[0].mxu0
      %6837 = vmatprep.mubr.bf16.mxu0 %v6460
      %6838 = vmatmul.mubr.bf16.gmra.mrb[0].mxu0 %v6448
      %v6839 = vpop.f32.mrb[0].mxu0
      %v6840 = vadd.f32 0.0, %v6839
      %v6841 = vpop.f32.mrb[0].mxu0
      %v6842 = vpop.f32.mrb[0].mxu0
      %v6843 = vadd.f32 0.0, %v6842
      %v6844 = vpop.f32.mrb[0].mxu0
      %6845 = vmatprep.mubr.bf16.mxu0 %v6484
      %6846 = vmatmul.mubr.bf16.gmra.mrb[0].mxu0 %v6472
      %v6847 = vpop.f32.mrb[0].mxu0
      %v6848 = vadd.f32 0.0, %v6847
      %v6849 = vpop.f32.mrb[0].mxu0
      %v6850 = vpop.f32.mrb[0].mxu0
      %v6851 = vadd.f32 0.0, %v6850
      %v6852 = vpop.f32.mrb[0].mxu0
      %6853 = vmatprep.mubr.bf16.mxu0 %v6508
      %6854 = vmatmul.mubr.bf16.gmra.mrb[0].mxu0 %v6496
      %v6855 = vpop.f32.mrb[0].mxu0
      %v6856 = vadd.f32 0.0, %v6855
      %v6857 = vpop.f32.mrb[0].mxu0
      %v6858 = vpop.f32.mrb[0].mxu0
      %v6859 = vadd.f32 0.0, %v6858
      %v6860 = vpop.f32.mrb[0].mxu0
      %6861 = vmatprep.mubr.bf16.mxu0 %v6532
      %6862 = vmatmul.mubr.bf16.gmra.mrb[0].mxu0 %v6520
      %v6863 = vpop.f32.mrb[0].mxu0
      %v6864 = vadd.f32 0.0, %v6863
      %v6865 = vpop.f32.mrb[0].mxu0
      %v6866 = vpop.f32.mrb[0].mxu0
      %v6867 = vadd.f32 0.0, %v6866
      %v6868 = vpop.f32.mrb[0].mxu0
      %6869 = vmatprep.mubr.bf16.mxu0 %v6556
      %6870 = vmatmul.mubr.bf16.gmra.mrb[0].mxu0 %v6544
      %v6871 = vpop.f32.mrb[0].mxu0
      %v6872 = vadd.f32 0.0, %v6871
      %v6873 = vpop.f32.mrb[0].mxu0
      %v6874 = vpop.f32.mrb[0].mxu0
      %v6875 = vadd.f32 0.0, %v6874
      %v6876 = vpop.f32.mrb[0].mxu0
      %6877 = vdwg.mxu0
      %v6878 = vadd.f32 %v6029, %v6752
      %v6879 = vadd.f32 %v6030, %v6755
      %v6880 = vadd.f32 %v6031, %v6760
      %v6881 = vadd.f32 %v6032, %v6763
      %v6882 = vadd.f32 %v6033, %v6768
      %v6883 = vadd.f32 %v6034, %v6771
      %v6884 = vadd.f32 %v6035, %v6776
      %v6885 = vadd.f32 %v6036, %v6779
      %v6886 = vadd.f32 %v6037, %v6784
      %v6887 = vadd.f32 %v6038, %v6787
      %v6888 = vadd.f32 %v6039, %v6792
      %v6889 = vadd.f32 %v6040, %v6795
      %v6890 = vadd.f32 %v6041, %v6800
      %v6891 = vadd.f32 %v6042, %v6803
      %v6892 = vadd.f32 %v6043, %v6808
      %v6893 = vadd.f32 %v6044, %v6811
      %v6894 = vadd.f32 %v6045, %v6816
      %v6895 = vadd.f32 %v6046, %v6819
      %v6896 = vadd.f32 %v6047, %v6824
      %v6897 = vadd.f32 %v6048, %v6827
      %v6898 = vadd.f32 %v6049, %v6832
      %v6899 = vadd.f32 %v6050, %v6835
      %v6900 = vadd.f32 %v6051, %v6840
      %v6901 = vadd.f32 %v6052, %v6843
      %v6902 = vadd.f32 %v6053, %v6848
      %v6903 = vadd.f32 %v6054, %v6851
      %v6904 = vadd.f32 %v6055, %v6856
      %v6905 = vadd.f32 %v6056, %v6859
      %v6906 = vadd.f32 %v6057, %v6864
      %v6907 = vadd.f32 %v6058, %v6867
      %v6908 = vadd.f32 %v6059, %v6872
      %v6909 = vadd.f32 %v6060, %v6875
      %v6910 = vld [vmem:[%s890 + $0x8] sm:$0x7]
      %v6911 = vld [vmem:[%s890 + $0x14] sm:$0x7]
      %v6912 = vld [vmem:[%s890 + $0x20] sm:$0x7]
      %v6913 = vld [vmem:[%s890 + $0x2c] sm:$0x7]
      %v6914 = vld [vmem:[%s890 + $0x38] sm:$0x7]
      %v6915 = vld [vmem:[%s890 + $0x44] sm:$0x7]
      %v6916 = vld [vmem:[%s890 + $0x50] sm:$0x7]
      %v6917 = vld [vmem:[%s890 + $0x5c] sm:$0x7]
      %v6918 = vld [vmem:[%s890 + $0x68] sm:$0x7]
      %v6919 = vld [vmem:[%s890 + $0x74] sm:$0x7]
      %v6920 = vld [vmem:[%s890 + $0x80] sm:$0x7]
      %v6921 = vld [vmem:[%s890 + $0x8c] sm:$0x7]
      %v6922 = vld [vmem:[%s890 + $0x98] sm:$0x7]
      %v6923 = vld [vmem:[%s890 + $0xa4] sm:$0x7]
      %v6924 = vld [vmem:[%s890 + $0xb0] sm:$0x7]
      %v6925 = vld [vmem:[%s890 + $0xbc] sm:$0x7]
      %s6926 = sadd.s32 %s224, 5
      %s6927 = smul.u32 %s6926, 3
      %s6928 = smul.addr %s6927, 4
      %s6929 = scalar_lea.vmem %s211, %s6928
      %v6930 = vld [vmem:[%s6929] sm:$0xf]
      %v6931 = vld [vmem:[%s6929 + $0x4] sm:$0xf]
      %v6932 = vld [vmem:[%s6929 + $0x8] sm:$0x1]
      %v6933 = vld [vmem:[%s6929 + $0xc] sm:$0xf]
      %v6934 = vld [vmem:[%s6929 + $0x10] sm:$0xf]
      %v6935 = vld [vmem:[%s6929 + $0x14] sm:$0x1]
      %v6936 = vld [vmem:[%s6929 + $0x18] sm:$0xf]
      %v6937 = vld [vmem:[%s6929 + $0x1c] sm:$0xf]
      %v6938 = vld [vmem:[%s6929 + $0x20] sm:$0x1]
      %v6939 = vld [vmem:[%s6929 + $0x24] sm:$0xf]
      %v6940 = vld [vmem:[%s6929 + $0x28] sm:$0xf]
      %v6941 = vld [vmem:[%s6929 + $0x2c] sm:$0x1]
      %v6942 = vld [vmem:[%s6929 + $0x30] sm:$0xf]
      %v6943 = vld [vmem:[%s6929 + $0x34] sm:$0xf]
      %v6944 = vld [vmem:[%s6929 + $0x38] sm:$0x1]
      %v6945 = vld [vmem:[%s6929 + $0x3c] sm:$0xf]
      %v6946 = vld [vmem:[%s6929 + $0x40] sm:$0xf]
      %v6947 = vld [vmem:[%s6929 + $0x44] sm:$0x1]
      %v6948 = vld [vmem:[%s6929 + $0x48] sm:$0xf]
      %v6949 = vld [vmem:[%s6929 + $0x4c] sm:$0xf]
      %v6950 = vld [vmem:[%s6929 + $0x50] sm:$0x1]
      %v6951 = vld [vmem:[%s6929 + $0x54] sm:$0xf]
      %v6952 = vld [vmem:[%s6929 + $0x58] sm:$0xf]
      %v6953 = vld [vmem:[%s6929 + $0x5c] sm:$0x1]
      %v6954 = vld [vmem:[%s6929 + $0x60] sm:$0xf]
      %v6955 = vld [vmem:[%s6929 + $0x64] sm:$0xf]
      %v6956 = vld [vmem:[%s6929 + $0x68] sm:$0x1]
      %v6957 = vld [vmem:[%s6929 + $0x6c] sm:$0xf]
      %v6958 = vld [vmem:[%s6929 + $0x70] sm:$0xf]
      %v6959 = vld [vmem:[%s6929 + $0x74] sm:$0x1]
      %v6960 = vld [vmem:[%s6929 + $0x78] sm:$0xf]
      %v6961 = vld [vmem:[%s6929 + $0x7c] sm:$0xf]
      %v6962 = vld [vmem:[%s6929 + $0x80] sm:$0x1]
      %v6963 = vld [vmem:[%s6929 + $0x84] sm:$0xf]
      %v6964 = vld [vmem:[%s6929 + $0x88] sm:$0xf]
      %v6965 = vld [vmem:[%s6929 + $0x8c] sm:$0x1]
      %v6966 = vld [vmem:[%s6929 + $0x90] sm:$0xf]
      %v6967 = vld [vmem:[%s6929 + $0x94] sm:$0xf]
      %v6968 = vld [vmem:[%s6929 + $0x98] sm:$0x1]
      %v6969 = vld [vmem:[%s6929 + $0x9c] sm:$0xf]
      %v6970 = vld [vmem:[%s6929 + $0xa0] sm:$0xf]
      %v6971 = vld [vmem:[%s6929 + $0xa4] sm:$0x1]
      %v6972 = vld [vmem:[%s6929 + $0xa8] sm:$0xf]
      %v6973 = vld [vmem:[%s6929 + $0xac] sm:$0xf]
      %v6974 = vld [vmem:[%s6929 + $0xb0] sm:$0x1]
      %v6975 = vld [vmem:[%s6929 + $0xb4] sm:$0xf]
      %v6976 = vld [vmem:[%s6929 + $0xb8] sm:$0xf]
      %v6977 = vld [vmem:[%s6929 + $0xbc] sm:$0x1]
      %v6994 = vunpack.c.l.b16 %v6910
      %v6995 = vunpack.c.l.b16 %v6911
      %v6996 = vunpack.c.l.b16 %v6912
      %v6997 = vunpack.c.l.b16 %v6913
      %v6998 = vunpack.c.l.b16 %v6914
      %v6999 = vunpack.c.l.b16 %v6915
      %v7000 = vunpack.c.l.b16 %v6916
      %v7001 = vunpack.c.l.b16 %v6917
      %v7002 = vunpack.c.l.b16 %v6918
      %v7003 = vunpack.c.l.b16 %v6919
      %v7004 = vunpack.c.l.b16 %v6920
      %v7005 = vunpack.c.l.b16 %v6921
      %v7006 = vunpack.c.l.b16 %v6922
      %v7007 = vunpack.c.l.b16 %v6923
      %v7008 = vunpack.c.l.b16 %v6924
      %v7009 = vunpack.c.l.b16 %v6925
      %v7010 = vpack.c.b16 %v6994, %v6994
      %v7011 = vpack.c.b16 %v6995, %v6995
      %v7012 = vpack.c.b16 %v6996, %v6996
      %v7013 = vpack.c.b16 %v6997, %v6997
      %v7014 = vpack.c.b16 %v6998, %v6998
      %v7015 = vpack.c.b16 %v6999, %v6999
      %v7016 = vpack.c.b16 %v7000, %v7000
      %v7017 = vpack.c.b16 %v7001, %v7001
      %v7018 = vpack.c.b16 %v7002, %v7002
      %v7019 = vpack.c.b16 %v7003, %v7003
      %v7020 = vpack.c.b16 %v7004, %v7004
      %v7021 = vpack.c.b16 %v7005, %v7005
      %v7022 = vpack.c.b16 %v7006, %v7006
      %v7023 = vpack.c.b16 %v7007, %v7007
      %v7024 = vpack.c.b16 %v7008, %v7008
      %v7025 = vpack.c.b16 %v7009, %v7009
      %v7074 = vunpack.c.l.b16 %v6930
      %v7075 = vunpack.c.l.b16 %v6931
      %v7076 = vunpack.c.l.b16 %v6932
      %v7077 = vunpack.c.l.b16 %v6933
      %v7078 = vunpack.c.l.b16 %v6934
      %v7079 = vunpack.c.l.b16 %v6935
      %v7080 = vunpack.c.l.b16 %v6936
      %v7081 = vunpack.c.l.b16 %v6937
      %v7082 = vunpack.c.l.b16 %v6938
      %v7083 = vunpack.c.l.b16 %v6939
      %v7084 = vunpack.c.l.b16 %v6940
      %v7085 = vunpack.c.l.b16 %v6941
      %v7086 = vunpack.c.l.b16 %v6942
      %v7087 = vunpack.c.l.b16 %v6943
      %v7088 = vunpack.c.l.b16 %v6944
      %v7089 = vunpack.c.l.b16 %v6945
      %v7090 = vunpack.c.l.b16 %v6946
      %v7091 = vunpack.c.l.b16 %v6947
      %v7092 = vunpack.c.l.b16 %v6948
      %v7093 = vunpack.c.l.b16 %v6949
      %v7094 = vunpack.c.l.b16 %v6950
      %v7095 = vunpack.c.l.b16 %v6951
      %v7096 = vunpack.c.l.b16 %v6952
      %v7097 = vunpack.c.l.b16 %v6953
      %v7098 = vunpack.c.l.b16 %v6954
      %v7099 = vunpack.c.l.b16 %v6955
      %v7100 = vunpack.c.l.b16 %v6956
      %v7101 = vunpack.c.l.b16 %v6957
      %v7102 = vunpack.c.l.b16 %v6958
      %v7103 = vunpack.c.l.b16 %v6959
      %v7104 = vunpack.c.l.b16 %v6960
      %v7105 = vunpack.c.l.b16 %v6961
      %v7106 = vunpack.c.l.b16 %v6962
      %v7107 = vunpack.c.l.b16 %v6963
      %v7108 = vunpack.c.l.b16 %v6964
      %v7109 = vunpack.c.l.b16 %v6965
      %v7110 = vunpack.c.l.b16 %v6966
      %v7111 = vunpack.c.l.b16 %v6967
      %v7112 = vunpack.c.l.b16 %v6968
      %v7113 = vunpack.c.l.b16 %v6969
      %v7114 = vunpack.c.l.b16 %v6970
      %v7115 = vunpack.c.l.b16 %v6971
      %v7116 = vunpack.c.l.b16 %v6972
      %v7117 = vunpack.c.l.b16 %v6973
      %v7118 = vunpack.c.l.b16 %v6974
      %v7119 = vunpack.c.l.b16 %v6975
      %v7120 = vunpack.c.l.b16 %v6976
      %v7121 = vunpack.c.l.b16 %v6977
      %v7122 = vpack.c.b16 %v7075, %v7074
      %v7123 = vpack.c.b16 %v7076, %v7076
      %v7124 = vpack.c.b16 %v7078, %v7077
      %v7125 = vpack.c.b16 %v7079, %v7079
      %v7126 = vpack.c.b16 %v7081, %v7080
      %v7127 = vpack.c.b16 %v7082, %v7082
      %v7128 = vpack.c.b16 %v7084, %v7083
      %v7129 = vpack.c.b16 %v7085, %v7085
      %v7130 = vpack.c.b16 %v7087, %v7086
      %v7131 = vpack.c.b16 %v7088, %v7088
      %v7132 = vpack.c.b16 %v7090, %v7089
      %v7133 = vpack.c.b16 %v7091, %v7091
      %v7134 = vpack.c.b16 %v7093, %v7092
      %v7135 = vpack.c.b16 %v7094, %v7094
      %v7136 = vpack.c.b16 %v7096, %v7095
      %v7137 = vpack.c.b16 %v7097, %v7097
      %v7138 = vpack.c.b16 %v7099, %v7098
      %v7139 = vpack.c.b16 %v7100, %v7100
      %v7140 = vpack.c.b16 %v7102, %v7101
      %v7141 = vpack.c.b16 %v7103, %v7103
      %v7142 = vpack.c.b16 %v7105, %v7104
      %v7143 = vpack.c.b16 %v7106, %v7106
      %v7144 = vpack.c.b16 %v7108, %v7107
      %v7145 = vpack.c.b16 %v7109, %v7109
      %v7146 = vpack.c.b16 %v7111, %v7110
      %v7147 = vpack.c.b16 %v7112, %v7112
      %v7148 = vpack.c.b16 %v7114, %v7113
      %v7149 = vpack.c.b16 %v7115, %v7115
      %v7150 = vpack.c.b16 %v7117, %v7116
      %v7151 = vpack.c.b16 %v7118, %v7118
      %v7152 = vpack.c.b16 %v7120, %v7119
      %v7153 = vpack.c.b16 %v7121, %v7121
      %vm7154 = vcmask 1041408
      %v7155 = vrot.slane %v7122, 6
      %v7156 = vrot.slane %v7123, 6
      %v7157 = vsel %vm7154, %v7155, %v7156
      %v7158 = vrot.slane %v7124, 6
      %v7159 = vrot.slane %v7125, 6
      %v7160 = vsel %vm7154, %v7158, %v7159
      %v7161 = vrot.slane %v7126, 6
      %v7162 = vrot.slane %v7127, 6
      %v7163 = vsel %vm7154, %v7161, %v7162
      %v7164 = vrot.slane %v7128, 6
      %v7165 = vrot.slane %v7129, 6
      %v7166 = vsel %vm7154, %v7164, %v7165
      %v7167 = vrot.slane %v7130, 6
      %v7168 = vrot.slane %v7131, 6
      %v7169 = vsel %vm7154, %v7167, %v7168
      %v7170 = vrot.slane %v7132, 6
      %v7171 = vrot.slane %v7133, 6
      %v7172 = vsel %vm7154, %v7170, %v7171
      %v7173 = vrot.slane %v7134, 6
      %v7174 = vrot.slane %v7135, 6
      %v7175 = vsel %vm7154, %v7173, %v7174
      %v7176 = vrot.slane %v7136, 6
      %v7177 = vrot.slane %v7137, 6
      %v7178 = vsel %vm7154, %v7176, %v7177
      %v7179 = vrot.slane %v7138, 6
      %v7180 = vrot.slane %v7139, 6
      %v7181 = vsel %vm7154, %v7179, %v7180
      %v7182 = vrot.slane %v7140, 6
      %v7183 = vrot.slane %v7141, 6
      %v7184 = vsel %vm7154, %v7182, %v7183
      %v7185 = vrot.slane %v7142, 6
      %v7186 = vrot.slane %v7143, 6
      %v7187 = vsel %vm7154, %v7185, %v7186
      %v7188 = vrot.slane %v7144, 6
      %v7189 = vrot.slane %v7145, 6
      %v7190 = vsel %vm7154, %v7188, %v7189
      %v7191 = vrot.slane %v7146, 6
      %v7192 = vrot.slane %v7147, 6
      %v7193 = vsel %vm7154, %v7191, %v7192
      %v7194 = vrot.slane %v7148, 6
      %v7195 = vrot.slane %v7149, 6
      %v7196 = vsel %vm7154, %v7194, %v7195
      %v7197 = vrot.slane %v7150, 6
      %v7198 = vrot.slane %v7151, 6
      %v7199 = vsel %vm7154, %v7197, %v7198
      %v7200 = vrot.slane %v7152, 6
      %v7201 = vrot.slane %v7153, 6
      %v7202 = vsel %vm7154, %v7200, %v7201
      %vm7203 = vsmask.f32 5376
      %v7204 = vrot.slane %v1968, 2
      %v7205 = vrot.slane %v1970, 3
      %v7206 = vor.u32 %v7204, %v7205
      %v7208 = vshrl.u32 %v7010, 16
      %v7210 = vrot.slane %v7208, 2
      %v7211 = vshll.u32 %v7010, 16
      %v7213 = vrot.slane %v7211, 3
      %v7214 = vor.u32 %v7210, %v7213
      %v7215 = vsel %vm7203, %v7206, %v7214
      %v7217 = vshrl.u32 %v7155, 16
      %v7219 = vrot.slane %v7217, 2
      %v7220 = vshll.u32 %v7155, 16
      %v7222 = vrot.slane %v7220, 3
      %v7223 = vor.u32 %v7219, %v7222
      %v7225 = vshrl.u32 %v7157, 16
      %v7227 = vrot.slane %v7225, 2
      %v7228 = vshll.u32 %v7157, 16
      %v7230 = vrot.slane %v7228, 3
      %v7231 = vor.u32 %v7227, %v7230
      %v7232 = vsel %vm7203, %v7223, %v7231
      %v7233 = vrot.slane %v1983, 2
      %v7234 = vrot.slane %v1985, 3
      %v7235 = vor.u32 %v7233, %v7234
      %v7237 = vshrl.u32 %v7011, 16
      %v7239 = vrot.slane %v7237, 2
      %v7240 = vshll.u32 %v7011, 16
      %v7242 = vrot.slane %v7240, 3
      %v7243 = vor.u32 %v7239, %v7242
      %v7244 = vsel %vm7203, %v7235, %v7243
      %v7246 = vshrl.u32 %v7158, 16
      %v7248 = vrot.slane %v7246, 2
      %v7249 = vshll.u32 %v7158, 16
      %v7251 = vrot.slane %v7249, 3
      %v7252 = vor.u32 %v7248, %v7251
      %v7254 = vshrl.u32 %v7160, 16
      %v7256 = vrot.slane %v7254, 2
      %v7257 = vshll.u32 %v7160, 16
      %v7259 = vrot.slane %v7257, 3
      %v7260 = vor.u32 %v7256, %v7259
      %v7261 = vsel %vm7203, %v7252, %v7260
      %v7262 = vrot.slane %v1998, 2
      %v7263 = vrot.slane %v2000, 3
      %v7264 = vor.u32 %v7262, %v7263
      %v7266 = vshrl.u32 %v7012, 16
      %v7268 = vrot.slane %v7266, 2
      %v7269 = vshll.u32 %v7012, 16
      %v7271 = vrot.slane %v7269, 3
      %v7272 = vor.u32 %v7268, %v7271
      %v7273 = vsel %vm7203, %v7264, %v7272
      %v7275 = vshrl.u32 %v7161, 16
      %v7277 = vrot.slane %v7275, 2
      %v7278 = vshll.u32 %v7161, 16
      %v7280 = vrot.slane %v7278, 3
      %v7281 = vor.u32 %v7277, %v7280
      %v7283 = vshrl.u32 %v7163, 16
      %v7285 = vrot.slane %v7283, 2
      %v7286 = vshll.u32 %v7163, 16
      %v7288 = vrot.slane %v7286, 3
      %v7289 = vor.u32 %v7285, %v7288
      %v7290 = vsel %vm7203, %v7281, %v7289
      %v7291 = vrot.slane %v2013, 2
      %v7292 = vrot.slane %v2015, 3
      %v7293 = vor.u32 %v7291, %v7292
      %v7295 = vshrl.u32 %v7013, 16
      %v7297 = vrot.slane %v7295, 2
      %v7298 = vshll.u32 %v7013, 16
      %v7300 = vrot.slane %v7298, 3
      %v7301 = vor.u32 %v7297, %v7300
      %v7302 = vsel %vm7203, %v7293, %v7301
      %v7304 = vshrl.u32 %v7164, 16
      %v7306 = vrot.slane %v7304, 2
      %v7307 = vshll.u32 %v7164, 16
      %v7309 = vrot.slane %v7307, 3
      %v7310 = vor.u32 %v7306, %v7309
      %v7312 = vshrl.u32 %v7166, 16
      %v7314 = vrot.slane %v7312, 2
      %v7315 = vshll.u32 %v7166, 16
      %v7317 = vrot.slane %v7315, 3
      %v7318 = vor.u32 %v7314, %v7317
      %v7319 = vsel %vm7203, %v7310, %v7318
      %v7320 = vrot.slane %v2028, 2
      %v7321 = vrot.slane %v2030, 3
      %v7322 = vor.u32 %v7320, %v7321
      %v7324 = vshrl.u32 %v7014, 16
      %v7326 = vrot.slane %v7324, 2
      %v7327 = vshll.u32 %v7014, 16
      %v7329 = vrot.slane %v7327, 3
      %v7330 = vor.u32 %v7326, %v7329
      %v7331 = vsel %vm7203, %v7322, %v7330
      %v7333 = vshrl.u32 %v7167, 16
      %v7335 = vrot.slane %v7333, 2
      %v7336 = vshll.u32 %v7167, 16
      %v7338 = vrot.slane %v7336, 3
      %v7339 = vor.u32 %v7335, %v7338
      %v7341 = vshrl.u32 %v7169, 16
      %v7343 = vrot.slane %v7341, 2
      %v7344 = vshll.u32 %v7169, 16
      %v7346 = vrot.slane %v7344, 3
      %v7347 = vor.u32 %v7343, %v7346
      %v7348 = vsel %vm7203, %v7339, %v7347
      %v7349 = vrot.slane %v2043, 2
      %v7350 = vrot.slane %v2045, 3
      %v7351 = vor.u32 %v7349, %v7350
      %v7353 = vshrl.u32 %v7015, 16
      %v7355 = vrot.slane %v7353, 2
      %v7356 = vshll.u32 %v7015, 16
      %v7358 = vrot.slane %v7356, 3
      %v7359 = vor.u32 %v7355, %v7358
      %v7360 = vsel %vm7203, %v7351, %v7359
      %v7362 = vshrl.u32 %v7170, 16
      %v7364 = vrot.slane %v7362, 2
      %v7365 = vshll.u32 %v7170, 16
      %v7367 = vrot.slane %v7365, 3
      %v7368 = vor.u32 %v7364, %v7367
      %v7370 = vshrl.u32 %v7172, 16
      %v7372 = vrot.slane %v7370, 2
      %v7373 = vshll.u32 %v7172, 16
      %v7375 = vrot.slane %v7373, 3
      %v7376 = vor.u32 %v7372, %v7375
      %v7377 = vsel %vm7203, %v7368, %v7376
      %v7378 = vrot.slane %v2058, 2
      %v7379 = vrot.slane %v2060, 3
      %v7380 = vor.u32 %v7378, %v7379
      %v7382 = vshrl.u32 %v7016, 16
      %v7384 = vrot.slane %v7382, 2
      %v7385 = vshll.u32 %v7016, 16
      %v7387 = vrot.slane %v7385, 3
      %v7388 = vor.u32 %v7384, %v7387
      %v7389 = vsel %vm7203, %v7380, %v7388
      %v7391 = vshrl.u32 %v7173, 16
      %v7393 = vrot.slane %v7391, 2
      %v7394 = vshll.u32 %v7173, 16
      %v7396 = vrot.slane %v7394, 3
      %v7397 = vor.u32 %v7393, %v7396
      %v7399 = vshrl.u32 %v7175, 16
      %v7401 = vrot.slane %v7399, 2
      %v7402 = vshll.u32 %v7175, 16
      %v7404 = vrot.slane %v7402, 3
      %v7405 = vor.u32 %v7401, %v7404
      %v7406 = vsel %vm7203, %v7397, %v7405
      %v7407 = vrot.slane %v2073, 2
      %v7408 = vrot.slane %v2075, 3
      %v7409 = vor.u32 %v7407, %v7408
      %v7411 = vshrl.u32 %v7017, 16
      %v7413 = vrot.slane %v7411, 2
      %v7414 = vshll.u32 %v7017, 16
      %v7416 = vrot.slane %v7414, 3
      %v7417 = vor.u32 %v7413, %v7416
      %v7418 = vsel %vm7203, %v7409, %v7417
      %v7420 = vshrl.u32 %v7176, 16
      %v7422 = vrot.slane %v7420, 2
      %v7423 = vshll.u32 %v7176, 16
      %v7425 = vrot.slane %v7423, 3
      %v7426 = vor.u32 %v7422, %v7425
      %v7428 = vshrl.u32 %v7178, 16
      %v7430 = vrot.slane %v7428, 2
      %v7431 = vshll.u32 %v7178, 16
      %v7433 = vrot.slane %v7431, 3
      %v7434 = vor.u32 %v7430, %v7433
      %v7435 = vsel %vm7203, %v7426, %v7434
      %v7436 = vrot.slane %v2088, 2
      %v7437 = vrot.slane %v2090, 3
      %v7438 = vor.u32 %v7436, %v7437
      %v7440 = vshrl.u32 %v7018, 16
      %v7442 = vrot.slane %v7440, 2
      %v7443 = vshll.u32 %v7018, 16
      %v7445 = vrot.slane %v7443, 3
      %v7446 = vor.u32 %v7442, %v7445
      %v7447 = vsel %vm7203, %v7438, %v7446
      %v7449 = vshrl.u32 %v7179, 16
      %v7451 = vrot.slane %v7449, 2
      %v7452 = vshll.u32 %v7179, 16
      %v7454 = vrot.slane %v7452, 3
      %v7455 = vor.u32 %v7451, %v7454
      %v7457 = vshrl.u32 %v7181, 16
      %v7459 = vrot.slane %v7457, 2
      %v7460 = vshll.u32 %v7181, 16
      %v7462 = vrot.slane %v7460, 3
      %v7463 = vor.u32 %v7459, %v7462
      %v7464 = vsel %vm7203, %v7455, %v7463
      %v7465 = vrot.slane %v2103, 2
      %v7466 = vrot.slane %v2105, 3
      %v7467 = vor.u32 %v7465, %v7466
      %v7469 = vshrl.u32 %v7019, 16
      %v7471 = vrot.slane %v7469, 2
      %v7472 = vshll.u32 %v7019, 16
      %v7474 = vrot.slane %v7472, 3
      %v7475 = vor.u32 %v7471, %v7474
      %v7476 = vsel %vm7203, %v7467, %v7475
      %v7478 = vshrl.u32 %v7182, 16
      %v7480 = vrot.slane %v7478, 2
      %v7481 = vshll.u32 %v7182, 16
      %v7483 = vrot.slane %v7481, 3
      %v7484 = vor.u32 %v7480, %v7483
      %v7486 = vshrl.u32 %v7184, 16
      %v7488 = vrot.slane %v7486, 2
      %v7489 = vshll.u32 %v7184, 16
      %v7491 = vrot.slane %v7489, 3
      %v7492 = vor.u32 %v7488, %v7491
      %v7493 = vsel %vm7203, %v7484, %v7492
      %v7494 = vrot.slane %v2118, 2
      %v7495 = vrot.slane %v2120, 3
      %v7496 = vor.u32 %v7494, %v7495
      %v7498 = vshrl.u32 %v7020, 16
      %v7500 = vrot.slane %v7498, 2
      %v7501 = vshll.u32 %v7020, 16
      %v7503 = vrot.slane %v7501, 3
      %v7504 = vor.u32 %v7500, %v7503
      %v7505 = vsel %vm7203, %v7496, %v7504
      %v7507 = vshrl.u32 %v7185, 16
      %v7509 = vrot.slane %v7507, 2
      %v7510 = vshll.u32 %v7185, 16
      %v7512 = vrot.slane %v7510, 3
      %v7513 = vor.u32 %v7509, %v7512
      %v7515 = vshrl.u32 %v7187, 16
      %v7517 = vrot.slane %v7515, 2
      %v7518 = vshll.u32 %v7187, 16
      %v7520 = vrot.slane %v7518, 3
      %v7521 = vor.u32 %v7517, %v7520
      %v7522 = vsel %vm7203, %v7513, %v7521
      %v7523 = vrot.slane %v2133, 2
      %v7524 = vrot.slane %v2135, 3
      %v7525 = vor.u32 %v7523, %v7524
      %v7527 = vshrl.u32 %v7021, 16
      %v7529 = vrot.slane %v7527, 2
      %v7530 = vshll.u32 %v7021, 16
      %v7532 = vrot.slane %v7530, 3
      %v7533 = vor.u32 %v7529, %v7532
      %v7534 = vsel %vm7203, %v7525, %v7533
      %v7536 = vshrl.u32 %v7188, 16
      %v7538 = vrot.slane %v7536, 2
      %v7539 = vshll.u32 %v7188, 16
      %v7541 = vrot.slane %v7539, 3
      %v7542 = vor.u32 %v7538, %v7541
      %v7544 = vshrl.u32 %v7190, 16
      %v7546 = vrot.slane %v7544, 2
      %v7547 = vshll.u32 %v7190, 16
      %v7549 = vrot.slane %v7547, 3
      %v7550 = vor.u32 %v7546, %v7549
      %v7551 = vsel %vm7203, %v7542, %v7550
      %v7552 = vrot.slane %v2148, 2
      %v7553 = vrot.slane %v2150, 3
      %v7554 = vor.u32 %v7552, %v7553
      %v7556 = vshrl.u32 %v7022, 16
      %v7558 = vrot.slane %v7556, 2
      %v7559 = vshll.u32 %v7022, 16
      %v7561 = vrot.slane %v7559, 3
      %v7562 = vor.u32 %v7558, %v7561
      %v7563 = vsel %vm7203, %v7554, %v7562
      %v7565 = vshrl.u32 %v7191, 16
      %v7567 = vrot.slane %v7565, 2
      %v7568 = vshll.u32 %v7191, 16
      %v7570 = vrot.slane %v7568, 3
      %v7571 = vor.u32 %v7567, %v7570
      %v7573 = vshrl.u32 %v7193, 16
      %v7575 = vrot.slane %v7573, 2
      %v7576 = vshll.u32 %v7193, 16
      %v7578 = vrot.slane %v7576, 3
      %v7579 = vor.u32 %v7575, %v7578
      %v7580 = vsel %vm7203, %v7571, %v7579
      %v7581 = vrot.slane %v2163, 2
      %v7582 = vrot.slane %v2165, 3
      %v7583 = vor.u32 %v7581, %v7582
      %v7585 = vshrl.u32 %v7023, 16
      %v7587 = vrot.slane %v7585, 2
      %v7588 = vshll.u32 %v7023, 16
      %v7590 = vrot.slane %v7588, 3
      %v7591 = vor.u32 %v7587, %v7590
      %v7592 = vsel %vm7203, %v7583, %v7591
      %v7594 = vshrl.u32 %v7194, 16
      %v7596 = vrot.slane %v7594, 2
      %v7597 = vshll.u32 %v7194, 16
      %v7599 = vrot.slane %v7597, 3
      %v7600 = vor.u32 %v7596, %v7599
      %v7602 = vshrl.u32 %v7196, 16
      %v7604 = vrot.slane %v7602, 2
      %v7605 = vshll.u32 %v7196, 16
      %v7607 = vrot.slane %v7605, 3
      %v7608 = vor.u32 %v7604, %v7607
      %v7609 = vsel %vm7203, %v7600, %v7608
      %v7610 = vrot.slane %v2178, 2
      %v7611 = vrot.slane %v2180, 3
      %v7612 = vor.u32 %v7610, %v7611
      %v7614 = vshrl.u32 %v7024, 16
      %v7616 = vrot.slane %v7614, 2
      %v7617 = vshll.u32 %v7024, 16
      %v7619 = vrot.slane %v7617, 3
      %v7620 = vor.u32 %v7616, %v7619
      %v7621 = vsel %vm7203, %v7612, %v7620
      %v7623 = vshrl.u32 %v7197, 16
      %v7625 = vrot.slane %v7623, 2
      %v7626 = vshll.u32 %v7197, 16
      %v7628 = vrot.slane %v7626, 3
      %v7629 = vor.u32 %v7625, %v7628
      %v7631 = vshrl.u32 %v7199, 16
      %v7633 = vrot.slane %v7631, 2
      %v7634 = vshll.u32 %v7199, 16
      %v7636 = vrot.slane %v7634, 3
      %v7637 = vor.u32 %v7633, %v7636
      %v7638 = vsel %vm7203, %v7629, %v7637
      %v7639 = vrot.slane %v2193, 2
      %v7640 = vrot.slane %v2195, 3
      %v7641 = vor.u32 %v7639, %v7640
      %v7643 = vshrl.u32 %v7025, 16
      %v7645 = vrot.slane %v7643, 2
      %v7646 = vshll.u32 %v7025, 16
      %v7648 = vrot.slane %v7646, 3
      %v7649 = vor.u32 %v7645, %v7648
      %v7650 = vsel %vm7203, %v7641, %v7649
      %v7652 = vshrl.u32 %v7200, 16
      %v7654 = vrot.slane %v7652, 2
      %v7655 = vshll.u32 %v7200, 16
      %v7657 = vrot.slane %v7655, 3
      %v7658 = vor.u32 %v7654, %v7657
      %v7660 = vshrl.u32 %v7202, 16
      %v7662 = vrot.slane %v7660, 2
      %v7663 = vshll.u32 %v7202, 16
      %v7665 = vrot.slane %v7663, 3
      %v7666 = vor.u32 %v7662, %v7665
      %v7667 = vsel %vm7203, %v7658, %v7666
      %v7700 = vld [vmem:[%s1 + $0x380] sm:$0xf]
      %v7701 = vld [vmem:[%s1 + $0x384] sm:$0xf]
      %v7702 = vld [vmem:[%s1 + $0x388] sm:$0xf]
      %v7703 = vld [vmem:[%s1 + $0x38c] sm:$0xf]
      %v7704 = vld [vmem:[%s1 + $0x390] sm:$0xf]
      %v7705 = vld [vmem:[%s1 + $0x394] sm:$0xf]
      %v7706 = vld [vmem:[%s1 + $0x398] sm:$0xf]
      %v7707 = vld [vmem:[%s1 + $0x39c] sm:$0xf]
      %v7708 = vld [vmem:[%s1 + $0x3a0] sm:$0xf]
      %v7709 = vld [vmem:[%s1 + $0x3a4] sm:$0xf]
      %v7710 = vld [vmem:[%s1 + $0x3a8] sm:$0xf]
      %v7711 = vld [vmem:[%s1 + $0x3ac] sm:$0xf]
      %v7712 = vld [vmem:[%s1 + $0x3b0] sm:$0xf]
      %v7713 = vld [vmem:[%s1 + $0x3b4] sm:$0xf]
      %v7714 = vld [vmem:[%s1 + $0x3b8] sm:$0xf]
      %v7715 = vld [vmem:[%s1 + $0x3bc] sm:$0xf]
      %v7716 = vld [vmem:[%s1 + $0x3c0] sm:$0xf]
      %v7717 = vld [vmem:[%s1 + $0x3c4] sm:$0xf]
      %v7718 = vld [vmem:[%s1 + $0x3c8] sm:$0xf]
      %v7719 = vld [vmem:[%s1 + $0x3cc] sm:$0xf]
      %v7720 = vld [vmem:[%s1 + $0x3d0] sm:$0xf]
      %v7721 = vld [vmem:[%s1 + $0x3d4] sm:$0xf]
      %v7722 = vld [vmem:[%s1 + $0x3d8] sm:$0xf]
      %v7723 = vld [vmem:[%s1 + $0x3dc] sm:$0xf]
      %v7724 = vld [vmem:[%s1 + $0x3e0] sm:$0xf]
      %v7725 = vld [vmem:[%s1 + $0x3e4] sm:$0xf]
      %v7726 = vld [vmem:[%s1 + $0x3e8] sm:$0xf]
      %v7727 = vld [vmem:[%s1 + $0x3ec] sm:$0xf]
      %v7728 = vld [vmem:[%s1 + $0x3f0] sm:$0xf]
      %v7729 = vld [vmem:[%s1 + $0x3f4] sm:$0xf]
      %v7730 = vld [vmem:[%s1 + $0x3f8] sm:$0xf]
      %v7731 = vld [vmem:[%s1 + $0x3fc] sm:$0xf]
      %v7764 = vunpack.c.l.b16 %v7700
      %v7765 = vunpack.c.l.b16 %v7701
      %v7766 = vunpack.c.l.b16 %v7702
      %v7767 = vunpack.c.l.b16 %v7703
      %v7768 = vunpack.c.l.b16 %v7704
      %v7769 = vunpack.c.l.b16 %v7705
      %v7770 = vunpack.c.l.b16 %v7706
      %v7771 = vunpack.c.l.b16 %v7707
      %v7772 = vunpack.c.l.b16 %v7708
      %v7773 = vunpack.c.l.b16 %v7709
      %v7774 = vunpack.c.l.b16 %v7710
      %v7775 = vunpack.c.l.b16 %v7711
      %v7776 = vunpack.c.l.b16 %v7712
      %v7777 = vunpack.c.l.b16 %v7713
      %v7778 = vunpack.c.l.b16 %v7714
      %v7779 = vunpack.c.l.b16 %v7715
      %v7780 = vunpack.c.l.b16 %v7716
      %v7781 = vunpack.c.l.b16 %v7717
      %v7782 = vunpack.c.l.b16 %v7718
      %v7783 = vunpack.c.l.b16 %v7719
      %v7784 = vunpack.c.l.b16 %v7720
      %v7785 = vunpack.c.l.b16 %v7721
      %v7786 = vunpack.c.l.b16 %v7722
      %v7787 = vunpack.c.l.b16 %v7723
      %v7788 = vunpack.c.l.b16 %v7724
      %v7789 = vunpack.c.l.b16 %v7725
      %v7790 = vunpack.c.l.b16 %v7726
      %v7791 = vunpack.c.l.b16 %v7727
      %v7792 = vunpack.c.l.b16 %v7728
      %v7793 = vunpack.c.l.b16 %v7729
      %v7794 = vunpack.c.l.b16 %v7730
      %v7795 = vunpack.c.l.b16 %v7731
      %v7796 = vpack.c.b16 %v7765, %v7764
      %v7797 = vpack.c.b16 %v7767, %v7766
      %v7798 = vpack.c.b16 %v7769, %v7768
      %v7799 = vpack.c.b16 %v7771, %v7770
      %v7800 = vpack.c.b16 %v7773, %v7772
      %v7801 = vpack.c.b16 %v7775, %v7774
      %v7802 = vpack.c.b16 %v7777, %v7776
      %v7803 = vpack.c.b16 %v7779, %v7778
      %v7804 = vpack.c.b16 %v7781, %v7780
      %v7805 = vpack.c.b16 %v7783, %v7782
      %v7806 = vpack.c.b16 %v7785, %v7784
      %v7807 = vpack.c.b16 %v7787, %v7786
      %v7808 = vpack.c.b16 %v7789, %v7788
      %v7809 = vpack.c.b16 %v7791, %v7790
      %v7810 = vpack.c.b16 %v7793, %v7792
      %v7811 = vpack.c.b16 %v7795, %v7794
      %7828 = vmatprep.subr.bf16.mxu0 0
      %7829 = vmatpush1.bf16.msra.mxu0 %v7796
      %7830 = vmatprep.subr.bf16.mxu0 0
      %7831 = vmatpush1.bf16.msra.mxu0 %v7797
      %7832 = vmatprep.subr.bf16.mxu0 0
      %7833 = vmatpush1.bf16.msra.mxu0 %v7798
      %7834 = vmatprep.subr.bf16.mxu0 0
      %7835 = vmatpush1.bf16.msra.mxu0 %v7799
      %7836 = vmatprep.subr.bf16.mxu0 0
      %7837 = vmatpush1.bf16.msra.mxu0 %v7800
      %7838 = vmatprep.subr.bf16.mxu0 0
      %7839 = vmatpush1.bf16.msra.mxu0 %v7801
      %7840 = vmatprep.subr.bf16.mxu0 0
      %7841 = vmatpush1.bf16.msra.mxu0 %v7802
      %7842 = vmatprep.subr.bf16.mxu0 0
      %7843 = vmatpush1.bf16.msra.mxu0 %v7803
      %7844 = vmatprep.subr.bf16.mxu0 0
      %7845 = vmatpush1.bf16.msra.mxu0 %v7804
      %7846 = vmatprep.subr.bf16.mxu0 0
      %7847 = vmatpush1.bf16.msra.mxu0 %v7805
      %7848 = vmatprep.subr.bf16.mxu0 0
      %7849 = vmatpush1.bf16.msra.mxu0 %v7806
      %7850 = vmatprep.subr.bf16.mxu0 0
      %7851 = vmatpush1.bf16.msra.mxu0 %v7807
      %7852 = vmatprep.subr.bf16.mxu0 0
      %7853 = vmatpush1.bf16.msra.mxu0 %v7808
      %7854 = vmatprep.subr.bf16.mxu0 0
      %7855 = vmatpush1.bf16.msra.mxu0 %v7809
      %7856 = vmatprep.subr.bf16.mxu0 0
      %7857 = vmatpush1.bf16.msra.mxu0 %v7810
      %7858 = vmatprep.subr.bf16.mxu0 0
      %7859 = vmatpush1.bf16.msra.mxu0 %v7811
      %7860 = vmatprep.mubr.bf16.mxu0 %v7232
      %7861 = vmatmul.mubr.bf16.gmra.mrb[0].mxu0 %v7215
      %v7862 = vpop.f32.mrb[0].mxu0
      %v7863 = vadd.f32 0.0, %v7862
      %v7864 = vpop.f32.mrb[0].mxu0
      %v7865 = vpop.f32.mrb[0].mxu0
      %v7866 = vadd.f32 0.0, %v7865
      %v7867 = vpop.f32.mrb[0].mxu0
      %7868 = vmatprep.mubr.bf16.mxu0 %v7261
      %7869 = vmatmul.mubr.bf16.gmra.mrb[0].mxu0 %v7244
      %v7870 = vpop.f32.mrb[0].mxu0
      %v7871 = vadd.f32 0.0, %v7870
      %v7872 = vpop.f32.mrb[0].mxu0
      %v7873 = vpop.f32.mrb[0].mxu0
      %v7874 = vadd.f32 0.0, %v7873
      %v7875 = vpop.f32.mrb[0].mxu0
      %7876 = vmatprep.mubr.bf16.mxu0 %v7290
      %7877 = vmatmul.mubr.bf16.gmra.mrb[0].mxu0 %v7273
      %v7878 = vpop.f32.mrb[0].mxu0
      %v7879 = vadd.f32 0.0, %v7878
      %v7880 = vpop.f32.mrb[0].mxu0
      %v7881 = vpop.f32.mrb[0].mxu0
      %v7882 = vadd.f32 0.0, %v7881
      %v7883 = vpop.f32.mrb[0].mxu0
      %7884 = vmatprep.mubr.bf16.mxu0 %v7319
      %7885 = vmatmul.mubr.bf16.gmra.mrb[0].mxu0 %v7302
      %v7886 = vpop.f32.mrb[0].mxu0
      %v7887 = vadd.f32 0.0, %v7886
      %v7888 = vpop.f32.mrb[0].mxu0
      %v7889 = vpop.f32.mrb[0].mxu0
      %v7890 = vadd.f32 0.0, %v7889
      %v7891 = vpop.f32.mrb[0].mxu0
      %7892 = vmatprep.mubr.bf16.mxu0 %v7348
      %7893 = vmatmul.mubr.bf16.gmra.mrb[0].mxu0 %v7331
      %v7894 = vpop.f32.mrb[0].mxu0
      %v7895 = vadd.f32 0.0, %v7894
      %v7896 = vpop.f32.mrb[0].mxu0
      %v7897 = vpop.f32.mrb[0].mxu0
      %v7898 = vadd.f32 0.0, %v7897
      %v7899 = vpop.f32.mrb[0].mxu0
      %7900 = vmatprep.mubr.bf16.mxu0 %v7377
      %7901 = vmatmul.mubr.bf16.gmra.mrb[0].mxu0 %v7360
      %v7902 = vpop.f32.mrb[0].mxu0
      %v7903 = vadd.f32 0.0, %v7902
      %v7904 = vpop.f32.mrb[0].mxu0
      %v7905 = vpop.f32.mrb[0].mxu0
      %v7906 = vadd.f32 0.0, %v7905
      %v7907 = vpop.f32.mrb[0].mxu0
      %7908 = vmatprep.mubr.bf16.mxu0 %v7406
      %7909 = vmatmul.mubr.bf16.gmra.mrb[0].mxu0 %v7389
      %v7910 = vpop.f32.mrb[0].mxu0
      %v7911 = vadd.f32 0.0, %v7910
      %v7912 = vpop.f32.mrb[0].mxu0
      %v7913 = vpop.f32.mrb[0].mxu0
      %v7914 = vadd.f32 0.0, %v7913
      %v7915 = vpop.f32.mrb[0].mxu0
      %7916 = vmatprep.mubr.bf16.mxu0 %v7435
      %7917 = vmatmul.mubr.bf16.gmra.mrb[0].mxu0 %v7418
      %v7918 = vpop.f32.mrb[0].mxu0
      %v7919 = vadd.f32 0.0, %v7918
      %v7920 = vpop.f32.mrb[0].mxu0
      %v7921 = vpop.f32.mrb[0].mxu0
      %v7922 = vadd.f32 0.0, %v7921
      %v7923 = vpop.f32.mrb[0].mxu0
      %7924 = vmatprep.mubr.bf16.mxu0 %v7464
      %7925 = vmatmul.mubr.bf16.gmra.mrb[0].mxu0 %v7447
      %v7926 = vpop.f32.mrb[0].mxu0
      %v7927 = vadd.f32 0.0, %v7926
      %v7928 = vpop.f32.mrb[0].mxu0
      %v7929 = vpop.f32.mrb[0].mxu0
      %v7930 = vadd.f32 0.0, %v7929
      %v7931 = vpop.f32.mrb[0].mxu0
      %7932 = vmatprep.mubr.bf16.mxu0 %v7493
      %7933 = vmatmul.mubr.bf16.gmra.mrb[0].mxu0 %v7476
      %v7934 = vpop.f32.mrb[0].mxu0
      %v7935 = vadd.f32 0.0, %v7934
      %v7936 = vpop.f32.mrb[0].mxu0
      %v7937 = vpop.f32.mrb[0].mxu0
      %v7938 = vadd.f32 0.0, %v7937
      %v7939 = vpop.f32.mrb[0].mxu0
      %7940 = vmatprep.mubr.bf16.mxu0 %v7522
      %7941 = vmatmul.mubr.bf16.gmra.mrb[0].mxu0 %v7505
      %v7942 = vpop.f32.mrb[0].mxu0
      %v7943 = vadd.f32 0.0, %v7942
      %v7944 = vpop.f32.mrb[0].mxu0
      %v7945 = vpop.f32.mrb[0].mxu0
      %v7946 = vadd.f32 0.0, %v7945
      %v7947 = vpop.f32.mrb[0].mxu0
      %7948 = vmatprep.mubr.bf16.mxu0 %v7551
      %7949 = vmatmul.mubr.bf16.gmra.mrb[0].mxu0 %v7534
      %v7950 = vpop.f32.mrb[0].mxu0
      %v7951 = vadd.f32 0.0, %v7950
      %v7952 = vpop.f32.mrb[0].mxu0
      %v7953 = vpop.f32.mrb[0].mxu0
      %v7954 = vadd.f32 0.0, %v7953
      %v7955 = vpop.f32.mrb[0].mxu0
      %7956 = vmatprep.mubr.bf16.mxu0 %v7580
      %7957 = vmatmul.mubr.bf16.gmra.mrb[0].mxu0 %v7563
      %v7958 = vpop.f32.mrb[0].mxu0
      %v7959 = vadd.f32 0.0, %v7958
      %v7960 = vpop.f32.mrb[0].mxu0
      %v7961 = vpop.f32.mrb[0].mxu0
      %v7962 = vadd.f32 0.0, %v7961
      %v7963 = vpop.f32.mrb[0].mxu0
      %7964 = vmatprep.mubr.bf16.mxu0 %v7609
      %7965 = vmatmul.mubr.bf16.gmra.mrb[0].mxu0 %v7592
      %v7966 = vpop.f32.mrb[0].mxu0
      %v7967 = vadd.f32 0.0, %v7966
      %v7968 = vpop.f32.mrb[0].mxu0
      %v7969 = vpop.f32.mrb[0].mxu0
      %v7970 = vadd.f32 0.0, %v7969
      %v7971 = vpop.f32.mrb[0].mxu0
      %7972 = vmatprep.mubr.bf16.mxu0 %v7638
      %7973 = vmatmul.mubr.bf16.gmra.mrb[0].mxu0 %v7621
      %v7974 = vpop.f32.mrb[0].mxu0
      %v7975 = vadd.f32 0.0, %v7974
      %v7976 = vpop.f32.mrb[0].mxu0
      %v7977 = vpop.f32.mrb[0].mxu0
      %v7978 = vadd.f32 0.0, %v7977
      %v7979 = vpop.f32.mrb[0].mxu0
      %7980 = vmatprep.mubr.bf16.mxu0 %v7667
      %7981 = vmatmul.mubr.bf16.gmra.mrb[0].mxu0 %v7650
      %v7982 = vpop.f32.mrb[0].mxu0
      %v7983 = vadd.f32 0.0, %v7982
      %v7984 = vpop.f32.mrb[0].mxu0
      %v7985 = vpop.f32.mrb[0].mxu0
      %v7986 = vadd.f32 0.0, %v7985
      %v7987 = vpop.f32.mrb[0].mxu0
      %7988 = vdwg.mxu0
      %v7989 = vadd.f32 %v6878, %v7863
      %v7990 = vadd.f32 %v6879, %v7866
      %v7991 = vadd.f32 %v6880, %v7871
      %v7992 = vadd.f32 %v6881, %v7874
      %v7993 = vadd.f32 %v6882, %v7879
      %v7994 = vadd.f32 %v6883, %v7882
      %v7995 = vadd.f32 %v6884, %v7887
      %v7996 = vadd.f32 %v6885, %v7890
      %v7997 = vadd.f32 %v6886, %v7895
      %v7998 = vadd.f32 %v6887, %v7898
      %v7999 = vadd.f32 %v6888, %v7903
      %v8000 = vadd.f32 %v6889, %v7906
      %v8001 = vadd.f32 %v6890, %v7911
      %v8002 = vadd.f32 %v6891, %v7914
      %v8003 = vadd.f32 %v6892, %v7919
      %v8004 = vadd.f32 %v6893, %v7922
      %v8005 = vadd.f32 %v6894, %v7927
      %v8006 = vadd.f32 %v6895, %v7930
      %v8007 = vadd.f32 %v6896, %v7935
      %v8008 = vadd.f32 %v6897, %v7938
      %v8009 = vadd.f32 %v6898, %v7943
      %v8010 = vadd.f32 %v6899, %v7946
      %v8011 = vadd.f32 %v6900, %v7951
      %v8012 = vadd.f32 %v6901, %v7954
      %v8013 = vadd.f32 %v6902, %v7959
      %v8014 = vadd.f32 %v6903, %v7962
      %v8015 = vadd.f32 %v6904, %v7967
      %v8016 = vadd.f32 %v6905, %v7970
      %v8017 = vadd.f32 %v6906, %v7975
      %v8018 = vadd.f32 %v6907, %v7978
      %v8019 = vadd.f32 %v6908, %v7983
      %v8020 = vadd.f32 %v6909, %v7986
      %v8021 = vld [vmem:[%s6929] sm:$0xe]
      %v8022 = vld [vmem:[%s6929 + $0x8] sm:$0x3]
      %v8023 = vld [vmem:[%s6929 + $0xc] sm:$0xe]
      %v8024 = vld [vmem:[%s6929 + $0x14] sm:$0x3]
      %v8025 = vld [vmem:[%s6929 + $0x18] sm:$0xe]
      %v8026 = vld [vmem:[%s6929 + $0x20] sm:$0x3]
      %v8027 = vld [vmem:[%s6929 + $0x24] sm:$0xe]
      %v8028 = vld [vmem:[%s6929 + $0x2c] sm:$0x3]
      %v8029 = vld [vmem:[%s6929 + $0x30] sm:$0xe]
      %v8030 = vld [vmem:[%s6929 + $0x38] sm:$0x3]
      %v8031 = vld [vmem:[%s6929 + $0x3c] sm:$0xe]
      %v8032 = vld [vmem:[%s6929 + $0x44] sm:$0x3]
      %v8033 = vld [vmem:[%s6929 + $0x48] sm:$0xe]
      %v8034 = vld [vmem:[%s6929 + $0x50] sm:$0x3]
      %v8035 = vld [vmem:[%s6929 + $0x54] sm:$0xe]
      %v8036 = vld [vmem:[%s6929 + $0x5c] sm:$0x3]
      %v8037 = vld [vmem:[%s6929 + $0x60] sm:$0xe]
      %v8038 = vld [vmem:[%s6929 + $0x68] sm:$0x3]
      %v8039 = vld [vmem:[%s6929 + $0x6c] sm:$0xe]
      %v8040 = vld [vmem:[%s6929 + $0x74] sm:$0x3]
      %v8041 = vld [vmem:[%s6929 + $0x78] sm:$0xe]
      %v8042 = vld [vmem:[%s6929 + $0x80] sm:$0x3]
      %v8043 = vld [vmem:[%s6929 + $0x84] sm:$0xe]
      %v8044 = vld [vmem:[%s6929 + $0x8c] sm:$0x3]
      %v8045 = vld [vmem:[%s6929 + $0x90] sm:$0xe]
      %v8046 = vld [vmem:[%s6929 + $0x98] sm:$0x3]
      %v8047 = vld [vmem:[%s6929 + $0x9c] sm:$0xe]
      %v8048 = vld [vmem:[%s6929 + $0xa4] sm:$0x3]
      %v8049 = vld [vmem:[%s6929 + $0xa8] sm:$0xe]
      %v8050 = vld [vmem:[%s6929 + $0xb0] sm:$0x3]
      %v8051 = vld [vmem:[%s6929 + $0xb4] sm:$0xe]
      %v8052 = vld [vmem:[%s6929 + $0xbc] sm:$0x3]
      %v8053 = vld [vmem:[%s6929] sm:$0xc]
      %v8054 = vld [vmem:[%s6929 + $0x8] sm:$0x7]
      %v8055 = vld [vmem:[%s6929 + $0xc] sm:$0xc]
      %v8056 = vld [vmem:[%s6929 + $0x14] sm:$0x7]
      %v8057 = vld [vmem:[%s6929 + $0x18] sm:$0xc]
      %v8058 = vld [vmem:[%s6929 + $0x20] sm:$0x7]
      %v8059 = vld [vmem:[%s6929 + $0x24] sm:$0xc]
      %v8060 = vld [vmem:[%s6929 + $0x2c] sm:$0x7]
      %v8061 = vld [vmem:[%s6929 + $0x30] sm:$0xc]
      %v8062 = vld [vmem:[%s6929 + $0x38] sm:$0x7]
      %v8063 = vld [vmem:[%s6929 + $0x3c] sm:$0xc]
      %v8064 = vld [vmem:[%s6929 + $0x44] sm:$0x7]
      %v8065 = vld [vmem:[%s6929 + $0x48] sm:$0xc]
      %v8066 = vld [vmem:[%s6929 + $0x50] sm:$0x7]
      %v8067 = vld [vmem:[%s6929 + $0x54] sm:$0xc]
      %v8068 = vld [vmem:[%s6929 + $0x5c] sm:$0x7]
      %v8069 = vld [vmem:[%s6929 + $0x60] sm:$0xc]
      %v8070 = vld [vmem:[%s6929 + $0x68] sm:$0x7]
      %v8071 = vld [vmem:[%s6929 + $0x6c] sm:$0xc]
      %v8072 = vld [vmem:[%s6929 + $0x74] sm:$0x7]
      %v8073 = vld [vmem:[%s6929 + $0x78] sm:$0xc]
      %v8074 = vld [vmem:[%s6929 + $0x80] sm:$0x7]
      %v8075 = vld [vmem:[%s6929 + $0x84] sm:$0xc]
      %v8076 = vld [vmem:[%s6929 + $0x8c] sm:$0x7]
      %v8077 = vld [vmem:[%s6929 + $0x90] sm:$0xc]
      %v8078 = vld [vmem:[%s6929 + $0x98] sm:$0x7]
      %v8079 = vld [vmem:[%s6929 + $0x9c] sm:$0xc]
      %v8080 = vld [vmem:[%s6929 + $0xa4] sm:$0x7]
      %v8081 = vld [vmem:[%s6929 + $0xa8] sm:$0xc]
      %v8082 = vld [vmem:[%s6929 + $0xb0] sm:$0x7]
      %v8083 = vld [vmem:[%s6929 + $0xb4] sm:$0xc]
      %v8084 = vld [vmem:[%s6929 + $0xbc] sm:$0x7]
      %v8117 = vunpack.c.l.b16 %v8021
      %v8118 = vunpack.c.l.b16 %v8022
      %v8119 = vunpack.c.l.b16 %v8023
      %v8120 = vunpack.c.l.b16 %v8024
      %v8121 = vunpack.c.l.b16 %v8025
      %v8122 = vunpack.c.l.b16 %v8026
      %v8123 = vunpack.c.l.b16 %v8027
      %v8124 = vunpack.c.l.b16 %v8028
      %v8125 = vunpack.c.l.b16 %v8029
      %v8126 = vunpack.c.l.b16 %v8030
      %v8127 = vunpack.c.l.b16 %v8031
      %v8128 = vunpack.c.l.b16 %v8032
      %v8129 = vunpack.c.l.b16 %v8033
      %v8130 = vunpack.c.l.b16 %v8034
      %v8131 = vunpack.c.l.b16 %v8035
      %v8132 = vunpack.c.l.b16 %v8036
      %v8133 = vunpack.c.l.b16 %v8037
      %v8134 = vunpack.c.l.b16 %v8038
      %v8135 = vunpack.c.l.b16 %v8039
      %v8136 = vunpack.c.l.b16 %v8040
      %v8137 = vunpack.c.l.b16 %v8041
      %v8138 = vunpack.c.l.b16 %v8042
      %v8139 = vunpack.c.l.b16 %v8043
      %v8140 = vunpack.c.l.b16 %v8044
      %v8141 = vunpack.c.l.b16 %v8045
      %v8142 = vunpack.c.l.b16 %v8046
      %v8143 = vunpack.c.l.b16 %v8047
      %v8144 = vunpack.c.l.b16 %v8048
      %v8145 = vunpack.c.l.b16 %v8049
      %v8146 = vunpack.c.l.b16 %v8050
      %v8147 = vunpack.c.l.b16 %v8051
      %v8148 = vunpack.c.l.b16 %v8052
      %v8149 = vpack.c.b16 %v7075, %v8117
      %v8150 = vpack.c.b16 %v8118, %v8118
      %v8151 = vpack.c.b16 %v7078, %v8119
      %v8152 = vpack.c.b16 %v8120, %v8120
      %v8153 = vpack.c.b16 %v7081, %v8121
      %v8154 = vpack.c.b16 %v8122, %v8122
      %v8155 = vpack.c.b16 %v7084, %v8123
      %v8156 = vpack.c.b16 %v8124, %v8124
      %v8157 = vpack.c.b16 %v7087, %v8125
      %v8158 = vpack.c.b16 %v8126, %v8126
      %v8159 = vpack.c.b16 %v7090, %v8127
      %v8160 = vpack.c.b16 %v8128, %v8128
      %v8161 = vpack.c.b16 %v7093, %v8129
      %v8162 = vpack.c.b16 %v8130, %v8130
      %v8163 = vpack.c.b16 %v7096, %v8131
      %v8164 = vpack.c.b16 %v8132, %v8132
      %v8165 = vpack.c.b16 %v7099, %v8133
      %v8166 = vpack.c.b16 %v8134, %v8134
      %v8167 = vpack.c.b16 %v7102, %v8135
      %v8168 = vpack.c.b16 %v8136, %v8136
      %v8169 = vpack.c.b16 %v7105, %v8137
      %v8170 = vpack.c.b16 %v8138, %v8138
      %v8171 = vpack.c.b16 %v7108, %v8139
      %v8172 = vpack.c.b16 %v8140, %v8140
      %v8173 = vpack.c.b16 %v7111, %v8141
      %v8174 = vpack.c.b16 %v8142, %v8142
      %v8175 = vpack.c.b16 %v7114, %v8143
      %v8176 = vpack.c.b16 %v8144, %v8144
      %v8177 = vpack.c.b16 %v7117, %v8145
      %v8178 = vpack.c.b16 %v8146, %v8146
      %v8179 = vpack.c.b16 %v7120, %v8147
      %v8180 = vpack.c.b16 %v8148, %v8148
      %v8213 = vunpack.c.l.b16 %v8053
      %v8214 = vunpack.c.l.b16 %v8054
      %v8215 = vunpack.c.l.b16 %v8055
      %v8216 = vunpack.c.l.b16 %v8056
      %v8217 = vunpack.c.l.b16 %v8057
      %v8218 = vunpack.c.l.b16 %v8058
      %v8219 = vunpack.c.l.b16 %v8059
      %v8220 = vunpack.c.l.b16 %v8060
      %v8221 = vunpack.c.l.b16 %v8061
      %v8222 = vunpack.c.l.b16 %v8062
      %v8223 = vunpack.c.l.b16 %v8063
      %v8224 = vunpack.c.l.b16 %v8064
      %v8225 = vunpack.c.l.b16 %v8065
      %v8226 = vunpack.c.l.b16 %v8066
      %v8227 = vunpack.c.l.b16 %v8067
      %v8228 = vunpack.c.l.b16 %v8068
      %v8229 = vunpack.c.l.b16 %v8069
      %v8230 = vunpack.c.l.b16 %v8070
      %v8231 = vunpack.c.l.b16 %v8071
      %v8232 = vunpack.c.l.b16 %v8072
      %v8233 = vunpack.c.l.b16 %v8073
      %v8234 = vunpack.c.l.b16 %v8074
      %v8235 = vunpack.c.l.b16 %v8075
      %v8236 = vunpack.c.l.b16 %v8076
      %v8237 = vunpack.c.l.b16 %v8077
      %v8238 = vunpack.c.l.b16 %v8078
      %v8239 = vunpack.c.l.b16 %v8079
      %v8240 = vunpack.c.l.b16 %v8080
      %v8241 = vunpack.c.l.b16 %v8081
      %v8242 = vunpack.c.l.b16 %v8082
      %v8243 = vunpack.c.l.b16 %v8083
      %v8244 = vunpack.c.l.b16 %v8084
      %v8245 = vpack.c.b16 %v7075, %v8213
      %v8246 = vpack.c.b16 %v8214, %v8214
      %v8247 = vpack.c.b16 %v7078, %v8215
      %v8248 = vpack.c.b16 %v8216, %v8216
      %v8249 = vpack.c.b16 %v7081, %v8217
      %v8250 = vpack.c.b16 %v8218, %v8218
      %v8251 = vpack.c.b16 %v7084, %v8219
      %v8252 = vpack.c.b16 %v8220, %v8220
      %v8253 = vpack.c.b16 %v7087, %v8221
      %v8254 = vpack.c.b16 %v8222, %v8222
      %v8255 = vpack.c.b16 %v7090, %v8223
      %v8256 = vpack.c.b16 %v8224, %v8224
      %v8257 = vpack.c.b16 %v7093, %v8225
      %v8258 = vpack.c.b16 %v8226, %v8226
      %v8259 = vpack.c.b16 %v7096, %v8227
      %v8260 = vpack.c.b16 %v8228, %v8228
      %v8261 = vpack.c.b16 %v7099, %v8229
      %v8262 = vpack.c.b16 %v8230, %v8230
      %v8263 = vpack.c.b16 %v7102, %v8231
      %v8264 = vpack.c.b16 %v8232, %v8232
      %v8265 = vpack.c.b16 %v7105, %v8233
      %v8266 = vpack.c.b16 %v8234, %v8234
      %v8267 = vpack.c.b16 %v7108, %v8235
      %v8268 = vpack.c.b16 %v8236, %v8236
      %v8269 = vpack.c.b16 %v7111, %v8237
      %v8270 = vpack.c.b16 %v8238, %v8238
      %v8271 = vpack.c.b16 %v7114, %v8239
      %v8272 = vpack.c.b16 %v8240, %v8240
      %v8273 = vpack.c.b16 %v7117, %v8241
      %v8274 = vpack.c.b16 %v8242, %v8242
      %v8275 = vpack.c.b16 %v7120, %v8243
      %v8276 = vpack.c.b16 %v8244, %v8244
      %v8277 = vrot.slane %v8245, 1
      %v8278 = vrot.slane %v8246, 1
      %v8279 = vsel %vm710, %v8277, %v8278
      %v8280 = vrot.slane %v8247, 1
      %v8281 = vrot.slane %v8248, 1
      %v8282 = vsel %vm710, %v8280, %v8281
      %v8283 = vrot.slane %v8249, 1
      %v8284 = vrot.slane %v8250, 1
      %v8285 = vsel %vm710, %v8283, %v8284
      %v8286 = vrot.slane %v8251, 1
      %v8287 = vrot.slane %v8252, 1
      %v8288 = vsel %vm710, %v8286, %v8287
      %v8289 = vrot.slane %v8253, 1
      %v8290 = vrot.slane %v8254, 1
      %v8291 = vsel %vm710, %v8289, %v8290
      %v8292 = vrot.slane %v8255, 1
      %v8293 = vrot.slane %v8256, 1
      %v8294 = vsel %vm710, %v8292, %v8293
      %v8295 = vrot.slane %v8257, 1
      %v8296 = vrot.slane %v8258, 1
      %v8297 = vsel %vm710, %v8295, %v8296
      %v8298 = vrot.slane %v8259, 1
      %v8299 = vrot.slane %v8260, 1
      %v8300 = vsel %vm710, %v8298, %v8299
      %v8301 = vrot.slane %v8261, 1
      %v8302 = vrot.slane %v8262, 1
      %v8303 = vsel %vm710, %v8301, %v8302
      %v8304 = vrot.slane %v8263, 1
      %v8305 = vrot.slane %v8264, 1
      %v8306 = vsel %vm710, %v8304, %v8305
      %v8307 = vrot.slane %v8265, 1
      %v8308 = vrot.slane %v8266, 1
      %v8309 = vsel %vm710, %v8307, %v8308
      %v8310 = vrot.slane %v8267, 1
      %v8311 = vrot.slane %v8268, 1
      %v8312 = vsel %vm710, %v8310, %v8311
      %v8313 = vrot.slane %v8269, 1
      %v8314 = vrot.slane %v8270, 1
      %v8315 = vsel %vm710, %v8313, %v8314
      %v8316 = vrot.slane %v8271, 1
      %v8317 = vrot.slane %v8272, 1
      %v8318 = vsel %vm710, %v8316, %v8317
      %v8319 = vrot.slane %v8273, 1
      %v8320 = vrot.slane %v8274, 1
      %v8321 = vsel %vm710, %v8319, %v8320
      %v8322 = vrot.slane %v8275, 1
      %v8323 = vrot.slane %v8276, 1
      %v8324 = vsel %vm710, %v8322, %v8323
      %v8326 = vshrl.u32 %v8149, 16
      %v8328 = vrot.slane %v8326, 1
      %v8329 = vshll.u32 %v8149, 16
      %v8331 = vrot.slane %v8329, 2
      %v8332 = vor.u32 %v8328, %v8331
      %v8334 = vshrl.u32 %v8150, 16
      %v8336 = vrot.slane %v8334, 1
      %v8337 = vshll.u32 %v8150, 16
      %v8339 = vrot.slane %v8337, 2
      %v8340 = vor.u32 %v8336, %v8339
      %v8341 = vsel %vm2207, %v8332, %v8340
      %v8343 = vshrl.u32 %v8279, 16
      %v8345 = vrot.slane %v8343, 1
      %v8346 = vshll.u32 %v8279, 16
      %v8348 = vrot.slane %v8346, 2
      %v8349 = vor.u32 %v8345, %v8348
      %v8351 = vshrl.u32 %v8278, 16
      %v8353 = vrot.slane %v8351, 1
      %v8354 = vshll.u32 %v8278, 16
      %v8356 = vrot.slane %v8354, 2
      %v8357 = vor.u32 %v8353, %v8356
      %v8358 = vsel %vm2207, %v8349, %v8357
      %v8360 = vshrl.u32 %v8151, 16
      %v8362 = vrot.slane %v8360, 1
      %v8363 = vshll.u32 %v8151, 16
      %v8365 = vrot.slane %v8363, 2
      %v8366 = vor.u32 %v8362, %v8365
      %v8368 = vshrl.u32 %v8152, 16
      %v8370 = vrot.slane %v8368, 1
      %v8371 = vshll.u32 %v8152, 16
      %v8373 = vrot.slane %v8371, 2
      %v8374 = vor.u32 %v8370, %v8373
      %v8375 = vsel %vm2207, %v8366, %v8374
      %v8377 = vshrl.u32 %v8282, 16
      %v8379 = vrot.slane %v8377, 1
      %v8380 = vshll.u32 %v8282, 16
      %v8382 = vrot.slane %v8380, 2
      %v8383 = vor.u32 %v8379, %v8382
      %v8385 = vshrl.u32 %v8281, 16
      %v8387 = vrot.slane %v8385, 1
      %v8388 = vshll.u32 %v8281, 16
      %v8390 = vrot.slane %v8388, 2
      %v8391 = vor.u32 %v8387, %v8390
      %v8392 = vsel %vm2207, %v8383, %v8391
      %v8394 = vshrl.u32 %v8153, 16
      %v8396 = vrot.slane %v8394, 1
      %v8397 = vshll.u32 %v8153, 16
      %v8399 = vrot.slane %v8397, 2
      %v8400 = vor.u32 %v8396, %v8399
      %v8402 = vshrl.u32 %v8154, 16
      %v8404 = vrot.slane %v8402, 1
      %v8405 = vshll.u32 %v8154, 16
      %v8407 = vrot.slane %v8405, 2
      %v8408 = vor.u32 %v8404, %v8407
      %v8409 = vsel %vm2207, %v8400, %v8408
      %v8411 = vshrl.u32 %v8285, 16
      %v8413 = vrot.slane %v8411, 1
      %v8414 = vshll.u32 %v8285, 16
      %v8416 = vrot.slane %v8414, 2
      %v8417 = vor.u32 %v8413, %v8416
      %v8419 = vshrl.u32 %v8284, 16
      %v8421 = vrot.slane %v8419, 1
      %v8422 = vshll.u32 %v8284, 16
      %v8424 = vrot.slane %v8422, 2
      %v8425 = vor.u32 %v8421, %v8424
      %v8426 = vsel %vm2207, %v8417, %v8425
      %v8428 = vshrl.u32 %v8155, 16
      %v8430 = vrot.slane %v8428, 1
      %v8431 = vshll.u32 %v8155, 16
      %v8433 = vrot.slane %v8431, 2
      %v8434 = vor.u32 %v8430, %v8433
      %v8436 = vshrl.u32 %v8156, 16
      %v8438 = vrot.slane %v8436, 1
      %v8439 = vshll.u32 %v8156, 16
      %v8441 = vrot.slane %v8439, 2
      %v8442 = vor.u32 %v8438, %v8441
      %v8443 = vsel %vm2207, %v8434, %v8442
      %v8445 = vshrl.u32 %v8288, 16
      %v8447 = vrot.slane %v8445, 1
      %v8448 = vshll.u32 %v8288, 16
      %v8450 = vrot.slane %v8448, 2
      %v8451 = vor.u32 %v8447, %v8450
      %v8453 = vshrl.u32 %v8287, 16
      %v8455 = vrot.slane %v8453, 1
      %v8456 = vshll.u32 %v8287, 16
      %v8458 = vrot.slane %v8456, 2
      %v8459 = vor.u32 %v8455, %v8458
      %v8460 = vsel %vm2207, %v8451, %v8459
      %v8462 = vshrl.u32 %v8157, 16
      %v8464 = vrot.slane %v8462, 1
      %v8465 = vshll.u32 %v8157, 16
      %v8467 = vrot.slane %v8465, 2
      %v8468 = vor.u32 %v8464, %v8467
      %v8470 = vshrl.u32 %v8158, 16
      %v8472 = vrot.slane %v8470, 1
      %v8473 = vshll.u32 %v8158, 16
      %v8475 = vrot.slane %v8473, 2
      %v8476 = vor.u32 %v8472, %v8475
      %v8477 = vsel %vm2207, %v8468, %v8476
      %v8479 = vshrl.u32 %v8291, 16
      %v8481 = vrot.slane %v8479, 1
      %v8482 = vshll.u32 %v8291, 16
      %v8484 = vrot.slane %v8482, 2
      %v8485 = vor.u32 %v8481, %v8484
      %v8487 = vshrl.u32 %v8290, 16
      %v8489 = vrot.slane %v8487, 1
      %v8490 = vshll.u32 %v8290, 16
      %v8492 = vrot.slane %v8490, 2
      %v8493 = vor.u32 %v8489, %v8492
      %v8494 = vsel %vm2207, %v8485, %v8493
      %v8496 = vshrl.u32 %v8159, 16
      %v8498 = vrot.slane %v8496, 1
      %v8499 = vshll.u32 %v8159, 16
      %v8501 = vrot.slane %v8499, 2
      %v8502 = vor.u32 %v8498, %v8501
      %v8504 = vshrl.u32 %v8160, 16
      %v8506 = vrot.slane %v8504, 1
      %v8507 = vshll.u32 %v8160, 16
      %v8509 = vrot.slane %v8507, 2
      %v8510 = vor.u32 %v8506, %v8509
      %v8511 = vsel %vm2207, %v8502, %v8510
      %v8513 = vshrl.u32 %v8294, 16
      %v8515 = vrot.slane %v8513, 1
      %v8516 = vshll.u32 %v8294, 16
      %v8518 = vrot.slane %v8516, 2
      %v8519 = vor.u32 %v8515, %v8518
      %v8521 = vshrl.u32 %v8293, 16
      %v8523 = vrot.slane %v8521, 1
      %v8524 = vshll.u32 %v8293, 16
      %v8526 = vrot.slane %v8524, 2
      %v8527 = vor.u32 %v8523, %v8526
      %v8528 = vsel %vm2207, %v8519, %v8527
      %v8530 = vshrl.u32 %v8161, 16
      %v8532 = vrot.slane %v8530, 1
      %v8533 = vshll.u32 %v8161, 16
      %v8535 = vrot.slane %v8533, 2
      %v8536 = vor.u32 %v8532, %v8535
      %v8538 = vshrl.u32 %v8162, 16
      %v8540 = vrot.slane %v8538, 1
      %v8541 = vshll.u32 %v8162, 16
      %v8543 = vrot.slane %v8541, 2
      %v8544 = vor.u32 %v8540, %v8543
      %v8545 = vsel %vm2207, %v8536, %v8544
      %v8547 = vshrl.u32 %v8297, 16
      %v8549 = vrot.slane %v8547, 1
      %v8550 = vshll.u32 %v8297, 16
      %v8552 = vrot.slane %v8550, 2
      %v8553 = vor.u32 %v8549, %v8552
      %v8555 = vshrl.u32 %v8296, 16
      %v8557 = vrot.slane %v8555, 1
      %v8558 = vshll.u32 %v8296, 16
      %v8560 = vrot.slane %v8558, 2
      %v8561 = vor.u32 %v8557, %v8560
      %v8562 = vsel %vm2207, %v8553, %v8561
      %v8564 = vshrl.u32 %v8163, 16
      %v8566 = vrot.slane %v8564, 1
      %v8567 = vshll.u32 %v8163, 16
      %v8569 = vrot.slane %v8567, 2
      %v8570 = vor.u32 %v8566, %v8569
      %v8572 = vshrl.u32 %v8164, 16
      %v8574 = vrot.slane %v8572, 1
      %v8575 = vshll.u32 %v8164, 16
      %v8577 = vrot.slane %v8575, 2
      %v8578 = vor.u32 %v8574, %v8577
      %v8579 = vsel %vm2207, %v8570, %v8578
      %v8581 = vshrl.u32 %v8300, 16
      %v8583 = vrot.slane %v8581, 1
      %v8584 = vshll.u32 %v8300, 16
      %v8586 = vrot.slane %v8584, 2
      %v8587 = vor.u32 %v8583, %v8586
      %v8589 = vshrl.u32 %v8299, 16
      %v8591 = vrot.slane %v8589, 1
      %v8592 = vshll.u32 %v8299, 16
      %v8594 = vrot.slane %v8592, 2
      %v8595 = vor.u32 %v8591, %v8594
      %v8596 = vsel %vm2207, %v8587, %v8595
      %v8598 = vshrl.u32 %v8165, 16
      %v8600 = vrot.slane %v8598, 1
      %v8601 = vshll.u32 %v8165, 16
      %v8603 = vrot.slane %v8601, 2
      %v8604 = vor.u32 %v8600, %v8603
      %v8606 = vshrl.u32 %v8166, 16
      %v8608 = vrot.slane %v8606, 1
      %v8609 = vshll.u32 %v8166, 16
      %v8611 = vrot.slane %v8609, 2
      %v8612 = vor.u32 %v8608, %v8611
      %v8613 = vsel %vm2207, %v8604, %v8612
      %v8615 = vshrl.u32 %v8303, 16
      %v8617 = vrot.slane %v8615, 1
      %v8618 = vshll.u32 %v8303, 16
      %v8620 = vrot.slane %v8618, 2
      %v8621 = vor.u32 %v8617, %v8620
      %v8623 = vshrl.u32 %v8302, 16
      %v8625 = vrot.slane %v8623, 1
      %v8626 = vshll.u32 %v8302, 16
      %v8628 = vrot.slane %v8626, 2
      %v8629 = vor.u32 %v8625, %v8628
      %v8630 = vsel %vm2207, %v8621, %v8629
      %v8632 = vshrl.u32 %v8167, 16
      %v8634 = vrot.slane %v8632, 1
      %v8635 = vshll.u32 %v8167, 16
      %v8637 = vrot.slane %v8635, 2
      %v8638 = vor.u32 %v8634, %v8637
      %v8640 = vshrl.u32 %v8168, 16
      %v8642 = vrot.slane %v8640, 1
      %v8643 = vshll.u32 %v8168, 16
      %v8645 = vrot.slane %v8643, 2
      %v8646 = vor.u32 %v8642, %v8645
      %v8647 = vsel %vm2207, %v8638, %v8646
      %v8649 = vshrl.u32 %v8306, 16
      %v8651 = vrot.slane %v8649, 1
      %v8652 = vshll.u32 %v8306, 16
      %v8654 = vrot.slane %v8652, 2
      %v8655 = vor.u32 %v8651, %v8654
      %v8657 = vshrl.u32 %v8305, 16
      %v8659 = vrot.slane %v8657, 1
      %v8660 = vshll.u32 %v8305, 16
      %v8662 = vrot.slane %v8660, 2
      %v8663 = vor.u32 %v8659, %v8662
      %v8664 = vsel %vm2207, %v8655, %v8663
      %v8666 = vshrl.u32 %v8169, 16
      %v8668 = vrot.slane %v8666, 1
      %v8669 = vshll.u32 %v8169, 16
      %v8671 = vrot.slane %v8669, 2
      %v8672 = vor.u32 %v8668, %v8671
      %v8674 = vshrl.u32 %v8170, 16
      %v8676 = vrot.slane %v8674, 1
      %v8677 = vshll.u32 %v8170, 16
      %v8679 = vrot.slane %v8677, 2
      %v8680 = vor.u32 %v8676, %v8679
      %v8681 = vsel %vm2207, %v8672, %v8680
      %v8683 = vshrl.u32 %v8309, 16
      %v8685 = vrot.slane %v8683, 1
      %v8686 = vshll.u32 %v8309, 16
      %v8688 = vrot.slane %v8686, 2
      %v8689 = vor.u32 %v8685, %v8688
      %v8691 = vshrl.u32 %v8308, 16
      %v8693 = vrot.slane %v8691, 1
      %v8694 = vshll.u32 %v8308, 16
      %v8696 = vrot.slane %v8694, 2
      %v8697 = vor.u32 %v8693, %v8696
      %v8698 = vsel %vm2207, %v8689, %v8697
      %v8700 = vshrl.u32 %v8171, 16
      %v8702 = vrot.slane %v8700, 1
      %v8703 = vshll.u32 %v8171, 16
      %v8705 = vrot.slane %v8703, 2
      %v8706 = vor.u32 %v8702, %v8705
      %v8708 = vshrl.u32 %v8172, 16
      %v8710 = vrot.slane %v8708, 1
      %v8711 = vshll.u32 %v8172, 16
      %v8713 = vrot.slane %v8711, 2
      %v8714 = vor.u32 %v8710, %v8713
      %v8715 = vsel %vm2207, %v8706, %v8714
      %v8717 = vshrl.u32 %v8312, 16
      %v8719 = vrot.slane %v8717, 1
      %v8720 = vshll.u32 %v8312, 16
      %v8722 = vrot.slane %v8720, 2
      %v8723 = vor.u32 %v8719, %v8722
      %v8725 = vshrl.u32 %v8311, 16
      %v8727 = vrot.slane %v8725, 1
      %v8728 = vshll.u32 %v8311, 16
      %v8730 = vrot.slane %v8728, 2
      %v8731 = vor.u32 %v8727, %v8730
      %v8732 = vsel %vm2207, %v8723, %v8731
      %v8734 = vshrl.u32 %v8173, 16
      %v8736 = vrot.slane %v8734, 1
      %v8737 = vshll.u32 %v8173, 16
      %v8739 = vrot.slane %v8737, 2
      %v8740 = vor.u32 %v8736, %v8739
      %v8742 = vshrl.u32 %v8174, 16
      %v8744 = vrot.slane %v8742, 1
      %v8745 = vshll.u32 %v8174, 16
      %v8747 = vrot.slane %v8745, 2
      %v8748 = vor.u32 %v8744, %v8747
      %v8749 = vsel %vm2207, %v8740, %v8748
      %v8751 = vshrl.u32 %v8315, 16
      %v8753 = vrot.slane %v8751, 1
      %v8754 = vshll.u32 %v8315, 16
      %v8756 = vrot.slane %v8754, 2
      %v8757 = vor.u32 %v8753, %v8756
      %v8759 = vshrl.u32 %v8314, 16
      %v8761 = vrot.slane %v8759, 1
      %v8762 = vshll.u32 %v8314, 16
      %v8764 = vrot.slane %v8762, 2
      %v8765 = vor.u32 %v8761, %v8764
      %v8766 = vsel %vm2207, %v8757, %v8765
      %v8768 = vshrl.u32 %v8175, 16
      %v8770 = vrot.slane %v8768, 1
      %v8771 = vshll.u32 %v8175, 16
      %v8773 = vrot.slane %v8771, 2
      %v8774 = vor.u32 %v8770, %v8773
      %v8776 = vshrl.u32 %v8176, 16
      %v8778 = vrot.slane %v8776, 1
      %v8779 = vshll.u32 %v8176, 16
      %v8781 = vrot.slane %v8779, 2
      %v8782 = vor.u32 %v8778, %v8781
      %v8783 = vsel %vm2207, %v8774, %v8782
      %v8785 = vshrl.u32 %v8318, 16
      %v8787 = vrot.slane %v8785, 1
      %v8788 = vshll.u32 %v8318, 16
      %v8790 = vrot.slane %v8788, 2
      %v8791 = vor.u32 %v8787, %v8790
      %v8793 = vshrl.u32 %v8317, 16
      %v8795 = vrot.slane %v8793, 1
      %v8796 = vshll.u32 %v8317, 16
      %v8798 = vrot.slane %v8796, 2
      %v8799 = vor.u32 %v8795, %v8798
      %v8800 = vsel %vm2207, %v8791, %v8799
      %v8802 = vshrl.u32 %v8177, 16
      %v8804 = vrot.slane %v8802, 1
      %v8805 = vshll.u32 %v8177, 16
      %v8807 = vrot.slane %v8805, 2
      %v8808 = vor.u32 %v8804, %v8807
      %v8810 = vshrl.u32 %v8178, 16
      %v8812 = vrot.slane %v8810, 1
      %v8813 = vshll.u32 %v8178, 16
      %v8815 = vrot.slane %v8813, 2
      %v8816 = vor.u32 %v8812, %v8815
      %v8817 = vsel %vm2207, %v8808, %v8816
      %v8819 = vshrl.u32 %v8321, 16
      %v8821 = vrot.slane %v8819, 1
      %v8822 = vshll.u32 %v8321, 16
      %v8824 = vrot.slane %v8822, 2
      %v8825 = vor.u32 %v8821, %v8824
      %v8827 = vshrl.u32 %v8320, 16
      %v8829 = vrot.slane %v8827, 1
      %v8830 = vshll.u32 %v8320, 16
      %v8832 = vrot.slane %v8830, 2
      %v8833 = vor.u32 %v8829, %v8832
      %v8834 = vsel %vm2207, %v8825, %v8833
      %v8836 = vshrl.u32 %v8179, 16
      %v8838 = vrot.slane %v8836, 1
      %v8839 = vshll.u32 %v8179, 16
      %v8841 = vrot.slane %v8839, 2
      %v8842 = vor.u32 %v8838, %v8841
      %v8844 = vshrl.u32 %v8180, 16
      %v8846 = vrot.slane %v8844, 1
      %v8847 = vshll.u32 %v8180, 16
      %v8849 = vrot.slane %v8847, 2
      %v8850 = vor.u32 %v8846, %v8849
      %v8851 = vsel %vm2207, %v8842, %v8850
      %v8853 = vshrl.u32 %v8324, 16
      %v8855 = vrot.slane %v8853, 1
      %v8856 = vshll.u32 %v8324, 16
      %v8858 = vrot.slane %v8856, 2
      %v8859 = vor.u32 %v8855, %v8858
      %v8861 = vshrl.u32 %v8323, 16
      %v8863 = vrot.slane %v8861, 1
      %v8864 = vshll.u32 %v8323, 16
      %v8866 = vrot.slane %v8864, 2
      %v8867 = vor.u32 %v8863, %v8866
      %v8868 = vsel %vm2207, %v8859, %v8867
      %v8901 = vld [vmem:[%s1 + $0x400] sm:$0xf]
      %v8902 = vld [vmem:[%s1 + $0x404] sm:$0xf]
      %v8903 = vld [vmem:[%s1 + $0x408] sm:$0xf]
      %v8904 = vld [vmem:[%s1 + $0x40c] sm:$0xf]
      %v8905 = vld [vmem:[%s1 + $0x410] sm:$0xf]
      %v8906 = vld [vmem:[%s1 + $0x414] sm:$0xf]
      %v8907 = vld [vmem:[%s1 + $0x418] sm:$0xf]
      %v8908 = vld [vmem:[%s1 + $0x41c] sm:$0xf]
      %v8909 = vld [vmem:[%s1 + $0x420] sm:$0xf]
      %v8910 = vld [vmem:[%s1 + $0x424] sm:$0xf]
      %v8911 = vld [vmem:[%s1 + $0x428] sm:$0xf]
      %v8912 = vld [vmem:[%s1 + $0x42c] sm:$0xf]
      %v8913 = vld [vmem:[%s1 + $0x430] sm:$0xf]
      %v8914 = vld [vmem:[%s1 + $0x434] sm:$0xf]
      %v8915 = vld [vmem:[%s1 + $0x438] sm:$0xf]
      %v8916 = vld [vmem:[%s1 + $0x43c] sm:$0xf]
      %v8917 = vld [vmem:[%s1 + $0x440] sm:$0xf]
      %v8918 = vld [vmem:[%s1 + $0x444] sm:$0xf]
      %v8919 = vld [vmem:[%s1 + $0x448] sm:$0xf]
      %v8920 = vld [vmem:[%s1 + $0x44c] sm:$0xf]
      %v8921 = vld [vmem:[%s1 + $0x450] sm:$0xf]
      %v8922 = vld [vmem:[%s1 + $0x454] sm:$0xf]
      %v8923 = vld [vmem:[%s1 + $0x458] sm:$0xf]
      %v8924 = vld [vmem:[%s1 + $0x45c] sm:$0xf]
      %v8925 = vld [vmem:[%s1 + $0x460] sm:$0xf]
      %v8926 = vld [vmem:[%s1 + $0x464] sm:$0xf]
      %v8927 = vld [vmem:[%s1 + $0x468] sm:$0xf]
      %v8928 = vld [vmem:[%s1 + $0x46c] sm:$0xf]
      %v8929 = vld [vmem:[%s1 + $0x470] sm:$0xf]
      %v8930 = vld [vmem:[%s1 + $0x474] sm:$0xf]
      %v8931 = vld [vmem:[%s1 + $0x478] sm:$0xf]
      %v8932 = vld [vmem:[%s1 + $0x47c] sm:$0xf]
      %v8965 = vunpack.c.l.b16 %v8901
      %v8966 = vunpack.c.l.b16 %v8902
      %v8967 = vunpack.c.l.b16 %v8903
      %v8968 = vunpack.c.l.b16 %v8904
      %v8969 = vunpack.c.l.b16 %v8905
      %v8970 = vunpack.c.l.b16 %v8906
      %v8971 = vunpack.c.l.b16 %v8907
      %v8972 = vunpack.c.l.b16 %v8908
      %v8973 = vunpack.c.l.b16 %v8909
      %v8974 = vunpack.c.l.b16 %v8910
      %v8975 = vunpack.c.l.b16 %v8911
      %v8976 = vunpack.c.l.b16 %v8912
      %v8977 = vunpack.c.l.b16 %v8913
      %v8978 = vunpack.c.l.b16 %v8914
      %v8979 = vunpack.c.l.b16 %v8915
      %v8980 = vunpack.c.l.b16 %v8916
      %v8981 = vunpack.c.l.b16 %v8917
      %v8982 = vunpack.c.l.b16 %v8918
      %v8983 = vunpack.c.l.b16 %v8919
      %v8984 = vunpack.c.l.b16 %v8920
      %v8985 = vunpack.c.l.b16 %v8921
      %v8986 = vunpack.c.l.b16 %v8922
      %v8987 = vunpack.c.l.b16 %v8923
      %v8988 = vunpack.c.l.b16 %v8924
      %v8989 = vunpack.c.l.b16 %v8925
      %v8990 = vunpack.c.l.b16 %v8926
      %v8991 = vunpack.c.l.b16 %v8927
      %v8992 = vunpack.c.l.b16 %v8928
      %v8993 = vunpack.c.l.b16 %v8929
      %v8994 = vunpack.c.l.b16 %v8930
      %v8995 = vunpack.c.l.b16 %v8931
      %v8996 = vunpack.c.l.b16 %v8932
      %v8997 = vpack.c.b16 %v8966, %v8965
      %v8998 = vpack.c.b16 %v8968, %v8967
      %v8999 = vpack.c.b16 %v8970, %v8969
      %v9000 = vpack.c.b16 %v8972, %v8971
      %v9001 = vpack.c.b16 %v8974, %v8973
      %v9002 = vpack.c.b16 %v8976, %v8975
      %v9003 = vpack.c.b16 %v8978, %v8977
      %v9004 = vpack.c.b16 %v8980, %v8979
      %v9005 = vpack.c.b16 %v8982, %v8981
      %v9006 = vpack.c.b16 %v8984, %v8983
      %v9007 = vpack.c.b16 %v8986, %v8985
      %v9008 = vpack.c.b16 %v8988, %v8987
      %v9009 = vpack.c.b16 %v8990, %v8989
      %v9010 = vpack.c.b16 %v8992, %v8991
      %v9011 = vpack.c.b16 %v8994, %v8993
      %v9012 = vpack.c.b16 %v8996, %v8995
      %9029 = vmatprep.subr.bf16.mxu0 0
      %9030 = vmatpush1.bf16.msra.mxu0 %v8997
      %9031 = vmatprep.subr.bf16.mxu0 0
      %9032 = vmatpush1.bf16.msra.mxu0 %v8998
      %9033 = vmatprep.subr.bf16.mxu0 0
      %9034 = vmatpush1.bf16.msra.mxu0 %v8999
      %9035 = vmatprep.subr.bf16.mxu0 0
      %9036 = vmatpush1.bf16.msra.mxu0 %v9000
      %9037 = vmatprep.subr.bf16.mxu0 0
      %9038 = vmatpush1.bf16.msra.mxu0 %v9001
      %9039 = vmatprep.subr.bf16.mxu0 0
      %9040 = vmatpush1.bf16.msra.mxu0 %v9002
      %9041 = vmatprep.subr.bf16.mxu0 0
      %9042 = vmatpush1.bf16.msra.mxu0 %v9003
      %9043 = vmatprep.subr.bf16.mxu0 0
      %9044 = vmatpush1.bf16.msra.mxu0 %v9004
      %9045 = vmatprep.subr.bf16.mxu0 0
      %9046 = vmatpush1.bf16.msra.mxu0 %v9005
      %9047 = vmatprep.subr.bf16.mxu0 0
      %9048 = vmatpush1.bf16.msra.mxu0 %v9006
      %9049 = vmatprep.subr.bf16.mxu0 0
      %9050 = vmatpush1.bf16.msra.mxu0 %v9007
      %9051 = vmatprep.subr.bf16.mxu0 0
      %9052 = vmatpush1.bf16.msra.mxu0 %v9008
      %9053 = vmatprep.subr.bf16.mxu0 0
      %9054 = vmatpush1.bf16.msra.mxu0 %v9009
      %9055 = vmatprep.subr.bf16.mxu0 0
      %9056 = vmatpush1.bf16.msra.mxu0 %v9010
      %9057 = vmatprep.subr.bf16.mxu0 0
      %9058 = vmatpush1.bf16.msra.mxu0 %v9011
      %9059 = vmatprep.subr.bf16.mxu0 0
      %9060 = vmatpush1.bf16.msra.mxu0 %v9012
      %9061 = vmatprep.mubr.bf16.mxu0 %v8358
      %9062 = vmatmul.mubr.bf16.gmra.mrb[0].mxu0 %v8341
      %v9063 = vpop.f32.mrb[0].mxu0
      %v9064 = vadd.f32 0.0, %v9063
      %v9065 = vpop.f32.mrb[0].mxu0
      %v9066 = vpop.f32.mrb[0].mxu0
      %v9067 = vadd.f32 0.0, %v9066
      %v9068 = vpop.f32.mrb[0].mxu0
      %9069 = vmatprep.mubr.bf16.mxu0 %v8392
      %9070 = vmatmul.mubr.bf16.gmra.mrb[0].mxu0 %v8375
      %v9071 = vpop.f32.mrb[0].mxu0
      %v9072 = vadd.f32 0.0, %v9071
      %v9073 = vpop.f32.mrb[0].mxu0
      %v9074 = vpop.f32.mrb[0].mxu0
      %v9075 = vadd.f32 0.0, %v9074
      %v9076 = vpop.f32.mrb[0].mxu0
      %9077 = vmatprep.mubr.bf16.mxu0 %v8426
      %9078 = vmatmul.mubr.bf16.gmra.mrb[0].mxu0 %v8409
      %v9079 = vpop.f32.mrb[0].mxu0
      %v9080 = vadd.f32 0.0, %v9079
      %v9081 = vpop.f32.mrb[0].mxu0
      %v9082 = vpop.f32.mrb[0].mxu0
      %v9083 = vadd.f32 0.0, %v9082
      %v9084 = vpop.f32.mrb[0].mxu0
      %9085 = vmatprep.mubr.bf16.mxu0 %v8460
      %9086 = vmatmul.mubr.bf16.gmra.mrb[0].mxu0 %v8443
      %v9087 = vpop.f32.mrb[0].mxu0
      %v9088 = vadd.f32 0.0, %v9087
      %v9089 = vpop.f32.mrb[0].mxu0
      %v9090 = vpop.f32.mrb[0].mxu0
      %v9091 = vadd.f32 0.0, %v9090
      %v9092 = vpop.f32.mrb[0].mxu0
      %9093 = vmatprep.mubr.bf16.mxu0 %v8494
      %9094 = vmatmul.mubr.bf16.gmra.mrb[0].mxu0 %v8477
      %v9095 = vpop.f32.mrb[0].mxu0
      %v9096 = vadd.f32 0.0, %v9095
      %v9097 = vpop.f32.mrb[0].mxu0
      %v9098 = vpop.f32.mrb[0].mxu0
      %v9099 = vadd.f32 0.0, %v9098
      %v9100 = vpop.f32.mrb[0].mxu0
      %9101 = vmatprep.mubr.bf16.mxu0 %v8528
      %9102 = vmatmul.mubr.bf16.gmra.mrb[0].mxu0 %v8511
      %v9103 = vpop.f32.mrb[0].mxu0
      %v9104 = vadd.f32 0.0, %v9103
      %v9105 = vpop.f32.mrb[0].mxu0
      %v9106 = vpop.f32.mrb[0].mxu0
      %v9107 = vadd.f32 0.0, %v9106
      %v9108 = vpop.f32.mrb[0].mxu0
      %9109 = vmatprep.mubr.bf16.mxu0 %v8562
      %9110 = vmatmul.mubr.bf16.gmra.mrb[0].mxu0 %v8545
      %v9111 = vpop.f32.mrb[0].mxu0
      %v9112 = vadd.f32 0.0, %v9111
      %v9113 = vpop.f32.mrb[0].mxu0
      %v9114 = vpop.f32.mrb[0].mxu0
      %v9115 = vadd.f32 0.0, %v9114
      %v9116 = vpop.f32.mrb[0].mxu0
      %9117 = vmatprep.mubr.bf16.mxu0 %v8596
      %9118 = vmatmul.mubr.bf16.gmra.mrb[0].mxu0 %v8579
      %v9119 = vpop.f32.mrb[0].mxu0
      %v9120 = vadd.f32 0.0, %v9119
      %v9121 = vpop.f32.mrb[0].mxu0
      %v9122 = vpop.f32.mrb[0].mxu0
      %v9123 = vadd.f32 0.0, %v9122
      %v9124 = vpop.f32.mrb[0].mxu0
      %9125 = vmatprep.mubr.bf16.mxu0 %v8630
      %9126 = vmatmul.mubr.bf16.gmra.mrb[0].mxu0 %v8613
      %v9127 = vpop.f32.mrb[0].mxu0
      %v9128 = vadd.f32 0.0, %v9127
      %v9129 = vpop.f32.mrb[0].mxu0
      %v9130 = vpop.f32.mrb[0].mxu0
      %v9131 = vadd.f32 0.0, %v9130
      %v9132 = vpop.f32.mrb[0].mxu0
      %9133 = vmatprep.mubr.bf16.mxu0 %v8664
      %9134 = vmatmul.mubr.bf16.gmra.mrb[0].mxu0 %v8647
      %v9135 = vpop.f32.mrb[0].mxu0
      %v9136 = vadd.f32 0.0, %v9135
      %v9137 = vpop.f32.mrb[0].mxu0
      %v9138 = vpop.f32.mrb[0].mxu0
      %v9139 = vadd.f32 0.0, %v9138
      %v9140 = vpop.f32.mrb[0].mxu0
      %9141 = vmatprep.mubr.bf16.mxu0 %v8698
      %9142 = vmatmul.mubr.bf16.gmra.mrb[0].mxu0 %v8681
      %v9143 = vpop.f32.mrb[0].mxu0
      %v9144 = vadd.f32 0.0, %v9143
      %v9145 = vpop.f32.mrb[0].mxu0
      %v9146 = vpop.f32.mrb[0].mxu0
      %v9147 = vadd.f32 0.0, %v9146
      %v9148 = vpop.f32.mrb[0].mxu0
      %9149 = vmatprep.mubr.bf16.mxu0 %v8732
      %9150 = vmatmul.mubr.bf16.gmra.mrb[0].mxu0 %v8715
      %v9151 = vpop.f32.mrb[0].mxu0
      %v9152 = vadd.f32 0.0, %v9151
      %v9153 = vpop.f32.mrb[0].mxu0
      %v9154 = vpop.f32.mrb[0].mxu0
      %v9155 = vadd.f32 0.0, %v9154
      %v9156 = vpop.f32.mrb[0].mxu0
      %9157 = vmatprep.mubr.bf16.mxu0 %v8766
      %9158 = vmatmul.mubr.bf16.gmra.mrb[0].mxu0 %v8749
      %v9159 = vpop.f32.mrb[0].mxu0
      %v9160 = vadd.f32 0.0, %v9159
      %v9161 = vpop.f32.mrb[0].mxu0
      %v9162 = vpop.f32.mrb[0].mxu0
      %v9163 = vadd.f32 0.0, %v9162
      %v9164 = vpop.f32.mrb[0].mxu0
      %9165 = vmatprep.mubr.bf16.mxu0 %v8800
      %9166 = vmatmul.mubr.bf16.gmra.mrb[0].mxu0 %v8783
      %v9167 = vpop.f32.mrb[0].mxu0
      %v9168 = vadd.f32 0.0, %v9167
      %v9169 = vpop.f32.mrb[0].mxu0
      %v9170 = vpop.f32.mrb[0].mxu0
      %v9171 = vadd.f32 0.0, %v9170
      %v9172 = vpop.f32.mrb[0].mxu0
      %9173 = vmatprep.mubr.bf16.mxu0 %v8834
      %9174 = vmatmul.mubr.bf16.gmra.mrb[0].mxu0 %v8817
      %v9175 = vpop.f32.mrb[0].mxu0
      %v9176 = vadd.f32 0.0, %v9175
      %v9177 = vpop.f32.mrb[0].mxu0
      %v9178 = vpop.f32.mrb[0].mxu0
      %v9179 = vadd.f32 0.0, %v9178
      %v9180 = vpop.f32.mrb[0].mxu0
      %9181 = vmatprep.mubr.bf16.mxu0 %v8868
      %9182 = vmatmul.mubr.bf16.gmra.mrb[0].mxu0 %v8851
      %v9183 = vpop.f32.mrb[0].mxu0
      %v9184 = vadd.f32 0.0, %v9183
      %v9185 = vpop.f32.mrb[0].mxu0
      %v9186 = vpop.f32.mrb[0].mxu0
      %v9187 = vadd.f32 0.0, %v9186
      %v9188 = vpop.f32.mrb[0].mxu0
      %9189 = vdwg.mxu0
      %v9190 = vadd.f32 %v7989, %v9064
      %v9191 = vadd.f32 %v7990, %v9067
      %v9192 = vadd.f32 %v7991, %v9072
      %v9193 = vadd.f32 %v7992, %v9075
      %v9194 = vadd.f32 %v7993, %v9080
      %v9195 = vadd.f32 %v7994, %v9083
      %v9196 = vadd.f32 %v7995, %v9088
      %v9197 = vadd.f32 %v7996, %v9091
      %v9198 = vadd.f32 %v7997, %v9096
      %v9199 = vadd.f32 %v7998, %v9099
      %v9200 = vadd.f32 %v7999, %v9104
      %v9201 = vadd.f32 %v8000, %v9107
      %v9202 = vadd.f32 %v8001, %v9112
      %v9203 = vadd.f32 %v8002, %v9115
      %v9204 = vadd.f32 %v8003, %v9120
      %v9205 = vadd.f32 %v8004, %v9123
      %v9206 = vadd.f32 %v8005, %v9128
      %v9207 = vadd.f32 %v8006, %v9131
      %v9208 = vadd.f32 %v8007, %v9136
      %v9209 = vadd.f32 %v8008, %v9139
      %v9210 = vadd.f32 %v8009, %v9144
      %v9211 = vadd.f32 %v8010, %v9147
      %v9212 = vadd.f32 %v8011, %v9152
      %v9213 = vadd.f32 %v8012, %v9155
      %v9214 = vadd.f32 %v8013, %v9160
      %v9215 = vadd.f32 %v8014, %v9163
      %v9216 = vadd.f32 %v8015, %v9168
      %v9217 = vadd.f32 %v8016, %v9171
      %v9218 = vadd.f32 %v8017, %v9176
      %v9219 = vadd.f32 %v8018, %v9179
      %v9220 = vadd.f32 %v8019, %v9184
      %v9221 = vadd.f32 %v8020, %v9187
      %s9222 = smul.u32 %s224, 3
      %s9223 = smul.addr %s9222, 4
      %s9224 = scalar_lea.vmem %s211, %s9223
      %v9225 = vld [vmem:[%s9224] sm:$0xf]
      %v9226 = vld [vmem:[%s9224 + $0x4] sm:$0xf]
      %v9227 = vld [vmem:[%s9224 + $0xc] sm:$0xf]
      %v9228 = vld [vmem:[%s9224 + $0x10] sm:$0xf]
      %v9229 = vld [vmem:[%s9224 + $0x18] sm:$0xf]
      %v9230 = vld [vmem:[%s9224 + $0x1c] sm:$0xf]
      %v9231 = vld [vmem:[%s9224 + $0x24] sm:$0xf]
      %v9232 = vld [vmem:[%s9224 + $0x28] sm:$0xf]
      %v9233 = vld [vmem:[%s9224 + $0x30] sm:$0xf]
      %v9234 = vld [vmem:[%s9224 + $0x34] sm:$0xf]
      %v9235 = vld [vmem:[%s9224 + $0x3c] sm:$0xf]
      %v9236 = vld [vmem:[%s9224 + $0x40] sm:$0xf]
      %v9237 = vld [vmem:[%s9224 + $0x48] sm:$0xf]
      %v9238 = vld [vmem:[%s9224 + $0x4c] sm:$0xf]
      %v9239 = vld [vmem:[%s9224 + $0x54] sm:$0xf]
      %v9240 = vld [vmem:[%s9224 + $0x58] sm:$0xf]
      %v9241 = vld [vmem:[%s9224 + $0x60] sm:$0xf]
      %v9242 = vld [vmem:[%s9224 + $0x64] sm:$0xf]
      %v9243 = vld [vmem:[%s9224 + $0x6c] sm:$0xf]
      %v9244 = vld [vmem:[%s9224 + $0x70] sm:$0xf]
      %v9245 = vld [vmem:[%s9224 + $0x78] sm:$0xf]
      %v9246 = vld [vmem:[%s9224 + $0x7c] sm:$0xf]
      %v9247 = vld [vmem:[%s9224 + $0x84] sm:$0xf]
      %v9248 = vld [vmem:[%s9224 + $0x88] sm:$0xf]
      %v9249 = vld [vmem:[%s9224 + $0x90] sm:$0xf]
      %v9250 = vld [vmem:[%s9224 + $0x94] sm:$0xf]
      %v9251 = vld [vmem:[%s9224 + $0x9c] sm:$0xf]
      %v9252 = vld [vmem:[%s9224 + $0xa0] sm:$0xf]
      %v9253 = vld [vmem:[%s9224 + $0xa8] sm:$0xf]
      %v9254 = vld [vmem:[%s9224 + $0xac] sm:$0xf]
      %v9255 = vld [vmem:[%s9224 + $0xb4] sm:$0xf]
      %v9256 = vld [vmem:[%s9224 + $0xb8] sm:$0xf]
      %v9257 = vld [vmem:[%s9224] sm:$0xe]
      %v9258 = vld [vmem:[%s9224 + $0x8] sm:$0x3]
      %v9259 = vld [vmem:[%s9224 + $0xc] sm:$0xe]
      %v9260 = vld [vmem:[%s9224 + $0x14] sm:$0x3]
      %v9261 = vld [vmem:[%s9224 + $0x18] sm:$0xe]
      %v9262 = vld [vmem:[%s9224 + $0x20] sm:$0x3]
      %v9263 = vld [vmem:[%s9224 + $0x24] sm:$0xe]
      %v9264 = vld [vmem:[%s9224 + $0x2c] sm:$0x3]
      %v9265 = vld [vmem:[%s9224 + $0x30] sm:$0xe]
      %v9266 = vld [vmem:[%s9224 + $0x38] sm:$0x3]
      %v9267 = vld [vmem:[%s9224 + $0x3c] sm:$0xe]
      %v9268 = vld [vmem:[%s9224 + $0x44] sm:$0x3]
      %v9269 = vld [vmem:[%s9224 + $0x48] sm:$0xe]
      %v9270 = vld [vmem:[%s9224 + $0x50] sm:$0x3]
      %v9271 = vld [vmem:[%s9224 + $0x54] sm:$0xe]
      %v9272 = vld [vmem:[%s9224 + $0x5c] sm:$0x3]
      %v9273 = vld [vmem:[%s9224 + $0x60] sm:$0xe]
      %v9274 = vld [vmem:[%s9224 + $0x68] sm:$0x3]
      %v9275 = vld [vmem:[%s9224 + $0x6c] sm:$0xe]
      %v9276 = vld [vmem:[%s9224 + $0x74] sm:$0x3]
      %v9277 = vld [vmem:[%s9224 + $0x78] sm:$0xe]
      %v9278 = vld [vmem:[%s9224 + $0x80] sm:$0x3]
      %v9279 = vld [vmem:[%s9224 + $0x84] sm:$0xe]
      %v9280 = vld [vmem:[%s9224 + $0x8c] sm:$0x3]
      %v9281 = vld [vmem:[%s9224 + $0x90] sm:$0xe]
      %v9282 = vld [vmem:[%s9224 + $0x98] sm:$0x3]
      %v9283 = vld [vmem:[%s9224 + $0x9c] sm:$0xe]
      %v9284 = vld [vmem:[%s9224 + $0xa4] sm:$0x3]
      %v9285 = vld [vmem:[%s9224 + $0xa8] sm:$0xe]
      %v9286 = vld [vmem:[%s9224 + $0xb0] sm:$0x3]
      %v9287 = vld [vmem:[%s9224 + $0xb4] sm:$0xe]
      %v9288 = vld [vmem:[%s9224 + $0xbc] sm:$0x3]
      %v9321 = vunpack.c.l.b16 %v9225
      %v9322 = vunpack.c.l.b16 %v9226
      %v9323 = vunpack.c.l.b16 %v9227
      %v9324 = vunpack.c.l.b16 %v9228
      %v9325 = vunpack.c.l.b16 %v9229
      %v9326 = vunpack.c.l.b16 %v9230
      %v9327 = vunpack.c.l.b16 %v9231
      %v9328 = vunpack.c.l.b16 %v9232
      %v9329 = vunpack.c.l.b16 %v9233
      %v9330 = vunpack.c.l.b16 %v9234
      %v9331 = vunpack.c.l.b16 %v9235
      %v9332 = vunpack.c.l.b16 %v9236
      %v9333 = vunpack.c.l.b16 %v9237
      %v9334 = vunpack.c.l.b16 %v9238
      %v9335 = vunpack.c.l.b16 %v9239
      %v9336 = vunpack.c.l.b16 %v9240
      %v9337 = vunpack.c.l.b16 %v9241
      %v9338 = vunpack.c.l.b16 %v9242
      %v9339 = vunpack.c.l.b16 %v9243
      %v9340 = vunpack.c.l.b16 %v9244
      %v9341 = vunpack.c.l.b16 %v9245
      %v9342 = vunpack.c.l.b16 %v9246
      %v9343 = vunpack.c.l.b16 %v9247
      %v9344 = vunpack.c.l.b16 %v9248
      %v9345 = vunpack.c.l.b16 %v9249
      %v9346 = vunpack.c.l.b16 %v9250
      %v9347 = vunpack.c.l.b16 %v9251
      %v9348 = vunpack.c.l.b16 %v9252
      %v9349 = vunpack.c.l.b16 %v9253
      %v9350 = vunpack.c.l.b16 %v9254
      %v9351 = vunpack.c.l.b16 %v9255
      %v9352 = vunpack.c.l.b16 %v9256
      %v9353 = vpack.c.b16 %v9322, %v9321
      %v9354 = vpack.c.b16 %v9324, %v9323
      %v9355 = vpack.c.b16 %v9326, %v9325
      %v9356 = vpack.c.b16 %v9328, %v9327
      %v9357 = vpack.c.b16 %v9330, %v9329
      %v9358 = vpack.c.b16 %v9332, %v9331
      %v9359 = vpack.c.b16 %v9334, %v9333
      %v9360 = vpack.c.b16 %v9336, %v9335
      %v9361 = vpack.c.b16 %v9338, %v9337
      %v9362 = vpack.c.b16 %v9340, %v9339
      %v9363 = vpack.c.b16 %v9342, %v9341
      %v9364 = vpack.c.b16 %v9344, %v9343
      %v9365 = vpack.c.b16 %v9346, %v9345
      %v9366 = vpack.c.b16 %v9348, %v9347
      %v9367 = vpack.c.b16 %v9350, %v9349
      %v9368 = vpack.c.b16 %v9352, %v9351
      %v9417 = vunpack.c.l.b16 %v9257
      %v9418 = vunpack.c.l.b16 %v9258
      %v9419 = vunpack.c.l.b16 %v9259
      %v9420 = vunpack.c.l.b16 %v9260
      %v9421 = vunpack.c.l.b16 %v9261
      %v9422 = vunpack.c.l.b16 %v9262
      %v9423 = vunpack.c.l.b16 %v9263
      %v9424 = vunpack.c.l.b16 %v9264
      %v9425 = vunpack.c.l.b16 %v9265
      %v9426 = vunpack.c.l.b16 %v9266
      %v9427 = vunpack.c.l.b16 %v9267
      %v9428 = vunpack.c.l.b16 %v9268
      %v9429 = vunpack.c.l.b16 %v9269
      %v9430 = vunpack.c.l.b16 %v9270
      %v9431 = vunpack.c.l.b16 %v9271
      %v9432 = vunpack.c.l.b16 %v9272
      %v9433 = vunpack.c.l.b16 %v9273
      %v9434 = vunpack.c.l.b16 %v9274
      %v9435 = vunpack.c.l.b16 %v9275
      %v9436 = vunpack.c.l.b16 %v9276
      %v9437 = vunpack.c.l.b16 %v9277
      %v9438 = vunpack.c.l.b16 %v9278
      %v9439 = vunpack.c.l.b16 %v9279
      %v9440 = vunpack.c.l.b16 %v9280
      %v9441 = vunpack.c.l.b16 %v9281
      %v9442 = vunpack.c.l.b16 %v9282
      %v9443 = vunpack.c.l.b16 %v9283
      %v9444 = vunpack.c.l.b16 %v9284
      %v9445 = vunpack.c.l.b16 %v9285
      %v9446 = vunpack.c.l.b16 %v9286
      %v9447 = vunpack.c.l.b16 %v9287
      %v9448 = vunpack.c.l.b16 %v9288
      %v9449 = vpack.c.b16 %v9322, %v9417
      %v9450 = vpack.c.b16 %v9418, %v9418
      %v9451 = vpack.c.b16 %v9324, %v9419
      %v9452 = vpack.c.b16 %v9420, %v9420
      %v9453 = vpack.c.b16 %v9326, %v9421
      %v9454 = vpack.c.b16 %v9422, %v9422
      %v9455 = vpack.c.b16 %v9328, %v9423
      %v9456 = vpack.c.b16 %v9424, %v9424
      %v9457 = vpack.c.b16 %v9330, %v9425
      %v9458 = vpack.c.b16 %v9426, %v9426
      %v9459 = vpack.c.b16 %v9332, %v9427
      %v9460 = vpack.c.b16 %v9428, %v9428
      %v9461 = vpack.c.b16 %v9334, %v9429
      %v9462 = vpack.c.b16 %v9430, %v9430
      %v9463 = vpack.c.b16 %v9336, %v9431
      %v9464 = vpack.c.b16 %v9432, %v9432
      %v9465 = vpack.c.b16 %v9338, %v9433
      %v9466 = vpack.c.b16 %v9434, %v9434
      %v9467 = vpack.c.b16 %v9340, %v9435
      %v9468 = vpack.c.b16 %v9436, %v9436
      %v9469 = vpack.c.b16 %v9342, %v9437
      %v9470 = vpack.c.b16 %v9438, %v9438
      %v9471 = vpack.c.b16 %v9344, %v9439
      %v9472 = vpack.c.b16 %v9440, %v9440
      %v9473 = vpack.c.b16 %v9346, %v9441
      %v9474 = vpack.c.b16 %v9442, %v9442
      %v9475 = vpack.c.b16 %v9348, %v9443
      %v9476 = vpack.c.b16 %v9444, %v9444
      %v9477 = vpack.c.b16 %v9350, %v9445
      %v9478 = vpack.c.b16 %v9446, %v9446
      %v9479 = vpack.c.b16 %v9352, %v9447
      %v9480 = vpack.c.b16 %v9448, %v9448
      %v9482 = vshrl.u32 %v9449, 16
      %v9484 = vrot.slane %v9482, 1
      %v9485 = vshll.u32 %v9449, 16
      %v9487 = vrot.slane %v9485, 2
      %v9488 = vor.u32 %v9484, %v9487
      %v9490 = vshrl.u32 %v9450, 16
      %v9492 = vrot.slane %v9490, 1
      %v9493 = vshll.u32 %v9450, 16
      %v9495 = vrot.slane %v9493, 2
      %v9496 = vor.u32 %v9492, %v9495
      %v9497 = vsel %vm2207, %v9488, %v9496
      %v9499 = vshrl.u32 %v9451, 16
      %v9501 = vrot.slane %v9499, 1
      %v9502 = vshll.u32 %v9451, 16
      %v9504 = vrot.slane %v9502, 2
      %v9505 = vor.u32 %v9501, %v9504
      %v9507 = vshrl.u32 %v9452, 16
      %v9509 = vrot.slane %v9507, 1
      %v9510 = vshll.u32 %v9452, 16
      %v9512 = vrot.slane %v9510, 2
      %v9513 = vor.u32 %v9509, %v9512
      %v9514 = vsel %vm2207, %v9505, %v9513
      %v9516 = vshrl.u32 %v9453, 16
      %v9518 = vrot.slane %v9516, 1
      %v9519 = vshll.u32 %v9453, 16
      %v9521 = vrot.slane %v9519, 2
      %v9522 = vor.u32 %v9518, %v9521
      %v9524 = vshrl.u32 %v9454, 16
      %v9526 = vrot.slane %v9524, 1
      %v9527 = vshll.u32 %v9454, 16
      %v9529 = vrot.slane %v9527, 2
      %v9530 = vor.u32 %v9526, %v9529
      %v9531 = vsel %vm2207, %v9522, %v9530
      %v9533 = vshrl.u32 %v9455, 16
      %v9535 = vrot.slane %v9533, 1
      %v9536 = vshll.u32 %v9455, 16
      %v9538 = vrot.slane %v9536, 2
      %v9539 = vor.u32 %v9535, %v9538
      %v9541 = vshrl.u32 %v9456, 16
      %v9543 = vrot.slane %v9541, 1
      %v9544 = vshll.u32 %v9456, 16
      %v9546 = vrot.slane %v9544, 2
      %v9547 = vor.u32 %v9543, %v9546
      %v9548 = vsel %vm2207, %v9539, %v9547
      %v9550 = vshrl.u32 %v9457, 16
      %v9552 = vrot.slane %v9550, 1
      %v9553 = vshll.u32 %v9457, 16
      %v9555 = vrot.slane %v9553, 2
      %v9556 = vor.u32 %v9552, %v9555
      %v9558 = vshrl.u32 %v9458, 16
      %v9560 = vrot.slane %v9558, 1
      %v9561 = vshll.u32 %v9458, 16
      %v9563 = vrot.slane %v9561, 2
      %v9564 = vor.u32 %v9560, %v9563
      %v9565 = vsel %vm2207, %v9556, %v9564
      %v9567 = vshrl.u32 %v9459, 16
      %v9569 = vrot.slane %v9567, 1
      %v9570 = vshll.u32 %v9459, 16
      %v9572 = vrot.slane %v9570, 2
      %v9573 = vor.u32 %v9569, %v9572
      %v9575 = vshrl.u32 %v9460, 16
      %v9577 = vrot.slane %v9575, 1
      %v9578 = vshll.u32 %v9460, 16
      %v9580 = vrot.slane %v9578, 2
      %v9581 = vor.u32 %v9577, %v9580
      %v9582 = vsel %vm2207, %v9573, %v9581
      %v9584 = vshrl.u32 %v9461, 16
      %v9586 = vrot.slane %v9584, 1
      %v9587 = vshll.u32 %v9461, 16
      %v9589 = vrot.slane %v9587, 2
      %v9590 = vor.u32 %v9586, %v9589
      %v9592 = vshrl.u32 %v9462, 16
      %v9594 = vrot.slane %v9592, 1
      %v9595 = vshll.u32 %v9462, 16
      %v9597 = vrot.slane %v9595, 2
      %v9598 = vor.u32 %v9594, %v9597
      %v9599 = vsel %vm2207, %v9590, %v9598
      %v9601 = vshrl.u32 %v9463, 16
      %v9603 = vrot.slane %v9601, 1
      %v9604 = vshll.u32 %v9463, 16
      %v9606 = vrot.slane %v9604, 2
      %v9607 = vor.u32 %v9603, %v9606
      %v9609 = vshrl.u32 %v9464, 16
      %v9611 = vrot.slane %v9609, 1
      %v9612 = vshll.u32 %v9464, 16
      %v9614 = vrot.slane %v9612, 2
      %v9615 = vor.u32 %v9611, %v9614
      %v9616 = vsel %vm2207, %v9607, %v9615
      %v9618 = vshrl.u32 %v9465, 16
      %v9620 = vrot.slane %v9618, 1
      %v9621 = vshll.u32 %v9465, 16
      %v9623 = vrot.slane %v9621, 2
      %v9624 = vor.u32 %v9620, %v9623
      %v9626 = vshrl.u32 %v9466, 16
      %v9628 = vrot.slane %v9626, 1
      %v9629 = vshll.u32 %v9466, 16
      %v9631 = vrot.slane %v9629, 2
      %v9632 = vor.u32 %v9628, %v9631
      %v9633 = vsel %vm2207, %v9624, %v9632
      %v9635 = vshrl.u32 %v9467, 16
      %v9637 = vrot.slane %v9635, 1
      %v9638 = vshll.u32 %v9467, 16
      %v9640 = vrot.slane %v9638, 2
      %v9641 = vor.u32 %v9637, %v9640
      %v9643 = vshrl.u32 %v9468, 16
      %v9645 = vrot.slane %v9643, 1
      %v9646 = vshll.u32 %v9468, 16
      %v9648 = vrot.slane %v9646, 2
      %v9649 = vor.u32 %v9645, %v9648
      %v9650 = vsel %vm2207, %v9641, %v9649
      %v9652 = vshrl.u32 %v9469, 16
      %v9654 = vrot.slane %v9652, 1
      %v9655 = vshll.u32 %v9469, 16
      %v9657 = vrot.slane %v9655, 2
      %v9658 = vor.u32 %v9654, %v9657
      %v9660 = vshrl.u32 %v9470, 16
      %v9662 = vrot.slane %v9660, 1
      %v9663 = vshll.u32 %v9470, 16
      %v9665 = vrot.slane %v9663, 2
      %v9666 = vor.u32 %v9662, %v9665
      %v9667 = vsel %vm2207, %v9658, %v9666
      %v9669 = vshrl.u32 %v9471, 16
      %v9671 = vrot.slane %v9669, 1
      %v9672 = vshll.u32 %v9471, 16
      %v9674 = vrot.slane %v9672, 2
      %v9675 = vor.u32 %v9671, %v9674
      %v9677 = vshrl.u32 %v9472, 16
      %v9679 = vrot.slane %v9677, 1
      %v9680 = vshll.u32 %v9472, 16
      %v9682 = vrot.slane %v9680, 2
      %v9683 = vor.u32 %v9679, %v9682
      %v9684 = vsel %vm2207, %v9675, %v9683
      %v9686 = vshrl.u32 %v9473, 16
      %v9688 = vrot.slane %v9686, 1
      %v9689 = vshll.u32 %v9473, 16
      %v9691 = vrot.slane %v9689, 2
      %v9692 = vor.u32 %v9688, %v9691
      %v9694 = vshrl.u32 %v9474, 16
      %v9696 = vrot.slane %v9694, 1
      %v9697 = vshll.u32 %v9474, 16
      %v9699 = vrot.slane %v9697, 2
      %v9700 = vor.u32 %v9696, %v9699
      %v9701 = vsel %vm2207, %v9692, %v9700
      %v9703 = vshrl.u32 %v9475, 16
      %v9705 = vrot.slane %v9703, 1
      %v9706 = vshll.u32 %v9475, 16
      %v9708 = vrot.slane %v9706, 2
      %v9709 = vor.u32 %v9705, %v9708
      %v9711 = vshrl.u32 %v9476, 16
      %v9713 = vrot.slane %v9711, 1
      %v9714 = vshll.u32 %v9476, 16
      %v9716 = vrot.slane %v9714, 2
      %v9717 = vor.u32 %v9713, %v9716
      %v9718 = vsel %vm2207, %v9709, %v9717
      %v9720 = vshrl.u32 %v9477, 16
      %v9722 = vrot.slane %v9720, 1
      %v9723 = vshll.u32 %v9477, 16
      %v9725 = vrot.slane %v9723, 2
      %v9726 = vor.u32 %v9722, %v9725
      %v9728 = vshrl.u32 %v9478, 16
      %v9730 = vrot.slane %v9728, 1
      %v9731 = vshll.u32 %v9478, 16
      %v9733 = vrot.slane %v9731, 2
      %v9734 = vor.u32 %v9730, %v9733
      %v9735 = vsel %vm2207, %v9726, %v9734
      %v9737 = vshrl.u32 %v9479, 16
      %v9739 = vrot.slane %v9737, 1
      %v9740 = vshll.u32 %v9479, 16
      %v9742 = vrot.slane %v9740, 2
      %v9743 = vor.u32 %v9739, %v9742
      %v9745 = vshrl.u32 %v9480, 16
      %v9747 = vrot.slane %v9745, 1
      %v9748 = vshll.u32 %v9480, 16
      %v9750 = vrot.slane %v9748, 2
      %v9751 = vor.u32 %v9747, %v9750
      %v9752 = vsel %vm2207, %v9743, %v9751
      %v9769 = vld [vmem:[%s1 + $0x480] sm:$0xf]
      %v9770 = vld [vmem:[%s1 + $0x484] sm:$0xf]
      %v9771 = vld [vmem:[%s1 + $0x488] sm:$0xf]
      %v9772 = vld [vmem:[%s1 + $0x48c] sm:$0xf]
      %v9773 = vld [vmem:[%s1 + $0x490] sm:$0xf]
      %v9774 = vld [vmem:[%s1 + $0x494] sm:$0xf]
      %v9775 = vld [vmem:[%s1 + $0x498] sm:$0xf]
      %v9776 = vld [vmem:[%s1 + $0x49c] sm:$0xf]
      %v9777 = vld [vmem:[%s1 + $0x4a0] sm:$0xf]
      %v9778 = vld [vmem:[%s1 + $0x4a4] sm:$0xf]
      %v9779 = vld [vmem:[%s1 + $0x4a8] sm:$0xf]
      %v9780 = vld [vmem:[%s1 + $0x4ac] sm:$0xf]
      %v9781 = vld [vmem:[%s1 + $0x4b0] sm:$0xf]
      %v9782 = vld [vmem:[%s1 + $0x4b4] sm:$0xf]
      %v9783 = vld [vmem:[%s1 + $0x4b8] sm:$0xf]
      %v9784 = vld [vmem:[%s1 + $0x4bc] sm:$0xf]
      %v9785 = vld [vmem:[%s1 + $0x4c0] sm:$0xf]
      %v9786 = vld [vmem:[%s1 + $0x4c4] sm:$0xf]
      %v9787 = vld [vmem:[%s1 + $0x4c8] sm:$0xf]
      %v9788 = vld [vmem:[%s1 + $0x4cc] sm:$0xf]
      %v9789 = vld [vmem:[%s1 + $0x4d0] sm:$0xf]
      %v9790 = vld [vmem:[%s1 + $0x4d4] sm:$0xf]
      %v9791 = vld [vmem:[%s1 + $0x4d8] sm:$0xf]
      %v9792 = vld [vmem:[%s1 + $0x4dc] sm:$0xf]
      %v9793 = vld [vmem:[%s1 + $0x4e0] sm:$0xf]
      %v9794 = vld [vmem:[%s1 + $0x4e4] sm:$0xf]
      %v9795 = vld [vmem:[%s1 + $0x4e8] sm:$0xf]
      %v9796 = vld [vmem:[%s1 + $0x4ec] sm:$0xf]
      %v9797 = vld [vmem:[%s1 + $0x4f0] sm:$0xf]
      %v9798 = vld [vmem:[%s1 + $0x4f4] sm:$0xf]
      %v9799 = vld [vmem:[%s1 + $0x4f8] sm:$0xf]
      %v9800 = vld [vmem:[%s1 + $0x4fc] sm:$0xf]
      %v9833 = vunpack.c.l.b16 %v9769
      %v9834 = vunpack.c.l.b16 %v9770
      %v9835 = vunpack.c.l.b16 %v9771
      %v9836 = vunpack.c.l.b16 %v9772
      %v9837 = vunpack.c.l.b16 %v9773
      %v9838 = vunpack.c.l.b16 %v9774
      %v9839 = vunpack.c.l.b16 %v9775
      %v9840 = vunpack.c.l.b16 %v9776
      %v9841 = vunpack.c.l.b16 %v9777
      %v9842 = vunpack.c.l.b16 %v9778
      %v9843 = vunpack.c.l.b16 %v9779
      %v9844 = vunpack.c.l.b16 %v9780
      %v9845 = vunpack.c.l.b16 %v9781
      %v9846 = vunpack.c.l.b16 %v9782
      %v9847 = vunpack.c.l.b16 %v9783
      %v9848 = vunpack.c.l.b16 %v9784
      %v9849 = vunpack.c.l.b16 %v9785
      %v9850 = vunpack.c.l.b16 %v9786
      %v9851 = vunpack.c.l.b16 %v9787
      %v9852 = vunpack.c.l.b16 %v9788
      %v9853 = vunpack.c.l.b16 %v9789
      %v9854 = vunpack.c.l.b16 %v9790
      %v9855 = vunpack.c.l.b16 %v9791
      %v9856 = vunpack.c.l.b16 %v9792
      %v9857 = vunpack.c.l.b16 %v9793
      %v9858 = vunpack.c.l.b16 %v9794
      %v9859 = vunpack.c.l.b16 %v9795
      %v9860 = vunpack.c.l.b16 %v9796
      %v9861 = vunpack.c.l.b16 %v9797
      %v9862 = vunpack.c.l.b16 %v9798
      %v9863 = vunpack.c.l.b16 %v9799
      %v9864 = vunpack.c.l.b16 %v9800
      %v9865 = vpack.c.b16 %v9834, %v9833
      %v9866 = vpack.c.b16 %v9836, %v9835
      %v9867 = vpack.c.b16 %v9838, %v9837
      %v9868 = vpack.c.b16 %v9840, %v9839
      %v9869 = vpack.c.b16 %v9842, %v9841
      %v9870 = vpack.c.b16 %v9844, %v9843
      %v9871 = vpack.c.b16 %v9846, %v9845
      %v9872 = vpack.c.b16 %v9848, %v9847
      %v9873 = vpack.c.b16 %v9850, %v9849
      %v9874 = vpack.c.b16 %v9852, %v9851
      %v9875 = vpack.c.b16 %v9854, %v9853
      %v9876 = vpack.c.b16 %v9856, %v9855
      %v9877 = vpack.c.b16 %v9858, %v9857
      %v9878 = vpack.c.b16 %v9860, %v9859
      %v9879 = vpack.c.b16 %v9862, %v9861
      %v9880 = vpack.c.b16 %v9864, %v9863
      %9897 = vmatprep.subr.bf16.mxu0 0
      %9898 = vmatpush1.bf16.msra.mxu0 %v9865
      %9899 = vmatprep.subr.bf16.mxu0 0
      %9900 = vmatpush1.bf16.msra.mxu0 %v9866
      %9901 = vmatprep.subr.bf16.mxu0 0
      %9902 = vmatpush1.bf16.msra.mxu0 %v9867
      %9903 = vmatprep.subr.bf16.mxu0 0
      %9904 = vmatpush1.bf16.msra.mxu0 %v9868
      %9905 = vmatprep.subr.bf16.mxu0 0
      %9906 = vmatpush1.bf16.msra.mxu0 %v9869
      %9907 = vmatprep.subr.bf16.mxu0 0
      %9908 = vmatpush1.bf16.msra.mxu0 %v9870
      %9909 = vmatprep.subr.bf16.mxu0 0
      %9910 = vmatpush1.bf16.msra.mxu0 %v9871
      %9911 = vmatprep.subr.bf16.mxu0 0
      %9912 = vmatpush1.bf16.msra.mxu0 %v9872
      %9913 = vmatprep.subr.bf16.mxu0 0
      %9914 = vmatpush1.bf16.msra.mxu0 %v9873
      %9915 = vmatprep.subr.bf16.mxu0 0
      %9916 = vmatpush1.bf16.msra.mxu0 %v9874
      %9917 = vmatprep.subr.bf16.mxu0 0
      %9918 = vmatpush1.bf16.msra.mxu0 %v9875
      %9919 = vmatprep.subr.bf16.mxu0 0
      %9920 = vmatpush1.bf16.msra.mxu0 %v9876
      %9921 = vmatprep.subr.bf16.mxu0 0
      %9922 = vmatpush1.bf16.msra.mxu0 %v9877
      %9923 = vmatprep.subr.bf16.mxu0 0
      %9924 = vmatpush1.bf16.msra.mxu0 %v9878
      %9925 = vmatprep.subr.bf16.mxu0 0
      %9926 = vmatpush1.bf16.msra.mxu0 %v9879
      %9927 = vmatprep.subr.bf16.mxu0 0
      %9928 = vmatpush1.bf16.msra.mxu0 %v9880
      %9929 = vmatprep.mubr.bf16.mxu0 %v9497
      %9930 = vmatmul.mubr.bf16.gmra.mrb[0].mxu0 %v9353
      %v9931 = vpop.f32.mrb[0].mxu0
      %v9932 = vadd.f32 0.0, %v9931
      %v9933 = vpop.f32.mrb[0].mxu0
      %v9934 = vpop.f32.mrb[0].mxu0
      %v9935 = vadd.f32 0.0, %v9934
      %v9936 = vpop.f32.mrb[0].mxu0
      %9937 = vmatprep.mubr.bf16.mxu0 %v9514
      %9938 = vmatmul.mubr.bf16.gmra.mrb[0].mxu0 %v9354
      %v9939 = vpop.f32.mrb[0].mxu0
      %v9940 = vadd.f32 0.0, %v9939
      %v9941 = vpop.f32.mrb[0].mxu0
      %v9942 = vpop.f32.mrb[0].mxu0
      %v9943 = vadd.f32 0.0, %v9942
      %v9944 = vpop.f32.mrb[0].mxu0
      %9945 = vmatprep.mubr.bf16.mxu0 %v9531
      %9946 = vmatmul.mubr.bf16.gmra.mrb[0].mxu0 %v9355
      %v9947 = vpop.f32.mrb[0].mxu0
      %v9948 = vadd.f32 0.0, %v9947
      %v9949 = vpop.f32.mrb[0].mxu0
      %v9950 = vpop.f32.mrb[0].mxu0
      %v9951 = vadd.f32 0.0, %v9950
      %v9952 = vpop.f32.mrb[0].mxu0
      %9953 = vmatprep.mubr.bf16.mxu0 %v9548
      %9954 = vmatmul.mubr.bf16.gmra.mrb[0].mxu0 %v9356
      %v9955 = vpop.f32.mrb[0].mxu0
      %v9956 = vadd.f32 0.0, %v9955
      %v9957 = vpop.f32.mrb[0].mxu0
      %v9958 = vpop.f32.mrb[0].mxu0
      %v9959 = vadd.f32 0.0, %v9958
      %v9960 = vpop.f32.mrb[0].mxu0
      %9961 = vmatprep.mubr.bf16.mxu0 %v9565
      %9962 = vmatmul.mubr.bf16.gmra.mrb[0].mxu0 %v9357
      %v9963 = vpop.f32.mrb[0].mxu0
      %v9964 = vadd.f32 0.0, %v9963
      %v9965 = vpop.f32.mrb[0].mxu0
      %v9966 = vpop.f32.mrb[0].mxu0
      %v9967 = vadd.f32 0.0, %v9966
      %v9968 = vpop.f32.mrb[0].mxu0
      %9969 = vmatprep.mubr.bf16.mxu0 %v9582
      %9970 = vmatmul.mubr.bf16.gmra.mrb[0].mxu0 %v9358
      %v9971 = vpop.f32.mrb[0].mxu0
      %v9972 = vadd.f32 0.0, %v9971
      %v9973 = vpop.f32.mrb[0].mxu0
      %v9974 = vpop.f32.mrb[0].mxu0
      %v9975 = vadd.f32 0.0, %v9974
      %v9976 = vpop.f32.mrb[0].mxu0
      %9977 = vmatprep.mubr.bf16.mxu0 %v9599
      %9978 = vmatmul.mubr.bf16.gmra.mrb[0].mxu0 %v9359
      %v9979 = vpop.f32.mrb[0].mxu0
      %v9980 = vadd.f32 0.0, %v9979
      %v9981 = vpop.f32.mrb[0].mxu0
      %v9982 = vpop.f32.mrb[0].mxu0
      %v9983 = vadd.f32 0.0, %v9982
      %v9984 = vpop.f32.mrb[0].mxu0
      %9985 = vmatprep.mubr.bf16.mxu0 %v9616
      %9986 = vmatmul.mubr.bf16.gmra.mrb[0].mxu0 %v9360
      %v9987 = vpop.f32.mrb[0].mxu0
      %v9988 = vadd.f32 0.0, %v9987
      %v9989 = vpop.f32.mrb[0].mxu0
      %v9990 = vpop.f32.mrb[0].mxu0
      %v9991 = vadd.f32 0.0, %v9990
      %v9992 = vpop.f32.mrb[0].mxu0
      %9993 = vmatprep.mubr.bf16.mxu0 %v9633
      %9994 = vmatmul.mubr.bf16.gmra.mrb[0].mxu0 %v9361
      %v9995 = vpop.f32.mrb[0].mxu0
      %v9996 = vadd.f32 0.0, %v9995
      %v9997 = vpop.f32.mrb[0].mxu0
      %v9998 = vpop.f32.mrb[0].mxu0
      %v9999 = vadd.f32 0.0, %v9998
      %v10000 = vpop.f32.mrb[0].mxu0
      %10001 = vmatprep.mubr.bf16.mxu0 %v9650
      %10002 = vmatmul.mubr.bf16.gmra.mrb[0].mxu0 %v9362
      %v10003 = vpop.f32.mrb[0].mxu0
      %v10004 = vadd.f32 0.0, %v10003
      %v10005 = vpop.f32.mrb[0].mxu0
      %v10006 = vpop.f32.mrb[0].mxu0
      %v10007 = vadd.f32 0.0, %v10006
      %v10008 = vpop.f32.mrb[0].mxu0
      %10009 = vmatprep.mubr.bf16.mxu0 %v9667
      %10010 = vmatmul.mubr.bf16.gmra.mrb[0].mxu0 %v9363
      %v10011 = vpop.f32.mrb[0].mxu0
      %v10012 = vadd.f32 0.0, %v10011
      %v10013 = vpop.f32.mrb[0].mxu0
      %v10014 = vpop.f32.mrb[0].mxu0
      %v10015 = vadd.f32 0.0, %v10014
      %v10016 = vpop.f32.mrb[0].mxu0
      %10017 = vmatprep.mubr.bf16.mxu0 %v9684
      %10018 = vmatmul.mubr.bf16.gmra.mrb[0].mxu0 %v9364
      %v10019 = vpop.f32.mrb[0].mxu0
      %v10020 = vadd.f32 0.0, %v10019
      %v10021 = vpop.f32.mrb[0].mxu0
      %v10022 = vpop.f32.mrb[0].mxu0
      %v10023 = vadd.f32 0.0, %v10022
      %v10024 = vpop.f32.mrb[0].mxu0
      %10025 = vmatprep.mubr.bf16.mxu0 %v9701
      %10026 = vmatmul.mubr.bf16.gmra.mrb[0].mxu0 %v9365
      %v10027 = vpop.f32.mrb[0].mxu0
      %v10028 = vadd.f32 0.0, %v10027
      %v10029 = vpop.f32.mrb[0].mxu0
      %v10030 = vpop.f32.mrb[0].mxu0
      %v10031 = vadd.f32 0.0, %v10030
      %v10032 = vpop.f32.mrb[0].mxu0
      %10033 = vmatprep.mubr.bf16.mxu0 %v9718
      %10034 = vmatmul.mubr.bf16.gmra.mrb[0].mxu0 %v9366
      %v10035 = vpop.f32.mrb[0].mxu0
      %v10036 = vadd.f32 0.0, %v10035
      %v10037 = vpop.f32.mrb[0].mxu0
      %v10038 = vpop.f32.mrb[0].mxu0
      %v10039 = vadd.f32 0.0, %v10038
      %v10040 = vpop.f32.mrb[0].mxu0
      %10041 = vmatprep.mubr.bf16.mxu0 %v9735
      %10042 = vmatmul.mubr.bf16.gmra.mrb[0].mxu0 %v9367
      %v10043 = vpop.f32.mrb[0].mxu0
      %v10044 = vadd.f32 0.0, %v10043
      %v10045 = vpop.f32.mrb[0].mxu0
      %v10046 = vpop.f32.mrb[0].mxu0
      %v10047 = vadd.f32 0.0, %v10046
      %v10048 = vpop.f32.mrb[0].mxu0
      %10049 = vmatprep.mubr.bf16.mxu0 %v9752
      %10050 = vmatmul.mubr.bf16.gmra.mrb[0].mxu0 %v9368
      %v10051 = vpop.f32.mrb[0].mxu0
      %v10052 = vadd.f32 0.0, %v10051
      %v10053 = vpop.f32.mrb[0].mxu0
      %v10054 = vpop.f32.mrb[0].mxu0
      %v10055 = vadd.f32 0.0, %v10054
      %v10056 = vpop.f32.mrb[0].mxu0
      %10057 = vdwg.mxu0
      %v10058 = vadd.f32 %v9190, %v9932
      %v10059 = vadd.f32 %v9191, %v9935
      %v10060 = vadd.f32 %v9192, %v9940
      %v10061 = vadd.f32 %v9193, %v9943
      %v10062 = vadd.f32 %v9194, %v9948
      %v10063 = vadd.f32 %v9195, %v9951
      %v10064 = vadd.f32 %v9196, %v9956
      %v10065 = vadd.f32 %v9197, %v9959
      %v10066 = vadd.f32 %v9198, %v9964
      %v10067 = vadd.f32 %v9199, %v9967
      %v10068 = vadd.f32 %v9200, %v9972
      %v10069 = vadd.f32 %v9201, %v9975
      %v10070 = vadd.f32 %v9202, %v9980
      %v10071 = vadd.f32 %v9203, %v9983
      %v10072 = vadd.f32 %v9204, %v9988
      %v10073 = vadd.f32 %v9205, %v9991
      %v10074 = vadd.f32 %v9206, %v9996
      %v10075 = vadd.f32 %v9207, %v9999
      %v10076 = vadd.f32 %v9208, %v10004
      %v10077 = vadd.f32 %v9209, %v10007
      %v10078 = vadd.f32 %v9210, %v10012
      %v10079 = vadd.f32 %v9211, %v10015
      %v10080 = vadd.f32 %v9212, %v10020
      %v10081 = vadd.f32 %v9213, %v10023
      %v10082 = vadd.f32 %v9214, %v10028
      %v10083 = vadd.f32 %v9215, %v10031
      %v10084 = vadd.f32 %v9216, %v10036
      %v10085 = vadd.f32 %v9217, %v10039
      %v10086 = vadd.f32 %v9218, %v10044
      %v10087 = vadd.f32 %v9219, %v10047
      %v10088 = vadd.f32 %v9220, %v10052
      %v10089 = vadd.f32 %v9221, %v10055
      %v10090 = vld [vmem:[%s9224] sm:$0x8]
      %v10091 = vld [vmem:[%s9224 + $0x8] sm:$0x7]
      %v10092 = vld [vmem:[%s9224 + $0xc] sm:$0x8]
      %v10093 = vld [vmem:[%s9224 + $0x14] sm:$0x7]
      %v10094 = vld [vmem:[%s9224 + $0x18] sm:$0x8]
      %v10095 = vld [vmem:[%s9224 + $0x20] sm:$0x7]
      %v10096 = vld [vmem:[%s9224 + $0x24] sm:$0x8]
      %v10097 = vld [vmem:[%s9224 + $0x2c] sm:$0x7]
      %v10098 = vld [vmem:[%s9224 + $0x30] sm:$0x8]
      %v10099 = vld [vmem:[%s9224 + $0x38] sm:$0x7]
      %v10100 = vld [vmem:[%s9224 + $0x3c] sm:$0x8]
      %v10101 = vld [vmem:[%s9224 + $0x44] sm:$0x7]
      %v10102 = vld [vmem:[%s9224 + $0x48] sm:$0x8]
      %v10103 = vld [vmem:[%s9224 + $0x50] sm:$0x7]
      %v10104 = vld [vmem:[%s9224 + $0x54] sm:$0x8]
      %v10105 = vld [vmem:[%s9224 + $0x5c] sm:$0x7]
      %v10106 = vld [vmem:[%s9224 + $0x60] sm:$0x8]
      %v10107 = vld [vmem:[%s9224 + $0x68] sm:$0x7]
      %v10108 = vld [vmem:[%s9224 + $0x6c] sm:$0x8]
      %v10109 = vld [vmem:[%s9224 + $0x74] sm:$0x7]
      %v10110 = vld [vmem:[%s9224 + $0x78] sm:$0x8]
      %v10111 = vld [vmem:[%s9224 + $0x80] sm:$0x7]
      %v10112 = vld [vmem:[%s9224 + $0x84] sm:$0x8]
      %v10113 = vld [vmem:[%s9224 + $0x8c] sm:$0x7]
      %v10114 = vld [vmem:[%s9224 + $0x90] sm:$0x8]
      %v10115 = vld [vmem:[%s9224 + $0x98] sm:$0x7]
      %v10116 = vld [vmem:[%s9224 + $0x9c] sm:$0x8]
      %v10117 = vld [vmem:[%s9224 + $0xa4] sm:$0x7]
      %v10118 = vld [vmem:[%s9224 + $0xa8] sm:$0x8]
      %v10119 = vld [vmem:[%s9224 + $0xb0] sm:$0x7]
      %v10120 = vld [vmem:[%s9224 + $0xb4] sm:$0x8]
      %v10121 = vld [vmem:[%s9224 + $0xbc] sm:$0x7]
      %v10122 = vld [vmem:[%s890] sm:$0xf]
      %v10123 = vld [vmem:[%s890 + $0x4] sm:$0xf]
      %v10124 = vld [vmem:[%s890 + $0xc] sm:$0xf]
      %v10125 = vld [vmem:[%s890 + $0x10] sm:$0xf]
      %v10126 = vld [vmem:[%s890 + $0x18] sm:$0xf]
      %v10127 = vld [vmem:[%s890 + $0x1c] sm:$0xf]
      %v10128 = vld [vmem:[%s890 + $0x24] sm:$0xf]
      %v10129 = vld [vmem:[%s890 + $0x28] sm:$0xf]
      %v10130 = vld [vmem:[%s890 + $0x30] sm:$0xf]
      %v10131 = vld [vmem:[%s890 + $0x34] sm:$0xf]
      %v10132 = vld [vmem:[%s890 + $0x3c] sm:$0xf]
      %v10133 = vld [vmem:[%s890 + $0x40] sm:$0xf]
      %v10134 = vld [vmem:[%s890 + $0x48] sm:$0xf]
      %v10135 = vld [vmem:[%s890 + $0x4c] sm:$0xf]
      %v10136 = vld [vmem:[%s890 + $0x54] sm:$0xf]
      %v10137 = vld [vmem:[%s890 + $0x58] sm:$0xf]
      %v10138 = vld [vmem:[%s890 + $0x60] sm:$0xf]
      %v10139 = vld [vmem:[%s890 + $0x64] sm:$0xf]
      %v10140 = vld [vmem:[%s890 + $0x6c] sm:$0xf]
      %v10141 = vld [vmem:[%s890 + $0x70] sm:$0xf]
      %v10142 = vld [vmem:[%s890 + $0x78] sm:$0xf]
      %v10143 = vld [vmem:[%s890 + $0x7c] sm:$0xf]
      %v10144 = vld [vmem:[%s890 + $0x84] sm:$0xf]
      %v10145 = vld [vmem:[%s890 + $0x88] sm:$0xf]
      %v10146 = vld [vmem:[%s890 + $0x90] sm:$0xf]
      %v10147 = vld [vmem:[%s890 + $0x94] sm:$0xf]
      %v10148 = vld [vmem:[%s890 + $0x9c] sm:$0xf]
      %v10149 = vld [vmem:[%s890 + $0xa0] sm:$0xf]
      %v10150 = vld [vmem:[%s890 + $0xa8] sm:$0xf]
      %v10151 = vld [vmem:[%s890 + $0xac] sm:$0xf]
      %v10152 = vld [vmem:[%s890 + $0xb4] sm:$0xf]
      %v10153 = vld [vmem:[%s890 + $0xb8] sm:$0xf]
      %v10186 = vunpack.c.l.b16 %v10090
      %v10187 = vunpack.c.l.b16 %v10091
      %v10188 = vunpack.c.l.b16 %v10092
      %v10189 = vunpack.c.l.b16 %v10093
      %v10190 = vunpack.c.l.b16 %v10094
      %v10191 = vunpack.c.l.b16 %v10095
      %v10192 = vunpack.c.l.b16 %v10096
      %v10193 = vunpack.c.l.b16 %v10097
      %v10194 = vunpack.c.l.b16 %v10098
      %v10195 = vunpack.c.l.b16 %v10099
      %v10196 = vunpack.c.l.b16 %v10100
      %v10197 = vunpack.c.l.b16 %v10101
      %v10198 = vunpack.c.l.b16 %v10102
      %v10199 = vunpack.c.l.b16 %v10103
      %v10200 = vunpack.c.l.b16 %v10104
      %v10201 = vunpack.c.l.b16 %v10105
      %v10202 = vunpack.c.l.b16 %v10106
      %v10203 = vunpack.c.l.b16 %v10107
      %v10204 = vunpack.c.l.b16 %v10108
      %v10205 = vunpack.c.l.b16 %v10109
      %v10206 = vunpack.c.l.b16 %v10110
      %v10207 = vunpack.c.l.b16 %v10111
      %v10208 = vunpack.c.l.b16 %v10112
      %v10209 = vunpack.c.l.b16 %v10113
      %v10210 = vunpack.c.l.b16 %v10114
      %v10211 = vunpack.c.l.b16 %v10115
      %v10212 = vunpack.c.l.b16 %v10116
      %v10213 = vunpack.c.l.b16 %v10117
      %v10214 = vunpack.c.l.b16 %v10118
      %v10215 = vunpack.c.l.b16 %v10119
      %v10216 = vunpack.c.l.b16 %v10120
      %v10217 = vunpack.c.l.b16 %v10121
      %v10218 = vpack.c.b16 %v9322, %v10186
      %v10219 = vpack.c.b16 %v10187, %v10187
      %v10220 = vpack.c.b16 %v9324, %v10188
      %v10221 = vpack.c.b16 %v10189, %v10189
      %v10222 = vpack.c.b16 %v9326, %v10190
      %v10223 = vpack.c.b16 %v10191, %v10191
      %v10224 = vpack.c.b16 %v9328, %v10192
      %v10225 = vpack.c.b16 %v10193, %v10193
      %v10226 = vpack.c.b16 %v9330, %v10194
      %v10227 = vpack.c.b16 %v10195, %v10195
      %v10228 = vpack.c.b16 %v9332, %v10196
      %v10229 = vpack.c.b16 %v10197, %v10197
      %v10230 = vpack.c.b16 %v9334, %v10198
      %v10231 = vpack.c.b16 %v10199, %v10199
      %v10232 = vpack.c.b16 %v9336, %v10200
      %v10233 = vpack.c.b16 %v10201, %v10201
      %v10234 = vpack.c.b16 %v9338, %v10202
      %v10235 = vpack.c.b16 %v10203, %v10203
      %v10236 = vpack.c.b16 %v9340, %v10204
      %v10237 = vpack.c.b16 %v10205, %v10205
      %v10238 = vpack.c.b16 %v9342, %v10206
      %v10239 = vpack.c.b16 %v10207, %v10207
      %v10240 = vpack.c.b16 %v9344, %v10208
      %v10241 = vpack.c.b16 %v10209, %v10209
      %v10242 = vpack.c.b16 %v9346, %v10210
      %v10243 = vpack.c.b16 %v10211, %v10211
      %v10244 = vpack.c.b16 %v9348, %v10212
      %v10245 = vpack.c.b16 %v10213, %v10213
      %v10246 = vpack.c.b16 %v9350, %v10214
      %v10247 = vpack.c.b16 %v10215, %v10215
      %v10248 = vpack.c.b16 %v9352, %v10216
      %v10249 = vpack.c.b16 %v10217, %v10217
      %v10282 = vunpack.c.l.b16 %v10122
      %v10283 = vunpack.c.l.b16 %v10123
      %v10284 = vunpack.c.l.b16 %v10124
      %v10285 = vunpack.c.l.b16 %v10125
      %v10286 = vunpack.c.l.b16 %v10126
      %v10287 = vunpack.c.l.b16 %v10127
      %v10288 = vunpack.c.l.b16 %v10128
      %v10289 = vunpack.c.l.b16 %v10129
      %v10290 = vunpack.c.l.b16 %v10130
      %v10291 = vunpack.c.l.b16 %v10131
      %v10292 = vunpack.c.l.b16 %v10132
      %v10293 = vunpack.c.l.b16 %v10133
      %v10294 = vunpack.c.l.b16 %v10134
      %v10295 = vunpack.c.l.b16 %v10135
      %v10296 = vunpack.c.l.b16 %v10136
      %v10297 = vunpack.c.l.b16 %v10137
      %v10298 = vunpack.c.l.b16 %v10138
      %v10299 = vunpack.c.l.b16 %v10139
      %v10300 = vunpack.c.l.b16 %v10140
      %v10301 = vunpack.c.l.b16 %v10141
      %v10302 = vunpack.c.l.b16 %v10142
      %v10303 = vunpack.c.l.b16 %v10143
      %v10304 = vunpack.c.l.b16 %v10144
      %v10305 = vunpack.c.l.b16 %v10145
      %v10306 = vunpack.c.l.b16 %v10146
      %v10307 = vunpack.c.l.b16 %v10147
      %v10308 = vunpack.c.l.b16 %v10148
      %v10309 = vunpack.c.l.b16 %v10149
      %v10310 = vunpack.c.l.b16 %v10150
      %v10311 = vunpack.c.l.b16 %v10151
      %v10312 = vunpack.c.l.b16 %v10152
      %v10313 = vunpack.c.l.b16 %v10153
      %v10314 = vpack.c.b16 %v10283, %v10282
      %v10315 = vpack.c.b16 %v10285, %v10284
      %v10316 = vpack.c.b16 %v10287, %v10286
      %v10317 = vpack.c.b16 %v10289, %v10288
      %v10318 = vpack.c.b16 %v10291, %v10290
      %v10319 = vpack.c.b16 %v10293, %v10292
      %v10320 = vpack.c.b16 %v10295, %v10294
      %v10321 = vpack.c.b16 %v10297, %v10296
      %v10322 = vpack.c.b16 %v10299, %v10298
      %v10323 = vpack.c.b16 %v10301, %v10300
      %v10324 = vpack.c.b16 %v10303, %v10302
      %v10325 = vpack.c.b16 %v10305, %v10304
      %v10326 = vpack.c.b16 %v10307, %v10306
      %v10327 = vpack.c.b16 %v10309, %v10308
      %v10328 = vpack.c.b16 %v10311, %v10310
      %v10329 = vpack.c.b16 %v10313, %v10312
      %v10330 = vrot.slane %v10314, 5
      %v10331 = vrot.slane %v10315, 5
      %v10332 = vrot.slane %v10316, 5
      %v10333 = vrot.slane %v10317, 5
      %v10334 = vrot.slane %v10318, 5
      %v10335 = vrot.slane %v10319, 5
      %v10336 = vrot.slane %v10320, 5
      %v10337 = vrot.slane %v10321, 5
      %v10338 = vrot.slane %v10322, 5
      %v10339 = vrot.slane %v10323, 5
      %v10340 = vrot.slane %v10324, 5
      %v10341 = vrot.slane %v10325, 5
      %v10342 = vrot.slane %v10326, 5
      %v10343 = vrot.slane %v10327, 5
      %v10344 = vrot.slane %v10328, 5
      %v10345 = vrot.slane %v10329, 5
      %vm10346 = vcmask 1044480
      %v10347 = vrot.slane %v10218, 3
      %v10348 = vrot.slane %v10219, 3
      %v10349 = vsel %vm10346, %v10347, %v10348
      %v10350 = vrot.slane %v10330, 3
      %v10351 = vsel %vm10346, %v10350, %v10350
      %v10352 = vrot.slane %v10220, 3
      %v10353 = vrot.slane %v10221, 3
      %v10354 = vsel %vm10346, %v10352, %v10353
      %v10355 = vrot.slane %v10331, 3
      %v10356 = vsel %vm10346, %v10355, %v10355
      %v10357 = vrot.slane %v10222, 3
      %v10358 = vrot.slane %v10223, 3
      %v10359 = vsel %vm10346, %v10357, %v10358
      %v10360 = vrot.slane %v10332, 3
      %v10361 = vsel %vm10346, %v10360, %v10360
      %v10362 = vrot.slane %v10224, 3
      %v10363 = vrot.slane %v10225, 3
      %v10364 = vsel %vm10346, %v10362, %v10363
      %v10365 = vrot.slane %v10333, 3
      %v10366 = vsel %vm10346, %v10365, %v10365
      %v10367 = vrot.slane %v10226, 3
      %v10368 = vrot.slane %v10227, 3
      %v10369 = vsel %vm10346, %v10367, %v10368
      %v10370 = vrot.slane %v10334, 3
      %v10371 = vsel %vm10346, %v10370, %v10370
      %v10372 = vrot.slane %v10228, 3
      %v10373 = vrot.slane %v10229, 3
      %v10374 = vsel %vm10346, %v10372, %v10373
      %v10375 = vrot.slane %v10335, 3
      %v10376 = vsel %vm10346, %v10375, %v10375
      %v10377 = vrot.slane %v10230, 3
      %v10378 = vrot.slane %v10231, 3
      %v10379 = vsel %vm10346, %v10377, %v10378
      %v10380 = vrot.slane %v10336, 3
      %v10381 = vsel %vm10346, %v10380, %v10380
      %v10382 = vrot.slane %v10232, 3
      %v10383 = vrot.slane %v10233, 3
      %v10384 = vsel %vm10346, %v10382, %v10383
      %v10385 = vrot.slane %v10337, 3
      %v10386 = vsel %vm10346, %v10385, %v10385
      %v10387 = vrot.slane %v10234, 3
      %v10388 = vrot.slane %v10235, 3
      %v10389 = vsel %vm10346, %v10387, %v10388
      %v10390 = vrot.slane %v10338, 3
      %v10391 = vsel %vm10346, %v10390, %v10390
      %v10392 = vrot.slane %v10236, 3
      %v10393 = vrot.slane %v10237, 3
      %v10394 = vsel %vm10346, %v10392, %v10393
      %v10395 = vrot.slane %v10339, 3
      %v10396 = vsel %vm10346, %v10395, %v10395
      %v10397 = vrot.slane %v10238, 3
      %v10398 = vrot.slane %v10239, 3
      %v10399 = vsel %vm10346, %v10397, %v10398
      %v10400 = vrot.slane %v10340, 3
      %v10401 = vsel %vm10346, %v10400, %v10400
      %v10402 = vrot.slane %v10240, 3
      %v10403 = vrot.slane %v10241, 3
      %v10404 = vsel %vm10346, %v10402, %v10403
      %v10405 = vrot.slane %v10341, 3
      %v10406 = vsel %vm10346, %v10405, %v10405
      %v10407 = vrot.slane %v10242, 3
      %v10408 = vrot.slane %v10243, 3
      %v10409 = vsel %vm10346, %v10407, %v10408
      %v10410 = vrot.slane %v10342, 3
      %v10411 = vsel %vm10346, %v10410, %v10410
      %v10412 = vrot.slane %v10244, 3
      %v10413 = vrot.slane %v10245, 3
      %v10414 = vsel %vm10346, %v10412, %v10413
      %v10415 = vrot.slane %v10343, 3
      %v10416 = vsel %vm10346, %v10415, %v10415
      %v10417 = vrot.slane %v10246, 3
      %v10418 = vrot.slane %v10247, 3
      %v10419 = vsel %vm10346, %v10417, %v10418
      %v10420 = vrot.slane %v10344, 3
      %v10421 = vsel %vm10346, %v10420, %v10420
      %v10422 = vrot.slane %v10248, 3
      %v10423 = vrot.slane %v10249, 3
      %v10424 = vsel %vm10346, %v10422, %v10423
      %v10425 = vrot.slane %v10345, 3
      %v10426 = vsel %vm10346, %v10425, %v10425
      %v10459 = vld [vmem:[%s1 + $0x500] sm:$0xf]
      %v10460 = vld [vmem:[%s1 + $0x504] sm:$0xf]
      %v10461 = vld [vmem:[%s1 + $0x508] sm:$0xf]
      %v10462 = vld [vmem:[%s1 + $0x50c] sm:$0xf]
      %v10463 = vld [vmem:[%s1 + $0x510] sm:$0xf]
      %v10464 = vld [vmem:[%s1 + $0x514] sm:$0xf]
      %v10465 = vld [vmem:[%s1 + $0x518] sm:$0xf]
      %v10466 = vld [vmem:[%s1 + $0x51c] sm:$0xf]
      %v10467 = vld [vmem:[%s1 + $0x520] sm:$0xf]
      %v10468 = vld [vmem:[%s1 + $0x524] sm:$0xf]
      %v10469 = vld [vmem:[%s1 + $0x528] sm:$0xf]
      %v10470 = vld [vmem:[%s1 + $0x52c] sm:$0xf]
      %v10471 = vld [vmem:[%s1 + $0x530] sm:$0xf]
      %v10472 = vld [vmem:[%s1 + $0x534] sm:$0xf]
      %v10473 = vld [vmem:[%s1 + $0x538] sm:$0xf]
      %v10474 = vld [vmem:[%s1 + $0x53c] sm:$0xf]
      %v10475 = vld [vmem:[%s1 + $0x540] sm:$0xf]
      %v10476 = vld [vmem:[%s1 + $0x544] sm:$0xf]
      %v10477 = vld [vmem:[%s1 + $0x548] sm:$0xf]
      %v10478 = vld [vmem:[%s1 + $0x54c] sm:$0xf]
      %v10479 = vld [vmem:[%s1 + $0x550] sm:$0xf]
      %v10480 = vld [vmem:[%s1 + $0x554] sm:$0xf]
      %v10481 = vld [vmem:[%s1 + $0x558] sm:$0xf]
      %v10482 = vld [vmem:[%s1 + $0x55c] sm:$0xf]
      %v10483 = vld [vmem:[%s1 + $0x560] sm:$0xf]
      %v10484 = vld [vmem:[%s1 + $0x564] sm:$0xf]
      %v10485 = vld [vmem:[%s1 + $0x568] sm:$0xf]
      %v10486 = vld [vmem:[%s1 + $0x56c] sm:$0xf]
      %v10487 = vld [vmem:[%s1 + $0x570] sm:$0xf]
      %v10488 = vld [vmem:[%s1 + $0x574] sm:$0xf]
      %v10489 = vld [vmem:[%s1 + $0x578] sm:$0xf]
      %v10490 = vld [vmem:[%s1 + $0x57c] sm:$0xf]
      %v10523 = vunpack.c.l.b16 %v10459
      %v10524 = vunpack.c.l.b16 %v10460
      %v10525 = vunpack.c.l.b16 %v10461
      %v10526 = vunpack.c.l.b16 %v10462
      %v10527 = vunpack.c.l.b16 %v10463
      %v10528 = vunpack.c.l.b16 %v10464
      %v10529 = vunpack.c.l.b16 %v10465
      %v10530 = vunpack.c.l.b16 %v10466
      %v10531 = vunpack.c.l.b16 %v10467
      %v10532 = vunpack.c.l.b16 %v10468
      %v10533 = vunpack.c.l.b16 %v10469
      %v10534 = vunpack.c.l.b16 %v10470
      %v10535 = vunpack.c.l.b16 %v10471
      %v10536 = vunpack.c.l.b16 %v10472
      %v10537 = vunpack.c.l.b16 %v10473
      %v10538 = vunpack.c.l.b16 %v10474
      %v10539 = vunpack.c.l.b16 %v10475
      %v10540 = vunpack.c.l.b16 %v10476
      %v10541 = vunpack.c.l.b16 %v10477
      %v10542 = vunpack.c.l.b16 %v10478
      %v10543 = vunpack.c.l.b16 %v10479
      %v10544 = vunpack.c.l.b16 %v10480
      %v10545 = vunpack.c.l.b16 %v10481
      %v10546 = vunpack.c.l.b16 %v10482
      %v10547 = vunpack.c.l.b16 %v10483
      %v10548 = vunpack.c.l.b16 %v10484
      %v10549 = vunpack.c.l.b16 %v10485
      %v10550 = vunpack.c.l.b16 %v10486
      %v10551 = vunpack.c.l.b16 %v10487
      %v10552 = vunpack.c.l.b16 %v10488
      %v10553 = vunpack.c.l.b16 %v10489
      %v10554 = vunpack.c.l.b16 %v10490
      %v10555 = vpack.c.b16 %v10524, %v10523
      %v10556 = vpack.c.b16 %v10526, %v10525
      %v10557 = vpack.c.b16 %v10528, %v10527
      %v10558 = vpack.c.b16 %v10530, %v10529
      %v10559 = vpack.c.b16 %v10532, %v10531
      %v10560 = vpack.c.b16 %v10534, %v10533
      %v10561 = vpack.c.b16 %v10536, %v10535
      %v10562 = vpack.c.b16 %v10538, %v10537
      %v10563 = vpack.c.b16 %v10540, %v10539
      %v10564 = vpack.c.b16 %v10542, %v10541
      %v10565 = vpack.c.b16 %v10544, %v10543
      %v10566 = vpack.c.b16 %v10546, %v10545
      %v10567 = vpack.c.b16 %v10548, %v10547
      %v10568 = vpack.c.b16 %v10550, %v10549
      %v10569 = vpack.c.b16 %v10552, %v10551
      %v10570 = vpack.c.b16 %v10554, %v10553
      %10587 = vmatprep.subr.bf16.mxu0 0
      %10588 = vmatpush1.bf16.msra.mxu0 %v10555
      %10589 = vmatprep.subr.bf16.mxu0 0
      %10590 = vmatpush1.bf16.msra.mxu0 %v10556
      %10591 = vmatprep.subr.bf16.mxu0 0
      %10592 = vmatpush1.bf16.msra.mxu0 %v10557
      %10593 = vmatprep.subr.bf16.mxu0 0
      %10594 = vmatpush1.bf16.msra.mxu0 %v10558
      %10595 = vmatprep.subr.bf16.mxu0 0
      %10596 = vmatpush1.bf16.msra.mxu0 %v10559
      %10597 = vmatprep.subr.bf16.mxu0 0
      %10598 = vmatpush1.bf16.msra.mxu0 %v10560
      %10599 = vmatprep.subr.bf16.mxu0 0
      %10600 = vmatpush1.bf16.msra.mxu0 %v10561
      %10601 = vmatprep.subr.bf16.mxu0 0
      %10602 = vmatpush1.bf16.msra.mxu0 %v10562
      %10603 = vmatprep.subr.bf16.mxu0 0
      %10604 = vmatpush1.bf16.msra.mxu0 %v10563
      %10605 = vmatprep.subr.bf16.mxu0 0
      %10606 = vmatpush1.bf16.msra.mxu0 %v10564
      %10607 = vmatprep.subr.bf16.mxu0 0
      %10608 = vmatpush1.bf16.msra.mxu0 %v10565
      %10609 = vmatprep.subr.bf16.mxu0 0
      %10610 = vmatpush1.bf16.msra.mxu0 %v10566
      %10611 = vmatprep.subr.bf16.mxu0 0
      %10612 = vmatpush1.bf16.msra.mxu0 %v10567
      %10613 = vmatprep.subr.bf16.mxu0 0
      %10614 = vmatpush1.bf16.msra.mxu0 %v10568
      %10615 = vmatprep.subr.bf16.mxu0 0
      %10616 = vmatpush1.bf16.msra.mxu0 %v10569
      %10617 = vmatprep.subr.bf16.mxu0 0
      %10618 = vmatpush1.bf16.msra.mxu0 %v10570
      %10619 = vmatprep.mubr.bf16.mxu0 %v10351
      %10620 = vmatmul.mubr.bf16.gmra.mrb[0].mxu0 %v10349
      %v10621 = vpop.f32.mrb[0].mxu0
      %v10622 = vadd.f32 0.0, %v10621
      %v10623 = vpop.f32.mrb[0].mxu0
      %v10624 = vpop.f32.mrb[0].mxu0
      %v10625 = vadd.f32 0.0, %v10624
      %v10626 = vpop.f32.mrb[0].mxu0
      %10627 = vmatprep.mubr.bf16.mxu0 %v10356
      %10628 = vmatmul.mubr.bf16.gmra.mrb[0].mxu0 %v10354
      %v10629 = vpop.f32.mrb[0].mxu0
      %v10630 = vadd.f32 0.0, %v10629
      %v10631 = vpop.f32.mrb[0].mxu0
      %v10632 = vpop.f32.mrb[0].mxu0
      %v10633 = vadd.f32 0.0, %v10632
      %v10634 = vpop.f32.mrb[0].mxu0
      %10635 = vmatprep.mubr.bf16.mxu0 %v10361
      %10636 = vmatmul.mubr.bf16.gmra.mrb[0].mxu0 %v10359
      %v10637 = vpop.f32.mrb[0].mxu0
      %v10638 = vadd.f32 0.0, %v10637
      %v10639 = vpop.f32.mrb[0].mxu0
      %v10640 = vpop.f32.mrb[0].mxu0
      %v10641 = vadd.f32 0.0, %v10640
      %v10642 = vpop.f32.mrb[0].mxu0
      %10643 = vmatprep.mubr.bf16.mxu0 %v10366
      %10644 = vmatmul.mubr.bf16.gmra.mrb[0].mxu0 %v10364
      %v10645 = vpop.f32.mrb[0].mxu0
      %v10646 = vadd.f32 0.0, %v10645
      %v10647 = vpop.f32.mrb[0].mxu0
      %v10648 = vpop.f32.mrb[0].mxu0
      %v10649 = vadd.f32 0.0, %v10648
      %v10650 = vpop.f32.mrb[0].mxu0
      %10651 = vmatprep.mubr.bf16.mxu0 %v10371
      %10652 = vmatmul.mubr.bf16.gmra.mrb[0].mxu0 %v10369
      %v10653 = vpop.f32.mrb[0].mxu0
      %v10654 = vadd.f32 0.0, %v10653
      %v10655 = vpop.f32.mrb[0].mxu0
      %v10656 = vpop.f32.mrb[0].mxu0
      %v10657 = vadd.f32 0.0, %v10656
      %v10658 = vpop.f32.mrb[0].mxu0
      %10659 = vmatprep.mubr.bf16.mxu0 %v10376
      %10660 = vmatmul.mubr.bf16.gmra.mrb[0].mxu0 %v10374
      %v10661 = vpop.f32.mrb[0].mxu0
      %v10662 = vadd.f32 0.0, %v10661
      %v10663 = vpop.f32.mrb[0].mxu0
      %v10664 = vpop.f32.mrb[0].mxu0
      %v10665 = vadd.f32 0.0, %v10664
      %v10666 = vpop.f32.mrb[0].mxu0
      %10667 = vmatprep.mubr.bf16.mxu0 %v10381
      %10668 = vmatmul.mubr.bf16.gmra.mrb[0].mxu0 %v10379
      %v10669 = vpop.f32.mrb[0].mxu0
      %v10670 = vadd.f32 0.0, %v10669
      %v10671 = vpop.f32.mrb[0].mxu0
      %v10672 = vpop.f32.mrb[0].mxu0
      %v10673 = vadd.f32 0.0, %v10672
      %v10674 = vpop.f32.mrb[0].mxu0
      %10675 = vmatprep.mubr.bf16.mxu0 %v10386
      %10676 = vmatmul.mubr.bf16.gmra.mrb[0].mxu0 %v10384
      %v10677 = vpop.f32.mrb[0].mxu0
      %v10678 = vadd.f32 0.0, %v10677
      %v10679 = vpop.f32.mrb[0].mxu0
      %v10680 = vpop.f32.mrb[0].mxu0
      %v10681 = vadd.f32 0.0, %v10680
      %v10682 = vpop.f32.mrb[0].mxu0
      %10683 = vmatprep.mubr.bf16.mxu0 %v10391
      %10684 = vmatmul.mubr.bf16.gmra.mrb[0].mxu0 %v10389
      %v10685 = vpop.f32.mrb[0].mxu0
      %v10686 = vadd.f32 0.0, %v10685
      %v10687 = vpop.f32.mrb[0].mxu0
      %v10688 = vpop.f32.mrb[0].mxu0
      %v10689 = vadd.f32 0.0, %v10688
      %v10690 = vpop.f32.mrb[0].mxu0
      %10691 = vmatprep.mubr.bf16.mxu0 %v10396
      %10692 = vmatmul.mubr.bf16.gmra.mrb[0].mxu0 %v10394
      %v10693 = vpop.f32.mrb[0].mxu0
      %v10694 = vadd.f32 0.0, %v10693
      %v10695 = vpop.f32.mrb[0].mxu0
      %v10696 = vpop.f32.mrb[0].mxu0
      %v10697 = vadd.f32 0.0, %v10696
      %v10698 = vpop.f32.mrb[0].mxu0
      %10699 = vmatprep.mubr.bf16.mxu0 %v10401
      %10700 = vmatmul.mubr.bf16.gmra.mrb[0].mxu0 %v10399
      %v10701 = vpop.f32.mrb[0].mxu0
      %v10702 = vadd.f32 0.0, %v10701
      %v10703 = vpop.f32.mrb[0].mxu0
      %v10704 = vpop.f32.mrb[0].mxu0
      %v10705 = vadd.f32 0.0, %v10704
      %v10706 = vpop.f32.mrb[0].mxu0
      %10707 = vmatprep.mubr.bf16.mxu0 %v10406
      %10708 = vmatmul.mubr.bf16.gmra.mrb[0].mxu0 %v10404
      %v10709 = vpop.f32.mrb[0].mxu0
      %v10710 = vadd.f32 0.0, %v10709
      %v10711 = vpop.f32.mrb[0].mxu0
      %v10712 = vpop.f32.mrb[0].mxu0
      %v10713 = vadd.f32 0.0, %v10712
      %v10714 = vpop.f32.mrb[0].mxu0
      %10715 = vmatprep.mubr.bf16.mxu0 %v10411
      %10716 = vmatmul.mubr.bf16.gmra.mrb[0].mxu0 %v10409
      %v10717 = vpop.f32.mrb[0].mxu0
      %v10718 = vadd.f32 0.0, %v10717
      %v10719 = vpop.f32.mrb[0].mxu0
      %v10720 = vpop.f32.mrb[0].mxu0
      %v10721 = vadd.f32 0.0, %v10720
      %v10722 = vpop.f32.mrb[0].mxu0
      %10723 = vmatprep.mubr.bf16.mxu0 %v10416
      %10724 = vmatmul.mubr.bf16.gmra.mrb[0].mxu0 %v10414
      %v10725 = vpop.f32.mrb[0].mxu0
      %v10726 = vadd.f32 0.0, %v10725
      %v10727 = vpop.f32.mrb[0].mxu0
      %v10728 = vpop.f32.mrb[0].mxu0
      %v10729 = vadd.f32 0.0, %v10728
      %v10730 = vpop.f32.mrb[0].mxu0
      %10731 = vmatprep.mubr.bf16.mxu0 %v10421
      %10732 = vmatmul.mubr.bf16.gmra.mrb[0].mxu0 %v10419
      %v10733 = vpop.f32.mrb[0].mxu0
      %v10734 = vadd.f32 0.0, %v10733
      %v10735 = vpop.f32.mrb[0].mxu0
      %v10736 = vpop.f32.mrb[0].mxu0
      %v10737 = vadd.f32 0.0, %v10736
      %v10738 = vpop.f32.mrb[0].mxu0
      %10739 = vmatprep.mubr.bf16.mxu0 %v10426
      %10740 = vmatmul.mubr.bf16.gmra.mrb[0].mxu0 %v10424
      %v10741 = vpop.f32.mrb[0].mxu0
      %v10742 = vadd.f32 0.0, %v10741
      %v10743 = vpop.f32.mrb[0].mxu0
      %v10744 = vpop.f32.mrb[0].mxu0
      %v10745 = vadd.f32 0.0, %v10744
      %v10746 = vpop.f32.mrb[0].mxu0
      %10747 = vdwg.mxu0
      %v10748 = vadd.f32 %v10058, %v10622
      %v10749 = vadd.f32 %v10059, %v10625
      %v10750 = vadd.f32 %v10060, %v10630
      %v10751 = vadd.f32 %v10061, %v10633
      %v10752 = vadd.f32 %v10062, %v10638
      %v10753 = vadd.f32 %v10063, %v10641
      %v10754 = vadd.f32 %v10064, %v10646
      %v10755 = vadd.f32 %v10065, %v10649
      %v10756 = vadd.f32 %v10066, %v10654
      %v10757 = vadd.f32 %v10067, %v10657
      %v10758 = vadd.f32 %v10068, %v10662
      %v10759 = vadd.f32 %v10069, %v10665
      %v10760 = vadd.f32 %v10070, %v10670
      %v10761 = vadd.f32 %v10071, %v10673
      %v10762 = vadd.f32 %v10072, %v10678
      %v10763 = vadd.f32 %v10073, %v10681
      %v10764 = vadd.f32 %v10074, %v10686
      %v10765 = vadd.f32 %v10075, %v10689
      %v10766 = vadd.f32 %v10076, %v10694
      %v10767 = vadd.f32 %v10077, %v10697
      %v10768 = vadd.f32 %v10078, %v10702
      %v10769 = vadd.f32 %v10079, %v10705
      %v10770 = vadd.f32 %v10080, %v10710
      %v10771 = vadd.f32 %v10081, %v10713
      %v10772 = vadd.f32 %v10082, %v10718
      %v10773 = vadd.f32 %v10083, %v10721
      %v10774 = vadd.f32 %v10084, %v10726
      %v10775 = vadd.f32 %v10085, %v10729
      %v10776 = vadd.f32 %v10086, %v10734
      %v10777 = vadd.f32 %v10087, %v10737
      %v10778 = vadd.f32 %v10088, %v10742
      %v10779 = vadd.f32 %v10089, %v10745
      %v10780 = vld [vmem:[%s890] sm:$0x8]
      %v10781 = vld [vmem:[%s890 + $0xc] sm:$0x8]
      %v10782 = vld [vmem:[%s890 + $0x18] sm:$0x8]
      %v10783 = vld [vmem:[%s890 + $0x24] sm:$0x8]
      %v10784 = vld [vmem:[%s890 + $0x30] sm:$0x8]
      %v10785 = vld [vmem:[%s890 + $0x3c] sm:$0x8]
      %v10786 = vld [vmem:[%s890 + $0x48] sm:$0x8]
      %v10787 = vld [vmem:[%s890 + $0x54] sm:$0x8]
      %v10788 = vld [vmem:[%s890 + $0x60] sm:$0x8]
      %v10789 = vld [vmem:[%s890 + $0x6c] sm:$0x8]
      %v10790 = vld [vmem:[%s890 + $0x78] sm:$0x8]
      %v10791 = vld [vmem:[%s890 + $0x84] sm:$0x8]
      %v10792 = vld [vmem:[%s890 + $0x90] sm:$0x8]
      %v10793 = vld [vmem:[%s890 + $0x9c] sm:$0x8]
      %v10794 = vld [vmem:[%s890 + $0xa8] sm:$0x8]
      %v10795 = vld [vmem:[%s890 + $0xb4] sm:$0x8]
      %v10812 = vunpack.c.l.b16 %v10780
      %v10813 = vunpack.c.l.b16 %v10781
      %v10814 = vunpack.c.l.b16 %v10782
      %v10815 = vunpack.c.l.b16 %v10783
      %v10816 = vunpack.c.l.b16 %v10784
      %v10817 = vunpack.c.l.b16 %v10785
      %v10818 = vunpack.c.l.b16 %v10786
      %v10819 = vunpack.c.l.b16 %v10787
      %v10820 = vunpack.c.l.b16 %v10788
      %v10821 = vunpack.c.l.b16 %v10789
      %v10822 = vunpack.c.l.b16 %v10790
      %v10823 = vunpack.c.l.b16 %v10791
      %v10824 = vunpack.c.l.b16 %v10792
      %v10825 = vunpack.c.l.b16 %v10793
      %v10826 = vunpack.c.l.b16 %v10794
      %v10827 = vunpack.c.l.b16 %v10795
      %v10828 = vpack.c.b16 %v1036, %v10812
      %v10829 = vpack.c.b16 %v1039, %v10813
      %v10830 = vpack.c.b16 %v1042, %v10814
      %v10831 = vpack.c.b16 %v1045, %v10815
      %v10832 = vpack.c.b16 %v1048, %v10816
      %v10833 = vpack.c.b16 %v1051, %v10817
      %v10834 = vpack.c.b16 %v1054, %v10818
      %v10835 = vpack.c.b16 %v1057, %v10819
      %v10836 = vpack.c.b16 %v1060, %v10820
      %v10837 = vpack.c.b16 %v1063, %v10821
      %v10838 = vpack.c.b16 %v1066, %v10822
      %v10839 = vpack.c.b16 %v1069, %v10823
      %v10840 = vpack.c.b16 %v1072, %v10824
      %v10841 = vpack.c.b16 %v1075, %v10825
      %v10842 = vpack.c.b16 %v1078, %v10826
      %v10843 = vpack.c.b16 %v1081, %v10827
      %v10845 = vshrl.u32 %v10828, 16
      %v10847 = vrot.slane %v10845, 1
      %v10848 = vshll.u32 %v10828, 16
      %v10850 = vrot.slane %v10848, 2
      %v10851 = vor.u32 %v10847, %v10850
      %v10852 = vrot.slane %v7208, 1
      %v10853 = vrot.slane %v7211, 2
      %v10854 = vor.u32 %v10852, %v10853
      %v10855 = vsel %vm2207, %v10851, %v10854
      %v10857 = vshrl.u32 %v10829, 16
      %v10859 = vrot.slane %v10857, 1
      %v10860 = vshll.u32 %v10829, 16
      %v10862 = vrot.slane %v10860, 2
      %v10863 = vor.u32 %v10859, %v10862
      %v10864 = vrot.slane %v7237, 1
      %v10865 = vrot.slane %v7240, 2
      %v10866 = vor.u32 %v10864, %v10865
      %v10867 = vsel %vm2207, %v10863, %v10866
      %v10869 = vshrl.u32 %v10830, 16
      %v10871 = vrot.slane %v10869, 1
      %v10872 = vshll.u32 %v10830, 16
      %v10874 = vrot.slane %v10872, 2
      %v10875 = vor.u32 %v10871, %v10874
      %v10876 = vrot.slane %v7266, 1
      %v10877 = vrot.slane %v7269, 2
      %v10878 = vor.u32 %v10876, %v10877
      %v10879 = vsel %vm2207, %v10875, %v10878
      %v10881 = vshrl.u32 %v10831, 16
      %v10883 = vrot.slane %v10881, 1
      %v10884 = vshll.u32 %v10831, 16
      %v10886 = vrot.slane %v10884, 2
      %v10887 = vor.u32 %v10883, %v10886
      %v10888 = vrot.slane %v7295, 1
      %v10889 = vrot.slane %v7298, 2
      %v10890 = vor.u32 %v10888, %v10889
      %v10891 = vsel %vm2207, %v10887, %v10890
      %v10893 = vshrl.u32 %v10832, 16
      %v10895 = vrot.slane %v10893, 1
      %v10896 = vshll.u32 %v10832, 16
      %v10898 = vrot.slane %v10896, 2
      %v10899 = vor.u32 %v10895, %v10898
      %v10900 = vrot.slane %v7324, 1
      %v10901 = vrot.slane %v7327, 2
      %v10902 = vor.u32 %v10900, %v10901
      %v10903 = vsel %vm2207, %v10899, %v10902
      %v10905 = vshrl.u32 %v10833, 16
      %v10907 = vrot.slane %v10905, 1
      %v10908 = vshll.u32 %v10833, 16
      %v10910 = vrot.slane %v10908, 2
      %v10911 = vor.u32 %v10907, %v10910
      %v10912 = vrot.slane %v7353, 1
      %v10913 = vrot.slane %v7356, 2
      %v10914 = vor.u32 %v10912, %v10913
      %v10915 = vsel %vm2207, %v10911, %v10914
      %v10917 = vshrl.u32 %v10834, 16
      %v10919 = vrot.slane %v10917, 1
      %v10920 = vshll.u32 %v10834, 16
      %v10922 = vrot.slane %v10920, 2
      %v10923 = vor.u32 %v10919, %v10922
      %v10924 = vrot.slane %v7382, 1
      %v10925 = vrot.slane %v7385, 2
      %v10926 = vor.u32 %v10924, %v10925
      %v10927 = vsel %vm2207, %v10923, %v10926
      %v10929 = vshrl.u32 %v10835, 16
      %v10931 = vrot.slane %v10929, 1
      %v10932 = vshll.u32 %v10835, 16
      %v10934 = vrot.slane %v10932, 2
      %v10935 = vor.u32 %v10931, %v10934
      %v10936 = vrot.slane %v7411, 1
      %v10937 = vrot.slane %v7414, 2
      %v10938 = vor.u32 %v10936, %v10937
      %v10939 = vsel %vm2207, %v10935, %v10938
      %v10941 = vshrl.u32 %v10836, 16
      %v10943 = vrot.slane %v10941, 1
      %v10944 = vshll.u32 %v10836, 16
      %v10946 = vrot.slane %v10944, 2
      %v10947 = vor.u32 %v10943, %v10946
      %v10948 = vrot.slane %v7440, 1
      %v10949 = vrot.slane %v7443, 2
      %v10950 = vor.u32 %v10948, %v10949
      %v10951 = vsel %vm2207, %v10947, %v10950
      %v10953 = vshrl.u32 %v10837, 16
      %v10955 = vrot.slane %v10953, 1
      %v10956 = vshll.u32 %v10837, 16
      %v10958 = vrot.slane %v10956, 2
      %v10959 = vor.u32 %v10955, %v10958
      %v10960 = vrot.slane %v7469, 1
      %v10961 = vrot.slane %v7472, 2
      %v10962 = vor.u32 %v10960, %v10961
      %v10963 = vsel %vm2207, %v10959, %v10962
      %v10965 = vshrl.u32 %v10838, 16
      %v10967 = vrot.slane %v10965, 1
      %v10968 = vshll.u32 %v10838, 16
      %v10970 = vrot.slane %v10968, 2
      %v10971 = vor.u32 %v10967, %v10970
      %v10972 = vrot.slane %v7498, 1
      %v10973 = vrot.slane %v7501, 2
      %v10974 = vor.u32 %v10972, %v10973
      %v10975 = vsel %vm2207, %v10971, %v10974
      %v10977 = vshrl.u32 %v10839, 16
      %v10979 = vrot.slane %v10977, 1
      %v10980 = vshll.u32 %v10839, 16
      %v10982 = vrot.slane %v10980, 2
      %v10983 = vor.u32 %v10979, %v10982
      %v10984 = vrot.slane %v7527, 1
      %v10985 = vrot.slane %v7530, 2
      %v10986 = vor.u32 %v10984, %v10985
      %v10987 = vsel %vm2207, %v10983, %v10986
      %v10989 = vshrl.u32 %v10840, 16
      %v10991 = vrot.slane %v10989, 1
      %v10992 = vshll.u32 %v10840, 16
      %v10994 = vrot.slane %v10992, 2
      %v10995 = vor.u32 %v10991, %v10994
      %v10996 = vrot.slane %v7556, 1
      %v10997 = vrot.slane %v7559, 2
      %v10998 = vor.u32 %v10996, %v10997
      %v10999 = vsel %vm2207, %v10995, %v10998
      %v11001 = vshrl.u32 %v10841, 16
      %v11003 = vrot.slane %v11001, 1
      %v11004 = vshll.u32 %v10841, 16
      %v11006 = vrot.slane %v11004, 2
      %v11007 = vor.u32 %v11003, %v11006
      %v11008 = vrot.slane %v7585, 1
      %v11009 = vrot.slane %v7588, 2
      %v11010 = vor.u32 %v11008, %v11009
      %v11011 = vsel %vm2207, %v11007, %v11010
      %v11013 = vshrl.u32 %v10842, 16
      %v11015 = vrot.slane %v11013, 1
      %v11016 = vshll.u32 %v10842, 16
      %v11018 = vrot.slane %v11016, 2
      %v11019 = vor.u32 %v11015, %v11018
      %v11020 = vrot.slane %v7614, 1
      %v11021 = vrot.slane %v7617, 2
      %v11022 = vor.u32 %v11020, %v11021
      %v11023 = vsel %vm2207, %v11019, %v11022
      %v11025 = vshrl.u32 %v10843, 16
      %v11027 = vrot.slane %v11025, 1
      %v11028 = vshll.u32 %v10843, 16
      %v11030 = vrot.slane %v11028, 2
      %v11031 = vor.u32 %v11027, %v11030
      %v11032 = vrot.slane %v7643, 1
      %v11033 = vrot.slane %v7646, 2
      %v11034 = vor.u32 %v11032, %v11033
      %v11035 = vsel %vm2207, %v11031, %v11034
      %v11037 = vshrl.u32 %v10855, 16
      %v11039 = vrot.slane %v11037, 1
      %v11040 = vshll.u32 %v10855, 16
      %v11042 = vrot.slane %v11040, 2
      %v11043 = vor.u32 %v11039, %v11042
      %v11045 = vshrl.u32 %v10854, 16
      %v11047 = vrot.slane %v11045, 1
      %v11048 = vshll.u32 %v10854, 16
      %v11050 = vrot.slane %v11048, 2
      %v11051 = vor.u32 %v11047, %v11050
      %v11052 = vsel %vm2207, %v11043, %v11051
      %v11054 = vshrl.u32 %v10867, 16
      %v11056 = vrot.slane %v11054, 1
      %v11057 = vshll.u32 %v10867, 16
      %v11059 = vrot.slane %v11057, 2
      %v11060 = vor.u32 %v11056, %v11059
      %v11062 = vshrl.u32 %v10866, 16
      %v11064 = vrot.slane %v11062, 1
      %v11065 = vshll.u32 %v10866, 16
      %v11067 = vrot.slane %v11065, 2
      %v11068 = vor.u32 %v11064, %v11067
      %v11069 = vsel %vm2207, %v11060, %v11068
      %v11071 = vshrl.u32 %v10879, 16
      %v11073 = vrot.slane %v11071, 1
      %v11074 = vshll.u32 %v10879, 16
      %v11076 = vrot.slane %v11074, 2
      %v11077 = vor.u32 %v11073, %v11076
      %v11079 = vshrl.u32 %v10878, 16
      %v11081 = vrot.slane %v11079, 1
      %v11082 = vshll.u32 %v10878, 16
      %v11084 = vrot.slane %v11082, 2
      %v11085 = vor.u32 %v11081, %v11084
      %v11086 = vsel %vm2207, %v11077, %v11085
      %v11088 = vshrl.u32 %v10891, 16
      %v11090 = vrot.slane %v11088, 1
      %v11091 = vshll.u32 %v10891, 16
      %v11093 = vrot.slane %v11091, 2
      %v11094 = vor.u32 %v11090, %v11093
      %v11096 = vshrl.u32 %v10890, 16
      %v11098 = vrot.slane %v11096, 1
      %v11099 = vshll.u32 %v10890, 16
      %v11101 = vrot.slane %v11099, 2
      %v11102 = vor.u32 %v11098, %v11101
      %v11103 = vsel %vm2207, %v11094, %v11102
      %v11105 = vshrl.u32 %v10903, 16
      %v11107 = vrot.slane %v11105, 1
      %v11108 = vshll.u32 %v10903, 16
      %v11110 = vrot.slane %v11108, 2
      %v11111 = vor.u32 %v11107, %v11110
      %v11113 = vshrl.u32 %v10902, 16
      %v11115 = vrot.slane %v11113, 1
      %v11116 = vshll.u32 %v10902, 16
      %v11118 = vrot.slane %v11116, 2
      %v11119 = vor.u32 %v11115, %v11118
      %v11120 = vsel %vm2207, %v11111, %v11119
      %v11122 = vshrl.u32 %v10915, 16
      %v11124 = vrot.slane %v11122, 1
      %v11125 = vshll.u32 %v10915, 16
      %v11127 = vrot.slane %v11125, 2
      %v11128 = vor.u32 %v11124, %v11127
      %v11130 = vshrl.u32 %v10914, 16
      %v11132 = vrot.slane %v11130, 1
      %v11133 = vshll.u32 %v10914, 16
      %v11135 = vrot.slane %v11133, 2
      %v11136 = vor.u32 %v11132, %v11135
      %v11137 = vsel %vm2207, %v11128, %v11136
      %v11139 = vshrl.u32 %v10927, 16
      %v11141 = vrot.slane %v11139, 1
      %v11142 = vshll.u32 %v10927, 16
      %v11144 = vrot.slane %v11142, 2
      %v11145 = vor.u32 %v11141, %v11144
      %v11147 = vshrl.u32 %v10926, 16
      %v11149 = vrot.slane %v11147, 1
      %v11150 = vshll.u32 %v10926, 16
      %v11152 = vrot.slane %v11150, 2
      %v11153 = vor.u32 %v11149, %v11152
      %v11154 = vsel %vm2207, %v11145, %v11153
      %v11156 = vshrl.u32 %v10939, 16
      %v11158 = vrot.slane %v11156, 1
      %v11159 = vshll.u32 %v10939, 16
      %v11161 = vrot.slane %v11159, 2
      %v11162 = vor.u32 %v11158, %v11161
      %v11164 = vshrl.u32 %v10938, 16
      %v11166 = vrot.slane %v11164, 1
      %v11167 = vshll.u32 %v10938, 16
      %v11169 = vrot.slane %v11167, 2
      %v11170 = vor.u32 %v11166, %v11169
      %v11171 = vsel %vm2207, %v11162, %v11170
      %v11173 = vshrl.u32 %v10951, 16
      %v11175 = vrot.slane %v11173, 1
      %v11176 = vshll.u32 %v10951, 16
      %v11178 = vrot.slane %v11176, 2
      %v11179 = vor.u32 %v11175, %v11178
      %v11181 = vshrl.u32 %v10950, 16
      %v11183 = vrot.slane %v11181, 1
      %v11184 = vshll.u32 %v10950, 16
      %v11186 = vrot.slane %v11184, 2
      %v11187 = vor.u32 %v11183, %v11186
      %v11188 = vsel %vm2207, %v11179, %v11187
      %v11190 = vshrl.u32 %v10963, 16
      %v11192 = vrot.slane %v11190, 1
      %v11193 = vshll.u32 %v10963, 16
      %v11195 = vrot.slane %v11193, 2
      %v11196 = vor.u32 %v11192, %v11195
      %v11198 = vshrl.u32 %v10962, 16
      %v11200 = vrot.slane %v11198, 1
      %v11201 = vshll.u32 %v10962, 16
      %v11203 = vrot.slane %v11201, 2
      %v11204 = vor.u32 %v11200, %v11203
      %v11205 = vsel %vm2207, %v11196, %v11204
      %v11207 = vshrl.u32 %v10975, 16
      %v11209 = vrot.slane %v11207, 1
      %v11210 = vshll.u32 %v10975, 16
      %v11212 = vrot.slane %v11210, 2
      %v11213 = vor.u32 %v11209, %v11212
      %v11215 = vshrl.u32 %v10974, 16
      %v11217 = vrot.slane %v11215, 1
      %v11218 = vshll.u32 %v10974, 16
      %v11220 = vrot.slane %v11218, 2
      %v11221 = vor.u32 %v11217, %v11220
      %v11222 = vsel %vm2207, %v11213, %v11221
      %v11224 = vshrl.u32 %v10987, 16
      %v11226 = vrot.slane %v11224, 1
      %v11227 = vshll.u32 %v10987, 16
      %v11229 = vrot.slane %v11227, 2
      %v11230 = vor.u32 %v11226, %v11229
      %v11232 = vshrl.u32 %v10986, 16
      %v11234 = vrot.slane %v11232, 1
      %v11235 = vshll.u32 %v10986, 16
      %v11237 = vrot.slane %v11235, 2
      %v11238 = vor.u32 %v11234, %v11237
      %v11239 = vsel %vm2207, %v11230, %v11238
      %v11241 = vshrl.u32 %v10999, 16
      %v11243 = vrot.slane %v11241, 1
      %v11244 = vshll.u32 %v10999, 16
      %v11246 = vrot.slane %v11244, 2
      %v11247 = vor.u32 %v11243, %v11246
      %v11249 = vshrl.u32 %v10998, 16
      %v11251 = vrot.slane %v11249, 1
      %v11252 = vshll.u32 %v10998, 16
      %v11254 = vrot.slane %v11252, 2
      %v11255 = vor.u32 %v11251, %v11254
      %v11256 = vsel %vm2207, %v11247, %v11255
      %v11258 = vshrl.u32 %v11011, 16
      %v11260 = vrot.slane %v11258, 1
      %v11261 = vshll.u32 %v11011, 16
      %v11263 = vrot.slane %v11261, 2
      %v11264 = vor.u32 %v11260, %v11263
      %v11266 = vshrl.u32 %v11010, 16
      %v11268 = vrot.slane %v11266, 1
      %v11269 = vshll.u32 %v11010, 16
      %v11271 = vrot.slane %v11269, 2
      %v11272 = vor.u32 %v11268, %v11271
      %v11273 = vsel %vm2207, %v11264, %v11272
      %v11275 = vshrl.u32 %v11023, 16
      %v11277 = vrot.slane %v11275, 1
      %v11278 = vshll.u32 %v11023, 16
      %v11280 = vrot.slane %v11278, 2
      %v11281 = vor.u32 %v11277, %v11280
      %v11283 = vshrl.u32 %v11022, 16
      %v11285 = vrot.slane %v11283, 1
      %v11286 = vshll.u32 %v11022, 16
      %v11288 = vrot.slane %v11286, 2
      %v11289 = vor.u32 %v11285, %v11288
      %v11290 = vsel %vm2207, %v11281, %v11289
      %v11292 = vshrl.u32 %v11035, 16
      %v11294 = vrot.slane %v11292, 1
      %v11295 = vshll.u32 %v11035, 16
      %v11297 = vrot.slane %v11295, 2
      %v11298 = vor.u32 %v11294, %v11297
      %v11300 = vshrl.u32 %v11034, 16
      %v11302 = vrot.slane %v11300, 1
      %v11303 = vshll.u32 %v11034, 16
      %v11305 = vrot.slane %v11303, 2
      %v11306 = vor.u32 %v11302, %v11305
      %v11307 = vsel %vm2207, %v11298, %v11306
      %v11324 = vld [vmem:[%s1 + $0x580] sm:$0xf]
      %v11325 = vld [vmem:[%s1 + $0x584] sm:$0xf]
      %v11326 = vld [vmem:[%s1 + $0x588] sm:$0xf]
      %v11327 = vld [vmem:[%s1 + $0x58c] sm:$0xf]
      %v11328 = vld [vmem:[%s1 + $0x590] sm:$0xf]
      %v11329 = vld [vmem:[%s1 + $0x594] sm:$0xf]
      %v11330 = vld [vmem:[%s1 + $0x598] sm:$0xf]
      %v11331 = vld [vmem:[%s1 + $0x59c] sm:$0xf]
      %v11332 = vld [vmem:[%s1 + $0x5a0] sm:$0xf]
      %v11333 = vld [vmem:[%s1 + $0x5a4] sm:$0xf]
      %v11334 = vld [vmem:[%s1 + $0x5a8] sm:$0xf]
      %v11335 = vld [vmem:[%s1 + $0x5ac] sm:$0xf]
      %v11336 = vld [vmem:[%s1 + $0x5b0] sm:$0xf]
      %v11337 = vld [vmem:[%s1 + $0x5b4] sm:$0xf]
      %v11338 = vld [vmem:[%s1 + $0x5b8] sm:$0xf]
      %v11339 = vld [vmem:[%s1 + $0x5bc] sm:$0xf]
      %v11340 = vld [vmem:[%s1 + $0x5c0] sm:$0xf]
      %v11341 = vld [vmem:[%s1 + $0x5c4] sm:$0xf]
      %v11342 = vld [vmem:[%s1 + $0x5c8] sm:$0xf]
      %v11343 = vld [vmem:[%s1 + $0x5cc] sm:$0xf]
      %v11344 = vld [vmem:[%s1 + $0x5d0] sm:$0xf]
      %v11345 = vld [vmem:[%s1 + $0x5d4] sm:$0xf]
      %v11346 = vld [vmem:[%s1 + $0x5d8] sm:$0xf]
      %v11347 = vld [vmem:[%s1 + $0x5dc] sm:$0xf]
      %v11348 = vld [vmem:[%s1 + $0x5e0] sm:$0xf]
      %v11349 = vld [vmem:[%s1 + $0x5e4] sm:$0xf]
      %v11350 = vld [vmem:[%s1 + $0x5e8] sm:$0xf]
      %v11351 = vld [vmem:[%s1 + $0x5ec] sm:$0xf]
      %v11352 = vld [vmem:[%s1 + $0x5f0] sm:$0xf]
      %v11353 = vld [vmem:[%s1 + $0x5f4] sm:$0xf]
      %v11354 = vld [vmem:[%s1 + $0x5f8] sm:$0xf]
      %v11355 = vld [vmem:[%s1 + $0x5fc] sm:$0xf]
      %v11388 = vunpack.c.l.b16 %v11324
      %v11389 = vunpack.c.l.b16 %v11325
      %v11390 = vunpack.c.l.b16 %v11326
      %v11391 = vunpack.c.l.b16 %v11327
      %v11392 = vunpack.c.l.b16 %v11328
      %v11393 = vunpack.c.l.b16 %v11329
      %v11394 = vunpack.c.l.b16 %v11330
      %v11395 = vunpack.c.l.b16 %v11331
      %v11396 = vunpack.c.l.b16 %v11332
      %v11397 = vunpack.c.l.b16 %v11333
      %v11398 = vunpack.c.l.b16 %v11334
      %v11399 = vunpack.c.l.b16 %v11335
      %v11400 = vunpack.c.l.b16 %v11336
      %v11401 = vunpack.c.l.b16 %v11337
      %v11402 = vunpack.c.l.b16 %v11338
      %v11403 = vunpack.c.l.b16 %v11339
      %v11404 = vunpack.c.l.b16 %v11340
      %v11405 = vunpack.c.l.b16 %v11341
      %v11406 = vunpack.c.l.b16 %v11342
      %v11407 = vunpack.c.l.b16 %v11343
      %v11408 = vunpack.c.l.b16 %v11344
      %v11409 = vunpack.c.l.b16 %v11345
      %v11410 = vunpack.c.l.b16 %v11346
      %v11411 = vunpack.c.l.b16 %v11347
      %v11412 = vunpack.c.l.b16 %v11348
      %v11413 = vunpack.c.l.b16 %v11349
      %v11414 = vunpack.c.l.b16 %v11350
      %v11415 = vunpack.c.l.b16 %v11351
      %v11416 = vunpack.c.l.b16 %v11352
      %v11417 = vunpack.c.l.b16 %v11353
      %v11418 = vunpack.c.l.b16 %v11354
      %v11419 = vunpack.c.l.b16 %v11355
      %v11420 = vpack.c.b16 %v11389, %v11388
      %v11421 = vpack.c.b16 %v11391, %v11390
      %v11422 = vpack.c.b16 %v11393, %v11392
      %v11423 = vpack.c.b16 %v11395, %v11394
      %v11424 = vpack.c.b16 %v11397, %v11396
      %v11425 = vpack.c.b16 %v11399, %v11398
      %v11426 = vpack.c.b16 %v11401, %v11400
      %v11427 = vpack.c.b16 %v11403, %v11402
      %v11428 = vpack.c.b16 %v11405, %v11404
      %v11429 = vpack.c.b16 %v11407, %v11406
      %v11430 = vpack.c.b16 %v11409, %v11408
      %v11431 = vpack.c.b16 %v11411, %v11410
      %v11432 = vpack.c.b16 %v11413, %v11412
      %v11433 = vpack.c.b16 %v11415, %v11414
      %v11434 = vpack.c.b16 %v11417, %v11416
      %v11435 = vpack.c.b16 %v11419, %v11418
      %11452 = vmatprep.subr.bf16.mxu0 0
      %11453 = vmatpush1.bf16.msra.mxu0 %v11420
      %11454 = vmatprep.subr.bf16.mxu0 0
      %11455 = vmatpush1.bf16.msra.mxu0 %v11421
      %11456 = vmatprep.subr.bf16.mxu0 0
      %11457 = vmatpush1.bf16.msra.mxu0 %v11422
      %11458 = vmatprep.subr.bf16.mxu0 0
      %11459 = vmatpush1.bf16.msra.mxu0 %v11423
      %11460 = vmatprep.subr.bf16.mxu0 0
      %11461 = vmatpush1.bf16.msra.mxu0 %v11424
      %11462 = vmatprep.subr.bf16.mxu0 0
      %11463 = vmatpush1.bf16.msra.mxu0 %v11425
      %11464 = vmatprep.subr.bf16.mxu0 0
      %11465 = vmatpush1.bf16.msra.mxu0 %v11426
      %11466 = vmatprep.subr.bf16.mxu0 0
      %11467 = vmatpush1.bf16.msra.mxu0 %v11427
      %11468 = vmatprep.subr.bf16.mxu0 0
      %11469 = vmatpush1.bf16.msra.mxu0 %v11428
      %11470 = vmatprep.subr.bf16.mxu0 0
      %11471 = vmatpush1.bf16.msra.mxu0 %v11429
      %11472 = vmatprep.subr.bf16.mxu0 0
      %11473 = vmatpush1.bf16.msra.mxu0 %v11430
      %11474 = vmatprep.subr.bf16.mxu0 0
      %11475 = vmatpush1.bf16.msra.mxu0 %v11431
      %11476 = vmatprep.subr.bf16.mxu0 0
      %11477 = vmatpush1.bf16.msra.mxu0 %v11432
      %11478 = vmatprep.subr.bf16.mxu0 0
      %11479 = vmatpush1.bf16.msra.mxu0 %v11433
      %11480 = vmatprep.subr.bf16.mxu0 0
      %11481 = vmatpush1.bf16.msra.mxu0 %v11434
      %11482 = vmatprep.subr.bf16.mxu0 0
      %11483 = vmatpush1.bf16.msra.mxu0 %v11435
      %11484 = vmatprep.mubr.bf16.mxu0 %v11052
      %11485 = vmatmul.mubr.bf16.gmra.mrb[0].mxu0 %v2219
      %v11486 = vpop.f32.mrb[0].mxu0
      %v11487 = vadd.f32 0.0, %v11486
      %v11488 = vpop.f32.mrb[0].mxu0
      %v11489 = vpop.f32.mrb[0].mxu0
      %v11490 = vadd.f32 0.0, %v11489
      %v11491 = vpop.f32.mrb[0].mxu0
      %11492 = vmatprep.mubr.bf16.mxu0 %v11069
      %11493 = vmatmul.mubr.bf16.gmra.mrb[0].mxu0 %v2248
      %v11494 = vpop.f32.mrb[0].mxu0
      %v11495 = vadd.f32 0.0, %v11494
      %v11496 = vpop.f32.mrb[0].mxu0
      %v11497 = vpop.f32.mrb[0].mxu0
      %v11498 = vadd.f32 0.0, %v11497
      %v11499 = vpop.f32.mrb[0].mxu0
      %11500 = vmatprep.mubr.bf16.mxu0 %v11086
      %11501 = vmatmul.mubr.bf16.gmra.mrb[0].mxu0 %v2277
      %v11502 = vpop.f32.mrb[0].mxu0
      %v11503 = vadd.f32 0.0, %v11502
      %v11504 = vpop.f32.mrb[0].mxu0
      %v11505 = vpop.f32.mrb[0].mxu0
      %v11506 = vadd.f32 0.0, %v11505
      %v11507 = vpop.f32.mrb[0].mxu0
      %11508 = vmatprep.mubr.bf16.mxu0 %v11103
      %11509 = vmatmul.mubr.bf16.gmra.mrb[0].mxu0 %v2306
      %v11510 = vpop.f32.mrb[0].mxu0
      %v11511 = vadd.f32 0.0, %v11510
      %v11512 = vpop.f32.mrb[0].mxu0
      %v11513 = vpop.f32.mrb[0].mxu0
      %v11514 = vadd.f32 0.0, %v11513
      %v11515 = vpop.f32.mrb[0].mxu0
      %11516 = vmatprep.mubr.bf16.mxu0 %v11120
      %11517 = vmatmul.mubr.bf16.gmra.mrb[0].mxu0 %v2335
      %v11518 = vpop.f32.mrb[0].mxu0
      %v11519 = vadd.f32 0.0, %v11518
      %v11520 = vpop.f32.mrb[0].mxu0
      %v11521 = vpop.f32.mrb[0].mxu0
      %v11522 = vadd.f32 0.0, %v11521
      %v11523 = vpop.f32.mrb[0].mxu0
      %11524 = vmatprep.mubr.bf16.mxu0 %v11137
      %11525 = vmatmul.mubr.bf16.gmra.mrb[0].mxu0 %v2364
      %v11526 = vpop.f32.mrb[0].mxu0
      %v11527 = vadd.f32 0.0, %v11526
      %v11528 = vpop.f32.mrb[0].mxu0
      %v11529 = vpop.f32.mrb[0].mxu0
      %v11530 = vadd.f32 0.0, %v11529
      %v11531 = vpop.f32.mrb[0].mxu0
      %11532 = vmatprep.mubr.bf16.mxu0 %v11154
      %11533 = vmatmul.mubr.bf16.gmra.mrb[0].mxu0 %v2393
      %v11534 = vpop.f32.mrb[0].mxu0
      %v11535 = vadd.f32 0.0, %v11534
      %v11536 = vpop.f32.mrb[0].mxu0
      %v11537 = vpop.f32.mrb[0].mxu0
      %v11538 = vadd.f32 0.0, %v11537
      %v11539 = vpop.f32.mrb[0].mxu0
      %11540 = vmatprep.mubr.bf16.mxu0 %v11171
      %11541 = vmatmul.mubr.bf16.gmra.mrb[0].mxu0 %v2422
      %v11542 = vpop.f32.mrb[0].mxu0
      %v11543 = vadd.f32 0.0, %v11542
      %v11544 = vpop.f32.mrb[0].mxu0
      %v11545 = vpop.f32.mrb[0].mxu0
      %v11546 = vadd.f32 0.0, %v11545
      %v11547 = vpop.f32.mrb[0].mxu0
      %11548 = vmatprep.mubr.bf16.mxu0 %v11188
      %11549 = vmatmul.mubr.bf16.gmra.mrb[0].mxu0 %v2451
      %v11550 = vpop.f32.mrb[0].mxu0
      %v11551 = vadd.f32 0.0, %v11550
      %v11552 = vpop.f32.mrb[0].mxu0
      %v11553 = vpop.f32.mrb[0].mxu0
      %v11554 = vadd.f32 0.0, %v11553
      %v11555 = vpop.f32.mrb[0].mxu0
      %11556 = vmatprep.mubr.bf16.mxu0 %v11205
      %11557 = vmatmul.mubr.bf16.gmra.mrb[0].mxu0 %v2480
      %v11558 = vpop.f32.mrb[0].mxu0
      %v11559 = vadd.f32 0.0, %v11558
      %v11560 = vpop.f32.mrb[0].mxu0
      %v11561 = vpop.f32.mrb[0].mxu0
      %v11562 = vadd.f32 0.0, %v11561
      %v11563 = vpop.f32.mrb[0].mxu0
      %11564 = vmatprep.mubr.bf16.mxu0 %v11222
      %11565 = vmatmul.mubr.bf16.gmra.mrb[0].mxu0 %v2509
      %v11566 = vpop.f32.mrb[0].mxu0
      %v11567 = vadd.f32 0.0, %v11566
      %v11568 = vpop.f32.mrb[0].mxu0
      %v11569 = vpop.f32.mrb[0].mxu0
      %v11570 = vadd.f32 0.0, %v11569
      %v11571 = vpop.f32.mrb[0].mxu0
      %11572 = vmatprep.mubr.bf16.mxu0 %v11239
      %11573 = vmatmul.mubr.bf16.gmra.mrb[0].mxu0 %v2538
      %v11574 = vpop.f32.mrb[0].mxu0
      %v11575 = vadd.f32 0.0, %v11574
      %v11576 = vpop.f32.mrb[0].mxu0
      %v11577 = vpop.f32.mrb[0].mxu0
      %v11578 = vadd.f32 0.0, %v11577
      %v11579 = vpop.f32.mrb[0].mxu0
      %11580 = vmatprep.mubr.bf16.mxu0 %v11256
      %11581 = vmatmul.mubr.bf16.gmra.mrb[0].mxu0 %v2567
      %v11582 = vpop.f32.mrb[0].mxu0
      %v11583 = vadd.f32 0.0, %v11582
      %v11584 = vpop.f32.mrb[0].mxu0
      %v11585 = vpop.f32.mrb[0].mxu0
      %v11586 = vadd.f32 0.0, %v11585
      %v11587 = vpop.f32.mrb[0].mxu0
      %11588 = vmatprep.mubr.bf16.mxu0 %v11273
      %11589 = vmatmul.mubr.bf16.gmra.mrb[0].mxu0 %v2596
      %v11590 = vpop.f32.mrb[0].mxu0
      %v11591 = vadd.f32 0.0, %v11590
      %v11592 = vpop.f32.mrb[0].mxu0
      %v11593 = vpop.f32.mrb[0].mxu0
      %v11594 = vadd.f32 0.0, %v11593
      %v11595 = vpop.f32.mrb[0].mxu0
      %11596 = vmatprep.mubr.bf16.mxu0 %v11290
      %11597 = vmatmul.mubr.bf16.gmra.mrb[0].mxu0 %v2625
      %v11598 = vpop.f32.mrb[0].mxu0
      %v11599 = vadd.f32 0.0, %v11598
      %v11600 = vpop.f32.mrb[0].mxu0
      %v11601 = vpop.f32.mrb[0].mxu0
      %v11602 = vadd.f32 0.0, %v11601
      %v11603 = vpop.f32.mrb[0].mxu0
      %11604 = vmatprep.mubr.bf16.mxu0 %v11307
      %11605 = vmatmul.mubr.bf16.gmra.mrb[0].mxu0 %v2654
      %v11606 = vpop.f32.mrb[0].mxu0
      %v11607 = vadd.f32 0.0, %v11606
      %v11608 = vpop.f32.mrb[0].mxu0
      %v11609 = vpop.f32.mrb[0].mxu0
      %v11610 = vadd.f32 0.0, %v11609
      %v11611 = vpop.f32.mrb[0].mxu0
      %11612 = vdwg.mxu0
      %v11613 = vadd.f32 %v10748, %v11487
      %v11614 = vadd.f32 %v10749, %v11490
      %v11615 = vadd.f32 %v10750, %v11495
      %v11616 = vadd.f32 %v10751, %v11498
      %v11617 = vadd.f32 %v10752, %v11503
      %v11618 = vadd.f32 %v10753, %v11506
      %v11619 = vadd.f32 %v10754, %v11511
      %v11620 = vadd.f32 %v10755, %v11514
      %v11621 = vadd.f32 %v10756, %v11519
      %v11622 = vadd.f32 %v10757, %v11522
      %v11623 = vadd.f32 %v10758, %v11527
      %v11624 = vadd.f32 %v10759, %v11530
      %v11625 = vadd.f32 %v10760, %v11535
      %v11626 = vadd.f32 %v10761, %v11538
      %v11627 = vadd.f32 %v10762, %v11543
      %v11628 = vadd.f32 %v10763, %v11546
      %v11629 = vadd.f32 %v10764, %v11551
      %v11630 = vadd.f32 %v10765, %v11554
      %v11631 = vadd.f32 %v10766, %v11559
      %v11632 = vadd.f32 %v10767, %v11562
      %v11633 = vadd.f32 %v10768, %v11567
      %v11634 = vadd.f32 %v10769, %v11570
      %v11635 = vadd.f32 %v10770, %v11575
      %v11636 = vadd.f32 %v10771, %v11578
      %v11637 = vadd.f32 %v10772, %v11583
      %v11638 = vadd.f32 %v10773, %v11586
      %v11639 = vadd.f32 %v10774, %v11591
      %v11640 = vadd.f32 %v10775, %v11594
      %v11641 = vadd.f32 %v10776, %v11599
      %v11642 = vadd.f32 %v10777, %v11602
      %v11643 = vadd.f32 %v10778, %v11607
      %v11644 = vadd.f32 %v10779, %v11610
      %s11645 = sadd.s32 %s224, 6
      %s11646 = smul.u32 %s11645, 3
      %s11647 = smul.addr %s11646, 4
      %s11648 = scalar_lea.vmem %s211, %s11647
      %v11649 = vld [vmem:[%s11648] sm:$0xf]
      %v11650 = vld [vmem:[%s11648 + $0x4] sm:$0xf]
      %v11651 = vld [vmem:[%s11648 + $0xc] sm:$0xf]
      %v11652 = vld [vmem:[%s11648 + $0x10] sm:$0xf]
      %v11653 = vld [vmem:[%s11648 + $0x18] sm:$0xf]
      %v11654 = vld [vmem:[%s11648 + $0x1c] sm:$0xf]
      %v11655 = vld [vmem:[%s11648 + $0x24] sm:$0xf]
      %v11656 = vld [vmem:[%s11648 + $0x28] sm:$0xf]
      %v11657 = vld [vmem:[%s11648 + $0x30] sm:$0xf]
      %v11658 = vld [vmem:[%s11648 + $0x34] sm:$0xf]
      %v11659 = vld [vmem:[%s11648 + $0x3c] sm:$0xf]
      %v11660 = vld [vmem:[%s11648 + $0x40] sm:$0xf]
      %v11661 = vld [vmem:[%s11648 + $0x48] sm:$0xf]
      %v11662 = vld [vmem:[%s11648 + $0x4c] sm:$0xf]
      %v11663 = vld [vmem:[%s11648 + $0x54] sm:$0xf]
      %v11664 = vld [vmem:[%s11648 + $0x58] sm:$0xf]
      %v11665 = vld [vmem:[%s11648 + $0x60] sm:$0xf]
      %v11666 = vld [vmem:[%s11648 + $0x64] sm:$0xf]
      %v11667 = vld [vmem:[%s11648 + $0x6c] sm:$0xf]
      %v11668 = vld [vmem:[%s11648 + $0x70] sm:$0xf]
      %v11669 = vld [vmem:[%s11648 + $0x78] sm:$0xf]
      %v11670 = vld [vmem:[%s11648 + $0x7c] sm:$0xf]
      %v11671 = vld [vmem:[%s11648 + $0x84] sm:$0xf]
      %v11672 = vld [vmem:[%s11648 + $0x88] sm:$0xf]
      %v11673 = vld [vmem:[%s11648 + $0x90] sm:$0xf]
      %v11674 = vld [vmem:[%s11648 + $0x94] sm:$0xf]
      %v11675 = vld [vmem:[%s11648 + $0x9c] sm:$0xf]
      %v11676 = vld [vmem:[%s11648 + $0xa0] sm:$0xf]
      %v11677 = vld [vmem:[%s11648 + $0xa8] sm:$0xf]
      %v11678 = vld [vmem:[%s11648 + $0xac] sm:$0xf]
      %v11679 = vld [vmem:[%s11648 + $0xb4] sm:$0xf]
      %v11680 = vld [vmem:[%s11648 + $0xb8] sm:$0xf]
      %v11681 = vld [vmem:[%s11648] sm:$0xe]
      %v11682 = vld [vmem:[%s11648 + $0x8] sm:$0x3]
      %v11683 = vld [vmem:[%s11648 + $0xc] sm:$0xe]
      %v11684 = vld [vmem:[%s11648 + $0x14] sm:$0x3]
      %v11685 = vld [vmem:[%s11648 + $0x18] sm:$0xe]
      %v11686 = vld [vmem:[%s11648 + $0x20] sm:$0x3]
      %v11687 = vld [vmem:[%s11648 + $0x24] sm:$0xe]
      %v11688 = vld [vmem:[%s11648 + $0x2c] sm:$0x3]
      %v11689 = vld [vmem:[%s11648 + $0x30] sm:$0xe]
      %v11690 = vld [vmem:[%s11648 + $0x38] sm:$0x3]
      %v11691 = vld [vmem:[%s11648 + $0x3c] sm:$0xe]
      %v11692 = vld [vmem:[%s11648 + $0x44] sm:$0x3]
      %v11693 = vld [vmem:[%s11648 + $0x48] sm:$0xe]
      %v11694 = vld [vmem:[%s11648 + $0x50] sm:$0x3]
      %v11695 = vld [vmem:[%s11648 + $0x54] sm:$0xe]
      %v11696 = vld [vmem:[%s11648 + $0x5c] sm:$0x3]
      %v11697 = vld [vmem:[%s11648 + $0x60] sm:$0xe]
      %v11698 = vld [vmem:[%s11648 + $0x68] sm:$0x3]
      %v11699 = vld [vmem:[%s11648 + $0x6c] sm:$0xe]
      %v11700 = vld [vmem:[%s11648 + $0x74] sm:$0x3]
      %v11701 = vld [vmem:[%s11648 + $0x78] sm:$0xe]
      %v11702 = vld [vmem:[%s11648 + $0x80] sm:$0x3]
      %v11703 = vld [vmem:[%s11648 + $0x84] sm:$0xe]
      %v11704 = vld [vmem:[%s11648 + $0x8c] sm:$0x3]
      %v11705 = vld [vmem:[%s11648 + $0x90] sm:$0xe]
      %v11706 = vld [vmem:[%s11648 + $0x98] sm:$0x3]
      %v11707 = vld [vmem:[%s11648 + $0x9c] sm:$0xe]
      %v11708 = vld [vmem:[%s11648 + $0xa4] sm:$0x3]
      %v11709 = vld [vmem:[%s11648 + $0xa8] sm:$0xe]
      %v11710 = vld [vmem:[%s11648 + $0xb0] sm:$0x3]
      %v11711 = vld [vmem:[%s11648 + $0xb4] sm:$0xe]
      %v11712 = vld [vmem:[%s11648 + $0xbc] sm:$0x3]
      %v11745 = vunpack.c.l.b16 %v11649
      %v11746 = vunpack.c.l.b16 %v11650
      %v11747 = vunpack.c.l.b16 %v11651
      %v11748 = vunpack.c.l.b16 %v11652
      %v11749 = vunpack.c.l.b16 %v11653
      %v11750 = vunpack.c.l.b16 %v11654
      %v11751 = vunpack.c.l.b16 %v11655
      %v11752 = vunpack.c.l.b16 %v11656
      %v11753 = vunpack.c.l.b16 %v11657
      %v11754 = vunpack.c.l.b16 %v11658
      %v11755 = vunpack.c.l.b16 %v11659
      %v11756 = vunpack.c.l.b16 %v11660
      %v11757 = vunpack.c.l.b16 %v11661
      %v11758 = vunpack.c.l.b16 %v11662
      %v11759 = vunpack.c.l.b16 %v11663
      %v11760 = vunpack.c.l.b16 %v11664
      %v11761 = vunpack.c.l.b16 %v11665
      %v11762 = vunpack.c.l.b16 %v11666
      %v11763 = vunpack.c.l.b16 %v11667
      %v11764 = vunpack.c.l.b16 %v11668
      %v11765 = vunpack.c.l.b16 %v11669
      %v11766 = vunpack.c.l.b16 %v11670
      %v11767 = vunpack.c.l.b16 %v11671
      %v11768 = vunpack.c.l.b16 %v11672
      %v11769 = vunpack.c.l.b16 %v11673
      %v11770 = vunpack.c.l.b16 %v11674
      %v11771 = vunpack.c.l.b16 %v11675
      %v11772 = vunpack.c.l.b16 %v11676
      %v11773 = vunpack.c.l.b16 %v11677
      %v11774 = vunpack.c.l.b16 %v11678
      %v11775 = vunpack.c.l.b16 %v11679
      %v11776 = vunpack.c.l.b16 %v11680
      %v11777 = vpack.c.b16 %v11746, %v11745
      %v11778 = vpack.c.b16 %v11748, %v11747
      %v11779 = vpack.c.b16 %v11750, %v11749
      %v11780 = vpack.c.b16 %v11752, %v11751
      %v11781 = vpack.c.b16 %v11754, %v11753
      %v11782 = vpack.c.b16 %v11756, %v11755
      %v11783 = vpack.c.b16 %v11758, %v11757
      %v11784 = vpack.c.b16 %v11760, %v11759
      %v11785 = vpack.c.b16 %v11762, %v11761
      %v11786 = vpack.c.b16 %v11764, %v11763
      %v11787 = vpack.c.b16 %v11766, %v11765
      %v11788 = vpack.c.b16 %v11768, %v11767
      %v11789 = vpack.c.b16 %v11770, %v11769
      %v11790 = vpack.c.b16 %v11772, %v11771
      %v11791 = vpack.c.b16 %v11774, %v11773
      %v11792 = vpack.c.b16 %v11776, %v11775
      %v11841 = vunpack.c.l.b16 %v11681
      %v11842 = vunpack.c.l.b16 %v11682
      %v11843 = vunpack.c.l.b16 %v11683
      %v11844 = vunpack.c.l.b16 %v11684
      %v11845 = vunpack.c.l.b16 %v11685
      %v11846 = vunpack.c.l.b16 %v11686
      %v11847 = vunpack.c.l.b16 %v11687
      %v11848 = vunpack.c.l.b16 %v11688
      %v11849 = vunpack.c.l.b16 %v11689
      %v11850 = vunpack.c.l.b16 %v11690
      %v11851 = vunpack.c.l.b16 %v11691
      %v11852 = vunpack.c.l.b16 %v11692
      %v11853 = vunpack.c.l.b16 %v11693
      %v11854 = vunpack.c.l.b16 %v11694
      %v11855 = vunpack.c.l.b16 %v11695
      %v11856 = vunpack.c.l.b16 %v11696
      %v11857 = vunpack.c.l.b16 %v11697
      %v11858 = vunpack.c.l.b16 %v11698
      %v11859 = vunpack.c.l.b16 %v11699
      %v11860 = vunpack.c.l.b16 %v11700
      %v11861 = vunpack.c.l.b16 %v11701
      %v11862 = vunpack.c.l.b16 %v11702
      %v11863 = vunpack.c.l.b16 %v11703
      %v11864 = vunpack.c.l.b16 %v11704
      %v11865 = vunpack.c.l.b16 %v11705
      %v11866 = vunpack.c.l.b16 %v11706
      %v11867 = vunpack.c.l.b16 %v11707
      %v11868 = vunpack.c.l.b16 %v11708
      %v11869 = vunpack.c.l.b16 %v11709
      %v11870 = vunpack.c.l.b16 %v11710
      %v11871 = vunpack.c.l.b16 %v11711
      %v11872 = vunpack.c.l.b16 %v11712
      %v11873 = vpack.c.b16 %v11746, %v11841
      %v11874 = vpack.c.b16 %v11842, %v11842
      %v11875 = vpack.c.b16 %v11748, %v11843
      %v11876 = vpack.c.b16 %v11844, %v11844
      %v11877 = vpack.c.b16 %v11750, %v11845
      %v11878 = vpack.c.b16 %v11846, %v11846
      %v11879 = vpack.c.b16 %v11752, %v11847
      %v11880 = vpack.c.b16 %v11848, %v11848
      %v11881 = vpack.c.b16 %v11754, %v11849
      %v11882 = vpack.c.b16 %v11850, %v11850
      %v11883 = vpack.c.b16 %v11756, %v11851
      %v11884 = vpack.c.b16 %v11852, %v11852
      %v11885 = vpack.c.b16 %v11758, %v11853
      %v11886 = vpack.c.b16 %v11854, %v11854
      %v11887 = vpack.c.b16 %v11760, %v11855
      %v11888 = vpack.c.b16 %v11856, %v11856
      %v11889 = vpack.c.b16 %v11762, %v11857
      %v11890 = vpack.c.b16 %v11858, %v11858
      %v11891 = vpack.c.b16 %v11764, %v11859
      %v11892 = vpack.c.b16 %v11860, %v11860
      %v11893 = vpack.c.b16 %v11766, %v11861
      %v11894 = vpack.c.b16 %v11862, %v11862
      %v11895 = vpack.c.b16 %v11768, %v11863
      %v11896 = vpack.c.b16 %v11864, %v11864
      %v11897 = vpack.c.b16 %v11770, %v11865
      %v11898 = vpack.c.b16 %v11866, %v11866
      %v11899 = vpack.c.b16 %v11772, %v11867
      %v11900 = vpack.c.b16 %v11868, %v11868
      %v11901 = vpack.c.b16 %v11774, %v11869
      %v11902 = vpack.c.b16 %v11870, %v11870
      %v11903 = vpack.c.b16 %v11776, %v11871
      %v11904 = vpack.c.b16 %v11872, %v11872
      %v11906 = vshrl.u32 %v11873, 16
      %v11908 = vrot.slane %v11906, 1
      %v11909 = vshll.u32 %v11873, 16
      %v11911 = vrot.slane %v11909, 2
      %v11912 = vor.u32 %v11908, %v11911
      %v11914 = vshrl.u32 %v11874, 16
      %v11916 = vrot.slane %v11914, 1
      %v11917 = vshll.u32 %v11874, 16
      %v11919 = vrot.slane %v11917, 2
      %v11920 = vor.u32 %v11916, %v11919
      %v11921 = vsel %vm2207, %v11912, %v11920
      %v11923 = vshrl.u32 %v11875, 16
      %v11925 = vrot.slane %v11923, 1
      %v11926 = vshll.u32 %v11875, 16
      %v11928 = vrot.slane %v11926, 2
      %v11929 = vor.u32 %v11925, %v11928
      %v11931 = vshrl.u32 %v11876, 16
      %v11933 = vrot.slane %v11931, 1
      %v11934 = vshll.u32 %v11876, 16
      %v11936 = vrot.slane %v11934, 2
      %v11937 = vor.u32 %v11933, %v11936
      %v11938 = vsel %vm2207, %v11929, %v11937
      %v11940 = vshrl.u32 %v11877, 16
      %v11942 = vrot.slane %v11940, 1
      %v11943 = vshll.u32 %v11877, 16
      %v11945 = vrot.slane %v11943, 2
      %v11946 = vor.u32 %v11942, %v11945
      %v11948 = vshrl.u32 %v11878, 16
      %v11950 = vrot.slane %v11948, 1
      %v11951 = vshll.u32 %v11878, 16
      %v11953 = vrot.slane %v11951, 2
      %v11954 = vor.u32 %v11950, %v11953
      %v11955 = vsel %vm2207, %v11946, %v11954
      %v11957 = vshrl.u32 %v11879, 16
      %v11959 = vrot.slane %v11957, 1
      %v11960 = vshll.u32 %v11879, 16
      %v11962 = vrot.slane %v11960, 2
      %v11963 = vor.u32 %v11959, %v11962
      %v11965 = vshrl.u32 %v11880, 16
      %v11967 = vrot.slane %v11965, 1
      %v11968 = vshll.u32 %v11880, 16
      %v11970 = vrot.slane %v11968, 2
      %v11971 = vor.u32 %v11967, %v11970
      %v11972 = vsel %vm2207, %v11963, %v11971
      %v11974 = vshrl.u32 %v11881, 16
      %v11976 = vrot.slane %v11974, 1
      %v11977 = vshll.u32 %v11881, 16
      %v11979 = vrot.slane %v11977, 2
      %v11980 = vor.u32 %v11976, %v11979
      %v11982 = vshrl.u32 %v11882, 16
      %v11984 = vrot.slane %v11982, 1
      %v11985 = vshll.u32 %v11882, 16
      %v11987 = vrot.slane %v11985, 2
      %v11988 = vor.u32 %v11984, %v11987
      %v11989 = vsel %vm2207, %v11980, %v11988
      %v11991 = vshrl.u32 %v11883, 16
      %v11993 = vrot.slane %v11991, 1
      %v11994 = vshll.u32 %v11883, 16
      %v11996 = vrot.slane %v11994, 2
      %v11997 = vor.u32 %v11993, %v11996
      %v11999 = vshrl.u32 %v11884, 16
      %v12001 = vrot.slane %v11999, 1
      %v12002 = vshll.u32 %v11884, 16
      %v12004 = vrot.slane %v12002, 2
      %v12005 = vor.u32 %v12001, %v12004
      %v12006 = vsel %vm2207, %v11997, %v12005
      %v12008 = vshrl.u32 %v11885, 16
      %v12010 = vrot.slane %v12008, 1
      %v12011 = vshll.u32 %v11885, 16
      %v12013 = vrot.slane %v12011, 2
      %v12014 = vor.u32 %v12010, %v12013
      %v12016 = vshrl.u32 %v11886, 16
      %v12018 = vrot.slane %v12016, 1
      %v12019 = vshll.u32 %v11886, 16
      %v12021 = vrot.slane %v12019, 2
      %v12022 = vor.u32 %v12018, %v12021
      %v12023 = vsel %vm2207, %v12014, %v12022
      %v12025 = vshrl.u32 %v11887, 16
      %v12027 = vrot.slane %v12025, 1
      %v12028 = vshll.u32 %v11887, 16
      %v12030 = vrot.slane %v12028, 2
      %v12031 = vor.u32 %v12027, %v12030
      %v12033 = vshrl.u32 %v11888, 16
      %v12035 = vrot.slane %v12033, 1
      %v12036 = vshll.u32 %v11888, 16
      %v12038 = vrot.slane %v12036, 2
      %v12039 = vor.u32 %v12035, %v12038
      %v12040 = vsel %vm2207, %v12031, %v12039
      %v12042 = vshrl.u32 %v11889, 16
      %v12044 = vrot.slane %v12042, 1
      %v12045 = vshll.u32 %v11889, 16
      %v12047 = vrot.slane %v12045, 2
      %v12048 = vor.u32 %v12044, %v12047
      %v12050 = vshrl.u32 %v11890, 16
      %v12052 = vrot.slane %v12050, 1
      %v12053 = vshll.u32 %v11890, 16
      %v12055 = vrot.slane %v12053, 2
      %v12056 = vor.u32 %v12052, %v12055
      %v12057 = vsel %vm2207, %v12048, %v12056
      %v12059 = vshrl.u32 %v11891, 16
      %v12061 = vrot.slane %v12059, 1
      %v12062 = vshll.u32 %v11891, 16
      %v12064 = vrot.slane %v12062, 2
      %v12065 = vor.u32 %v12061, %v12064
      %v12067 = vshrl.u32 %v11892, 16
      %v12069 = vrot.slane %v12067, 1
      %v12070 = vshll.u32 %v11892, 16
      %v12072 = vrot.slane %v12070, 2
      %v12073 = vor.u32 %v12069, %v12072
      %v12074 = vsel %vm2207, %v12065, %v12073
      %v12076 = vshrl.u32 %v11893, 16
      %v12078 = vrot.slane %v12076, 1
      %v12079 = vshll.u32 %v11893, 16
      %v12081 = vrot.slane %v12079, 2
      %v12082 = vor.u32 %v12078, %v12081
      %v12084 = vshrl.u32 %v11894, 16
      %v12086 = vrot.slane %v12084, 1
      %v12087 = vshll.u32 %v11894, 16
      %v12089 = vrot.slane %v12087, 2
      %v12090 = vor.u32 %v12086, %v12089
      %v12091 = vsel %vm2207, %v12082, %v12090
      %v12093 = vshrl.u32 %v11895, 16
      %v12095 = vrot.slane %v12093, 1
      %v12096 = vshll.u32 %v11895, 16
      %v12098 = vrot.slane %v12096, 2
      %v12099 = vor.u32 %v12095, %v12098
      %v12101 = vshrl.u32 %v11896, 16
      %v12103 = vrot.slane %v12101, 1
      %v12104 = vshll.u32 %v11896, 16
      %v12106 = vrot.slane %v12104, 2
      %v12107 = vor.u32 %v12103, %v12106
      %v12108 = vsel %vm2207, %v12099, %v12107
      %v12110 = vshrl.u32 %v11897, 16
      %v12112 = vrot.slane %v12110, 1
      %v12113 = vshll.u32 %v11897, 16
      %v12115 = vrot.slane %v12113, 2
      %v12116 = vor.u32 %v12112, %v12115
      %v12118 = vshrl.u32 %v11898, 16
      %v12120 = vrot.slane %v12118, 1
      %v12121 = vshll.u32 %v11898, 16
      %v12123 = vrot.slane %v12121, 2
      %v12124 = vor.u32 %v12120, %v12123
      %v12125 = vsel %vm2207, %v12116, %v12124
      %v12127 = vshrl.u32 %v11899, 16
      %v12129 = vrot.slane %v12127, 1
      %v12130 = vshll.u32 %v11899, 16
      %v12132 = vrot.slane %v12130, 2
      %v12133 = vor.u32 %v12129, %v12132
      %v12135 = vshrl.u32 %v11900, 16
      %v12137 = vrot.slane %v12135, 1
      %v12138 = vshll.u32 %v11900, 16
      %v12140 = vrot.slane %v12138, 2
      %v12141 = vor.u32 %v12137, %v12140
      %v12142 = vsel %vm2207, %v12133, %v12141
      %v12144 = vshrl.u32 %v11901, 16
      %v12146 = vrot.slane %v12144, 1
      %v12147 = vshll.u32 %v11901, 16
      %v12149 = vrot.slane %v12147, 2
      %v12150 = vor.u32 %v12146, %v12149
      %v12152 = vshrl.u32 %v11902, 16
      %v12154 = vrot.slane %v12152, 1
      %v12155 = vshll.u32 %v11902, 16
      %v12157 = vrot.slane %v12155, 2
      %v12158 = vor.u32 %v12154, %v12157
      %v12159 = vsel %vm2207, %v12150, %v12158
      %v12161 = vshrl.u32 %v11903, 16
      %v12163 = vrot.slane %v12161, 1
      %v12164 = vshll.u32 %v11903, 16
      %v12166 = vrot.slane %v12164, 2
      %v12167 = vor.u32 %v12163, %v12166
      %v12169 = vshrl.u32 %v11904, 16
      %v12171 = vrot.slane %v12169, 1
      %v12172 = vshll.u32 %v11904, 16
      %v12174 = vrot.slane %v12172, 2
      %v12175 = vor.u32 %v12171, %v12174
      %v12176 = vsel %vm2207, %v12167, %v12175
      %v12193 = vld [vmem:[%s1 + $0x600] sm:$0xf]
      %v12194 = vld [vmem:[%s1 + $0x604] sm:$0xf]
      %v12195 = vld [vmem:[%s1 + $0x608] sm:$0xf]
      %v12196 = vld [vmem:[%s1 + $0x60c] sm:$0xf]
      %v12197 = vld [vmem:[%s1 + $0x610] sm:$0xf]
      %v12198 = vld [vmem:[%s1 + $0x614] sm:$0xf]
      %v12199 = vld [vmem:[%s1 + $0x618] sm:$0xf]
      %v12200 = vld [vmem:[%s1 + $0x61c] sm:$0xf]
      %v12201 = vld [vmem:[%s1 + $0x620] sm:$0xf]
      %v12202 = vld [vmem:[%s1 + $0x624] sm:$0xf]
      %v12203 = vld [vmem:[%s1 + $0x628] sm:$0xf]
      %v12204 = vld [vmem:[%s1 + $0x62c] sm:$0xf]
      %v12205 = vld [vmem:[%s1 + $0x630] sm:$0xf]
      %v12206 = vld [vmem:[%s1 + $0x634] sm:$0xf]
      %v12207 = vld [vmem:[%s1 + $0x638] sm:$0xf]
      %v12208 = vld [vmem:[%s1 + $0x63c] sm:$0xf]
      %v12209 = vld [vmem:[%s1 + $0x640] sm:$0xf]
      %v12210 = vld [vmem:[%s1 + $0x644] sm:$0xf]
      %v12211 = vld [vmem:[%s1 + $0x648] sm:$0xf]
      %v12212 = vld [vmem:[%s1 + $0x64c] sm:$0xf]
      %v12213 = vld [vmem:[%s1 + $0x650] sm:$0xf]
      %v12214 = vld [vmem:[%s1 + $0x654] sm:$0xf]
      %v12215 = vld [vmem:[%s1 + $0x658] sm:$0xf]
      %v12216 = vld [vmem:[%s1 + $0x65c] sm:$0xf]
      %v12217 = vld [vmem:[%s1 + $0x660] sm:$0xf]
      %v12218 = vld [vmem:[%s1 + $0x664] sm:$0xf]
      %v12219 = vld [vmem:[%s1 + $0x668] sm:$0xf]
      %v12220 = vld [vmem:[%s1 + $0x66c] sm:$0xf]
      %v12221 = vld [vmem:[%s1 + $0x670] sm:$0xf]
      %v12222 = vld [vmem:[%s1 + $0x674] sm:$0xf]
      %v12223 = vld [vmem:[%s1 + $0x678] sm:$0xf]
      %v12224 = vld [vmem:[%s1 + $0x67c] sm:$0xf]
      %v12257 = vunpack.c.l.b16 %v12193
      %v12258 = vunpack.c.l.b16 %v12194
      %v12259 = vunpack.c.l.b16 %v12195
      %v12260 = vunpack.c.l.b16 %v12196
      %v12261 = vunpack.c.l.b16 %v12197
      %v12262 = vunpack.c.l.b16 %v12198
      %v12263 = vunpack.c.l.b16 %v12199
      %v12264 = vunpack.c.l.b16 %v12200
      %v12265 = vunpack.c.l.b16 %v12201
      %v12266 = vunpack.c.l.b16 %v12202
      %v12267 = vunpack.c.l.b16 %v12203
      %v12268 = vunpack.c.l.b16 %v12204
      %v12269 = vunpack.c.l.b16 %v12205
      %v12270 = vunpack.c.l.b16 %v12206
      %v12271 = vunpack.c.l.b16 %v12207
      %v12272 = vunpack.c.l.b16 %v12208
      %v12273 = vunpack.c.l.b16 %v12209
      %v12274 = vunpack.c.l.b16 %v12210
      %v12275 = vunpack.c.l.b16 %v12211
      %v12276 = vunpack.c.l.b16 %v12212
      %v12277 = vunpack.c.l.b16 %v12213
      %v12278 = vunpack.c.l.b16 %v12214
      %v12279 = vunpack.c.l.b16 %v12215
      %v12280 = vunpack.c.l.b16 %v12216
      %v12281 = vunpack.c.l.b16 %v12217
      %v12282 = vunpack.c.l.b16 %v12218
      %v12283 = vunpack.c.l.b16 %v12219
      %v12284 = vunpack.c.l.b16 %v12220
      %v12285 = vunpack.c.l.b16 %v12221
      %v12286 = vunpack.c.l.b16 %v12222
      %v12287 = vunpack.c.l.b16 %v12223
      %v12288 = vunpack.c.l.b16 %v12224
      %v12289 = vpack.c.b16 %v12258, %v12257
      %v12290 = vpack.c.b16 %v12260, %v12259
      %v12291 = vpack.c.b16 %v12262, %v12261
      %v12292 = vpack.c.b16 %v12264, %v12263
      %v12293 = vpack.c.b16 %v12266, %v12265
      %v12294 = vpack.c.b16 %v12268, %v12267
      %v12295 = vpack.c.b16 %v12270, %v12269
      %v12296 = vpack.c.b16 %v12272, %v12271
      %v12297 = vpack.c.b16 %v12274, %v12273
      %v12298 = vpack.c.b16 %v12276, %v12275
      %v12299 = vpack.c.b16 %v12278, %v12277
      %v12300 = vpack.c.b16 %v12280, %v12279
      %v12301 = vpack.c.b16 %v12282, %v12281
      %v12302 = vpack.c.b16 %v12284, %v12283
      %v12303 = vpack.c.b16 %v12286, %v12285
      %v12304 = vpack.c.b16 %v12288, %v12287
      %12321 = vmatprep.subr.bf16.mxu0 0
      %12322 = vmatpush1.bf16.msra.mxu0 %v12289
      %12323 = vmatprep.subr.bf16.mxu0 0
      %12324 = vmatpush1.bf16.msra.mxu0 %v12290
      %12325 = vmatprep.subr.bf16.mxu0 0
      %12326 = vmatpush1.bf16.msra.mxu0 %v12291
      %12327 = vmatprep.subr.bf16.mxu0 0
      %12328 = vmatpush1.bf16.msra.mxu0 %v12292
      %12329 = vmatprep.subr.bf16.mxu0 0
      %12330 = vmatpush1.bf16.msra.mxu0 %v12293
      %12331 = vmatprep.subr.bf16.mxu0 0
      %12332 = vmatpush1.bf16.msra.mxu0 %v12294
      %12333 = vmatprep.subr.bf16.mxu0 0
      %12334 = vmatpush1.bf16.msra.mxu0 %v12295
      %12335 = vmatprep.subr.bf16.mxu0 0
      %12336 = vmatpush1.bf16.msra.mxu0 %v12296
      %12337 = vmatprep.subr.bf16.mxu0 0
      %12338 = vmatpush1.bf16.msra.mxu0 %v12297
      %12339 = vmatprep.subr.bf16.mxu0 0
      %12340 = vmatpush1.bf16.msra.mxu0 %v12298
      %12341 = vmatprep.subr.bf16.mxu0 0
      %12342 = vmatpush1.bf16.msra.mxu0 %v12299
      %12343 = vmatprep.subr.bf16.mxu0 0
      %12344 = vmatpush1.bf16.msra.mxu0 %v12300
      %12345 = vmatprep.subr.bf16.mxu0 0
      %12346 = vmatpush1.bf16.msra.mxu0 %v12301
      %12347 = vmatprep.subr.bf16.mxu0 0
      %12348 = vmatpush1.bf16.msra.mxu0 %v12302
      %12349 = vmatprep.subr.bf16.mxu0 0
      %12350 = vmatpush1.bf16.msra.mxu0 %v12303
      %12351 = vmatprep.subr.bf16.mxu0 0
      %12352 = vmatpush1.bf16.msra.mxu0 %v12304
      %12353 = vmatprep.mubr.bf16.mxu0 %v11921
      %12354 = vmatmul.mubr.bf16.gmra.mrb[0].mxu0 %v11777
      %v12355 = vpop.f32.mrb[0].mxu0
      %v12356 = vadd.f32 0.0, %v12355
      %v12357 = vpop.f32.mrb[0].mxu0
      %v12358 = vpop.f32.mrb[0].mxu0
      %v12359 = vadd.f32 0.0, %v12358
      %v12360 = vpop.f32.mrb[0].mxu0
      %12361 = vmatprep.mubr.bf16.mxu0 %v11938
      %12362 = vmatmul.mubr.bf16.gmra.mrb[0].mxu0 %v11778
      %v12363 = vpop.f32.mrb[0].mxu0
      %v12364 = vadd.f32 0.0, %v12363
      %v12365 = vpop.f32.mrb[0].mxu0
      %v12366 = vpop.f32.mrb[0].mxu0
      %v12367 = vadd.f32 0.0, %v12366
      %v12368 = vpop.f32.mrb[0].mxu0
      %12369 = vmatprep.mubr.bf16.mxu0 %v11955
      %12370 = vmatmul.mubr.bf16.gmra.mrb[0].mxu0 %v11779
      %v12371 = vpop.f32.mrb[0].mxu0
      %v12372 = vadd.f32 0.0, %v12371
      %v12373 = vpop.f32.mrb[0].mxu0
      %v12374 = vpop.f32.mrb[0].mxu0
      %v12375 = vadd.f32 0.0, %v12374
      %v12376 = vpop.f32.mrb[0].mxu0
      %12377 = vmatprep.mubr.bf16.mxu0 %v11972
      %12378 = vmatmul.mubr.bf16.gmra.mrb[0].mxu0 %v11780
      %v12379 = vpop.f32.mrb[0].mxu0
      %v12380 = vadd.f32 0.0, %v12379
      %v12381 = vpop.f32.mrb[0].mxu0
      %v12382 = vpop.f32.mrb[0].mxu0
      %v12383 = vadd.f32 0.0, %v12382
      %v12384 = vpop.f32.mrb[0].mxu0
      %12385 = vmatprep.mubr.bf16.mxu0 %v11989
      %12386 = vmatmul.mubr.bf16.gmra.mrb[0].mxu0 %v11781
      %v12387 = vpop.f32.mrb[0].mxu0
      %v12388 = vadd.f32 0.0, %v12387
      %v12389 = vpop.f32.mrb[0].mxu0
      %v12390 = vpop.f32.mrb[0].mxu0
      %v12391 = vadd.f32 0.0, %v12390
      %v12392 = vpop.f32.mrb[0].mxu0
      %12393 = vmatprep.mubr.bf16.mxu0 %v12006
      %12394 = vmatmul.mubr.bf16.gmra.mrb[0].mxu0 %v11782
      %v12395 = vpop.f32.mrb[0].mxu0
      %v12396 = vadd.f32 0.0, %v12395
      %v12397 = vpop.f32.mrb[0].mxu0
      %v12398 = vpop.f32.mrb[0].mxu0
      %v12399 = vadd.f32 0.0, %v12398
      %v12400 = vpop.f32.mrb[0].mxu0
      %12401 = vmatprep.mubr.bf16.mxu0 %v12023
      %12402 = vmatmul.mubr.bf16.gmra.mrb[0].mxu0 %v11783
      %v12403 = vpop.f32.mrb[0].mxu0
      %v12404 = vadd.f32 0.0, %v12403
      %v12405 = vpop.f32.mrb[0].mxu0
      %v12406 = vpop.f32.mrb[0].mxu0
      %v12407 = vadd.f32 0.0, %v12406
      %v12408 = vpop.f32.mrb[0].mxu0
      %12409 = vmatprep.mubr.bf16.mxu0 %v12040
      %12410 = vmatmul.mubr.bf16.gmra.mrb[0].mxu0 %v11784
      %v12411 = vpop.f32.mrb[0].mxu0
      %v12412 = vadd.f32 0.0, %v12411
      %v12413 = vpop.f32.mrb[0].mxu0
      %v12414 = vpop.f32.mrb[0].mxu0
      %v12415 = vadd.f32 0.0, %v12414
      %v12416 = vpop.f32.mrb[0].mxu0
      %12417 = vmatprep.mubr.bf16.mxu0 %v12057
      %12418 = vmatmul.mubr.bf16.gmra.mrb[0].mxu0 %v11785
      %v12419 = vpop.f32.mrb[0].mxu0
      %v12420 = vadd.f32 0.0, %v12419
      %v12421 = vpop.f32.mrb[0].mxu0
      %v12422 = vpop.f32.mrb[0].mxu0
      %v12423 = vadd.f32 0.0, %v12422
      %v12424 = vpop.f32.mrb[0].mxu0
      %12425 = vmatprep.mubr.bf16.mxu0 %v12074
      %12426 = vmatmul.mubr.bf16.gmra.mrb[0].mxu0 %v11786
      %v12427 = vpop.f32.mrb[0].mxu0
      %v12428 = vadd.f32 0.0, %v12427
      %v12429 = vpop.f32.mrb[0].mxu0
      %v12430 = vpop.f32.mrb[0].mxu0
      %v12431 = vadd.f32 0.0, %v12430
      %v12432 = vpop.f32.mrb[0].mxu0
      %12433 = vmatprep.mubr.bf16.mxu0 %v12091
      %12434 = vmatmul.mubr.bf16.gmra.mrb[0].mxu0 %v11787
      %v12435 = vpop.f32.mrb[0].mxu0
      %v12436 = vadd.f32 0.0, %v12435
      %v12437 = vpop.f32.mrb[0].mxu0
      %v12438 = vpop.f32.mrb[0].mxu0
      %v12439 = vadd.f32 0.0, %v12438
      %v12440 = vpop.f32.mrb[0].mxu0
      %12441 = vmatprep.mubr.bf16.mxu0 %v12108
      %12442 = vmatmul.mubr.bf16.gmra.mrb[0].mxu0 %v11788
      %v12443 = vpop.f32.mrb[0].mxu0
      %v12444 = vadd.f32 0.0, %v12443
      %v12445 = vpop.f32.mrb[0].mxu0
      %v12446 = vpop.f32.mrb[0].mxu0
      %v12447 = vadd.f32 0.0, %v12446
      %v12448 = vpop.f32.mrb[0].mxu0
      %12449 = vmatprep.mubr.bf16.mxu0 %v12125
      %12450 = vmatmul.mubr.bf16.gmra.mrb[0].mxu0 %v11789
      %v12451 = vpop.f32.mrb[0].mxu0
      %v12452 = vadd.f32 0.0, %v12451
      %v12453 = vpop.f32.mrb[0].mxu0
      %v12454 = vpop.f32.mrb[0].mxu0
      %v12455 = vadd.f32 0.0, %v12454
      %v12456 = vpop.f32.mrb[0].mxu0
      %12457 = vmatprep.mubr.bf16.mxu0 %v12142
      %12458 = vmatmul.mubr.bf16.gmra.mrb[0].mxu0 %v11790
      %v12459 = vpop.f32.mrb[0].mxu0
      %v12460 = vadd.f32 0.0, %v12459
      %v12461 = vpop.f32.mrb[0].mxu0
      %v12462 = vpop.f32.mrb[0].mxu0
      %v12463 = vadd.f32 0.0, %v12462
      %v12464 = vpop.f32.mrb[0].mxu0
      %12465 = vmatprep.mubr.bf16.mxu0 %v12159
      %12466 = vmatmul.mubr.bf16.gmra.mrb[0].mxu0 %v11791
      %v12467 = vpop.f32.mrb[0].mxu0
      %v12468 = vadd.f32 0.0, %v12467
      %v12469 = vpop.f32.mrb[0].mxu0
      %v12470 = vpop.f32.mrb[0].mxu0
      %v12471 = vadd.f32 0.0, %v12470
      %v12472 = vpop.f32.mrb[0].mxu0
      %12473 = vmatprep.mubr.bf16.mxu0 %v12176
      %12474 = vmatmul.mubr.bf16.gmra.mrb[0].mxu0 %v11792
      %v12475 = vpop.f32.mrb[0].mxu0
      %v12476 = vadd.f32 0.0, %v12475
      %v12477 = vpop.f32.mrb[0].mxu0
      %v12478 = vpop.f32.mrb[0].mxu0
      %v12479 = vadd.f32 0.0, %v12478
      %v12480 = vpop.f32.mrb[0].mxu0
      %12481 = vdwg.mxu0
      %v12482 = vadd.f32 %v11613, %v12356
      %v12483 = vadd.f32 %v11614, %v12359
      %v12484 = vadd.f32 %v11615, %v12364
      %v12485 = vadd.f32 %v11616, %v12367
      %v12486 = vadd.f32 %v11617, %v12372
      %v12487 = vadd.f32 %v11618, %v12375
      %v12488 = vadd.f32 %v11619, %v12380
      %v12489 = vadd.f32 %v11620, %v12383
      %v12490 = vadd.f32 %v11621, %v12388
      %v12491 = vadd.f32 %v11622, %v12391
      %v12492 = vadd.f32 %v11623, %v12396
      %v12493 = vadd.f32 %v11624, %v12399
      %v12494 = vadd.f32 %v11625, %v12404
      %v12495 = vadd.f32 %v11626, %v12407
      %v12496 = vadd.f32 %v11627, %v12412
      %v12497 = vadd.f32 %v11628, %v12415
      %v12498 = vadd.f32 %v11629, %v12420
      %v12499 = vadd.f32 %v11630, %v12423
      %v12500 = vadd.f32 %v11631, %v12428
      %v12501 = vadd.f32 %v11632, %v12431
      %v12502 = vadd.f32 %v11633, %v12436
      %v12503 = vadd.f32 %v11634, %v12439
      %v12504 = vadd.f32 %v11635, %v12444
      %v12505 = vadd.f32 %v11636, %v12447
      %v12506 = vadd.f32 %v11637, %v12452
      %v12507 = vadd.f32 %v11638, %v12455
      %v12508 = vadd.f32 %v11639, %v12460
      %v12509 = vadd.f32 %v11640, %v12463
      %v12510 = vadd.f32 %v11641, %v12468
      %v12511 = vadd.f32 %v11642, %v12471
      %v12512 = vadd.f32 %v11643, %v12476
      %v12513 = vadd.f32 %v11644, %v12479
      %v12514 = vld [vmem:[%s11648] sm:$0x8]
      %v12515 = vld [vmem:[%s11648 + $0x8] sm:$0x7]
      %v12516 = vld [vmem:[%s11648 + $0xc] sm:$0x8]
      %v12517 = vld [vmem:[%s11648 + $0x14] sm:$0x7]
      %v12518 = vld [vmem:[%s11648 + $0x18] sm:$0x8]
      %v12519 = vld [vmem:[%s11648 + $0x20] sm:$0x7]
      %v12520 = vld [vmem:[%s11648 + $0x24] sm:$0x8]
      %v12521 = vld [vmem:[%s11648 + $0x2c] sm:$0x7]
      %v12522 = vld [vmem:[%s11648 + $0x30] sm:$0x8]
      %v12523 = vld [vmem:[%s11648 + $0x38] sm:$0x7]
      %v12524 = vld [vmem:[%s11648 + $0x3c] sm:$0x8]
      %v12525 = vld [vmem:[%s11648 + $0x44] sm:$0x7]
      %v12526 = vld [vmem:[%s11648 + $0x48] sm:$0x8]
      %v12527 = vld [vmem:[%s11648 + $0x50] sm:$0x7]
      %v12528 = vld [vmem:[%s11648 + $0x54] sm:$0x8]
      %v12529 = vld [vmem:[%s11648 + $0x5c] sm:$0x7]
      %v12530 = vld [vmem:[%s11648 + $0x60] sm:$0x8]
      %v12531 = vld [vmem:[%s11648 + $0x68] sm:$0x7]
      %v12532 = vld [vmem:[%s11648 + $0x6c] sm:$0x8]
      %v12533 = vld [vmem:[%s11648 + $0x74] sm:$0x7]
      %v12534 = vld [vmem:[%s11648 + $0x78] sm:$0x8]
      %v12535 = vld [vmem:[%s11648 + $0x80] sm:$0x7]
      %v12536 = vld [vmem:[%s11648 + $0x84] sm:$0x8]
      %v12537 = vld [vmem:[%s11648 + $0x8c] sm:$0x7]
      %v12538 = vld [vmem:[%s11648 + $0x90] sm:$0x8]
      %v12539 = vld [vmem:[%s11648 + $0x98] sm:$0x7]
      %v12540 = vld [vmem:[%s11648 + $0x9c] sm:$0x8]
      %v12541 = vld [vmem:[%s11648 + $0xa4] sm:$0x7]
      %v12542 = vld [vmem:[%s11648 + $0xa8] sm:$0x8]
      %v12543 = vld [vmem:[%s11648 + $0xb0] sm:$0x7]
      %v12544 = vld [vmem:[%s11648 + $0xb4] sm:$0x8]
      %v12545 = vld [vmem:[%s11648 + $0xbc] sm:$0x7]
      %vm12578 = vcmask 1044484
      %vm12579 = vmor %vm1115, %vm12578
      %v12580 = vrot.slane %v12514, 7
      %v12581 = vrot.slane %v12580, 4
      %v12582 = vrot.slane %v11650, 7
      %v12583 = vsel %vm12579, %v12581, %v12582
      %v12584 = vrot.slane %v12582, 4
      %v12585 = vrot.slane %v12515, 7
      %v12586 = vsel %vm12579, %v12584, %v12585
      %v12587 = vrot.slane %v12516, 7
      %v12588 = vrot.slane %v12587, 4
      %v12589 = vrot.slane %v11652, 7
      %v12590 = vsel %vm12579, %v12588, %v12589
      %v12591 = vrot.slane %v12589, 4
      %v12592 = vrot.slane %v12517, 7
      %v12593 = vsel %vm12579, %v12591, %v12592
      %v12594 = vrot.slane %v12518, 7
      %v12595 = vrot.slane %v12594, 4
      %v12596 = vrot.slane %v11654, 7
      %v12597 = vsel %vm12579, %v12595, %v12596
      %v12598 = vrot.slane %v12596, 4
      %v12599 = vrot.slane %v12519, 7
      %v12600 = vsel %vm12579, %v12598, %v12599
      %v12601 = vrot.slane %v12520, 7
      %v12602 = vrot.slane %v12601, 4
      %v12603 = vrot.slane %v11656, 7
      %v12604 = vsel %vm12579, %v12602, %v12603
      %v12605 = vrot.slane %v12603, 4
      %v12606 = vrot.slane %v12521, 7
      %v12607 = vsel %vm12579, %v12605, %v12606
      %v12608 = vrot.slane %v12522, 7
      %v12609 = vrot.slane %v12608, 4
      %v12610 = vrot.slane %v11658, 7
      %v12611 = vsel %vm12579, %v12609, %v12610
      %v12612 = vrot.slane %v12610, 4
      %v12613 = vrot.slane %v12523, 7
      %v12614 = vsel %vm12579, %v12612, %v12613
      %v12615 = vrot.slane %v12524, 7
      %v12616 = vrot.slane %v12615, 4
      %v12617 = vrot.slane %v11660, 7
      %v12618 = vsel %vm12579, %v12616, %v12617
      %v12619 = vrot.slane %v12617, 4
      %v12620 = vrot.slane %v12525, 7
      %v12621 = vsel %vm12579, %v12619, %v12620
      %v12622 = vrot.slane %v12526, 7
      %v12623 = vrot.slane %v12622, 4
      %v12624 = vrot.slane %v11662, 7
      %v12625 = vsel %vm12579, %v12623, %v12624
      %v12626 = vrot.slane %v12624, 4
      %v12627 = vrot.slane %v12527, 7
      %v12628 = vsel %vm12579, %v12626, %v12627
      %v12629 = vrot.slane %v12528, 7
      %v12630 = vrot.slane %v12629, 4
      %v12631 = vrot.slane %v11664, 7
      %v12632 = vsel %vm12579, %v12630, %v12631
      %v12633 = vrot.slane %v12631, 4
      %v12634 = vrot.slane %v12529, 7
      %v12635 = vsel %vm12579, %v12633, %v12634
      %v12636 = vrot.slane %v12530, 7
      %v12637 = vrot.slane %v12636, 4
      %v12638 = vrot.slane %v11666, 7
      %v12639 = vsel %vm12579, %v12637, %v12638
      %v12640 = vrot.slane %v12638, 4
      %v12641 = vrot.slane %v12531, 7
      %v12642 = vsel %vm12579, %v12640, %v12641
      %v12643 = vrot.slane %v12532, 7
      %v12644 = vrot.slane %v12643, 4
      %v12645 = vrot.slane %v11668, 7
      %v12646 = vsel %vm12579, %v12644, %v12645
      %v12647 = vrot.slane %v12645, 4
      %v12648 = vrot.slane %v12533, 7
      %v12649 = vsel %vm12579, %v12647, %v12648
      %v12650 = vrot.slane %v12534, 7
      %v12651 = vrot.slane %v12650, 4
      %v12652 = vrot.slane %v11670, 7
      %v12653 = vsel %vm12579, %v12651, %v12652
      %v12654 = vrot.slane %v12652, 4
      %v12655 = vrot.slane %v12535, 7
      %v12656 = vsel %vm12579, %v12654, %v12655
      %v12657 = vrot.slane %v12536, 7
      %v12658 = vrot.slane %v12657, 4
      %v12659 = vrot.slane %v11672, 7
      %v12660 = vsel %vm12579, %v12658, %v12659
      %v12661 = vrot.slane %v12659, 4
      %v12662 = vrot.slane %v12537, 7
      %v12663 = vsel %vm12579, %v12661, %v12662
      %v12664 = vrot.slane %v12538, 7
      %v12665 = vrot.slane %v12664, 4
      %v12666 = vrot.slane %v11674, 7
      %v12667 = vsel %vm12579, %v12665, %v12666
      %v12668 = vrot.slane %v12666, 4
      %v12669 = vrot.slane %v12539, 7
      %v12670 = vsel %vm12579, %v12668, %v12669
      %v12671 = vrot.slane %v12540, 7
      %v12672 = vrot.slane %v12671, 4
      %v12673 = vrot.slane %v11676, 7
      %v12674 = vsel %vm12579, %v12672, %v12673
      %v12675 = vrot.slane %v12673, 4
      %v12676 = vrot.slane %v12541, 7
      %v12677 = vsel %vm12579, %v12675, %v12676
      %v12678 = vrot.slane %v12542, 7
      %v12679 = vrot.slane %v12678, 4
      %v12680 = vrot.slane %v11678, 7
      %v12681 = vsel %vm12579, %v12679, %v12680
      %v12682 = vrot.slane %v12680, 4
      %v12683 = vrot.slane %v12543, 7
      %v12684 = vsel %vm12579, %v12682, %v12683
      %v12685 = vrot.slane %v12544, 7
      %v12686 = vrot.slane %v12685, 4
      %v12687 = vrot.slane %v11680, 7
      %v12688 = vsel %vm12579, %v12686, %v12687
      %v12689 = vrot.slane %v12687, 4
      %v12690 = vrot.slane %v12545, 7
      %v12691 = vsel %vm12579, %v12689, %v12690
      %v12692 = vld [vmem:[%s1 + $0x680] sm:$0xf]
      %v12693 = vld [vmem:[%s1 + $0x684] sm:$0xf]
      %v12694 = vld [vmem:[%s1 + $0x688] sm:$0xf]
      %v12695 = vld [vmem:[%s1 + $0x68c] sm:$0xf]
      %v12696 = vld [vmem:[%s1 + $0x690] sm:$0xf]
      %v12697 = vld [vmem:[%s1 + $0x694] sm:$0xf]
      %v12698 = vld [vmem:[%s1 + $0x698] sm:$0xf]
      %v12699 = vld [vmem:[%s1 + $0x69c] sm:$0xf]
      %v12700 = vld [vmem:[%s1 + $0x6a0] sm:$0xf]
      %v12701 = vld [vmem:[%s1 + $0x6a4] sm:$0xf]
      %v12702 = vld [vmem:[%s1 + $0x6a8] sm:$0xf]
      %v12703 = vld [vmem:[%s1 + $0x6ac] sm:$0xf]
      %v12704 = vld [vmem:[%s1 + $0x6b0] sm:$0xf]
      %v12705 = vld [vmem:[%s1 + $0x6b4] sm:$0xf]
      %v12706 = vld [vmem:[%s1 + $0x6b8] sm:$0xf]
      %v12707 = vld [vmem:[%s1 + $0x6bc] sm:$0xf]
      %v12708 = vunpack.c.l.b16 %v12583
      %v12709 = vunpack.c.l.b16 %v12586
      %v12710 = vunpack.c.l.b16 %v12590
      %v12711 = vunpack.c.l.b16 %v12593
      %v12712 = vunpack.c.l.b16 %v12597
      %v12713 = vunpack.c.l.b16 %v12600
      %v12714 = vunpack.c.l.b16 %v12604
      %v12715 = vunpack.c.l.b16 %v12607
      %v12716 = vunpack.c.l.b16 %v12611
      %v12717 = vunpack.c.l.b16 %v12614
      %v12718 = vunpack.c.l.b16 %v12618
      %v12719 = vunpack.c.l.b16 %v12621
      %v12720 = vunpack.c.l.b16 %v12625
      %v12721 = vunpack.c.l.b16 %v12628
      %v12722 = vunpack.c.l.b16 %v12632
      %v12723 = vunpack.c.l.b16 %v12635
      %v12724 = vunpack.c.l.b16 %v12639
      %v12725 = vunpack.c.l.b16 %v12642
      %v12726 = vunpack.c.l.b16 %v12646
      %v12727 = vunpack.c.l.b16 %v12649
      %v12728 = vunpack.c.l.b16 %v12653
      %v12729 = vunpack.c.l.b16 %v12656
      %v12730 = vunpack.c.l.b16 %v12660
      %v12731 = vunpack.c.l.b16 %v12663
      %v12732 = vunpack.c.l.b16 %v12667
      %v12733 = vunpack.c.l.b16 %v12670
      %v12734 = vunpack.c.l.b16 %v12674
      %v12735 = vunpack.c.l.b16 %v12677
      %v12736 = vunpack.c.l.b16 %v12681
      %v12737 = vunpack.c.l.b16 %v12684
      %v12738 = vunpack.c.l.b16 %v12688
      %v12739 = vunpack.c.l.b16 %v12691
      %v12740 = vpack.c.b16 %v12709, %v12708
      %v12741 = vpack.c.b16 %v12711, %v12710
      %v12742 = vpack.c.b16 %v12713, %v12712
      %v12743 = vpack.c.b16 %v12715, %v12714
      %v12744 = vpack.c.b16 %v12717, %v12716
      %v12745 = vpack.c.b16 %v12719, %v12718
      %v12746 = vpack.c.b16 %v12721, %v12720
      %v12747 = vpack.c.b16 %v12723, %v12722
      %v12748 = vpack.c.b16 %v12725, %v12724
      %v12749 = vpack.c.b16 %v12727, %v12726
      %v12750 = vpack.c.b16 %v12729, %v12728
      %v12751 = vpack.c.b16 %v12731, %v12730
      %v12752 = vpack.c.b16 %v12733, %v12732
      %v12753 = vpack.c.b16 %v12735, %v12734
      %v12754 = vpack.c.b16 %v12737, %v12736
      %v12755 = vpack.c.b16 %v12739, %v12738
      %v12788 = vunpack.c.l.b16 %v12692
      %v12789 = vunpack.c.l.b16 %v12693
      %v12790 = vunpack.c.l.b16 %v12694
      %v12791 = vunpack.c.l.b16 %v12695
      %v12792 = vunpack.c.l.b16 %v12696
      %v12793 = vunpack.c.l.b16 %v12697
      %v12794 = vunpack.c.l.b16 %v12698
      %v12795 = vunpack.c.l.b16 %v12699
      %v12796 = vunpack.c.l.b16 %v12700
      %v12797 = vunpack.c.l.b16 %v12701
      %v12798 = vunpack.c.l.b16 %v12702
      %v12799 = vunpack.c.l.b16 %v12703
      %v12800 = vunpack.c.l.b16 %v12704
      %v12801 = vunpack.c.l.b16 %v12705
      %v12802 = vunpack.c.l.b16 %v12706
      %v12803 = vunpack.c.l.b16 %v12707
      %v12804 = vpack.c.b16 %v12789, %v12788
      %v12805 = vpack.c.b16 %v12791, %v12790
      %v12806 = vpack.c.b16 %v12793, %v12792
      %v12807 = vpack.c.b16 %v12795, %v12794
      %v12808 = vpack.c.b16 %v12797, %v12796
      %v12809 = vpack.c.b16 %v12799, %v12798
      %v12810 = vpack.c.b16 %v12801, %v12800
      %v12811 = vpack.c.b16 %v12803, %v12802
      %12820 = vmatprep.subr.bf16.mxu0 0
      %12821 = vmatpush1.bf16.msra.mxu0 %v12804
      %12822 = vmatprep.subr.bf16.mxu0 0
      %12823 = vmatpush1.bf16.msra.mxu0 %v12805
      %12824 = vmatprep.subr.bf16.mxu0 0
      %12825 = vmatpush1.bf16.msra.mxu0 %v12806
      %12826 = vmatprep.subr.bf16.mxu0 0
      %12827 = vmatpush1.bf16.msra.mxu0 %v12807
      %12828 = vmatprep.subr.bf16.mxu0 0
      %12829 = vmatpush1.bf16.msra.mxu0 %v12808
      %12830 = vmatprep.subr.bf16.mxu0 0
      %12831 = vmatpush1.bf16.msra.mxu0 %v12809
      %12832 = vmatprep.subr.bf16.mxu0 0
      %12833 = vmatpush1.bf16.msra.mxu0 %v12810
      %12834 = vmatprep.subr.bf16.mxu0 0
      %12835 = vmatpush1.bf16.msra.mxu0 %v12811
      %12836 = vmatprep.subr.bf16.mxu0 0
      %12837 = vmatpush1.bf16.msra.mxu0 0
      %12838 = vmatprep.subr.bf16.mxu0 0
      %12839 = vmatpush1.bf16.msra.mxu0 0
      %12840 = vmatprep.subr.bf16.mxu0 0
      %12841 = vmatpush1.bf16.msra.mxu0 0
      %12842 = vmatprep.subr.bf16.mxu0 0
      %12843 = vmatpush1.bf16.msra.mxu0 0
      %12844 = vmatprep.subr.bf16.mxu0 0
      %12845 = vmatpush1.bf16.msra.mxu0 0
      %12846 = vmatprep.subr.bf16.mxu0 0
      %12847 = vmatpush1.bf16.msra.mxu0 0
      %12848 = vmatprep.subr.bf16.mxu0 0
      %12849 = vmatpush1.bf16.msra.mxu0 0
      %12850 = vmatprep.subr.bf16.mxu0 0
      %12851 = vmatpush1.bf16.msra.mxu0 0
      %12852 = vmatprep.mubr.bf16.mxu0 0
      %12853 = vmatmul.mubr.bf16.gmra.mrb[0].mxu0 %v12740
      %v12854 = vpop.f32.mrb[0].mxu0
      %v12855 = vadd.f32 0.0, %v12854
      %v12856 = vpop.f32.mrb[0].mxu0
      %v12857 = vpop.f32.mrb[0].mxu0
      %v12858 = vadd.f32 0.0, %v12857
      %v12859 = vpop.f32.mrb[0].mxu0
      %12860 = vmatprep.mubr.bf16.mxu0 0
      %12861 = vmatmul.mubr.bf16.gmra.mrb[0].mxu0 %v12741
      %v12862 = vpop.f32.mrb[0].mxu0
      %v12863 = vadd.f32 0.0, %v12862
      %v12864 = vpop.f32.mrb[0].mxu0
      %v12865 = vpop.f32.mrb[0].mxu0
      %v12866 = vadd.f32 0.0, %v12865
      %v12867 = vpop.f32.mrb[0].mxu0
      %12868 = vmatprep.mubr.bf16.mxu0 0
      %12869 = vmatmul.mubr.bf16.gmra.mrb[0].mxu0 %v12742
      %v12870 = vpop.f32.mrb[0].mxu0
      %v12871 = vadd.f32 0.0, %v12870
      %v12872 = vpop.f32.mrb[0].mxu0
      %v12873 = vpop.f32.mrb[0].mxu0
      %v12874 = vadd.f32 0.0, %v12873
      %v12875 = vpop.f32.mrb[0].mxu0
      %12876 = vmatprep.mubr.bf16.mxu0 0
      %12877 = vmatmul.mubr.bf16.gmra.mrb[0].mxu0 %v12743
      %v12878 = vpop.f32.mrb[0].mxu0
      %v12879 = vadd.f32 0.0, %v12878
      %v12880 = vpop.f32.mrb[0].mxu0
      %v12881 = vpop.f32.mrb[0].mxu0
      %v12882 = vadd.f32 0.0, %v12881
      %v12883 = vpop.f32.mrb[0].mxu0
      %12884 = vmatprep.mubr.bf16.mxu0 0
      %12885 = vmatmul.mubr.bf16.gmra.mrb[0].mxu0 %v12744
      %v12886 = vpop.f32.mrb[0].mxu0
      %v12887 = vadd.f32 0.0, %v12886
      %v12888 = vpop.f32.mrb[0].mxu0
      %v12889 = vpop.f32.mrb[0].mxu0
      %v12890 = vadd.f32 0.0, %v12889
      %v12891 = vpop.f32.mrb[0].mxu0
      %12892 = vmatprep.mubr.bf16.mxu0 0
      %12893 = vmatmul.mubr.bf16.gmra.mrb[0].mxu0 %v12745
      %v12894 = vpop.f32.mrb[0].mxu0
      %v12895 = vadd.f32 0.0, %v12894
      %v12896 = vpop.f32.mrb[0].mxu0
      %v12897 = vpop.f32.mrb[0].mxu0
      %v12898 = vadd.f32 0.0, %v12897
      %v12899 = vpop.f32.mrb[0].mxu0
      %12900 = vmatprep.mubr.bf16.mxu0 0
      %12901 = vmatmul.mubr.bf16.gmra.mrb[0].mxu0 %v12746
      %v12902 = vpop.f32.mrb[0].mxu0
      %v12903 = vadd.f32 0.0, %v12902
      %v12904 = vpop.f32.mrb[0].mxu0
      %v12905 = vpop.f32.mrb[0].mxu0
      %v12906 = vadd.f32 0.0, %v12905
      %v12907 = vpop.f32.mrb[0].mxu0
      %12908 = vmatprep.mubr.bf16.mxu0 0
      %12909 = vmatmul.mubr.bf16.gmra.mrb[0].mxu0 %v12747
      %v12910 = vpop.f32.mrb[0].mxu0
      %v12911 = vadd.f32 0.0, %v12910
      %v12912 = vpop.f32.mrb[0].mxu0
      %v12913 = vpop.f32.mrb[0].mxu0
      %v12914 = vadd.f32 0.0, %v12913
      %v12915 = vpop.f32.mrb[0].mxu0
      %12916 = vmatprep.mubr.bf16.mxu0 0
      %12917 = vmatmul.mubr.bf16.gmra.mrb[0].mxu0 %v12748
      %v12918 = vpop.f32.mrb[0].mxu0
      %v12919 = vadd.f32 0.0, %v12918
      %v12920 = vpop.f32.mrb[0].mxu0
      %v12921 = vpop.f32.mrb[0].mxu0
      %v12922 = vadd.f32 0.0, %v12921
      %v12923 = vpop.f32.mrb[0].mxu0
      %12924 = vmatprep.mubr.bf16.mxu0 0
      %12925 = vmatmul.mubr.bf16.gmra.mrb[0].mxu0 %v12749
      %v12926 = vpop.f32.mrb[0].mxu0
      %v12927 = vadd.f32 0.0, %v12926
      %v12928 = vpop.f32.mrb[0].mxu0
      %v12929 = vpop.f32.mrb[0].mxu0
      %v12930 = vadd.f32 0.0, %v12929
      %v12931 = vpop.f32.mrb[0].mxu0
      %12932 = vmatprep.mubr.bf16.mxu0 0
      %12933 = vmatmul.mubr.bf16.gmra.mrb[0].mxu0 %v12750
      %v12934 = vpop.f32.mrb[0].mxu0
      %v12935 = vadd.f32 0.0, %v12934
      %v12936 = vpop.f32.mrb[0].mxu0
      %v12937 = vpop.f32.mrb[0].mxu0
      %v12938 = vadd.f32 0.0, %v12937
      %v12939 = vpop.f32.mrb[0].mxu0
      %12940 = vmatprep.mubr.bf16.mxu0 0
      %12941 = vmatmul.mubr.bf16.gmra.mrb[0].mxu0 %v12751
      %v12942 = vpop.f32.mrb[0].mxu0
      %v12943 = vadd.f32 0.0, %v12942
      %v12944 = vpop.f32.mrb[0].mxu0
      %v12945 = vpop.f32.mrb[0].mxu0
      %v12946 = vadd.f32 0.0, %v12945
      %v12947 = vpop.f32.mrb[0].mxu0
      %12948 = vmatprep.mubr.bf16.mxu0 0
      %12949 = vmatmul.mubr.bf16.gmra.mrb[0].mxu0 %v12752
      %v12950 = vpop.f32.mrb[0].mxu0
      %v12951 = vadd.f32 0.0, %v12950
      %v12952 = vpop.f32.mrb[0].mxu0
      %v12953 = vpop.f32.mrb[0].mxu0
      %v12954 = vadd.f32 0.0, %v12953
      %v12955 = vpop.f32.mrb[0].mxu0
      %12956 = vmatprep.mubr.bf16.mxu0 0
      %12957 = vmatmul.mubr.bf16.gmra.mrb[0].mxu0 %v12753
      %v12958 = vpop.f32.mrb[0].mxu0
      %v12959 = vadd.f32 0.0, %v12958
      %v12960 = vpop.f32.mrb[0].mxu0
      %v12961 = vpop.f32.mrb[0].mxu0
      %v12962 = vadd.f32 0.0, %v12961
      %v12963 = vpop.f32.mrb[0].mxu0
      %12964 = vmatprep.mubr.bf16.mxu0 0
      %12965 = vmatmul.mubr.bf16.gmra.mrb[0].mxu0 %v12754
      %v12966 = vpop.f32.mrb[0].mxu0
      %v12967 = vadd.f32 0.0, %v12966
      %v12968 = vpop.f32.mrb[0].mxu0
      %v12969 = vpop.f32.mrb[0].mxu0
      %v12970 = vadd.f32 0.0, %v12969
      %v12971 = vpop.f32.mrb[0].mxu0
      %12972 = vmatprep.mubr.bf16.mxu0 0
      %12973 = vmatmul.mubr.bf16.gmra.mrb[0].mxu0 %v12755
      %v12974 = vpop.f32.mrb[0].mxu0
      %v12975 = vadd.f32 0.0, %v12974
      %v12976 = vpop.f32.mrb[0].mxu0
      %v12977 = vpop.f32.mrb[0].mxu0
      %v12978 = vadd.f32 0.0, %v12977
      %v12979 = vpop.f32.mrb[0].mxu0
      %12980 = vdwg.mxu0
      %v12981 = vadd.f32 %v12482, %v12855
      %v12982 = vadd.f32 %v12483, %v12858
      %v12983 = vadd.f32 %v12484, %v12863
      %v12984 = vadd.f32 %v12485, %v12866
      %v12985 = vadd.f32 %v12486, %v12871
      %v12986 = vadd.f32 %v12487, %v12874
      %v12987 = vadd.f32 %v12488, %v12879
      %v12988 = vadd.f32 %v12489, %v12882
      %v12989 = vadd.f32 %v12490, %v12887
      %v12990 = vadd.f32 %v12491, %v12890
      %v12991 = vadd.f32 %v12492, %v12895
      %v12992 = vadd.f32 %v12493, %v12898
      %v12993 = vadd.f32 %v12494, %v12903
      %v12994 = vadd.f32 %v12495, %v12906
      %v12995 = vadd.f32 %v12496, %v12911
      %v12996 = vadd.f32 %v12497, %v12914
      %v12997 = vadd.f32 %v12498, %v12919
      %v12998 = vadd.f32 %v12499, %v12922
      %v12999 = vadd.f32 %v12500, %v12927
      %v13000 = vadd.f32 %v12501, %v12930
      %v13001 = vadd.f32 %v12502, %v12935
      %v13002 = vadd.f32 %v12503, %v12938
      %v13003 = vadd.f32 %v12504, %v12943
      %v13004 = vadd.f32 %v12505, %v12946
      %v13005 = vadd.f32 %v12506, %v12951
      %v13006 = vadd.f32 %v12507, %v12954
      %v13007 = vadd.f32 %v12508, %v12959
      %v13008 = vadd.f32 %v12509, %v12962
      %v13009 = vadd.f32 %v12510, %v12967
      %v13010 = vadd.f32 %v12511, %v12970
      %v13011 = vadd.f32 %v12512, %v12975
      %v13012 = vadd.f32 %v12513, %v12978
      %v13013 = vmax.f32 %v12981, 0.0
      %v13014 = vmax.f32 %v12982, 0.0
      %v13015 = vmax.f32 %v12983, 0.0
      %v13016 = vmax.f32 %v12984, 0.0
      %v13017 = vmax.f32 %v12985, 0.0
      %v13018 = vmax.f32 %v12986, 0.0
      %v13019 = vmax.f32 %v12987, 0.0
      %v13020 = vmax.f32 %v12988, 0.0
      %v13021 = vmax.f32 %v12989, 0.0
      %v13022 = vmax.f32 %v12990, 0.0
      %v13023 = vmax.f32 %v12991, 0.0
      %v13024 = vmax.f32 %v12992, 0.0
      %v13025 = vmax.f32 %v12993, 0.0
      %v13026 = vmax.f32 %v12994, 0.0
      %v13027 = vmax.f32 %v12995, 0.0
      %v13028 = vmax.f32 %v12996, 0.0
      %v13029 = vmax.f32 %v12997, 0.0
      %v13030 = vmax.f32 %v12998, 0.0
      %v13031 = vmax.f32 %v12999, 0.0
      %v13032 = vmax.f32 %v13000, 0.0
      %v13033 = vmax.f32 %v13001, 0.0
      %v13034 = vmax.f32 %v13002, 0.0
      %v13035 = vmax.f32 %v13003, 0.0
      %v13036 = vmax.f32 %v13004, 0.0
      %v13037 = vmax.f32 %v13005, 0.0
      %v13038 = vmax.f32 %v13006, 0.0
      %v13039 = vmax.f32 %v13007, 0.0
      %v13040 = vmax.f32 %v13008, 0.0
      %v13041 = vmax.f32 %v13009, 0.0
      %v13042 = vmax.f32 %v13010, 0.0
      %v13043 = vmax.f32 %v13011, 0.0
      %v13044 = vmax.f32 %v13012, 0.0
      %v13045 = vpack.c.bf16 %v13014, %v13013
      %v13046 = vpack.c.bf16 %v13016, %v13015
      %v13047 = vpack.c.bf16 %v13018, %v13017
      %v13048 = vpack.c.bf16 %v13020, %v13019
      %v13049 = vpack.c.bf16 %v13022, %v13021
      %v13050 = vpack.c.bf16 %v13024, %v13023
      %v13051 = vpack.c.bf16 %v13026, %v13025
      %v13052 = vpack.c.bf16 %v13028, %v13027
      %v13053 = vpack.c.bf16 %v13030, %v13029
      %v13054 = vpack.c.bf16 %v13032, %v13031
      %v13055 = vpack.c.bf16 %v13034, %v13033
      %v13056 = vpack.c.bf16 %v13036, %v13035
      %v13057 = vpack.c.bf16 %v13038, %v13037
      %v13058 = vpack.c.bf16 %v13040, %v13039
      %v13059 = vpack.c.bf16 %v13042, %v13041
      %v13060 = vpack.c.bf16 %v13044, %v13043
      %v13061 = vld [vmem:[%s2] sm:$0xff]
      %v13062 = vld [vmem:[%s2 + $0x8] sm:$0xff]
      %v13063 = vld [vmem:[%s2 + $0x10] sm:$0xff]
      %v13064 = vld [vmem:[%s2 + $0x18] sm:$0xff]
      %v13065 = vld [vmem:[%s2 + $0x20] sm:$0xff]
      %v13066 = vld [vmem:[%s2 + $0x28] sm:$0xff]
      %v13067 = vld [vmem:[%s2 + $0x30] sm:$0xff]
      %v13068 = vld [vmem:[%s2 + $0x38] sm:$0xff]
      %v13069 = vld [vmem:[%s3] sm:$0x3]
      %v13071 = vlaneseq
      %v13072 = vshrl.u32 %v13071, 7
      %v13073 = vsub.s32 0, %v13072
      %v13074 = vrot.slane %v13069, %v13073
      %v13075 = vlaneseq
      %v13076 = vshrl.u32 %v13075, 7
      %v13077 = vsub.s32 1, %v13076
      %v13078 = vrot.slane %v13069, %v13077
      %v13089 = vunpack.c.l.b16 %v13061
      %v13090 = vunpack.c.h.b16 %v13061
      %v13091 = vunpack.c.l.b16 %v13062
      %v13092 = vunpack.c.h.b16 %v13062
      %v13093 = vunpack.c.l.b16 %v13063
      %v13094 = vunpack.c.h.b16 %v13063
      %v13095 = vunpack.c.l.b16 %v13064
      %v13096 = vunpack.c.h.b16 %v13064
      %v13097 = vunpack.c.l.b16 %v13065
      %v13098 = vunpack.c.h.b16 %v13065
      %v13099 = vunpack.c.l.b16 %v13066
      %v13100 = vunpack.c.h.b16 %v13066
      %v13101 = vunpack.c.l.b16 %v13067
      %v13102 = vunpack.c.h.b16 %v13067
      %v13103 = vunpack.c.l.b16 %v13068
      %v13104 = vunpack.c.h.b16 %v13068
      %v13105 = vpack.c.b16 %v13091, %v13089
      %v13106 = vpack.c.b16 %v13092, %v13090
      %v13107 = vpack.c.b16 %v13095, %v13093
      %v13108 = vpack.c.b16 %v13096, %v13094
      %v13109 = vpack.c.b16 %v13099, %v13097
      %v13110 = vpack.c.b16 %v13100, %v13098
      %v13111 = vpack.c.b16 %v13103, %v13101
      %v13112 = vpack.c.b16 %v13104, %v13102
      %vm13121 = vcmask 523264
      %v13123 = vsel %vm13121, %v13045, 0
      %v13126 = vsel %vm13121, %v13046, 0
      %v13129 = vsel %vm13121, %v13047, 0
      %v13132 = vsel %vm13121, %v13048, 0
      %v13135 = vsel %vm13121, %v13049, 0
      %v13138 = vsel %vm13121, %v13050, 0
      %v13141 = vsel %vm13121, %v13051, 0
      %v13144 = vsel %vm13121, %v13052, 0
      %v13147 = vsel %vm13121, %v13053, 0
      %v13150 = vsel %vm13121, %v13054, 0
      %v13153 = vsel %vm13121, %v13055, 0
      %v13156 = vsel %vm13121, %v13056, 0
      %v13159 = vsel %vm13121, %v13057, 0
      %v13162 = vsel %vm13121, %v13058, 0
      %v13165 = vsel %vm13121, %v13059, 0
      %v13168 = vsel %vm13121, %v13060, 0
      %13170 = vmatprep.subr.bf16.mxu0 %v13106
      %13171 = vmatpush1.bf16.msra.mxu0 %v13105
      %13172 = vmatprep.subr.bf16.mxu0 %v13108
      %13173 = vmatpush1.bf16.msra.mxu0 %v13107
      %13174 = vmatprep.subr.bf16.mxu0 %v13110
      %13175 = vmatpush1.bf16.msra.mxu0 %v13109
      %13176 = vmatprep.subr.bf16.mxu0 %v13112
      %13177 = vmatpush1.bf16.msra.mxu0 %v13111
      %13178 = vmatprep.subr.bf16.mxu0 0
      %13179 = vmatpush1.bf16.msra.mxu0 0
      %13180 = vmatprep.subr.bf16.mxu0 0
      %13181 = vmatpush1.bf16.msra.mxu0 0
      %13182 = vmatprep.subr.bf16.mxu0 0
      %13183 = vmatpush1.bf16.msra.mxu0 0
      %13184 = vmatprep.subr.bf16.mxu0 0
      %13185 = vmatpush1.bf16.msra.mxu0 0
      %13186 = vmatprep.subr.bf16.mxu0 0
      %13187 = vmatpush1.bf16.msra.mxu0 0
      %13188 = vmatprep.subr.bf16.mxu0 0
      %13189 = vmatpush1.bf16.msra.mxu0 0
      %13190 = vmatprep.subr.bf16.mxu0 0
      %13191 = vmatpush1.bf16.msra.mxu0 0
      %13192 = vmatprep.subr.bf16.mxu0 0
      %13193 = vmatpush1.bf16.msra.mxu0 0
      %13194 = vmatprep.subr.bf16.mxu0 0
      %13195 = vmatpush1.bf16.msra.mxu0 0
      %13196 = vmatprep.subr.bf16.mxu0 0
      %13197 = vmatpush1.bf16.msra.mxu0 0
      %13198 = vmatprep.subr.bf16.mxu0 0
      %13199 = vmatpush1.bf16.msra.mxu0 0
      %13200 = vmatprep.subr.bf16.mxu0 0
      %13201 = vmatpush1.bf16.msra.mxu0 0
      %13202 = vmatprep.mubr.bf16.mxu0 0
      %13203 = vmatmul.mubr.bf16.gmra.mrb[0].mxu0 %v13123
      %v13204 = vpop.f32.mrb[0].mxu0
      %v13205 = vadd.f32 %v13074, %v13204
      %v13206 = vpop.f32.mrb[0].mxu0
      %v13207 = vadd.f32 %v13078, %v13206
      %v13208 = vpop.f32.mrb[0].mxu0
      %v13209 = vadd.f32 %v13074, %v13208
      %v13210 = vpop.f32.mrb[0].mxu0
      %v13211 = vadd.f32 %v13078, %v13210
      %13212 = vmatprep.mubr.bf16.mxu0 0
      %13213 = vmatmul.mubr.bf16.gmra.mrb[0].mxu0 %v13126
      %v13214 = vpop.f32.mrb[0].mxu0
      %v13215 = vadd.f32 %v13074, %v13214
      %v13216 = vpop.f32.mrb[0].mxu0
      %v13217 = vadd.f32 %v13078, %v13216
      %v13218 = vpop.f32.mrb[0].mxu0
      %v13219 = vadd.f32 %v13074, %v13218
      %v13220 = vpop.f32.mrb[0].mxu0
      %v13221 = vadd.f32 %v13078, %v13220
      %13222 = vmatprep.mubr.bf16.mxu0 0
      %13223 = vmatmul.mubr.bf16.gmra.mrb[0].mxu0 %v13129
      %v13224 = vpop.f32.mrb[0].mxu0
      %v13225 = vadd.f32 %v13074, %v13224
      %v13226 = vpop.f32.mrb[0].mxu0
      %v13227 = vadd.f32 %v13078, %v13226
      %v13228 = vpop.f32.mrb[0].mxu0
      %v13229 = vadd.f32 %v13074, %v13228
      %v13230 = vpop.f32.mrb[0].mxu0
      %v13231 = vadd.f32 %v13078, %v13230
      %13232 = vmatprep.mubr.bf16.mxu0 0
      %13233 = vmatmul.mubr.bf16.gmra.mrb[0].mxu0 %v13132
      %v13234 = vpop.f32.mrb[0].mxu0
      %v13235 = vadd.f32 %v13074, %v13234
      %v13236 = vpop.f32.mrb[0].mxu0
      %v13237 = vadd.f32 %v13078, %v13236
      %v13238 = vpop.f32.mrb[0].mxu0
      %v13239 = vadd.f32 %v13074, %v13238
      %v13240 = vpop.f32.mrb[0].mxu0
      %v13241 = vadd.f32 %v13078, %v13240
      %13242 = vmatprep.mubr.bf16.mxu0 0
      %13243 = vmatmul.mubr.bf16.gmra.mrb[0].mxu0 %v13135
      %v13244 = vpop.f32.mrb[0].mxu0
      %v13245 = vadd.f32 %v13074, %v13244
      %v13246 = vpop.f32.mrb[0].mxu0
      %v13247 = vadd.f32 %v13078, %v13246
      %v13248 = vpop.f32.mrb[0].mxu0
      %v13249 = vadd.f32 %v13074, %v13248
      %v13250 = vpop.f32.mrb[0].mxu0
      %v13251 = vadd.f32 %v13078, %v13250
      %13252 = vmatprep.mubr.bf16.mxu0 0
      %13253 = vmatmul.mubr.bf16.gmra.mrb[0].mxu0 %v13138
      %v13254 = vpop.f32.mrb[0].mxu0
      %v13255 = vadd.f32 %v13074, %v13254
      %v13256 = vpop.f32.mrb[0].mxu0
      %v13257 = vadd.f32 %v13078, %v13256
      %v13258 = vpop.f32.mrb[0].mxu0
      %v13259 = vadd.f32 %v13074, %v13258
      %v13260 = vpop.f32.mrb[0].mxu0
      %v13261 = vadd.f32 %v13078, %v13260
      %13262 = vmatprep.mubr.bf16.mxu0 0
      %13263 = vmatmul.mubr.bf16.gmra.mrb[0].mxu0 %v13141
      %v13264 = vpop.f32.mrb[0].mxu0
      %v13265 = vadd.f32 %v13074, %v13264
      %v13266 = vpop.f32.mrb[0].mxu0
      %v13267 = vadd.f32 %v13078, %v13266
      %v13268 = vpop.f32.mrb[0].mxu0
      %v13269 = vadd.f32 %v13074, %v13268
      %v13270 = vpop.f32.mrb[0].mxu0
      %v13271 = vadd.f32 %v13078, %v13270
      %13272 = vmatprep.mubr.bf16.mxu0 0
      %13273 = vmatmul.mubr.bf16.gmra.mrb[0].mxu0 %v13144
      %v13274 = vpop.f32.mrb[0].mxu0
      %v13275 = vadd.f32 %v13074, %v13274
      %v13276 = vpop.f32.mrb[0].mxu0
      %v13277 = vadd.f32 %v13078, %v13276
      %v13278 = vpop.f32.mrb[0].mxu0
      %v13279 = vadd.f32 %v13074, %v13278
      %v13280 = vpop.f32.mrb[0].mxu0
      %v13281 = vadd.f32 %v13078, %v13280
      %13282 = vmatprep.mubr.bf16.mxu0 0
      %13283 = vmatmul.mubr.bf16.gmra.mrb[0].mxu0 %v13147
      %v13284 = vpop.f32.mrb[0].mxu0
      %v13285 = vadd.f32 %v13074, %v13284
      %v13286 = vpop.f32.mrb[0].mxu0
      %v13287 = vadd.f32 %v13078, %v13286
      %v13288 = vpop.f32.mrb[0].mxu0
      %v13289 = vadd.f32 %v13074, %v13288
      %v13290 = vpop.f32.mrb[0].mxu0
      %v13291 = vadd.f32 %v13078, %v13290
      %13292 = vmatprep.mubr.bf16.mxu0 0
      %13293 = vmatmul.mubr.bf16.gmra.mrb[0].mxu0 %v13150
      %v13294 = vpop.f32.mrb[0].mxu0
      %v13295 = vadd.f32 %v13074, %v13294
      %v13296 = vpop.f32.mrb[0].mxu0
      %v13297 = vadd.f32 %v13078, %v13296
      %v13298 = vpop.f32.mrb[0].mxu0
      %v13299 = vadd.f32 %v13074, %v13298
      %v13300 = vpop.f32.mrb[0].mxu0
      %v13301 = vadd.f32 %v13078, %v13300
      %13302 = vmatprep.mubr.bf16.mxu0 0
      %13303 = vmatmul.mubr.bf16.gmra.mrb[0].mxu0 %v13153
      %v13304 = vpop.f32.mrb[0].mxu0
      %v13305 = vadd.f32 %v13074, %v13304
      %v13306 = vpop.f32.mrb[0].mxu0
      %v13307 = vadd.f32 %v13078, %v13306
      %v13308 = vpop.f32.mrb[0].mxu0
      %v13309 = vadd.f32 %v13074, %v13308
      %v13310 = vpop.f32.mrb[0].mxu0
      %v13311 = vadd.f32 %v13078, %v13310
      %13312 = vmatprep.mubr.bf16.mxu0 0
      %13313 = vmatmul.mubr.bf16.gmra.mrb[0].mxu0 %v13156
      %v13314 = vpop.f32.mrb[0].mxu0
      %v13315 = vadd.f32 %v13074, %v13314
      %v13316 = vpop.f32.mrb[0].mxu0
      %v13317 = vadd.f32 %v13078, %v13316
      %v13318 = vpop.f32.mrb[0].mxu0
      %v13319 = vadd.f32 %v13074, %v13318
      %v13320 = vpop.f32.mrb[0].mxu0
      %v13321 = vadd.f32 %v13078, %v13320
      %13322 = vmatprep.mubr.bf16.mxu0 0
      %13323 = vmatmul.mubr.bf16.gmra.mrb[0].mxu0 %v13159
      %v13324 = vpop.f32.mrb[0].mxu0
      %v13325 = vadd.f32 %v13074, %v13324
      %v13326 = vpop.f32.mrb[0].mxu0
      %v13327 = vadd.f32 %v13078, %v13326
      %v13328 = vpop.f32.mrb[0].mxu0
      %v13329 = vadd.f32 %v13074, %v13328
      %v13330 = vpop.f32.mrb[0].mxu0
      %v13331 = vadd.f32 %v13078, %v13330
      %13332 = vmatprep.mubr.bf16.mxu0 0
      %13333 = vmatmul.mubr.bf16.gmra.mrb[0].mxu0 %v13162
      %v13334 = vpop.f32.mrb[0].mxu0
      %v13335 = vadd.f32 %v13074, %v13334
      %v13336 = vpop.f32.mrb[0].mxu0
      %v13337 = vadd.f32 %v13078, %v13336
      %v13338 = vpop.f32.mrb[0].mxu0
      %v13339 = vadd.f32 %v13074, %v13338
      %v13340 = vpop.f32.mrb[0].mxu0
      %v13341 = vadd.f32 %v13078, %v13340
      %13342 = vmatprep.mubr.bf16.mxu0 0
      %13343 = vmatmul.mubr.bf16.gmra.mrb[0].mxu0 %v13165
      %v13344 = vpop.f32.mrb[0].mxu0
      %v13345 = vadd.f32 %v13074, %v13344
      %v13346 = vpop.f32.mrb[0].mxu0
      %v13347 = vadd.f32 %v13078, %v13346
      %v13348 = vpop.f32.mrb[0].mxu0
      %v13349 = vadd.f32 %v13074, %v13348
      %v13350 = vpop.f32.mrb[0].mxu0
      %v13351 = vadd.f32 %v13078, %v13350
      %13352 = vmatprep.mubr.bf16.mxu0 0
      %13353 = vmatmul.mubr.bf16.gmra.mrb[0].mxu0 %v13168
      %v13354 = vpop.f32.mrb[0].mxu0
      %v13355 = vadd.f32 %v13074, %v13354
      %v13356 = vpop.f32.mrb[0].mxu0
      %v13357 = vadd.f32 %v13078, %v13356
      %v13358 = vpop.f32.mrb[0].mxu0
      %v13359 = vadd.f32 %v13074, %v13358
      %v13360 = vpop.f32.mrb[0].mxu0
      %v13361 = vadd.f32 %v13078, %v13360
      %13362 = vdwg.mxu0
      %13363 = vst [vmem:[%s221] sm:$0xff] %v13205
      %13364 = vst [vmem:[%s221 + $0x8] sm:$0xff] %v13207
      %13365 = vst [vmem:[%s221 + $0x10] sm:$0xff] %v13209
      %13366 = vst [vmem:[%s221 + $0x18] sm:$0xff] %v13211
      %13367 = vst [vmem:[%s221 + $0x20] sm:$0xff] %v13215
      %13368 = vst [vmem:[%s221 + $0x28] sm:$0xff] %v13217
      %13369 = vst [vmem:[%s221 + $0x30] sm:$0xff] %v13219
      %13370 = vst [vmem:[%s221 + $0x38] sm:$0xff] %v13221
      %13371 = vst [vmem:[%s221 + $0x40] sm:$0xff] %v13225
      %13372 = vst [vmem:[%s221 + $0x48] sm:$0xff] %v13227
      %13373 = vst [vmem:[%s221 + $0x50] sm:$0xff] %v13229
      %13374 = vst [vmem:[%s221 + $0x58] sm:$0xff] %v13231
      %13375 = vst [vmem:[%s221 + $0x60] sm:$0xff] %v13235
      %13376 = vst [vmem:[%s221 + $0x68] sm:$0xff] %v13237
      %13377 = vst [vmem:[%s221 + $0x70] sm:$0xff] %v13239
      %13378 = vst [vmem:[%s221 + $0x78] sm:$0xff] %v13241
      %13379 = vst [vmem:[%s221 + $0x80] sm:$0xff] %v13245
      %13380 = vst [vmem:[%s221 + $0x88] sm:$0xff] %v13247
      %13381 = vst [vmem:[%s221 + $0x90] sm:$0xff] %v13249
      %13382 = vst [vmem:[%s221 + $0x98] sm:$0xff] %v13251
      %13383 = vst [vmem:[%s221 + $0xa0] sm:$0xff] %v13255
      %13384 = vst [vmem:[%s221 + $0xa8] sm:$0xff] %v13257
      %13385 = vst [vmem:[%s221 + $0xb0] sm:$0xff] %v13259
      %13386 = vst [vmem:[%s221 + $0xb8] sm:$0xff] %v13261
      %13387 = vst [vmem:[%s221 + $0xc0] sm:$0xff] %v13265
      %13388 = vst [vmem:[%s221 + $0xc8] sm:$0xff] %v13267
      %13389 = vst [vmem:[%s221 + $0xd0] sm:$0xff] %v13269
      %13390 = vst [vmem:[%s221 + $0xd8] sm:$0xff] %v13271
      %13391 = vst [vmem:[%s221 + $0xe0] sm:$0xff] %v13275
      %13392 = vst [vmem:[%s221 + $0xe8] sm:$0xff] %v13277
      %13393 = vst [vmem:[%s221 + $0xf0] sm:$0xff] %v13279
      %13394 = vst [vmem:[%s221 + $0xf8] sm:$0xff] %v13281
      %13395 = vst [vmem:[%s221 + $0x100] sm:$0xff] %v13285
      %13396 = vst [vmem:[%s221 + $0x108] sm:$0xff] %v13287
      %13397 = vst [vmem:[%s221 + $0x110] sm:$0xff] %v13289
      %13398 = vst [vmem:[%s221 + $0x118] sm:$0xff] %v13291
      %13399 = vst [vmem:[%s221 + $0x120] sm:$0xff] %v13295
      %13400 = vst [vmem:[%s221 + $0x128] sm:$0xff] %v13297
      %13401 = vst [vmem:[%s221 + $0x130] sm:$0xff] %v13299
      %13402 = vst [vmem:[%s221 + $0x138] sm:$0xff] %v13301
      %13403 = vst [vmem:[%s221 + $0x140] sm:$0xff] %v13305
      %13404 = vst [vmem:[%s221 + $0x148] sm:$0xff] %v13307
      %13405 = vst [vmem:[%s221 + $0x150] sm:$0xff] %v13309
      %13406 = vst [vmem:[%s221 + $0x158] sm:$0xff] %v13311
      %13407 = vst [vmem:[%s221 + $0x160] sm:$0xff] %v13315
      %13408 = vst [vmem:[%s221 + $0x168] sm:$0xff] %v13317
      %13409 = vst [vmem:[%s221 + $0x170] sm:$0xff] %v13319
      %13410 = vst [vmem:[%s221 + $0x178] sm:$0xff] %v13321
      %13411 = vst [vmem:[%s221 + $0x180] sm:$0xff] %v13325
      %13412 = vst [vmem:[%s221 + $0x188] sm:$0xff] %v13327
      %13413 = vst [vmem:[%s221 + $0x190] sm:$0xff] %v13329
      %13414 = vst [vmem:[%s221 + $0x198] sm:$0xff] %v13331
      %13415 = vst [vmem:[%s221 + $0x1a0] sm:$0xff] %v13335
      %13416 = vst [vmem:[%s221 + $0x1a8] sm:$0xff] %v13337
      %13417 = vst [vmem:[%s221 + $0x1b0] sm:$0xff] %v13339
      %13418 = vst [vmem:[%s221 + $0x1b8] sm:$0xff] %v13341
      %13419 = vst [vmem:[%s221 + $0x1c0] sm:$0xff] %v13345
      %13420 = vst [vmem:[%s221 + $0x1c8] sm:$0xff] %v13347
      %13421 = vst [vmem:[%s221 + $0x1d0] sm:$0xff] %v13349
      %13422 = vst [vmem:[%s221 + $0x1d8] sm:$0xff] %v13351
      %13423 = vst [vmem:[%s221 + $0x1e0] sm:$0xff] %v13355
      %13424 = vst [vmem:[%s221 + $0x1e8] sm:$0xff] %v13357
      %13425 = vst [vmem:[%s221 + $0x1f0] sm:$0xff] %v13359
      %13426 = vst [vmem:[%s221 + $0x1f8] sm:$0xff] %v13361
      %s13427 = smul.u32 16, %s20
      %p13428 = scmp.lt.s32.totalorder %s19, 1
      %s13429 = scalar_select %p13428, %s19, 1
      %p13430 = scmp.lt.s32.totalorder %s13427, 15
      %s13431 = scalar_select %p13430, %s13427, 15
      %s13432 = smul.addr %s13431, 4
      %s13433 = smul.addr %s13429, 64
      %s13434 = sadd.s32 %s13432, %s13433
      %s13435 = smul.addr %s13434, 8
      %s13436 = scalar_lea.vmem %s4, %s13435
      // Predicated region
      $region37: #{dee_forward.1} parent=35 // pred_check
        %p13437 = pneg %p136
      $region38: #{dee_forward.1} parent=35 // pred_check_branch
        %13439 = sbr.rel (%p13437) target = $region40
      $region39: #{dee_forward.1} parent=35 // pred_region
        %s13440 = smul.u32 16, %s20
      $region40: #{dee_forward.1} parent=35 // pred_fallthru
        _
    $region36: #{dee_forward.1} parent=5 // pred_fallthru
      _
    %p13441 = scmp.le.s32.totalorder 2, %s10
    // Predicated region
    $region41: #{dee_forward.1} parent=5 // pred_check
      %p13442 = pneg %p13441
    $region42: #{dee_forward.1} parent=5 // pred_check_branch
      %13444 = sbr.rel (%p13442) target = $region44
    $region43: #{dee_forward.1} parent=5 // pred_region
      %s13445 = ssub.s32 %s10, 2
      // Predicated region
      $region45: #{dee_forward.1} parent=43 // pred_check
        %p13446 = pneg %p142
      $region46: #{dee_forward.1} parent=43 // pred_check_branch
        %13448 = sbr.rel (%p13446) target = $region48
      $region47: #{dee_forward.1} parent=43 // pred_region
        %s13449 = smul.u32 16, %s22
        %p13450 = scmp.lt.s32.totalorder %s21, 1
        %s13451 = scalar_select %p13450, %s21, 1
        %p13452 = scmp.lt.s32.totalorder %s13449, 15
        %s13453 = scalar_select %p13452, %s13449, 15
        %s13454 = smul.addr %s13453, 4
        %s13455 = smul.addr %s13451, 64
        %s13456 = sadd.s32 %s13454, %s13455
        %s13457 = smul.addr %s13456, 8
        %s13458 = scalar_lea.vmem %s4, %s13457
      $region48: #{dee_forward.1} parent=43 // pred_fallthru
        _
    $region44: #{dee_forward.1} parent=5 // pred_fallthru
      _
  $region6: #{dee_forward.1} parent=0 // loop_footer
    %s14 = sadd.s32 1, %s10
  $region7: #{dee_forward.1} parent=0 // loop_footer_branch
    %9 = sbr.rel target = $region3
  $region8: #{dee_forward.1} parent=0 // loop_exit
    _

</llo_original>
